<compile_context>
chip_gen: v7x
topology: tpu7x:2x2x1
jax: 0.10.0
libtpu: 0.0.40
codegen_flags: <defaults>
</compile_context>

<pallas_src>
import functools
import math

import jax
import jax.numpy as jnp
from jax.experimental import pallas as pl
from jax.experimental.pallas import tpu as pltpu

EPS = 1e-6            # OpenNMT/c2nl LayerNorm eps
NEG_INF = -1e18       # masked_fill value used by c2nl MultiHeadedAttention
VMEM_LIMIT_BYTES = 48 * 1024 * 1024   # < v7x 64 MiB physical; > v5e/v6e scoped defaults


def _round_up(x, m):
    return ((x + m - 1) // m) * m


def _pick_query_tile(T):
    # 256-multiples fill the v6e/v7x 2x256^2 MXU edge; 128 suffices on v5e.
    for cand in (256, 128):
        if T % cand == 0:
            return cand
    return T


def _layer_norm(x, g, b):
    mu = jnp.mean(x, axis=-1, keepdims=True)
    var = jnp.mean(jnp.square(x - mu), axis=-1, keepdims=True)
    return (x - mu) * jax.lax.rsqrt(var + EPS) * g + b


def decoder_layer_kernel(heads, d_k, sk, sv, t_q, compute_dtype, use_approx_recip,
                         x_ref, mem_ref, src_mask_ref, tgt_mask_ref,
                         wq1, bq1, wk1, bk1, wv1, bv1, wo1, bo1, g1, be1,
                         wq2, bq2, wk2, bk2, wv2, bv2, wo2, bo2, g2, be2,
                         gf, bef, w1, b1, w2, b2,
                         out_ref, attn_ref, ctx_slab):
    """Grid = (batch, query_tile). All hot-path GEMMs (bf16 operands, f32
    accumulate), softmax, layernorms and the FFN run inside this body."""
    qi = pl.program_id(1)
    q0 = pl.multiple_of(qi * t_q, t_q)

    x_full = x_ref[0]                              # (T, D)  self-attn keys/values
    x_tile = x_ref[0, pl.ds(q0, t_q), :]           # (t_q, D) query tile
    mem = mem_ref[0]                               # (S, D)
    T = x_full.shape[0]

    # ---- masks: built once per tile, in-kernel (no (B,T,T) HBM tensor) ------
    rows = jax.lax.broadcasted_iota(jnp.int32, (t_q, T), 0) + q0   # global query pos
    cols = jax.lax.broadcasted_iota(jnp.int32, (t_q, T), 1)
    dec_masked = jnp.logical_or(cols > rows, tgt_mask_ref[0] > 0.5)   # (t_q, T) bool
    src_masked = src_mask_ref[0] > 0.5                                # (1, S) bool (bcast)

    inv_sqrt_dk = 1.0 / math.sqrt(d_k)
    cdt = compute_dtype

    def mha(q_in, kv_in, masked, wq, bq, wk, bk, wv, bv, wo, bo):
        # Fused head projections: one bf16 GEMM per projection; heads packed
        # along lanes in 128-aligned stripes (zero-padded lanes are inert).
        q_c = q_in.astype(cdt)
        kv_c = kv_in.astype(cdt)
        q_all = (jnp.dot(q_c, wq[...], preferred_element_type=jnp.float32)
                 + bq[...]) * inv_sqrt_dk                                   # (Lq, H*sk)
        k_all = jnp.dot(kv_c, wk[...], preferred_element_type=jnp.float32) + bk[...]
        v_all = jnp.dot(kv_c, wv[...], preferred_element_type=jnp.float32) + bv[...]

        top_attn = None
        # TODO(synk): for large head counts drive this with
        # lax.fori_loop(unroll=True) to bound vreg live ranges.
        for h in range(heads):
            qh = q_all[:, h * sk:(h + 1) * sk].astype(cdt)   # lane-aligned stripes
            kh = k_all[:, h * sk:(h + 1) * sk].astype(cdt)
            vh = v_all[:, h * sv:(h + 1) * sv].astype(cdt)
            # scores = qh @ kh^T (padded lanes are zero in both -> no effect)
            scores = jax.lax.dot_general(qh, kh, (((1,), (1,)), ((), ())),
                                         preferred_element_type=jnp.float32)
            scores = jnp.where(masked, NEG_INF, scores)      # masked_fill semantics
            scores = scores - jnp.max(scores, axis=-1, keepdims=True)
            e = jnp.exp(scores)
            denom = jnp.sum(e, axis=-1, keepdims=True)
            if use_approx_recip:
                attn = e * pl.reciprocal(denom, approx=True)   # EUP slot
            else:
                attn = e / denom
            if h == 0:
                top_attn = attn
            # write the head's context straight into its lane stripe (no concat)
            ctx_slab[:, h * sv:(h + 1) * sv] = jnp.dot(
                attn.astype(cdt), vh, preferred_element_type=jnp.float32)

        ctx = ctx_slab[...].astype(cdt)                                      # (Lq, H*sv)
        out = jnp.dot(ctx, wo[...], preferred_element_type=jnp.float32) + bo[...]
        return out, top_attn

    # --- self attention (key=value=query=inputs) + residual + LayerNorm
    query, _ = mha(x_tile, x_full, dec_masked, wq1, bq1, wk1, bk1, wv1, bv1, wo1, bo1)
    query_norm = _layer_norm(query + x_tile, g1[...], be1[...])

    # --- context attention (key=value=memory_bank) + residual + LayerNorm
    mid, top_attn = mha(query_norm, mem, src_masked,
                        wq2, bq2, wk2, bk2, wv2, bv2, wo2, bo2)
    mid_norm = _layer_norm(mid + query_norm, g2[...], be2[...])

    # --- PositionwiseFeedForward (internal LayerNorm + residual)
    y = _layer_norm(mid_norm, gf[...], bef[...])
    inter = jnp.maximum(
        jnp.dot(y.astype(cdt), w1[...], preferred_element_type=jnp.float32) + b1[...], 0.0)
    ff = jnp.dot(inter.astype(cdt), w2[...], preferred_element_type=jnp.float32) + b2[...]

    out_ref[0] = (ff + mid_norm).astype(out_ref.dtype)
    attn_ref[0] = top_attn.astype(attn_ref.dtype)
    # NOTE: fully-masked (padded) query rows yield uniform attention, matching
    # the reference softmax; those rows are garbage by construction.


PARAM_ORDER = ['wq1', 'bq1', 'wk1', 'bk1', 'wv1', 'bv1', 'wo1', 'bo1', 'g1', 'be1',
               'wq2', 'bq2', 'wk2', 'bk2', 'wv2', 'bv2', 'wo2', 'bo2', 'g2', 'be2',
               'gf', 'bef', 'w1', 'b1', 'w2', 'b2']


def _fuse_params(p, sk, sv, compute_dtype):
    """Pre-fuse per-head weights (one GEMM per projection), pad each head to a
    128-lane stripe (zero lanes are inert), and cast GEMM weights to bf16 once
    so the DMA'd copies are already half-width. Biases/LayerNorm stay f32."""
    def head_w(w, stripe):          # (H, D, dh) -> (D, H*stripe)
        H, D, dh = w.shape
        w = jnp.transpose(w, (1, 0, 2))
        if stripe != dh:
            w = jnp.pad(w, ((0, 0), (0, 0), (0, stripe - dh)))
        return w.reshape(D, H * stripe).astype(compute_dtype)

    def head_b(b, stripe):          # (H, 1, dh) -> (1, H*stripe)
        H, _, dh = b.shape
        b = b.reshape(H, dh)
        if stripe != dh:
            b = jnp.pad(b, ((0, 0), (0, stripe - dh)))
        return b.reshape(1, H * stripe).astype(jnp.float32)

    def out_w(w, stripe):           # (H, dv, D) -> (H*stripe, D)
        H, dv, D = w.shape
        if stripe != dv:
            w = jnp.pad(w, ((0, 0), (0, stripe - dv), (0, 0)))
        return w.reshape(H * stripe, D).astype(compute_dtype)

    fp = {}
    for pre in ('1', '2'):
        fp['wq' + pre] = head_w(p['wq' + pre], sk); fp['bq' + pre] = head_b(p['bq' + pre], sk)
        fp['wk' + pre] = head_w(p['wk' + pre], sk); fp['bk' + pre] = head_b(p['bk' + pre], sk)
        fp['wv' + pre] = head_w(p['wv' + pre], sv); fp['bv' + pre] = head_b(p['bv' + pre], sv)
        fp['wo' + pre] = out_w(p['wo' + pre], sv)
        fp['bo' + pre] = p['bo' + pre].astype(jnp.float32)
        fp['g' + pre] = p['g' + pre].astype(jnp.float32)
        fp['be' + pre] = p['be' + pre].astype(jnp.float32)
    fp['gf'] = p['gf'].astype(jnp.float32); fp['bef'] = p['bef'].astype(jnp.float32)
    fp['w1'] = p['w1'].astype(compute_dtype); fp['b1'] = p['b1'].astype(jnp.float32)
    fp['w2'] = p['w2'].astype(compute_dtype); fp['b2'] = p['b2'].astype(jnp.float32)
    return fp


def transformer_decoder_layer(inputs, memory_bank, src_pad_mask, tgt_pad_mask,
                              params, heads, d_k, d_v,
                              compute_dtype=jnp.bfloat16,
                              attn_dtype=jnp.float32,
                              use_approx_recip=True):
    B, T, D = inputs.shape
    S = memory_bank.shape[1]

    sk = _round_up(d_k, 128)        # per-head Q/K lane stripe (zero-padded)
    sv = _round_up(d_v, 128)        # per-head V/ctx lane stripe (zero-padded)
    t_q = _pick_query_tile(T)
    n_qt = T // t_q

    fp = _fuse_params(params, sk, sv, compute_dtype)
    weight_args = [fp[n] for n in PARAM_ORDER]

    # only the thin (B,1,S) / (B,1,T) pad masks are shipped; the causal mask is
    # generated inside the kernel.
    src_mask = src_pad_mask.astype(jnp.float32)   # (B, 1, S)
    tgt_mask = tgt_pad_mask.astype(jnp.float32)   # (B, 1, T)

    kernel = functools.partial(decoder_layer_kernel, heads, d_k, sk, sv, t_q,
                               compute_dtype, use_approx_recip)

    out_shape = (jax.ShapeDtypeStruct((B, T, D), jnp.float32),
                 jax.ShapeDtypeStruct((B, T, S), attn_dtype))
    out_specs = [pl.BlockSpec((1, t_q, D), lambda b, qi: (b, qi, 0)),
                 pl.BlockSpec((1, t_q, S), lambda b, qi: (b, qi, 0))]

    def run(single_buffer_weights):
        def weight_spec(arr):
            nd = arr.ndim
            idx = lambda b, qi, nd=nd: (0,) * nd
            if single_buffer_weights:
                # constant across the grid -> single buffer, no re-fetch churn
                return pl.BlockSpec(arr.shape, idx, pipeline_mode=pl.Buffered(1))
            return pl.BlockSpec(arr.shape, idx)

        in_specs = ([pl.BlockSpec((1, T, D), lambda b, qi: (b, 0, 0)),
                     pl.BlockSpec((1, S, D), lambda b, qi: (b, 0, 0)),
                     pl.BlockSpec((1, 1, S), lambda b, qi: (b, 0, 0)),
                     pl.BlockSpec((1, 1, T), lambda b, qi: (b, 0, 0))]
                    + [weight_spec(w) for w in weight_args])

        return pl.pallas_call(
            kernel,
            out_shape=out_shape,
            grid_spec=pltpu.PrefetchScalarGridSpec(
                num_scalar_prefetch=0,
                grid=(B, n_qt),
                in_specs=in_specs,
                out_specs=out_specs,
                scratch_shapes=[pltpu.VMEM((t_q, heads * sv), jnp.float32)]),
            compiler_params=pltpu.CompilerParams(
                # batch + query-tile axes are independent -> shard across
                # v7x's 2 TensorCores. TODO(synk): profile CORE_PARALLEL on v7x.
                dimension_semantics=("parallel", "parallel"),
                vmem_limit_bytes=VMEM_LIMIT_BYTES),
        )(inputs, memory_bank, src_mask, tgt_mask, *weight_args)

    try:
        out, attn = run(True)        # single-buffer the constant weights
    except Exception:                # pl.Buffered(1) unsupported -> default pipelining
        out, attn = run(False)

    return out, attn, None   # coverage is None (coverage_attn=False)


# ------------------------- pure-JAX reference ------------------------------
def _ref_mha(q_in, kv_in, mask, wq, bq, wk, bk, wv, bv, wo, bo, d_k):
    hi = jax.lax.Precision.HIGHEST
    q = jnp.einsum('bld,hdk->bhlk', q_in, wq, precision=hi) + bq[None]
    k = jnp.einsum('bld,hdk->bhlk', kv_in, wk, precision=hi) + bk[None]
    v = jnp.einsum('bld,hdk->bhlk', kv_in, wv, precision=hi) + bv[None]
    q = q / jnp.sqrt(jnp.float32(d_k))
    scores = jnp.einsum('bhqk,bhsk->bhqs', q, k, precision=hi)
    scores = jnp.where(mask[:, None] > 0.5, NEG_INF, scores)
    attn = jax.nn.softmax(scores, axis=-1)
    ctx = jnp.einsum('bhqs,bhsk->bhqk', attn, v, precision=hi)
    out = jnp.einsum('bhqk,hkd->bqd', ctx, wo, precision=hi) + bo[None]
    return out, attn[:, 0]


def reference(inputs, memory_bank, src_pad_mask, tgt_pad_mask, p, heads, d_k, d_v):
    hi = jax.lax.Precision.HIGHEST
    B, T, D = inputs.shape
    future = jnp.triu(jnp.ones((T, T), jnp.int32), 1)[None]
    dec_mask = ((tgt_pad_mask.astype(jnp.int32) + future) > 0).astype(jnp.float32)
    src_mask = src_pad_mask.astype(jnp.float32)

    query, _ = _ref_mha(inputs, inputs, dec_mask,
                        p['wq1'], p['bq1'], p['wk1'], p['bk1'],
                        p['wv1'], p['bv1'], p['wo1'], p['bo1'], d_k)
    query_norm = _layer_norm(query + inputs, p['g1'], p['be1'])
    mid, top_attn = _ref_mha(query_norm, memory_bank, src_mask,
                             p['wq2'], p['bq2'], p['wk2'], p['bk2'],
                             p['wv2'], p['bv2'], p['wo2'], p['bo2'], d_k)
    mid_norm = _layer_norm(mid + query_norm, p['g2'], p['be2'])
    y = _layer_norm(mid_norm, p['gf'], p['bef'])
    inter = jnp.maximum(jnp.einsum('btd,df->btf', y, p['w1'], precision=hi) + p['b1'], 0.0)
    ff = jnp.einsum('btf,fd->btd', inter, p['w2'], precision=hi) + p['b2']
    return ff + mid_norm, top_attn


# ------------------------- deterministic params ----------------------------
def make_params(key, D, H, d_k, d_v, F):
    ks = iter(jax.random.split(key, 32))

    def w(shape, scale=0.05):
        return jax.random.normal(next(ks), shape, jnp.float32) * scale

    p = {}
    for pre in ('1', '2'):
        p['wq' + pre] = w((H, D, d_k)); p['bq' + pre] = w((H, 1, d_k), 0.02)
        p['wk' + pre] = w((H, D, d_k)); p['bk' + pre] = w((H, 1, d_k), 0.02)
        p['wv' + pre] = w((H, D, d_v)); p['bv' + pre] = w((H, 1, d_v), 0.02)
        p['wo' + pre] = w((H, d_v, D)); p['bo' + pre] = w((1, D), 0.02)
        p['g' + pre] = 1.0 + w((1, D), 0.1); p['be' + pre] = w((1, D), 0.1)
    p['gf'] = 1.0 + w((1, D), 0.1); p['bef'] = w((1, D), 0.1)
    p['w1'] = w((D, F)); p['b1'] = w((1, F), 0.02)
    p['w2'] = w((F, D)); p['b2'] = w((1, D), 0.02)
    return p


if __name__ == "__main__":
    B, T, S = 2, 8, 16
    D, H, DK, DV, F = 32, 4, 8, 8, 64

    root = jax.random.PRNGKey(0)
    k_in, k_mem, k_par = jax.random.split(root, 3)

    inputs = jax.random.normal(k_in, (B, T, D), jnp.float32)
    memory_bank = jax.random.normal(k_mem, (B, S, D), jnp.float32)

    # pad masks: 1 = padded position (masked out)
    src_lens = jnp.array([S, 12])
    tgt_lens = jnp.array([T, 6])
    src_pad_mask = (jnp.arange(S)[None, None, :] >= src_lens[:, None, None]).astype(jnp.int32)  # (B,1,S)
    tgt_pad_mask = (jnp.arange(T)[None, None, :] >= tgt_lens[:, None, None]).astype(jnp.int32)  # (B,1,T)

    params = make_params(k_par, D, H, DK, DV, F)

    out, attn, coverage = transformer_decoder_layer(
        inputs, memory_bank, src_pad_mask, tgt_pad_mask, params, H, DK, DV)
    jax.block_until_ready((out, attn))

    ref_out, ref_attn = reference(inputs, memory_bank, src_pad_mask, tgt_pad_mask,
                                  params, H, DK, DV)
    assert out.shape == (B, T, D) and attn.shape == (B, T, S) and coverage is None
    # bf16 MXU operands (f32 accumulate) -> tolerance relaxed from 5e-3.
    assert jnp.allclose(out, ref_out, atol=2e-2, rtol=2e-2), "output mismatch vs reference"
    assert jnp.allclose(attn, ref_attn, atol=2e-2, rtol=2e-2), "attention mismatch vs reference"

    print("KERNEL_OK")
</pallas_src>

<mosaic_0001>
module attributes {stable_mosaic.version = 11 : i64} {
  func.func @decoder_layer_kernel(%arg0: i32, %arg1: i32, %arg2: memref<1x8x32xf32, #tpu.memory_space<vmem>>, %arg3: memref<1x16x32xf32, #tpu.memory_space<vmem>>, %arg4: memref<1x1x16xf32, #tpu.memory_space<vmem>>, %arg5: memref<1x1x8xf32, #tpu.memory_space<vmem>>, %arg6: memref<32x512xbf16, #tpu.memory_space<vmem>>, %arg7: memref<1x512xf32, #tpu.memory_space<vmem>>, %arg8: memref<32x512xbf16, #tpu.memory_space<vmem>>, %arg9: memref<1x512xf32, #tpu.memory_space<vmem>>, %arg10: memref<32x512xbf16, #tpu.memory_space<vmem>>, %arg11: memref<1x512xf32, #tpu.memory_space<vmem>>, %arg12: memref<512x32xbf16, #tpu.memory_space<vmem>>, %arg13: memref<1x32xf32, #tpu.memory_space<vmem>>, %arg14: memref<1x32xf32, #tpu.memory_space<vmem>>, %arg15: memref<1x32xf32, #tpu.memory_space<vmem>>, %arg16: memref<32x512xbf16, #tpu.memory_space<vmem>>, %arg17: memref<1x512xf32, #tpu.memory_space<vmem>>, %arg18: memref<32x512xbf16, #tpu.memory_space<vmem>>, %arg19: memref<1x512xf32, #tpu.memory_space<vmem>>, %arg20: memref<32x512xbf16, #tpu.memory_space<vmem>>, %arg21: memref<1x512xf32, #tpu.memory_space<vmem>>, %arg22: memref<512x32xbf16, #tpu.memory_space<vmem>>, %arg23: memref<1x32xf32, #tpu.memory_space<vmem>>, %arg24: memref<1x32xf32, #tpu.memory_space<vmem>>, %arg25: memref<1x32xf32, #tpu.memory_space<vmem>>, %arg26: memref<1x32xf32, #tpu.memory_space<vmem>>, %arg27: memref<1x32xf32, #tpu.memory_space<vmem>>, %arg28: memref<32x64xbf16, #tpu.memory_space<vmem>>, %arg29: memref<1x64xf32, #tpu.memory_space<vmem>>, %arg30: memref<64x32xbf16, #tpu.memory_space<vmem>>, %arg31: memref<1x32xf32, #tpu.memory_space<vmem>>, %arg32: memref<1x8x32xf32, #tpu.memory_space<vmem>>, %arg33: memref<1x8x16xf32, #tpu.memory_space<vmem>>, %arg34: memref<8x512xf32, #tpu.memory_space<vmem>>) attributes {dimension_semantics = [#tpu.dimension_semantics<parallel>, #tpu.dimension_semantics<parallel>], iteration_bounds = array<i64: 2, 1>, scalar_prefetch = 0 : i64, scratch_operands = 1 : i64, tpu.core_type = #tpu.core_type<tc>, window_params = [{transform_indices = @transform_0, window_bounds = array<i64: 1, 8, 32>}, {transform_indices = @transform_1, window_bounds = array<i64: 1, 16, 32>}, {transform_indices = @transform_2, window_bounds = array<i64: 1, 1, 16>}, {transform_indices = @transform_3, window_bounds = array<i64: 1, 1, 8>}, {pipeline_mode = #tpu.pipeline_mode<synchronous>, transform_indices = @transform_4, window_bounds = array<i64: 32, 512>}, {pipeline_mode = #tpu.pipeline_mode<synchronous>, transform_indices = @transform_5, window_bounds = array<i64: 1, 512>}, {pipeline_mode = #tpu.pipeline_mode<synchronous>, transform_indices = @transform_6, window_bounds = array<i64: 32, 512>}, {pipeline_mode = #tpu.pipeline_mode<synchronous>, transform_indices = @transform_7, window_bounds = array<i64: 1, 512>}, {pipeline_mode = #tpu.pipeline_mode<synchronous>, transform_indices = @transform_8, window_bounds = array<i64: 32, 512>}, {pipeline_mode = #tpu.pipeline_mode<synchronous>, transform_indices = @transform_9, window_bounds = array<i64: 1, 512>}, {pipeline_mode = #tpu.pipeline_mode<synchronous>, transform_indices = @transform_10, window_bounds = array<i64: 512, 32>}, {pipeline_mode = #tpu.pipeline_mode<synchronous>, transform_indices = @transform_11, window_bounds = array<i64: 1, 32>}, {pipeline_mode = #tpu.pipeline_mode<synchronous>, transform_indices = @transform_12, window_bounds = array<i64: 1, 32>}, {pipeline_mode = #tpu.pipeline_mode<synchronous>, transform_indices = @transform_13, window_bounds = array<i64: 1, 32>}, {pipeline_mode = #tpu.pipeline_mode<synchronous>, transform_indices = @transform_14, window_bounds = array<i64: 32, 512>}, {pipeline_mode = #tpu.pipeline_mode<synchronous>, transform_indices = @transform_15, window_bounds = array<i64: 1, 512>}, {pipeline_mode = #tpu.pipeline_mode<synchronous>, transform_indices = @transform_16, window_bounds = array<i64: 32, 512>}, {pipeline_mode = #tpu.pipeline_mode<synchronous>, transform_indices = @transform_17, window_bounds = array<i64: 1, 512>}, {pipeline_mode = #tpu.pipeline_mode<synchronous>, transform_indices = @transform_18, window_bounds = array<i64: 32, 512>}, {pipeline_mode = #tpu.pipeline_mode<synchronous>, transform_indices = @transform_19, window_bounds = array<i64: 1, 512>}, {pipeline_mode = #tpu.pipeline_mode<synchronous>, transform_indices = @transform_20, window_bounds = array<i64: 512, 32>}, {pipeline_mode = #tpu.pipeline_mode<synchronous>, transform_indices = @transform_21, window_bounds = array<i64: 1, 32>}, {pipeline_mode = #tpu.pipeline_mode<synchronous>, transform_indices = @transform_22, window_bounds = array<i64: 1, 32>}, {pipeline_mode = #tpu.pipeline_mode<synchronous>, transform_indices = @transform_23, window_bounds = array<i64: 1, 32>}, {pipeline_mode = #tpu.pipeline_mode<synchronous>, transform_indices = @transform_24, window_bounds = array<i64: 1, 32>}, {pipeline_mode = #tpu.pipeline_mode<synchronous>, transform_indices = @transform_25, window_bounds = array<i64: 1, 32>}, {pipeline_mode = #tpu.pipeline_mode<synchronous>, transform_indices = @transform_26, window_bounds = array<i64: 32, 64>}, {pipeline_mode = #tpu.pipeline_mode<synchronous>, transform_indices = @transform_27, window_bounds = array<i64: 1, 64>}, {pipeline_mode = #tpu.pipeline_mode<synchronous>, transform_indices = @transform_28, window_bounds = array<i64: 64, 32>}, {pipeline_mode = #tpu.pipeline_mode<synchronous>, transform_indices = @transform_29, window_bounds = array<i64: 1, 32>}, {transform_indices = @transform_30, window_bounds = array<i64: 1, 8, 32>}, {transform_indices = @transform_31, window_bounds = array<i64: 1, 8, 16>}]} {
    %c8_i32 = arith.constant 8 : i32
    %0 = arith.muli %arg1, %c8_i32 : i32
    %1 = tpu.assume_multiple %0, 8 : i32
    %c0 = arith.constant 0 : index
    %c0_0 = arith.constant 0 : index
    %c0_1 = arith.constant 0 : index
    %2 = vector.load %arg2[%c0, %c0_0, %c0_1] : memref<1x8x32xf32, #tpu.memory_space<vmem>>, vector<1x8x32xf32>
    %3 = vector.shape_cast %2 : vector<1x8x32xf32> to vector<8x32xf32>
    %c0_2 = arith.constant 0 : index
    %4 = arith.index_cast %1 : i32 to index
    %c0_3 = arith.constant 0 : index
    %5 = vector.load %arg2[%c0_2, %4, %c0_3] : memref<1x8x32xf32, #tpu.memory_space<vmem>>, vector<1x8x32xf32>
    %6 = vector.shape_cast %5 : vector<1x8x32xf32> to vector<8x32xf32>
    %c0_4 = arith.constant 0 : index
    %c0_5 = arith.constant 0 : index
    %c0_6 = arith.constant 0 : index
    %7 = vector.load %arg3[%c0_4, %c0_5, %c0_6] : memref<1x16x32xf32, #tpu.memory_space<vmem>>, vector<1x16x32xf32>
    %8 = vector.shape_cast %7 : vector<1x16x32xf32> to vector<16x32xf32>
    %9 = tpu.iota {dimensions = array<i32: 0>} : vector<8x8xi32>
    %10 = vector.broadcast %1 : i32 to vector<8x8xi32>
    %11 = arith.addi %9, %10 : vector<8x8xi32>
    %12 = tpu.iota {dimensions = array<i32: 1>} : vector<8x8xi32>
    %13 = arith.cmpi sgt, %12, %11 : vector<8x8xi32>
    %c0_7 = arith.constant 0 : index
    %c0_8 = arith.constant 0 : index
    %c0_9 = arith.constant 0 : index
    %14 = vector.load %arg5[%c0_7, %c0_8, %c0_9] : memref<1x1x8xf32, #tpu.memory_space<vmem>>, vector<1x1x8xf32>
    %15 = vector.shape_cast %14 : vector<1x1x8xf32> to vector<1x8xf32>
    %cst = arith.constant 5.000000e-01 : f32
    %16 = vector.broadcast %cst : f32 to vector<1x8xf32>
    %17 = arith.cmpf ogt, %15, %16 : vector<1x8xf32>
    %18 = vector.broadcast %17 : vector<1x8xi1> to vector<8x8xi1>
    %19 = arith.ori %13, %18 : vector<8x8xi1>
    %c0_10 = arith.constant 0 : index
    %c0_11 = arith.constant 0 : index
    %c0_12 = arith.constant 0 : index
    %20 = vector.load %arg4[%c0_10, %c0_11, %c0_12] : memref<1x1x16xf32, #tpu.memory_space<vmem>>, vector<1x1x16xf32>
    %21 = vector.shape_cast %20 : vector<1x1x16xf32> to vector<1x16xf32>
    %cst_13 = arith.constant 5.000000e-01 : f32
    %22 = vector.broadcast %cst_13 : f32 to vector<1x16xf32>
    %23 = arith.cmpf ogt, %21, %22 : vector<1x16xf32>
    %24 = arith.truncf %6 : vector<8x32xf32> to vector<8x32xbf16>
    %25 = arith.truncf %3 : vector<8x32xf32> to vector<8x32xbf16>
    %c0_14 = arith.constant 0 : index
    %c0_15 = arith.constant 0 : index
    %26 = vector.load %arg6[%c0_14, %c0_15] : memref<32x512xbf16, #tpu.memory_space<vmem>>, vector<32x512xbf16>
    %cst_16 = arith.constant dense<0.000000e+00> : vector<8x512xf32>
    %27 = tpu.matmul %24, %26, %cst_16 {dimension_numbers = #tpu.dot_dimension_numbers<[1], [0], [0], [1], [0, 0, 1, 1], [], []>} : vector<8x32xbf16>, vector<32x512xbf16>, vector<8x512xf32> -> vector<8x512xf32>
    %c0_17 = arith.constant 0 : index
    %c0_18 = arith.constant 0 : index
    %28 = vector.load %arg7[%c0_17, %c0_18] : memref<1x512xf32, #tpu.memory_space<vmem>>, vector<1x512xf32>
    %29 = vector.broadcast %28 : vector<1x512xf32> to vector<8x512xf32>
    %30 = arith.addf %27, %29 : vector<8x512xf32>
    %cst_19 = arith.constant 0.353553385 : f32
    %31 = vector.broadcast %cst_19 : f32 to vector<8x512xf32>
    %32 = arith.mulf %30, %31 : vector<8x512xf32>
    %c0_20 = arith.constant 0 : index
    %c0_21 = arith.constant 0 : index
    %33 = vector.load %arg8[%c0_20, %c0_21] : memref<32x512xbf16, #tpu.memory_space<vmem>>, vector<32x512xbf16>
    %cst_22 = arith.constant dense<0.000000e+00> : vector<8x512xf32>
    %34 = tpu.matmul %25, %33, %cst_22 {dimension_numbers = #tpu.dot_dimension_numbers<[1], [0], [0], [1], [0, 0, 1, 1], [], []>} : vector<8x32xbf16>, vector<32x512xbf16>, vector<8x512xf32> -> vector<8x512xf32>
    %c0_23 = arith.constant 0 : index
    %c0_24 = arith.constant 0 : index
    %35 = vector.load %arg9[%c0_23, %c0_24] : memref<1x512xf32, #tpu.memory_space<vmem>>, vector<1x512xf32>
    %36 = vector.broadcast %35 : vector<1x512xf32> to vector<8x512xf32>
    %37 = arith.addf %34, %36 : vector<8x512xf32>
    %c0_25 = arith.constant 0 : index
    %c0_26 = arith.constant 0 : index
    %38 = vector.load %arg10[%c0_25, %c0_26] : memref<32x512xbf16, #tpu.memory_space<vmem>>, vector<32x512xbf16>
    %cst_27 = arith.constant dense<0.000000e+00> : vector<8x512xf32>
    %39 = tpu.matmul %25, %38, %cst_27 {dimension_numbers = #tpu.dot_dimension_numbers<[1], [0], [0], [1], [0, 0, 1, 1], [], []>} : vector<8x32xbf16>, vector<32x512xbf16>, vector<8x512xf32> -> vector<8x512xf32>
    %c0_28 = arith.constant 0 : index
    %c0_29 = arith.constant 0 : index
    %40 = vector.load %arg11[%c0_28, %c0_29] : memref<1x512xf32, #tpu.memory_space<vmem>>, vector<1x512xf32>
    %41 = vector.broadcast %40 : vector<1x512xf32> to vector<8x512xf32>
    %42 = arith.addf %39, %41 : vector<8x512xf32>
    %43 = vector.extract_strided_slice %32 {offsets = [0, 0], sizes = [8, 128], strides = [1, 1]} : vector<8x512xf32> to vector<8x128xf32>
    %44 = arith.truncf %43 : vector<8x128xf32> to vector<8x128xbf16>
    %45 = vector.extract_strided_slice %37 {offsets = [0, 0], sizes = [8, 128], strides = [1, 1]} : vector<8x512xf32> to vector<8x128xf32>
    %46 = arith.truncf %45 : vector<8x128xf32> to vector<8x128xbf16>
    %47 = vector.extract_strided_slice %42 {offsets = [0, 0], sizes = [8, 128], strides = [1, 1]} : vector<8x512xf32> to vector<8x128xf32>
    %48 = arith.truncf %47 : vector<8x128xf32> to vector<8x128xbf16>
    %cst_30 = arith.constant dense<0.000000e+00> : vector<8x8xf32>
    %49 = tpu.matmul %44, %46, %cst_30 {dimension_numbers = #tpu.dot_dimension_numbers<[1], [1], [0], [0], [0, 0, 1, 0], [], []>} : vector<8x128xbf16>, vector<8x128xbf16>, vector<8x8xf32> -> vector<8x8xf32>
    %cst_31 = arith.constant -9.99999984E+17 : f32
    %50 = vector.broadcast %cst_31 : f32 to vector<8x8xf32>
    %51 = arith.select %19, %50, %49 : vector<8x8xi1>, vector<8x8xf32>
    %cst_32 = arith.constant dense<0xFF800000> : vector<8xf32>
    %52 = vector.multi_reduction <maximumf>, %51, %cst_32 [1] : vector<8x8xf32> to vector<8xf32>
    %53 = vector.shape_cast %52 : vector<8xf32> to vector<8x1xf32>
    %54 = vector.broadcast %53 : vector<8x1xf32> to vector<8x8xf32>
    %55 = arith.subf %51, %54 : vector<8x8xf32>
    %56 = math.exp %55 : vector<8x8xf32>
    %cst_33 = arith.constant dense<0.000000e+00> : vector<8xf32>
    %57 = vector.multi_reduction <add>, %56, %cst_33 [1] : vector<8x8xf32> to vector<8xf32>
    %58 = vector.shape_cast %57 : vector<8xf32> to vector<8x1xf32>
    %59 = tpu.reciprocal %58 {approx = true} : vector<8x1xf32> -> vector<8x1xf32>
    %60 = vector.broadcast %59 : vector<8x1xf32> to vector<8x8xf32>
    %61 = arith.mulf %56, %60 : vector<8x8xf32>
    %62 = arith.truncf %61 : vector<8x8xf32> to vector<8x8xbf16>
    %cst_34 = arith.constant dense<0.000000e+00> : vector<8x128xf32>
    %63 = tpu.matmul %62, %48, %cst_34 {dimension_numbers = #tpu.dot_dimension_numbers<[1], [0], [0], [1], [0, 0, 1, 1], [], []>} : vector<8x8xbf16>, vector<8x128xbf16>, vector<8x128xf32> -> vector<8x128xf32>
    %c0_35 = arith.constant 0 : index
    %c0_36 = arith.constant 0 : index
    %64 = vector.load %arg34[%c0_35, %c0_36] : memref<8x512xf32, #tpu.memory_space<vmem>>, vector<8x128xf32>
    tpu.vector_store %arg34[%c0_35, %c0_36], %63 {strides = array<i32>} : memref<8x512xf32, #tpu.memory_space<vmem>>, vector<8x128xf32>,
    %65 = vector.extract_strided_slice %32 {offsets = [0, 128], sizes = [8, 128], strides = [1, 1]} : vector<8x512xf32> to vector<8x128xf32>
    %66 = arith.truncf %65 : vector<8x128xf32> to vector<8x128xbf16>
    %67 = vector.extract_strided_slice %37 {offsets = [0, 128], sizes = [8, 128], strides = [1, 1]} : vector<8x512xf32> to vector<8x128xf32>
    %68 = arith.truncf %67 : vector<8x128xf32> to vector<8x128xbf16>
    %69 = vector.extract_strided_slice %42 {offsets = [0, 128], sizes = [8, 128], strides = [1, 1]} : vector<8x512xf32> to vector<8x128xf32>
    %70 = arith.truncf %69 : vector<8x128xf32> to vector<8x128xbf16>
    %cst_37 = arith.constant dense<0.000000e+00> : vector<8x8xf32>
    %71 = tpu.matmul %66, %68, %cst_37 {dimension_numbers = #tpu.dot_dimension_numbers<[1], [1], [0], [0], [0, 0, 1, 0], [], []>} : vector<8x128xbf16>, vector<8x128xbf16>, vector<8x8xf32> -> vector<8x8xf32>
    %cst_38 = arith.constant -9.99999984E+17 : f32
    %72 = vector.broadcast %cst_38 : f32 to vector<8x8xf32>
    %73 = arith.select %19, %72, %71 : vector<8x8xi1>, vector<8x8xf32>
    %cst_39 = arith.constant dense<0xFF800000> : vector<8xf32>
    %74 = vector.multi_reduction <maximumf>, %73, %cst_39 [1] : vector<8x8xf32> to vector<8xf32>
    %75 = vector.shape_cast %74 : vector<8xf32> to vector<8x1xf32>
    %76 = vector.broadcast %75 : vector<8x1xf32> to vector<8x8xf32>
    %77 = arith.subf %73, %76 : vector<8x8xf32>
    %78 = math.exp %77 : vector<8x8xf32>
    %cst_40 = arith.constant dense<0.000000e+00> : vector<8xf32>
    %79 = vector.multi_reduction <add>, %78, %cst_40 [1] : vector<8x8xf32> to vector<8xf32>
    %80 = vector.shape_cast %79 : vector<8xf32> to vector<8x1xf32>
    %81 = tpu.reciprocal %80 {approx = true} : vector<8x1xf32> -> vector<8x1xf32>
    %82 = vector.broadcast %81 : vector<8x1xf32> to vector<8x8xf32>
    %83 = arith.mulf %78, %82 : vector<8x8xf32>
    %84 = arith.truncf %83 : vector<8x8xf32> to vector<8x8xbf16>
    %cst_41 = arith.constant dense<0.000000e+00> : vector<8x128xf32>
    %85 = tpu.matmul %84, %70, %cst_41 {dimension_numbers = #tpu.dot_dimension_numbers<[1], [0], [0], [1], [0, 0, 1, 1], [], []>} : vector<8x8xbf16>, vector<8x128xbf16>, vector<8x128xf32> -> vector<8x128xf32>
    %c0_42 = arith.constant 0 : index
    %c128 = arith.constant 128 : index
    %86 = vector.load %arg34[%c0_42, %c128] : memref<8x512xf32, #tpu.memory_space<vmem>>, vector<8x128xf32>
    tpu.vector_store %arg34[%c0_42, %c128], %85 {strides = array<i32>} : memref<8x512xf32, #tpu.memory_space<vmem>>, vector<8x128xf32>,
    %87 = vector.extract_strided_slice %32 {offsets = [0, 256], sizes = [8, 128], strides = [1, 1]} : vector<8x512xf32> to vector<8x128xf32>
    %88 = arith.truncf %87 : vector<8x128xf32> to vector<8x128xbf16>
    %89 = vector.extract_strided_slice %37 {offsets = [0, 256], sizes = [8, 128], strides = [1, 1]} : vector<8x512xf32> to vector<8x128xf32>
    %90 = arith.truncf %89 : vector<8x128xf32> to vector<8x128xbf16>
    %91 = vector.extract_strided_slice %42 {offsets = [0, 256], sizes = [8, 128], strides = [1, 1]} : vector<8x512xf32> to vector<8x128xf32>
    %92 = arith.truncf %91 : vector<8x128xf32> to vector<8x128xbf16>
    %cst_43 = arith.constant dense<0.000000e+00> : vector<8x8xf32>
    %93 = tpu.matmul %88, %90, %cst_43 {dimension_numbers = #tpu.dot_dimension_numbers<[1], [1], [0], [0], [0, 0, 1, 0], [], []>} : vector<8x128xbf16>, vector<8x128xbf16>, vector<8x8xf32> -> vector<8x8xf32>
    %cst_44 = arith.constant -9.99999984E+17 : f32
    %94 = vector.broadcast %cst_44 : f32 to vector<8x8xf32>
    %95 = arith.select %19, %94, %93 : vector<8x8xi1>, vector<8x8xf32>
    %cst_45 = arith.constant dense<0xFF800000> : vector<8xf32>
    %96 = vector.multi_reduction <maximumf>, %95, %cst_45 [1] : vector<8x8xf32> to vector<8xf32>
    %97 = vector.shape_cast %96 : vector<8xf32> to vector<8x1xf32>
    %98 = vector.broadcast %97 : vector<8x1xf32> to vector<8x8xf32>
    %99 = arith.subf %95, %98 : vector<8x8xf32>
    %100 = math.exp %99 : vector<8x8xf32>
    %cst_46 = arith.constant dense<0.000000e+00> : vector<8xf32>
    %101 = vector.multi_reduction <add>, %100, %cst_46 [1] : vector<8x8xf32> to vector<8xf32>
    %102 = vector.shape_cast %101 : vector<8xf32> to vector<8x1xf32>
    %103 = tpu.reciprocal %102 {approx = true} : vector<8x1xf32> -> vector<8x1xf32>
    %104 = vector.broadcast %103 : vector<8x1xf32> to vector<8x8xf32>
    %105 = arith.mulf %100, %104 : vector<8x8xf32>
    %106 = arith.truncf %105 : vector<8x8xf32> to vector<8x8xbf16>
    %cst_47 = arith.constant dense<0.000000e+00> : vector<8x128xf32>
    %107 = tpu.matmul %106, %92, %cst_47 {dimension_numbers = #tpu.dot_dimension_numbers<[1], [0], [0], [1], [0, 0, 1, 1], [], []>} : vector<8x8xbf16>, vector<8x128xbf16>, vector<8x128xf32> -> vector<8x128xf32>
    %c0_48 = arith.constant 0 : index
    %c256 = arith.constant 256 : index
    %108 = vector.load %arg34[%c0_48, %c256] : memref<8x512xf32, #tpu.memory_space<vmem>>, vector<8x128xf32>
    tpu.vector_store %arg34[%c0_48, %c256], %107 {strides = array<i32>} : memref<8x512xf32, #tpu.memory_space<vmem>>, vector<8x128xf32>,
    %109 = vector.extract_strided_slice %32 {offsets = [0, 384], sizes = [8, 128], strides = [1, 1]} : vector<8x512xf32> to vector<8x128xf32>
    %110 = arith.truncf %109 : vector<8x128xf32> to vector<8x128xbf16>
    %111 = vector.extract_strided_slice %37 {offsets = [0, 384], sizes = [8, 128], strides = [1, 1]} : vector<8x512xf32> to vector<8x128xf32>
    %112 = arith.truncf %111 : vector<8x128xf32> to vector<8x128xbf16>
    %113 = vector.extract_strided_slice %42 {offsets = [0, 384], sizes = [8, 128], strides = [1, 1]} : vector<8x512xf32> to vector<8x128xf32>
    %114 = arith.truncf %113 : vector<8x128xf32> to vector<8x128xbf16>
    %cst_49 = arith.constant dense<0.000000e+00> : vector<8x8xf32>
    %115 = tpu.matmul %110, %112, %cst_49 {dimension_numbers = #tpu.dot_dimension_numbers<[1], [1], [0], [0], [0, 0, 1, 0], [], []>} : vector<8x128xbf16>, vector<8x128xbf16>, vector<8x8xf32> -> vector<8x8xf32>
    %cst_50 = arith.constant -9.99999984E+17 : f32
    %116 = vector.broadcast %cst_50 : f32 to vector<8x8xf32>
    %117 = arith.select %19, %116, %115 : vector<8x8xi1>, vector<8x8xf32>
    %cst_51 = arith.constant dense<0xFF800000> : vector<8xf32>
    %118 = vector.multi_reduction <maximumf>, %117, %cst_51 [1] : vector<8x8xf32> to vector<8xf32>
    %119 = vector.shape_cast %118 : vector<8xf32> to vector<8x1xf32>
    %120 = vector.broadcast %119 : vector<8x1xf32> to vector<8x8xf32>
    %121 = arith.subf %117, %120 : vector<8x8xf32>
    %122 = math.exp %121 : vector<8x8xf32>
    %cst_52 = arith.constant dense<0.000000e+00> : vector<8xf32>
    %123 = vector.multi_reduction <add>, %122, %cst_52 [1] : vector<8x8xf32> to vector<8xf32>
    %124 = vector.shape_cast %123 : vector<8xf32> to vector<8x1xf32>
    %125 = tpu.reciprocal %124 {approx = true} : vector<8x1xf32> -> vector<8x1xf32>
    %126 = vector.broadcast %125 : vector<8x1xf32> to vector<8x8xf32>
    %127 = arith.mulf %122, %126 : vector<8x8xf32>
    %128 = arith.truncf %127 : vector<8x8xf32> to vector<8x8xbf16>
    %cst_53 = arith.constant dense<0.000000e+00> : vector<8x128xf32>
    %129 = tpu.matmul %128, %114, %cst_53 {dimension_numbers = #tpu.dot_dimension_numbers<[1], [0], [0], [1], [0, 0, 1, 1], [], []>} : vector<8x8xbf16>, vector<8x128xbf16>, vector<8x128xf32> -> vector<8x128xf32>
    %c0_54 = arith.constant 0 : index
    %c384 = arith.constant 384 : index
    %130 = vector.load %arg34[%c0_54, %c384] : memref<8x512xf32, #tpu.memory_space<vmem>>, vector<8x128xf32>
    tpu.vector_store %arg34[%c0_54, %c384], %129 {strides = array<i32>} : memref<8x512xf32, #tpu.memory_space<vmem>>, vector<8x128xf32>,
    %c0_55 = arith.constant 0 : index
    %c0_56 = arith.constant 0 : index
    %131 = vector.load %arg34[%c0_55, %c0_56] : memref<8x512xf32, #tpu.memory_space<vmem>>, vector<8x512xf32>
    %132 = arith.truncf %131 : vector<8x512xf32> to vector<8x512xbf16>
    %c0_57 = arith.constant 0 : index
    %c0_58 = arith.constant 0 : index
    %133 = vector.load %arg12[%c0_57, %c0_58] : memref<512x32xbf16, #tpu.memory_space<vmem>>, vector<512x32xbf16>
    %cst_59 = arith.constant dense<0.000000e+00> : vector<8x32xf32>
    %134 = tpu.matmul %132, %133, %cst_59 {dimension_numbers = #tpu.dot_dimension_numbers<[1], [0], [0], [1], [0, 0, 1, 1], [], []>} : vector<8x512xbf16>, vector<512x32xbf16>, vector<8x32xf32> -> vector<8x32xf32>
    %c0_60 = arith.constant 0 : index
    %c0_61 = arith.constant 0 : index
    %135 = vector.load %arg13[%c0_60, %c0_61] : memref<1x32xf32, #tpu.memory_space<vmem>>, vector<1x32xf32>
    %136 = vector.broadcast %135 : vector<1x32xf32> to vector<8x32xf32>
    %137 = arith.addf %134, %136 : vector<8x32xf32>
    %138 = arith.addf %137, %6 : vector<8x32xf32>
    %c0_62 = arith.constant 0 : index
    %c0_63 = arith.constant 0 : index
    %139 = vector.load %arg14[%c0_62, %c0_63] : memref<1x32xf32, #tpu.memory_space<vmem>>, vector<1x32xf32>
    %c0_64 = arith.constant 0 : index
    %c0_65 = arith.constant 0 : index
    %140 = vector.load %arg15[%c0_64, %c0_65] : memref<1x32xf32, #tpu.memory_space<vmem>>, vector<1x32xf32>
    %cst_66 = arith.constant dense<0.000000e+00> : vector<8xf32>
    %141 = vector.multi_reduction <add>, %138, %cst_66 [1] : vector<8x32xf32> to vector<8xf32>
    %142 = vector.shape_cast %141 : vector<8xf32> to vector<8x1xf32>
    %cst_67 = arith.constant 3.200000e+01 : f32
    %143 = vector.broadcast %cst_67 : f32 to vector<8x1xf32>
    %144 = arith.divf %142, %143 : vector<8x1xf32>
    %145 = vector.broadcast %144 : vector<8x1xf32> to vector<8x32xf32>
    %146 = arith.subf %138, %145 : vector<8x32xf32>
    %147 = arith.mulf %146, %146 : vector<8x32xf32>
    %cst_68 = arith.constant dense<0.000000e+00> : vector<8xf32>
    %148 = vector.multi_reduction <add>, %147, %cst_68 [1] : vector<8x32xf32> to vector<8xf32>
    %149 = vector.shape_cast %148 : vector<8xf32> to vector<8x1xf32>
    %cst_69 = arith.constant 3.200000e+01 : f32
    %150 = vector.broadcast %cst_69 : f32 to vector<8x1xf32>
    %151 = arith.divf %149, %150 : vector<8x1xf32>
    %152 = vector.broadcast %144 : vector<8x1xf32> to vector<8x32xf32>
    %153 = arith.subf %138, %152 : vector<8x32xf32>
    %cst_70 = arith.constant 9.99999997E-7 : f32
    %154 = vector.broadcast %cst_70 : f32 to vector<8x1xf32>
    %155 = arith.addf %151, %154 : vector<8x1xf32>
    %156 = math.rsqrt %155 : vector<8x1xf32>
    %157 = vector.broadcast %156 : vector<8x1xf32> to vector<8x32xf32>
    %158 = arith.mulf %153, %157 : vector<8x32xf32>
    %159 = vector.broadcast %139 : vector<1x32xf32> to vector<8x32xf32>
    %160 = arith.mulf %158, %159 : vector<8x32xf32>
    %161 = vector.broadcast %140 : vector<1x32xf32> to vector<8x32xf32>
    %162 = arith.addf %160, %161 : vector<8x32xf32>
    %163 = arith.truncf %162 : vector<8x32xf32> to vector<8x32xbf16>
    %164 = arith.truncf %8 : vector<16x32xf32> to vector<16x32xbf16>
    %c0_71 = arith.constant 0 : index
    %c0_72 = arith.constant 0 : index
    %165 = vector.load %arg16[%c0_71, %c0_72] : memref<32x512xbf16, #tpu.memory_space<vmem>>, vector<32x512xbf16>
    %cst_73 = arith.constant dense<0.000000e+00> : vector<8x512xf32>
    %166 = tpu.matmul %163, %165, %cst_73 {dimension_numbers = #tpu.dot_dimension_numbers<[1], [0], [0], [1], [0, 0, 1, 1], [], []>} : vector<8x32xbf16>, vector<32x512xbf16>, vector<8x512xf32> -> vector<8x512xf32>
    %c0_74 = arith.constant 0 : index
    %c0_75 = arith.constant 0 : index
    %167 = vector.load %arg17[%c0_74, %c0_75] : memref<1x512xf32, #tpu.memory_space<vmem>>, vector<1x512xf32>
    %168 = vector.broadcast %167 : vector<1x512xf32> to vector<8x512xf32>
    %169 = arith.addf %166, %168 : vector<8x512xf32>
    %cst_76 = arith.constant 0.353553385 : f32
    %170 = vector.broadcast %cst_76 : f32 to vector<8x512xf32>
    %171 = arith.mulf %169, %170 : vector<8x512xf32>
    %c0_77 = arith.constant 0 : index
    %c0_78 = arith.constant 0 : index
    %172 = vector.load %arg18[%c0_77, %c0_78] : memref<32x512xbf16, #tpu.memory_space<vmem>>, vector<32x512xbf16>
    %cst_79 = arith.constant dense<0.000000e+00> : vector<16x512xf32>
    %173 = tpu.matmul %164, %172, %cst_79 {dimension_numbers = #tpu.dot_dimension_numbers<[1], [0], [0], [1], [0, 0, 1, 1], [], []>} : vector<16x32xbf16>, vector<32x512xbf16>, vector<16x512xf32> -> vector<16x512xf32>
    %c0_80 = arith.constant 0 : index
    %c0_81 = arith.constant 0 : index
    %174 = vector.load %arg19[%c0_80, %c0_81] : memref<1x512xf32, #tpu.memory_space<vmem>>, vector<1x512xf32>
    %175 = vector.broadcast %174 : vector<1x512xf32> to vector<16x512xf32>
    %176 = arith.addf %173, %175 : vector<16x512xf32>
    %c0_82 = arith.constant 0 : index
    %c0_83 = arith.constant 0 : index
    %177 = vector.load %arg20[%c0_82, %c0_83] : memref<32x512xbf16, #tpu.memory_space<vmem>>, vector<32x512xbf16>
    %cst_84 = arith.constant dense<0.000000e+00> : vector<16x512xf32>
    %178 = tpu.matmul %164, %177, %cst_84 {dimension_numbers = #tpu.dot_dimension_numbers<[1], [0], [0], [1], [0, 0, 1, 1], [], []>} : vector<16x32xbf16>, vector<32x512xbf16>, vector<16x512xf32> -> vector<16x512xf32>
    %c0_85 = arith.constant 0 : index
    %c0_86 = arith.constant 0 : index
    %179 = vector.load %arg21[%c0_85, %c0_86] : memref<1x512xf32, #tpu.memory_space<vmem>>, vector<1x512xf32>
    %180 = vector.broadcast %179 : vector<1x512xf32> to vector<16x512xf32>
    %181 = arith.addf %178, %180 : vector<16x512xf32>
    %182 = vector.extract_strided_slice %171 {offsets = [0, 0], sizes = [8, 128], strides = [1, 1]} : vector<8x512xf32> to vector<8x128xf32>
    %183 = arith.truncf %182 : vector<8x128xf32> to vector<8x128xbf16>
    %184 = vector.extract_strided_slice %176 {offsets = [0, 0], sizes = [16, 128], strides = [1, 1]} : vector<16x512xf32> to vector<16x128xf32>
    %185 = arith.truncf %184 : vector<16x128xf32> to vector<16x128xbf16>
    %186 = vector.extract_strided_slice %181 {offsets = [0, 0], sizes = [16, 128], strides = [1, 1]} : vector<16x512xf32> to vector<16x128xf32>
    %187 = arith.truncf %186 : vector<16x128xf32> to vector<16x128xbf16>
    %cst_87 = arith.constant dense<0.000000e+00> : vector<8x16xf32>
    %188 = tpu.matmul %183, %185, %cst_87 {dimension_numbers = #tpu.dot_dimension_numbers<[1], [1], [0], [0], [0, 0, 1, 0], [], []>} : vector<8x128xbf16>, vector<16x128xbf16>, vector<8x16xf32> -> vector<8x16xf32>
    %cst_88 = arith.constant -9.99999984E+17 : f32
    %189 = vector.shape_cast %23 : vector<1x16xi1> to vector<1x16xi1>
    %190 = vector.broadcast %189 : vector<1x16xi1> to vector<8x16xi1>
    %191 = vector.broadcast %cst_88 : f32 to vector<8x16xf32>
    %192 = arith.select %190, %191, %188 : vector<8x16xi1>, vector<8x16xf32>
    %cst_89 = arith.constant dense<0xFF800000> : vector<8xf32>
    %193 = vector.multi_reduction <maximumf>, %192, %cst_89 [1] : vector<8x16xf32> to vector<8xf32>
    %194 = vector.shape_cast %193 : vector<8xf32> to vector<8x1xf32>
    %195 = vector.broadcast %194 : vector<8x1xf32> to vector<8x16xf32>
    %196 = arith.subf %192, %195 : vector<8x16xf32>
    %197 = math.exp %196 : vector<8x16xf32>
    %cst_90 = arith.constant dense<0.000000e+00> : vector<8xf32>
    %198 = vector.multi_reduction <add>, %197, %cst_90 [1] : vector<8x16xf32> to vector<8xf32>
    %199 = vector.shape_cast %198 : vector<8xf32> to vector<8x1xf32>
    %200 = tpu.reciprocal %199 {approx = true} : vector<8x1xf32> -> vector<8x1xf32>
    %201 = vector.broadcast %200 : vector<8x1xf32> to vector<8x16xf32>
    %202 = arith.mulf %197, %201 : vector<8x16xf32>
    %203 = arith.truncf %202 : vector<8x16xf32> to vector<8x16xbf16>
    %cst_91 = arith.constant dense<0.000000e+00> : vector<8x128xf32>
    %204 = tpu.matmul %203, %187, %cst_91 {dimension_numbers = #tpu.dot_dimension_numbers<[1], [0], [0], [1], [0, 0, 1, 1], [], []>} : vector<8x16xbf16>, vector<16x128xbf16>, vector<8x128xf32> -> vector<8x128xf32>
    %c0_92 = arith.constant 0 : index
    %c0_93 = arith.constant 0 : index
    %205 = vector.load %arg34[%c0_92, %c0_93] : memref<8x512xf32, #tpu.memory_space<vmem>>, vector<8x128xf32>
    tpu.vector_store %arg34[%c0_92, %c0_93], %204 {strides = array<i32>} : memref<8x512xf32, #tpu.memory_space<vmem>>, vector<8x128xf32>,
    %206 = vector.extract_strided_slice %171 {offsets = [0, 128], sizes = [8, 128], strides = [1, 1]} : vector<8x512xf32> to vector<8x128xf32>
    %207 = arith.truncf %206 : vector<8x128xf32> to vector<8x128xbf16>
    %208 = vector.extract_strided_slice %176 {offsets = [0, 128], sizes = [16, 128], strides = [1, 1]} : vector<16x512xf32> to vector<16x128xf32>
    %209 = arith.truncf %208 : vector<16x128xf32> to vector<16x128xbf16>
    %210 = vector.extract_strided_slice %181 {offsets = [0, 128], sizes = [16, 128], strides = [1, 1]} : vector<16x512xf32> to vector<16x128xf32>
    %211 = arith.truncf %210 : vector<16x128xf32> to vector<16x128xbf16>
    %cst_94 = arith.constant dense<0.000000e+00> : vector<8x16xf32>
    %212 = tpu.matmul %207, %209, %cst_94 {dimension_numbers = #tpu.dot_dimension_numbers<[1], [1], [0], [0], [0, 0, 1, 0], [], []>} : vector<8x128xbf16>, vector<16x128xbf16>, vector<8x16xf32> -> vector<8x16xf32>
    %cst_95 = arith.constant -9.99999984E+17 : f32
    %213 = vector.shape_cast %23 : vector<1x16xi1> to vector<1x16xi1>
    %214 = vector.broadcast %213 : vector<1x16xi1> to vector<8x16xi1>
    %215 = vector.broadcast %cst_95 : f32 to vector<8x16xf32>
    %216 = arith.select %214, %215, %212 : vector<8x16xi1>, vector<8x16xf32>
    %cst_96 = arith.constant dense<0xFF800000> : vector<8xf32>
    %217 = vector.multi_reduction <maximumf>, %216, %cst_96 [1] : vector<8x16xf32> to vector<8xf32>
    %218 = vector.shape_cast %217 : vector<8xf32> to vector<8x1xf32>
    %219 = vector.broadcast %218 : vector<8x1xf32> to vector<8x16xf32>
    %220 = arith.subf %216, %219 : vector<8x16xf32>
    %221 = math.exp %220 : vector<8x16xf32>
    %cst_97 = arith.constant dense<0.000000e+00> : vector<8xf32>
    %222 = vector.multi_reduction <add>, %221, %cst_97 [1] : vector<8x16xf32> to vector<8xf32>
    %223 = vector.shape_cast %222 : vector<8xf32> to vector<8x1xf32>
    %224 = tpu.reciprocal %223 {approx = true} : vector<8x1xf32> -> vector<8x1xf32>
    %225 = vector.broadcast %224 : vector<8x1xf32> to vector<8x16xf32>
    %226 = arith.mulf %221, %225 : vector<8x16xf32>
    %227 = arith.truncf %226 : vector<8x16xf32> to vector<8x16xbf16>
    %cst_98 = arith.constant dense<0.000000e+00> : vector<8x128xf32>
    %228 = tpu.matmul %227, %211, %cst_98 {dimension_numbers = #tpu.dot_dimension_numbers<[1], [0], [0], [1], [0, 0, 1, 1], [], []>} : vector<8x16xbf16>, vector<16x128xbf16>, vector<8x128xf32> -> vector<8x128xf32>
    %c0_99 = arith.constant 0 : index
    %c128_100 = arith.constant 128 : index
    %229 = vector.load %arg34[%c0_99, %c128_100] : memref<8x512xf32, #tpu.memory_space<vmem>>, vector<8x128xf32>
    tpu.vector_store %arg34[%c0_99, %c128_100], %228 {strides = array<i32>} : memref<8x512xf32, #tpu.memory_space<vmem>>, vector<8x128xf32>,
    %230 = vector.extract_strided_slice %171 {offsets = [0, 256], sizes = [8, 128], strides = [1, 1]} : vector<8x512xf32> to vector<8x128xf32>
    %231 = arith.truncf %230 : vector<8x128xf32> to vector<8x128xbf16>
    %232 = vector.extract_strided_slice %176 {offsets = [0, 256], sizes = [16, 128], strides = [1, 1]} : vector<16x512xf32> to vector<16x128xf32>
    %233 = arith.truncf %232 : vector<16x128xf32> to vector<16x128xbf16>
    %234 = vector.extract_strided_slice %181 {offsets = [0, 256], sizes = [16, 128], strides = [1, 1]} : vector<16x512xf32> to vector<16x128xf32>
    %235 = arith.truncf %234 : vector<16x128xf32> to vector<16x128xbf16>
    %cst_101 = arith.constant dense<0.000000e+00> : vector<8x16xf32>
    %236 = tpu.matmul %231, %233, %cst_101 {dimension_numbers = #tpu.dot_dimension_numbers<[1], [1], [0], [0], [0, 0, 1, 0], [], []>} : vector<8x128xbf16>, vector<16x128xbf16>, vector<8x16xf32> -> vector<8x16xf32>
    %cst_102 = arith.constant -9.99999984E+17 : f32
    %237 = vector.shape_cast %23 : vector<1x16xi1> to vector<1x16xi1>
    %238 = vector.broadcast %237 : vector<1x16xi1> to vector<8x16xi1>
    %239 = vector.broadcast %cst_102 : f32 to vector<8x16xf32>
    %240 = arith.select %238, %239, %236 : vector<8x16xi1>, vector<8x16xf32>
    %cst_103 = arith.constant dense<0xFF800000> : vector<8xf32>
    %241 = vector.multi_reduction <maximumf>, %240, %cst_103 [1] : vector<8x16xf32> to vector<8xf32>
    %242 = vector.shape_cast %241 : vector<8xf32> to vector<8x1xf32>
    %243 = vector.broadcast %242 : vector<8x1xf32> to vector<8x16xf32>
    %244 = arith.subf %240, %243 : vector<8x16xf32>
    %245 = math.exp %244 : vector<8x16xf32>
    %cst_104 = arith.constant dense<0.000000e+00> : vector<8xf32>
    %246 = vector.multi_reduction <add>, %245, %cst_104 [1] : vector<8x16xf32> to vector<8xf32>
    %247 = vector.shape_cast %246 : vector<8xf32> to vector<8x1xf32>
    %248 = tpu.reciprocal %247 {approx = true} : vector<8x1xf32> -> vector<8x1xf32>
    %249 = vector.broadcast %248 : vector<8x1xf32> to vector<8x16xf32>
    %250 = arith.mulf %245, %249 : vector<8x16xf32>
    %251 = arith.truncf %250 : vector<8x16xf32> to vector<8x16xbf16>
    %cst_105 = arith.constant dense<0.000000e+00> : vector<8x128xf32>
    %252 = tpu.matmul %251, %235, %cst_105 {dimension_numbers = #tpu.dot_dimension_numbers<[1], [0], [0], [1], [0, 0, 1, 1], [], []>} : vector<8x16xbf16>, vector<16x128xbf16>, vector<8x128xf32> -> vector<8x128xf32>
    %c0_106 = arith.constant 0 : index
    %c256_107 = arith.constant 256 : index
    %253 = vector.load %arg34[%c0_106, %c256_107] : memref<8x512xf32, #tpu.memory_space<vmem>>, vector<8x128xf32>
    tpu.vector_store %arg34[%c0_106, %c256_107], %252 {strides = array<i32>} : memref<8x512xf32, #tpu.memory_space<vmem>>, vector<8x128xf32>,
    %254 = vector.extract_strided_slice %171 {offsets = [0, 384], sizes = [8, 128], strides = [1, 1]} : vector<8x512xf32> to vector<8x128xf32>
    %255 = arith.truncf %254 : vector<8x128xf32> to vector<8x128xbf16>
    %256 = vector.extract_strided_slice %176 {offsets = [0, 384], sizes = [16, 128], strides = [1, 1]} : vector<16x512xf32> to vector<16x128xf32>
    %257 = arith.truncf %256 : vector<16x128xf32> to vector<16x128xbf16>
    %258 = vector.extract_strided_slice %181 {offsets = [0, 384], sizes = [16, 128], strides = [1, 1]} : vector<16x512xf32> to vector<16x128xf32>
    %259 = arith.truncf %258 : vector<16x128xf32> to vector<16x128xbf16>
    %cst_108 = arith.constant dense<0.000000e+00> : vector<8x16xf32>
    %260 = tpu.matmul %255, %257, %cst_108 {dimension_numbers = #tpu.dot_dimension_numbers<[1], [1], [0], [0], [0, 0, 1, 0], [], []>} : vector<8x128xbf16>, vector<16x128xbf16>, vector<8x16xf32> -> vector<8x16xf32>
    %cst_109 = arith.constant -9.99999984E+17 : f32
    %261 = vector.shape_cast %23 : vector<1x16xi1> to vector<1x16xi1>
    %262 = vector.broadcast %261 : vector<1x16xi1> to vector<8x16xi1>
    %263 = vector.broadcast %cst_109 : f32 to vector<8x16xf32>
    %264 = arith.select %262, %263, %260 : vector<8x16xi1>, vector<8x16xf32>
    %cst_110 = arith.constant dense<0xFF800000> : vector<8xf32>
    %265 = vector.multi_reduction <maximumf>, %264, %cst_110 [1] : vector<8x16xf32> to vector<8xf32>
    %266 = vector.shape_cast %265 : vector<8xf32> to vector<8x1xf32>
    %267 = vector.broadcast %266 : vector<8x1xf32> to vector<8x16xf32>
    %268 = arith.subf %264, %267 : vector<8x16xf32>
    %269 = math.exp %268 : vector<8x16xf32>
    %cst_111 = arith.constant dense<0.000000e+00> : vector<8xf32>
    %270 = vector.multi_reduction <add>, %269, %cst_111 [1] : vector<8x16xf32> to vector<8xf32>
    %271 = vector.shape_cast %270 : vector<8xf32> to vector<8x1xf32>
    %272 = tpu.reciprocal %271 {approx = true} : vector<8x1xf32> -> vector<8x1xf32>
    %273 = vector.broadcast %272 : vector<8x1xf32> to vector<8x16xf32>
    %274 = arith.mulf %269, %273 : vector<8x16xf32>
    %275 = arith.truncf %274 : vector<8x16xf32> to vector<8x16xbf16>
    %cst_112 = arith.constant dense<0.000000e+00> : vector<8x128xf32>
    %276 = tpu.matmul %275, %259, %cst_112 {dimension_numbers = #tpu.dot_dimension_numbers<[1], [0], [0], [1], [0, 0, 1, 1], [], []>} : vector<8x16xbf16>, vector<16x128xbf16>, vector<8x128xf32> -> vector<8x128xf32>
    %c0_113 = arith.constant 0 : index
    %c384_114 = arith.constant 384 : index
    %277 = vector.load %arg34[%c0_113, %c384_114] : memref<8x512xf32, #tpu.memory_space<vmem>>, vector<8x128xf32>
    tpu.vector_store %arg34[%c0_113, %c384_114], %276 {strides = array<i32>} : memref<8x512xf32, #tpu.memory_space<vmem>>, vector<8x128xf32>,
    %c0_115 = arith.constant 0 : index
    %c0_116 = arith.constant 0 : index
    %278 = vector.load %arg34[%c0_115, %c0_116] : memref<8x512xf32, #tpu.memory_space<vmem>>, vector<8x512xf32>
    %279 = arith.truncf %278 : vector<8x512xf32> to vector<8x512xbf16>
    %c0_117 = arith.constant 0 : index
    %c0_118 = arith.constant 0 : index
    %280 = vector.load %arg22[%c0_117, %c0_118] : memref<512x32xbf16, #tpu.memory_space<vmem>>, vector<512x32xbf16>
    %cst_119 = arith.constant dense<0.000000e+00> : vector<8x32xf32>
    %281 = tpu.matmul %279, %280, %cst_119 {dimension_numbers = #tpu.dot_dimension_numbers<[1], [0], [0], [1], [0, 0, 1, 1], [], []>} : vector<8x512xbf16>, vector<512x32xbf16>, vector<8x32xf32> -> vector<8x32xf32>
    %c0_120 = arith.constant 0 : index
    %c0_121 = arith.constant 0 : index
    %282 = vector.load %arg23[%c0_120, %c0_121] : memref<1x32xf32, #tpu.memory_space<vmem>>, vector<1x32xf32>
    %283 = vector.broadcast %282 : vector<1x32xf32> to vector<8x32xf32>
    %284 = arith.addf %281, %283 : vector<8x32xf32>
    %285 = arith.addf %284, %162 : vector<8x32xf32>
    %c0_122 = arith.constant 0 : index
    %c0_123 = arith.constant 0 : index
    %286 = vector.load %arg24[%c0_122, %c0_123] : memref<1x32xf32, #tpu.memory_space<vmem>>, vector<1x32xf32>
    %c0_124 = arith.constant 0 : index
    %c0_125 = arith.constant 0 : index
    %287 = vector.load %arg25[%c0_124, %c0_125] : memref<1x32xf32, #tpu.memory_space<vmem>>, vector<1x32xf32>
    %cst_126 = arith.constant dense<0.000000e+00> : vector<8xf32>
    %288 = vector.multi_reduction <add>, %285, %cst_126 [1] : vector<8x32xf32> to vector<8xf32>
    %289 = vector.shape_cast %288 : vector<8xf32> to vector<8x1xf32>
    %cst_127 = arith.constant 3.200000e+01 : f32
    %290 = vector.broadcast %cst_127 : f32 to vector<8x1xf32>
    %291 = arith.divf %289, %290 : vector<8x1xf32>
    %292 = vector.broadcast %291 : vector<8x1xf32> to vector<8x32xf32>
    %293 = arith.subf %285, %292 : vector<8x32xf32>
    %294 = arith.mulf %293, %293 : vector<8x32xf32>
    %cst_128 = arith.constant dense<0.000000e+00> : vector<8xf32>
    %295 = vector.multi_reduction <add>, %294, %cst_128 [1] : vector<8x32xf32> to vector<8xf32>
    %296 = vector.shape_cast %295 : vector<8xf32> to vector<8x1xf32>
    %cst_129 = arith.constant 3.200000e+01 : f32
    %297 = vector.broadcast %cst_129 : f32 to vector<8x1xf32>
    %298 = arith.divf %296, %297 : vector<8x1xf32>
    %299 = vector.broadcast %291 : vector<8x1xf32> to vector<8x32xf32>
    %300 = arith.subf %285, %299 : vector<8x32xf32>
    %cst_130 = arith.constant 9.99999997E-7 : f32
    %301 = vector.broadcast %cst_130 : f32 to vector<8x1xf32>
    %302 = arith.addf %298, %301 : vector<8x1xf32>
    %303 = math.rsqrt %302 : vector<8x1xf32>
    %304 = vector.broadcast %303 : vector<8x1xf32> to vector<8x32xf32>
    %305 = arith.mulf %300, %304 : vector<8x32xf32>
    %306 = vector.broadcast %286 : vector<1x32xf32> to vector<8x32xf32>
    %307 = arith.mulf %305, %306 : vector<8x32xf32>
    %308 = vector.broadcast %287 : vector<1x32xf32> to vector<8x32xf32>
    %309 = arith.addf %307, %308 : vector<8x32xf32>
    %c0_131 = arith.constant 0 : index
    %c0_132 = arith.constant 0 : index
    %310 = vector.load %arg26[%c0_131, %c0_132] : memref<1x32xf32, #tpu.memory_space<vmem>>, vector<1x32xf32>
    %c0_133 = arith.constant 0 : index
    %c0_134 = arith.constant 0 : index
    %311 = vector.load %arg27[%c0_133, %c0_134] : memref<1x32xf32, #tpu.memory_space<vmem>>, vector<1x32xf32>
    %cst_135 = arith.constant dense<0.000000e+00> : vector<8xf32>
    %312 = vector.multi_reduction <add>, %309, %cst_135 [1] : vector<8x32xf32> to vector<8xf32>
    %313 = vector.shape_cast %312 : vector<8xf32> to vector<8x1xf32>
    %cst_136 = arith.constant 3.200000e+01 : f32
    %314 = vector.broadcast %cst_136 : f32 to vector<8x1xf32>
    %315 = arith.divf %313, %314 : vector<8x1xf32>
    %316 = vector.broadcast %315 : vector<8x1xf32> to vector<8x32xf32>
    %317 = arith.subf %309, %316 : vector<8x32xf32>
    %318 = arith.mulf %317, %317 : vector<8x32xf32>
    %cst_137 = arith.constant dense<0.000000e+00> : vector<8xf32>
    %319 = vector.multi_reduction <add>, %318, %cst_137 [1] : vector<8x32xf32> to vector<8xf32>
    %320 = vector.shape_cast %319 : vector<8xf32> to vector<8x1xf32>
    %cst_138 = arith.constant 3.200000e+01 : f32
    %321 = vector.broadcast %cst_138 : f32 to vector<8x1xf32>
    %322 = arith.divf %320, %321 : vector<8x1xf32>
    %323 = vector.broadcast %315 : vector<8x1xf32> to vector<8x32xf32>
    %324 = arith.subf %309, %323 : vector<8x32xf32>
    %cst_139 = arith.constant 9.99999997E-7 : f32
    %325 = vector.broadcast %cst_139 : f32 to vector<8x1xf32>
    %326 = arith.addf %322, %325 : vector<8x1xf32>
    %327 = math.rsqrt %326 : vector<8x1xf32>
    %328 = vector.broadcast %327 : vector<8x1xf32> to vector<8x32xf32>
    %329 = arith.mulf %324, %328 : vector<8x32xf32>
    %330 = vector.broadcast %310 : vector<1x32xf32> to vector<8x32xf32>
    %331 = arith.mulf %329, %330 : vector<8x32xf32>
    %332 = vector.broadcast %311 : vector<1x32xf32> to vector<8x32xf32>
    %333 = arith.addf %331, %332 : vector<8x32xf32>
    %334 = arith.truncf %333 : vector<8x32xf32> to vector<8x32xbf16>
    %c0_140 = arith.constant 0 : index
    %c0_141 = arith.constant 0 : index
    %335 = vector.load %arg28[%c0_140, %c0_141] : memref<32x64xbf16, #tpu.memory_space<vmem>>, vector<32x64xbf16>
    %cst_142 = arith.constant dense<0.000000e+00> : vector<8x64xf32>
    %336 = tpu.matmul %334, %335, %cst_142 {dimension_numbers = #tpu.dot_dimension_numbers<[1], [0], [0], [1], [0, 0, 1, 1], [], []>} : vector<8x32xbf16>, vector<32x64xbf16>, vector<8x64xf32> -> vector<8x64xf32>
    %c0_143 = arith.constant 0 : index
    %c0_144 = arith.constant 0 : index
    %337 = vector.load %arg29[%c0_143, %c0_144] : memref<1x64xf32, #tpu.memory_space<vmem>>, vector<1x64xf32>
    %338 = vector.broadcast %337 : vector<1x64xf32> to vector<8x64xf32>
    %339 = arith.addf %336, %338 : vector<8x64xf32>
    %cst_145 = arith.constant 0.000000e+00 : f32
    %340 = vector.broadcast %cst_145 : f32 to vector<8x64xf32>
    %341 = arith.maximumf %339, %340 : vector<8x64xf32>
    %342 = arith.truncf %341 : vector<8x64xf32> to vector<8x64xbf16>
    %c0_146 = arith.constant 0 : index
    %c0_147 = arith.constant 0 : index
    %343 = vector.load %arg30[%c0_146, %c0_147] : memref<64x32xbf16, #tpu.memory_space<vmem>>, vector<64x32xbf16>
    %cst_148 = arith.constant dense<0.000000e+00> : vector<8x32xf32>
    %344 = tpu.matmul %342, %343, %cst_148 {dimension_numbers = #tpu.dot_dimension_numbers<[1], [0], [0], [1], [0, 0, 1, 1], [], []>} : vector<8x64xbf16>, vector<64x32xbf16>, vector<8x32xf32> -> vector<8x32xf32>
    %c0_149 = arith.constant 0 : index
    %c0_150 = arith.constant 0 : index
    %345 = vector.load %arg31[%c0_149, %c0_150] : memref<1x32xf32, #tpu.memory_space<vmem>>, vector<1x32xf32>
    %346 = vector.broadcast %345 : vector<1x32xf32> to vector<8x32xf32>
    %347 = arith.addf %344, %346 : vector<8x32xf32>
    %348 = arith.addf %347, %309 : vector<8x32xf32>
    %c0_151 = arith.constant 0 : index
    %c0_152 = arith.constant 0 : index
    %c0_153 = arith.constant 0 : index
    %349 = vector.load %arg32[%c0_151, %c0_152, %c0_153] : memref<1x8x32xf32, #tpu.memory_space<vmem>>, vector<1x8x32xf32>
    %350 = vector.shape_cast %349 : vector<1x8x32xf32> to vector<8x32xf32>
    %351 = vector.shape_cast %348 : vector<8x32xf32> to vector<1x8x32xf32>
    tpu.vector_store %arg32[%c0_151, %c0_152, %c0_153], %351 {strides = array<i32>} : memref<1x8x32xf32, #tpu.memory_space<vmem>>, vector<1x8x32xf32>,
    %c0_154 = arith.constant 0 : index
    %c0_155 = arith.constant 0 : index
    %c0_156 = arith.constant 0 : index
    %352 = vector.load %arg33[%c0_154, %c0_155, %c0_156] : memref<1x8x16xf32, #tpu.memory_space<vmem>>, vector<1x8x16xf32>
    %353 = vector.shape_cast %352 : vector<1x8x16xf32> to vector<8x16xf32>
    %354 = vector.shape_cast %202 : vector<8x16xf32> to vector<1x8x16xf32>
    tpu.vector_store %arg33[%c0_154, %c0_155, %c0_156], %354 {strides = array<i32>} : memref<1x8x16xf32, #tpu.memory_space<vmem>>, vector<1x8x16xf32>,
    return
  }
  func.func @transform_0(%arg0: i32, %arg1: i32) -> (i32, i32, i32) {
    %c0_i32 = arith.constant 0 : i32
    %c0_i32_0 = arith.constant 0 : i32
    %c0_i32_1 = arith.constant 0 : i32
    return %arg0, %c0_i32, %c0_i32_0 : i32, i32, i32
  }
  func.func @transform_1(%arg0: i32, %arg1: i32) -> (i32, i32, i32) {
    %c0_i32 = arith.constant 0 : i32
    %c0_i32_0 = arith.constant 0 : i32
    %c0_i32_1 = arith.constant 0 : i32
    return %arg0, %c0_i32, %c0_i32_0 : i32, i32, i32
  }
  func.func @transform_2(%arg0: i32, %arg1: i32) -> (i32, i32, i32) {
    %c0_i32 = arith.constant 0 : i32
    %c0_i32_0 = arith.constant 0 : i32
    %c0_i32_1 = arith.constant 0 : i32
    return %arg0, %c0_i32, %c0_i32_0 : i32, i32, i32
  }
  func.func @transform_3(%arg0: i32, %arg1: i32) -> (i32, i32, i32) {
    %c0_i32 = arith.constant 0 : i32
    %c0_i32_0 = arith.constant 0 : i32
    %c0_i32_1 = arith.constant 0 : i32
    return %arg0, %c0_i32, %c0_i32_0 : i32, i32, i32
  }
  func.func @transform_4(%arg0: i32, %arg1: i32) -> (i32, i32) {
    %c0_i32 = arith.constant 0 : i32
    %c0_i32_0 = arith.constant 0 : i32
    %c0_i32_1 = arith.constant 0 : i32
    return %c0_i32, %c0_i32_0 : i32, i32
  }
  func.func @transform_5(%arg0: i32, %arg1: i32) -> (i32, i32) {
    %c0_i32 = arith.constant 0 : i32
    %c0_i32_0 = arith.constant 0 : i32
    %c0_i32_1 = arith.constant 0 : i32
    return %c0_i32, %c0_i32_0 : i32, i32
  }
  func.func @transform_6(%arg0: i32, %arg1: i32) -> (i32, i32) {
    %c0_i32 = arith.constant 0 : i32
    %c0_i32_0 = arith.constant 0 : i32
    %c0_i32_1 = arith.constant 0 : i32
    return %c0_i32, %c0_i32_0 : i32, i32
  }
  func.func @transform_7(%arg0: i32, %arg1: i32) -> (i32, i32) {
    %c0_i32 = arith.constant 0 : i32
    %c0_i32_0 = arith.constant 0 : i32
    %c0_i32_1 = arith.constant 0 : i32
    return %c0_i32, %c0_i32_0 : i32, i32
  }
  func.func @transform_8(%arg0: i32, %arg1: i32) -> (i32, i32) {
    %c0_i32 = arith.constant 0 : i32
    %c0_i32_0 = arith.constant 0 : i32
    %c0_i32_1 = arith.constant 0 : i32
    return %c0_i32, %c0_i32_0 : i32, i32
  }
  func.func @transform_9(%arg0: i32, %arg1: i32) -> (i32, i32) {
    %c0_i32 = arith.constant 0 : i32
    %c0_i32_0 = arith.constant 0 : i32
    %c0_i32_1 = arith.constant 0 : i32
    return %c0_i32, %c0_i32_0 : i32, i32
  }
  func.func @transform_10(%arg0: i32, %arg1: i32) -> (i32, i32) {
    %c0_i32 = arith.constant 0 : i32
    %c0_i32_0 = arith.constant 0 : i32
    %c0_i32_1 = arith.constant 0 : i32
    return %c0_i32, %c0_i32_0 : i32, i32
  }
  func.func @transform_11(%arg0: i32, %arg1: i32) -> (i32, i32) {
    %c0_i32 = arith.constant 0 : i32
    %c0_i32_0 = arith.constant 0 : i32
    %c0_i32_1 = arith.constant 0 : i32
    return %c0_i32, %c0_i32_0 : i32, i32
  }
  func.func @transform_12(%arg0: i32, %arg1: i32) -> (i32, i32) {
    %c0_i32 = arith.constant 0 : i32
    %c0_i32_0 = arith.constant 0 : i32
    %c0_i32_1 = arith.constant 0 : i32
    return %c0_i32, %c0_i32_0 : i32, i32
  }
  func.func @transform_13(%arg0: i32, %arg1: i32) -> (i32, i32) {
    %c0_i32 = arith.constant 0 : i32
    %c0_i32_0 = arith.constant 0 : i32
    %c0_i32_1 = arith.constant 0 : i32
    return %c0_i32, %c0_i32_0 : i32, i32
  }
  func.func @transform_14(%arg0: i32, %arg1: i32) -> (i32, i32) {
    %c0_i32 = arith.constant 0 : i32
    %c0_i32_0 = arith.constant 0 : i32
    %c0_i32_1 = arith.constant 0 : i32
    return %c0_i32, %c0_i32_0 : i32, i32
  }
  func.func @transform_15(%arg0: i32, %arg1: i32) -> (i32, i32) {
    %c0_i32 = arith.constant 0 : i32
    %c0_i32_0 = arith.constant 0 : i32
    %c0_i32_1 = arith.constant 0 : i32
    return %c0_i32, %c0_i32_0 : i32, i32
  }
  func.func @transform_16(%arg0: i32, %arg1: i32) -> (i32, i32) {
    %c0_i32 = arith.constant 0 : i32
    %c0_i32_0 = arith.constant 0 : i32
    %c0_i32_1 = arith.constant 0 : i32
    return %c0_i32, %c0_i32_0 : i32, i32
  }
  func.func @transform_17(%arg0: i32, %arg1: i32) -> (i32, i32) {
    %c0_i32 = arith.constant 0 : i32
    %c0_i32_0 = arith.constant 0 : i32
    %c0_i32_1 = arith.constant 0 : i32
    return %c0_i32, %c0_i32_0 : i32, i32
  }
  func.func @transform_18(%arg0: i32, %arg1: i32) -> (i32, i32) {
    %c0_i32 = arith.constant 0 : i32
    %c0_i32_0 = arith.constant 0 : i32
    %c0_i32_1 = arith.constant 0 : i32
    return %c0_i32, %c0_i32_0 : i32, i32
  }
  func.func @transform_19(%arg0: i32, %arg1: i32) -> (i32, i32) {
    %c0_i32 = arith.constant 0 : i32
    %c0_i32_0 = arith.constant 0 : i32
    %c0_i32_1 = arith.constant 0 : i32
    return %c0_i32, %c0_i32_0 : i32, i32
  }
  func.func @transform_20(%arg0: i32, %arg1: i32) -> (i32, i32) {
    %c0_i32 = arith.constant 0 : i32
    %c0_i32_0 = arith.constant 0 : i32
    %c0_i32_1 = arith.constant 0 : i32
    return %c0_i32, %c0_i32_0 : i32, i32
  }
  func.func @transform_21(%arg0: i32, %arg1: i32) -> (i32, i32) {
    %c0_i32 = arith.constant 0 : i32
    %c0_i32_0 = arith.constant 0 : i32
    %c0_i32_1 = arith.constant 0 : i32
    return %c0_i32, %c0_i32_0 : i32, i32
  }
  func.func @transform_22(%arg0: i32, %arg1: i32) -> (i32, i32) {
    %c0_i32 = arith.constant 0 : i32
    %c0_i32_0 = arith.constant 0 : i32
    %c0_i32_1 = arith.constant 0 : i32
    return %c0_i32, %c0_i32_0 : i32, i32
  }
  func.func @transform_23(%arg0: i32, %arg1: i32) -> (i32, i32) {
    %c0_i32 = arith.constant 0 : i32
    %c0_i32_0 = arith.constant 0 : i32
    %c0_i32_1 = arith.constant 0 : i32
    return %c0_i32, %c0_i32_0 : i32, i32
  }
  func.func @transform_24(%arg0: i32, %arg1: i32) -> (i32, i32) {
    %c0_i32 = arith.constant 0 : i32
    %c0_i32_0 = arith.constant 0 : i32
    %c0_i32_1 = arith.constant 0 : i32
    return %c0_i32, %c0_i32_0 : i32, i32
  }
  func.func @transform_25(%arg0: i32, %arg1: i32) -> (i32, i32) {
    %c0_i32 = arith.constant 0 : i32
    %c0_i32_0 = arith.constant 0 : i32
    %c0_i32_1 = arith.constant 0 : i32
    return %c0_i32, %c0_i32_0 : i32, i32
  }
  func.func @transform_26(%arg0: i32, %arg1: i32) -> (i32, i32) {
    %c0_i32 = arith.constant 0 : i32
    %c0_i32_0 = arith.constant 0 : i32
    %c0_i32_1 = arith.constant 0 : i32
    return %c0_i32, %c0_i32_0 : i32, i32
  }
  func.func @transform_27(%arg0: i32, %arg1: i32) -> (i32, i32) {
    %c0_i32 = arith.constant 0 : i32
    %c0_i32_0 = arith.constant 0 : i32
    %c0_i32_1 = arith.constant 0 : i32
    return %c0_i32, %c0_i32_0 : i32, i32
  }
  func.func @transform_28(%arg0: i32, %arg1: i32) -> (i32, i32) {
    %c0_i32 = arith.constant 0 : i32
    %c0_i32_0 = arith.constant 0 : i32
    %c0_i32_1 = arith.constant 0 : i32
    return %c0_i32, %c0_i32_0 : i32, i32
  }
  func.func @transform_29(%arg0: i32, %arg1: i32) -> (i32, i32) {
    %c0_i32 = arith.constant 0 : i32
    %c0_i32_0 = arith.constant 0 : i32
    %c0_i32_1 = arith.constant 0 : i32
    return %c0_i32, %c0_i32_0 : i32, i32
  }
  func.func @transform_30(%arg0: i32, %arg1: i32) -> (i32, i32, i32) {
    %c0_i32 = arith.constant 0 : i32
    %c0_i32_0 = arith.constant 0 : i32
    return %arg0, %arg1, %c0_i32 : i32, i32, i32
  }
  func.func @transform_31(%arg0: i32, %arg1: i32) -> (i32, i32, i32) {
    %c0_i32 = arith.constant 0 : i32
    %c0_i32_0 = arith.constant 0 : i32
    return %arg0, %arg1, %c0_i32 : i32, i32, i32
  }
}

module attributes {stable_mosaic.version = 11 : i64} {
  func.func @decoder_layer_kernel(%arg0: i32, %arg1: i32, %arg2: memref<1x8x32xf32, #tpu.memory_space<vmem>>, %arg3: memref<1x16x32xf32, #tpu.memory_space<vmem>>, %arg4: memref<1x1x16xf32, #tpu.memory_space<vmem>>, %arg5: memref<1x1x8xf32, #tpu.memory_space<vmem>>, %arg6: memref<32x512xbf16, #tpu.memory_space<vmem>>, %arg7: memref<1x512xf32, #tpu.memory_space<vmem>>, %arg8: memref<32x512xbf16, #tpu.memory_space<vmem>>, %arg9: memref<1x512xf32, #tpu.memory_space<vmem>>, %arg10: memref<32x512xbf16, #tpu.memory_space<vmem>>, %arg11: memref<1x512xf32, #tpu.memory_space<vmem>>, %arg12: memref<512x32xbf16, #tpu.memory_space<vmem>>, %arg13: memref<1x32xf32, #tpu.memory_space<vmem>>, %arg14: memref<1x32xf32, #tpu.memory_space<vmem>>, %arg15: memref<1x32xf32, #tpu.memory_space<vmem>>, %arg16: memref<32x512xbf16, #tpu.memory_space<vmem>>, %arg17: memref<1x512xf32, #tpu.memory_space<vmem>>, %arg18: memref<32x512xbf16, #tpu.memory_space<vmem>>, %arg19: memref<1x512xf32, #tpu.memory_space<vmem>>, %arg20: memref<32x512xbf16, #tpu.memory_space<vmem>>, %arg21: memref<1x512xf32, #tpu.memory_space<vmem>>, %arg22: memref<512x32xbf16, #tpu.memory_space<vmem>>, %arg23: memref<1x32xf32, #tpu.memory_space<vmem>>, %arg24: memref<1x32xf32, #tpu.memory_space<vmem>>, %arg25: memref<1x32xf32, #tpu.memory_space<vmem>>, %arg26: memref<1x32xf32, #tpu.memory_space<vmem>>, %arg27: memref<1x32xf32, #tpu.memory_space<vmem>>, %arg28: memref<32x64xbf16, #tpu.memory_space<vmem>>, %arg29: memref<1x64xf32, #tpu.memory_space<vmem>>, %arg30: memref<64x32xbf16, #tpu.memory_space<vmem>>, %arg31: memref<1x32xf32, #tpu.memory_space<vmem>>, %arg32: memref<1x8x32xf32, #tpu.memory_space<vmem>>, %arg33: memref<1x8x16xf32, #tpu.memory_space<vmem>>, %arg34: memref<8x512xf32, #tpu.memory_space<vmem>>) attributes {dimension_semantics = [#tpu.dimension_semantics<parallel>, #tpu.dimension_semantics<parallel>], iteration_bounds = array<i64: 2, 1>, scalar_prefetch = 0 : i64, scratch_operands = 1 : i64, tpu.core_type = #tpu.core_type<tc>, window_params = [{transform_indices = @transform_0, window_bounds = array<i64: 1, 8, 32>}, {transform_indices = @transform_1, window_bounds = array<i64: 1, 16, 32>}, {transform_indices = @transform_2, window_bounds = array<i64: 1, 1, 16>}, {transform_indices = @transform_3, window_bounds = array<i64: 1, 1, 8>}, {pipeline_mode = #tpu.pipeline_mode<synchronous>, transform_indices = @transform_4, window_bounds = array<i64: 32, 512>}, {pipeline_mode = #tpu.pipeline_mode<synchronous>, transform_indices = @transform_5, window_bounds = array<i64: 1, 512>}, {pipeline_mode = #tpu.pipeline_mode<synchronous>, transform_indices = @transform_6, window_bounds = array<i64: 32, 512>}, {pipeline_mode = #tpu.pipeline_mode<synchronous>, transform_indices = @transform_7, window_bounds = array<i64: 1, 512>}, {pipeline_mode = #tpu.pipeline_mode<synchronous>, transform_indices = @transform_8, window_bounds = array<i64: 32, 512>}, {pipeline_mode = #tpu.pipeline_mode<synchronous>, transform_indices = @transform_9, window_bounds = array<i64: 1, 512>}, {pipeline_mode = #tpu.pipeline_mode<synchronous>, transform_indices = @transform_10, window_bounds = array<i64: 512, 32>}, {pipeline_mode = #tpu.pipeline_mode<synchronous>, transform_indices = @transform_11, window_bounds = array<i64: 1, 32>}, {pipeline_mode = #tpu.pipeline_mode<synchronous>, transform_indices = @transform_12, window_bounds = array<i64: 1, 32>}, {pipeline_mode = #tpu.pipeline_mode<synchronous>, transform_indices = @transform_13, window_bounds = array<i64: 1, 32>}, {pipeline_mode = #tpu.pipeline_mode<synchronous>, transform_indices = @transform_14, window_bounds = array<i64: 32, 512>}, {pipeline_mode = #tpu.pipeline_mode<synchronous>, transform_indices = @transform_15, window_bounds = array<i64: 1, 512>}, {pipeline_mode = #tpu.pipeline_mode<synchronous>, transform_indices = @transform_16, window_bounds = array<i64: 32, 512>}, {pipeline_mode = #tpu.pipeline_mode<synchronous>, transform_indices = @transform_17, window_bounds = array<i64: 1, 512>}, {pipeline_mode = #tpu.pipeline_mode<synchronous>, transform_indices = @transform_18, window_bounds = array<i64: 32, 512>}, {pipeline_mode = #tpu.pipeline_mode<synchronous>, transform_indices = @transform_19, window_bounds = array<i64: 1, 512>}, {pipeline_mode = #tpu.pipeline_mode<synchronous>, transform_indices = @transform_20, window_bounds = array<i64: 512, 32>}, {pipeline_mode = #tpu.pipeline_mode<synchronous>, transform_indices = @transform_21, window_bounds = array<i64: 1, 32>}, {pipeline_mode = #tpu.pipeline_mode<synchronous>, transform_indices = @transform_22, window_bounds = array<i64: 1, 32>}, {pipeline_mode = #tpu.pipeline_mode<synchronous>, transform_indices = @transform_23, window_bounds = array<i64: 1, 32>}, {pipeline_mode = #tpu.pipeline_mode<synchronous>, transform_indices = @transform_24, window_bounds = array<i64: 1, 32>}, {pipeline_mode = #tpu.pipeline_mode<synchronous>, transform_indices = @transform_25, window_bounds = array<i64: 1, 32>}, {pipeline_mode = #tpu.pipeline_mode<synchronous>, transform_indices = @transform_26, window_bounds = array<i64: 32, 64>}, {pipeline_mode = #tpu.pipeline_mode<synchronous>, transform_indices = @transform_27, window_bounds = array<i64: 1, 64>}, {pipeline_mode = #tpu.pipeline_mode<synchronous>, transform_indices = @transform_28, window_bounds = array<i64: 64, 32>}, {pipeline_mode = #tpu.pipeline_mode<synchronous>, transform_indices = @transform_29, window_bounds = array<i64: 1, 32>}, {transform_indices = @transform_30, window_bounds = array<i64: 1, 8, 32>}, {transform_indices = @transform_31, window_bounds = array<i64: 1, 8, 16>}]} {
    %c8_i32 = arith.constant 8 : i32
    %0 = arith.muli %arg1, %c8_i32 : i32
    %1 = tpu.assume_multiple %0, 8 : i32
    %c0 = arith.constant 0 : index
    %c0_0 = arith.constant 0 : index
    %c0_1 = arith.constant 0 : index
    %2 = vector.load %arg2[%c0, %c0_0, %c0_1] : memref<1x8x32xf32, #tpu.memory_space<vmem>>, vector<1x8x32xf32>
    %3 = vector.shape_cast %2 : vector<1x8x32xf32> to vector<8x32xf32>
    %c0_2 = arith.constant 0 : index
    %4 = arith.index_cast %1 : i32 to index
    %c0_3 = arith.constant 0 : index
    %5 = vector.load %arg2[%c0_2, %4, %c0_3] : memref<1x8x32xf32, #tpu.memory_space<vmem>>, vector<1x8x32xf32>
    %6 = vector.shape_cast %5 : vector<1x8x32xf32> to vector<8x32xf32>
    %c0_4 = arith.constant 0 : index
    %c0_5 = arith.constant 0 : index
    %c0_6 = arith.constant 0 : index
    %7 = vector.load %arg3[%c0_4, %c0_5, %c0_6] : memref<1x16x32xf32, #tpu.memory_space<vmem>>, vector<1x16x32xf32>
    %8 = vector.shape_cast %7 : vector<1x16x32xf32> to vector<16x32xf32>
    %9 = tpu.iota {dimensions = array<i32: 0>} : vector<8x8xi32>
    %10 = vector.broadcast %1 : i32 to vector<8x8xi32>
    %11 = arith.addi %9, %10 : vector<8x8xi32>
    %12 = tpu.iota {dimensions = array<i32: 1>} : vector<8x8xi32>
    %13 = arith.cmpi sgt, %12, %11 : vector<8x8xi32>
    %c0_7 = arith.constant 0 : index
    %c0_8 = arith.constant 0 : index
    %c0_9 = arith.constant 0 : index
    %14 = vector.load %arg5[%c0_7, %c0_8, %c0_9] : memref<1x1x8xf32, #tpu.memory_space<vmem>>, vector<1x1x8xf32>
    %15 = vector.shape_cast %14 : vector<1x1x8xf32> to vector<1x8xf32>
    %cst = arith.constant 5.000000e-01 : f32
    %16 = vector.broadcast %cst : f32 to vector<1x8xf32>
    %17 = arith.cmpf ogt, %15, %16 : vector<1x8xf32>
    %18 = vector.broadcast %17 : vector<1x8xi1> to vector<8x8xi1>
    %19 = arith.ori %13, %18 : vector<8x8xi1>
    %c0_10 = arith.constant 0 : index
    %c0_11 = arith.constant 0 : index
    %c0_12 = arith.constant 0 : index
    %20 = vector.load %arg4[%c0_10, %c0_11, %c0_12] : memref<1x1x16xf32, #tpu.memory_space<vmem>>, vector<1x1x16xf32>
    %21 = vector.shape_cast %20 : vector<1x1x16xf32> to vector<1x16xf32>
    %cst_13 = arith.constant 5.000000e-01 : f32
    %22 = vector.broadcast %cst_13 : f32 to vector<1x16xf32>
    %23 = arith.cmpf ogt, %21, %22 : vector<1x16xf32>
    %24 = arith.truncf %6 : vector<8x32xf32> to vector<8x32xbf16>
    %25 = arith.truncf %3 : vector<8x32xf32> to vector<8x32xbf16>
    %c0_14 = arith.constant 0 : index
    %c0_15 = arith.constant 0 : index
    %26 = vector.load %arg6[%c0_14, %c0_15] : memref<32x512xbf16, #tpu.memory_space<vmem>>, vector<32x512xbf16>
    %cst_16 = arith.constant dense<0.000000e+00> : vector<8x512xf32>
    %27 = tpu.matmul %24, %26, %cst_16 {dimension_numbers = #tpu.dot_dimension_numbers<[1], [0], [0], [1], [0, 0, 1, 1], [], []>} : vector<8x32xbf16>, vector<32x512xbf16>, vector<8x512xf32> -> vector<8x512xf32>
    %c0_17 = arith.constant 0 : index
    %c0_18 = arith.constant 0 : index
    %28 = vector.load %arg7[%c0_17, %c0_18] : memref<1x512xf32, #tpu.memory_space<vmem>>, vector<1x512xf32>
    %29 = vector.broadcast %28 : vector<1x512xf32> to vector<8x512xf32>
    %30 = arith.addf %27, %29 : vector<8x512xf32>
    %cst_19 = arith.constant 0.353553385 : f32
    %31 = vector.broadcast %cst_19 : f32 to vector<8x512xf32>
    %32 = arith.mulf %30, %31 : vector<8x512xf32>
    %c0_20 = arith.constant 0 : index
    %c0_21 = arith.constant 0 : index
    %33 = vector.load %arg8[%c0_20, %c0_21] : memref<32x512xbf16, #tpu.memory_space<vmem>>, vector<32x512xbf16>
    %cst_22 = arith.constant dense<0.000000e+00> : vector<8x512xf32>
    %34 = tpu.matmul %25, %33, %cst_22 {dimension_numbers = #tpu.dot_dimension_numbers<[1], [0], [0], [1], [0, 0, 1, 1], [], []>} : vector<8x32xbf16>, vector<32x512xbf16>, vector<8x512xf32> -> vector<8x512xf32>
    %c0_23 = arith.constant 0 : index
    %c0_24 = arith.constant 0 : index
    %35 = vector.load %arg9[%c0_23, %c0_24] : memref<1x512xf32, #tpu.memory_space<vmem>>, vector<1x512xf32>
    %36 = vector.broadcast %35 : vector<1x512xf32> to vector<8x512xf32>
    %37 = arith.addf %34, %36 : vector<8x512xf32>
    %c0_25 = arith.constant 0 : index
    %c0_26 = arith.constant 0 : index
    %38 = vector.load %arg10[%c0_25, %c0_26] : memref<32x512xbf16, #tpu.memory_space<vmem>>, vector<32x512xbf16>
    %cst_27 = arith.constant dense<0.000000e+00> : vector<8x512xf32>
    %39 = tpu.matmul %25, %38, %cst_27 {dimension_numbers = #tpu.dot_dimension_numbers<[1], [0], [0], [1], [0, 0, 1, 1], [], []>} : vector<8x32xbf16>, vector<32x512xbf16>, vector<8x512xf32> -> vector<8x512xf32>
    %c0_28 = arith.constant 0 : index
    %c0_29 = arith.constant 0 : index
    %40 = vector.load %arg11[%c0_28, %c0_29] : memref<1x512xf32, #tpu.memory_space<vmem>>, vector<1x512xf32>
    %41 = vector.broadcast %40 : vector<1x512xf32> to vector<8x512xf32>
    %42 = arith.addf %39, %41 : vector<8x512xf32>
    %43 = vector.extract_strided_slice %32 {offsets = [0, 0], sizes = [8, 128], strides = [1, 1]} : vector<8x512xf32> to vector<8x128xf32>
    %44 = arith.truncf %43 : vector<8x128xf32> to vector<8x128xbf16>
    %45 = vector.extract_strided_slice %37 {offsets = [0, 0], sizes = [8, 128], strides = [1, 1]} : vector<8x512xf32> to vector<8x128xf32>
    %46 = arith.truncf %45 : vector<8x128xf32> to vector<8x128xbf16>
    %47 = vector.extract_strided_slice %42 {offsets = [0, 0], sizes = [8, 128], strides = [1, 1]} : vector<8x512xf32> to vector<8x128xf32>
    %48 = arith.truncf %47 : vector<8x128xf32> to vector<8x128xbf16>
    %cst_30 = arith.constant dense<0.000000e+00> : vector<8x8xf32>
    %49 = tpu.matmul %44, %46, %cst_30 {dimension_numbers = #tpu.dot_dimension_numbers<[1], [1], [0], [0], [0, 0, 1, 0], [], []>} : vector<8x128xbf16>, vector<8x128xbf16>, vector<8x8xf32> -> vector<8x8xf32>
    %cst_31 = arith.constant -9.99999984E+17 : f32
    %50 = vector.broadcast %cst_31 : f32 to vector<8x8xf32>
    %51 = arith.select %19, %50, %49 : vector<8x8xi1>, vector<8x8xf32>
    %cst_32 = arith.constant dense<0xFF800000> : vector<8xf32>
    %52 = vector.multi_reduction <maximumf>, %51, %cst_32 [1] : vector<8x8xf32> to vector<8xf32>
    %53 = vector.shape_cast %52 : vector<8xf32> to vector<8x1xf32>
    %54 = vector.broadcast %53 : vector<8x1xf32> to vector<8x8xf32>
    %55 = arith.subf %51, %54 : vector<8x8xf32>
    %56 = math.exp %55 : vector<8x8xf32>
    %cst_33 = arith.constant dense<0.000000e+00> : vector<8xf32>
    %57 = vector.multi_reduction <add>, %56, %cst_33 [1] : vector<8x8xf32> to vector<8xf32>
    %58 = vector.shape_cast %57 : vector<8xf32> to vector<8x1xf32>
    %59 = tpu.reciprocal %58 {approx = true} : vector<8x1xf32> -> vector<8x1xf32>
    %60 = vector.broadcast %59 : vector<8x1xf32> to vector<8x8xf32>
    %61 = arith.mulf %56, %60 : vector<8x8xf32>
    %62 = arith.truncf %61 : vector<8x8xf32> to vector<8x8xbf16>
    %cst_34 = arith.constant dense<0.000000e+00> : vector<8x128xf32>
    %63 = tpu.matmul %62, %48, %cst_34 {dimension_numbers = #tpu.dot_dimension_numbers<[1], [0], [0], [1], [0, 0, 1, 1], [], []>} : vector<8x8xbf16>, vector<8x128xbf16>, vector<8x128xf32> -> vector<8x128xf32>
    %c0_35 = arith.constant 0 : index
    %c0_36 = arith.constant 0 : index
    %64 = vector.load %arg34[%c0_35, %c0_36] : memref<8x512xf32, #tpu.memory_space<vmem>>, vector<8x128xf32>
    tpu.vector_store %arg34[%c0_35, %c0_36], %63 {strides = array<i32>} : memref<8x512xf32, #tpu.memory_space<vmem>>, vector<8x128xf32>,
    %65 = vector.extract_strided_slice %32 {offsets = [0, 128], sizes = [8, 128], strides = [1, 1]} : vector<8x512xf32> to vector<8x128xf32>
    %66 = arith.truncf %65 : vector<8x128xf32> to vector<8x128xbf16>
    %67 = vector.extract_strided_slice %37 {offsets = [0, 128], sizes = [8, 128], strides = [1, 1]} : vector<8x512xf32> to vector<8x128xf32>
    %68 = arith.truncf %67 : vector<8x128xf32> to vector<8x128xbf16>
    %69 = vector.extract_strided_slice %42 {offsets = [0, 128], sizes = [8, 128], strides = [1, 1]} : vector<8x512xf32> to vector<8x128xf32>
    %70 = arith.truncf %69 : vector<8x128xf32> to vector<8x128xbf16>
    %cst_37 = arith.constant dense<0.000000e+00> : vector<8x8xf32>
    %71 = tpu.matmul %66, %68, %cst_37 {dimension_numbers = #tpu.dot_dimension_numbers<[1], [1], [0], [0], [0, 0, 1, 0], [], []>} : vector<8x128xbf16>, vector<8x128xbf16>, vector<8x8xf32> -> vector<8x8xf32>
    %cst_38 = arith.constant -9.99999984E+17 : f32
    %72 = vector.broadcast %cst_38 : f32 to vector<8x8xf32>
    %73 = arith.select %19, %72, %71 : vector<8x8xi1>, vector<8x8xf32>
    %cst_39 = arith.constant dense<0xFF800000> : vector<8xf32>
    %74 = vector.multi_reduction <maximumf>, %73, %cst_39 [1] : vector<8x8xf32> to vector<8xf32>
    %75 = vector.shape_cast %74 : vector<8xf32> to vector<8x1xf32>
    %76 = vector.broadcast %75 : vector<8x1xf32> to vector<8x8xf32>
    %77 = arith.subf %73, %76 : vector<8x8xf32>
    %78 = math.exp %77 : vector<8x8xf32>
    %cst_40 = arith.constant dense<0.000000e+00> : vector<8xf32>
    %79 = vector.multi_reduction <add>, %78, %cst_40 [1] : vector<8x8xf32> to vector<8xf32>
    %80 = vector.shape_cast %79 : vector<8xf32> to vector<8x1xf32>
    %81 = tpu.reciprocal %80 {approx = true} : vector<8x1xf32> -> vector<8x1xf32>
    %82 = vector.broadcast %81 : vector<8x1xf32> to vector<8x8xf32>
    %83 = arith.mulf %78, %82 : vector<8x8xf32>
    %84 = arith.truncf %83 : vector<8x8xf32> to vector<8x8xbf16>
    %cst_41 = arith.constant dense<0.000000e+00> : vector<8x128xf32>
    %85 = tpu.matmul %84, %70, %cst_41 {dimension_numbers = #tpu.dot_dimension_numbers<[1], [0], [0], [1], [0, 0, 1, 1], [], []>} : vector<8x8xbf16>, vector<8x128xbf16>, vector<8x128xf32> -> vector<8x128xf32>
    %c0_42 = arith.constant 0 : index
    %c128 = arith.constant 128 : index
    %86 = vector.load %arg34[%c0_42, %c128] : memref<8x512xf32, #tpu.memory_space<vmem>>, vector<8x128xf32>
    tpu.vector_store %arg34[%c0_42, %c128], %85 {strides = array<i32>} : memref<8x512xf32, #tpu.memory_space<vmem>>, vector<8x128xf32>,
    %87 = vector.extract_strided_slice %32 {offsets = [0, 256], sizes = [8, 128], strides = [1, 1]} : vector<8x512xf32> to vector<8x128xf32>
    %88 = arith.truncf %87 : vector<8x128xf32> to vector<8x128xbf16>
    %89 = vector.extract_strided_slice %37 {offsets = [0, 256], sizes = [8, 128], strides = [1, 1]} : vector<8x512xf32> to vector<8x128xf32>
    %90 = arith.truncf %89 : vector<8x128xf32> to vector<8x128xbf16>
    %91 = vector.extract_strided_slice %42 {offsets = [0, 256], sizes = [8, 128], strides = [1, 1]} : vector<8x512xf32> to vector<8x128xf32>
    %92 = arith.truncf %91 : vector<8x128xf32> to vector<8x128xbf16>
    %cst_43 = arith.constant dense<0.000000e+00> : vector<8x8xf32>
    %93 = tpu.matmul %88, %90, %cst_43 {dimension_numbers = #tpu.dot_dimension_numbers<[1], [1], [0], [0], [0, 0, 1, 0], [], []>} : vector<8x128xbf16>, vector<8x128xbf16>, vector<8x8xf32> -> vector<8x8xf32>
    %cst_44 = arith.constant -9.99999984E+17 : f32
    %94 = vector.broadcast %cst_44 : f32 to vector<8x8xf32>
    %95 = arith.select %19, %94, %93 : vector<8x8xi1>, vector<8x8xf32>
    %cst_45 = arith.constant dense<0xFF800000> : vector<8xf32>
    %96 = vector.multi_reduction <maximumf>, %95, %cst_45 [1] : vector<8x8xf32> to vector<8xf32>
    %97 = vector.shape_cast %96 : vector<8xf32> to vector<8x1xf32>
    %98 = vector.broadcast %97 : vector<8x1xf32> to vector<8x8xf32>
    %99 = arith.subf %95, %98 : vector<8x8xf32>
    %100 = math.exp %99 : vector<8x8xf32>
    %cst_46 = arith.constant dense<0.000000e+00> : vector<8xf32>
    %101 = vector.multi_reduction <add>, %100, %cst_46 [1] : vector<8x8xf32> to vector<8xf32>
    %102 = vector.shape_cast %101 : vector<8xf32> to vector<8x1xf32>
    %103 = tpu.reciprocal %102 {approx = true} : vector<8x1xf32> -> vector<8x1xf32>
    %104 = vector.broadcast %103 : vector<8x1xf32> to vector<8x8xf32>
    %105 = arith.mulf %100, %104 : vector<8x8xf32>
    %106 = arith.truncf %105 : vector<8x8xf32> to vector<8x8xbf16>
    %cst_47 = arith.constant dense<0.000000e+00> : vector<8x128xf32>
    %107 = tpu.matmul %106, %92, %cst_47 {dimension_numbers = #tpu.dot_dimension_numbers<[1], [0], [0], [1], [0, 0, 1, 1], [], []>} : vector<8x8xbf16>, vector<8x128xbf16>, vector<8x128xf32> -> vector<8x128xf32>
    %c0_48 = arith.constant 0 : index
    %c256 = arith.constant 256 : index
    %108 = vector.load %arg34[%c0_48, %c256] : memref<8x512xf32, #tpu.memory_space<vmem>>, vector<8x128xf32>
    tpu.vector_store %arg34[%c0_48, %c256], %107 {strides = array<i32>} : memref<8x512xf32, #tpu.memory_space<vmem>>, vector<8x128xf32>,
    %109 = vector.extract_strided_slice %32 {offsets = [0, 384], sizes = [8, 128], strides = [1, 1]} : vector<8x512xf32> to vector<8x128xf32>
    %110 = arith.truncf %109 : vector<8x128xf32> to vector<8x128xbf16>
    %111 = vector.extract_strided_slice %37 {offsets = [0, 384], sizes = [8, 128], strides = [1, 1]} : vector<8x512xf32> to vector<8x128xf32>
    %112 = arith.truncf %111 : vector<8x128xf32> to vector<8x128xbf16>
    %113 = vector.extract_strided_slice %42 {offsets = [0, 384], sizes = [8, 128], strides = [1, 1]} : vector<8x512xf32> to vector<8x128xf32>
    %114 = arith.truncf %113 : vector<8x128xf32> to vector<8x128xbf16>
    %cst_49 = arith.constant dense<0.000000e+00> : vector<8x8xf32>
    %115 = tpu.matmul %110, %112, %cst_49 {dimension_numbers = #tpu.dot_dimension_numbers<[1], [1], [0], [0], [0, 0, 1, 0], [], []>} : vector<8x128xbf16>, vector<8x128xbf16>, vector<8x8xf32> -> vector<8x8xf32>
    %cst_50 = arith.constant -9.99999984E+17 : f32
    %116 = vector.broadcast %cst_50 : f32 to vector<8x8xf32>
    %117 = arith.select %19, %116, %115 : vector<8x8xi1>, vector<8x8xf32>
    %cst_51 = arith.constant dense<0xFF800000> : vector<8xf32>
    %118 = vector.multi_reduction <maximumf>, %117, %cst_51 [1] : vector<8x8xf32> to vector<8xf32>
    %119 = vector.shape_cast %118 : vector<8xf32> to vector<8x1xf32>
    %120 = vector.broadcast %119 : vector<8x1xf32> to vector<8x8xf32>
    %121 = arith.subf %117, %120 : vector<8x8xf32>
    %122 = math.exp %121 : vector<8x8xf32>
    %cst_52 = arith.constant dense<0.000000e+00> : vector<8xf32>
    %123 = vector.multi_reduction <add>, %122, %cst_52 [1] : vector<8x8xf32> to vector<8xf32>
    %124 = vector.shape_cast %123 : vector<8xf32> to vector<8x1xf32>
    %125 = tpu.reciprocal %124 {approx = true} : vector<8x1xf32> -> vector<8x1xf32>
    %126 = vector.broadcast %125 : vector<8x1xf32> to vector<8x8xf32>
    %127 = arith.mulf %122, %126 : vector<8x8xf32>
    %128 = arith.truncf %127 : vector<8x8xf32> to vector<8x8xbf16>
    %cst_53 = arith.constant dense<0.000000e+00> : vector<8x128xf32>
    %129 = tpu.matmul %128, %114, %cst_53 {dimension_numbers = #tpu.dot_dimension_numbers<[1], [0], [0], [1], [0, 0, 1, 1], [], []>} : vector<8x8xbf16>, vector<8x128xbf16>, vector<8x128xf32> -> vector<8x128xf32>
    %c0_54 = arith.constant 0 : index
    %c384 = arith.constant 384 : index
    %130 = vector.load %arg34[%c0_54, %c384] : memref<8x512xf32, #tpu.memory_space<vmem>>, vector<8x128xf32>
    tpu.vector_store %arg34[%c0_54, %c384], %129 {strides = array<i32>} : memref<8x512xf32, #tpu.memory_space<vmem>>, vector<8x128xf32>,
    %c0_55 = arith.constant 0 : index
    %c0_56 = arith.constant 0 : index
    %131 = vector.load %arg34[%c0_55, %c0_56] : memref<8x512xf32, #tpu.memory_space<vmem>>, vector<8x512xf32>
    %132 = arith.truncf %131 : vector<8x512xf32> to vector<8x512xbf16>
    %c0_57 = arith.constant 0 : index
    %c0_58 = arith.constant 0 : index
    %133 = vector.load %arg12[%c0_57, %c0_58] : memref<512x32xbf16, #tpu.memory_space<vmem>>, vector<512x32xbf16>
    %cst_59 = arith.constant dense<0.000000e+00> : vector<8x32xf32>
    %134 = tpu.matmul %132, %133, %cst_59 {dimension_numbers = #tpu.dot_dimension_numbers<[1], [0], [0], [1], [0, 0, 1, 1], [], []>} : vector<8x512xbf16>, vector<512x32xbf16>, vector<8x32xf32> -> vector<8x32xf32>
    %c0_60 = arith.constant 0 : index
    %c0_61 = arith.constant 0 : index
    %135 = vector.load %arg13[%c0_60, %c0_61] : memref<1x32xf32, #tpu.memory_space<vmem>>, vector<1x32xf32>
    %136 = vector.broadcast %135 : vector<1x32xf32> to vector<8x32xf32>
    %137 = arith.addf %134, %136 : vector<8x32xf32>
    %138 = arith.addf %137, %6 : vector<8x32xf32>
    %c0_62 = arith.constant 0 : index
    %c0_63 = arith.constant 0 : index
    %139 = vector.load %arg14[%c0_62, %c0_63] : memref<1x32xf32, #tpu.memory_space<vmem>>, vector<1x32xf32>
    %c0_64 = arith.constant 0 : index
    %c0_65 = arith.constant 0 : index
    %140 = vector.load %arg15[%c0_64, %c0_65] : memref<1x32xf32, #tpu.memory_space<vmem>>, vector<1x32xf32>
    %cst_66 = arith.constant dense<0.000000e+00> : vector<8xf32>
    %141 = vector.multi_reduction <add>, %138, %cst_66 [1] : vector<8x32xf32> to vector<8xf32>
    %142 = vector.shape_cast %141 : vector<8xf32> to vector<8x1xf32>
    %cst_67 = arith.constant 3.200000e+01 : f32
    %143 = vector.broadcast %cst_67 : f32 to vector<8x1xf32>
    %144 = arith.divf %142, %143 : vector<8x1xf32>
    %145 = vector.broadcast %144 : vector<8x1xf32> to vector<8x32xf32>
    %146 = arith.subf %138, %145 : vector<8x32xf32>
    %147 = arith.mulf %146, %146 : vector<8x32xf32>
    %cst_68 = arith.constant dense<0.000000e+00> : vector<8xf32>
    %148 = vector.multi_reduction <add>, %147, %cst_68 [1] : vector<8x32xf32> to vector<8xf32>
    %149 = vector.shape_cast %148 : vector<8xf32> to vector<8x1xf32>
    %cst_69 = arith.constant 3.200000e+01 : f32
    %150 = vector.broadcast %cst_69 : f32 to vector<8x1xf32>
    %151 = arith.divf %149, %150 : vector<8x1xf32>
    %152 = vector.broadcast %144 : vector<8x1xf32> to vector<8x32xf32>
    %153 = arith.subf %138, %152 : vector<8x32xf32>
    %cst_70 = arith.constant 9.99999997E-7 : f32
    %154 = vector.broadcast %cst_70 : f32 to vector<8x1xf32>
    %155 = arith.addf %151, %154 : vector<8x1xf32>
    %156 = math.rsqrt %155 : vector<8x1xf32>
    %157 = vector.broadcast %156 : vector<8x1xf32> to vector<8x32xf32>
    %158 = arith.mulf %153, %157 : vector<8x32xf32>
    %159 = vector.broadcast %139 : vector<1x32xf32> to vector<8x32xf32>
    %160 = arith.mulf %158, %159 : vector<8x32xf32>
    %161 = vector.broadcast %140 : vector<1x32xf32> to vector<8x32xf32>
    %162 = arith.addf %160, %161 : vector<8x32xf32>
    %163 = arith.truncf %162 : vector<8x32xf32> to vector<8x32xbf16>
    %164 = arith.truncf %8 : vector<16x32xf32> to vector<16x32xbf16>
    %c0_71 = arith.constant 0 : index
    %c0_72 = arith.constant 0 : index
    %165 = vector.load %arg16[%c0_71, %c0_72] : memref<32x512xbf16, #tpu.memory_space<vmem>>, vector<32x512xbf16>
    %cst_73 = arith.constant dense<0.000000e+00> : vector<8x512xf32>
    %166 = tpu.matmul %163, %165, %cst_73 {dimension_numbers = #tpu.dot_dimension_numbers<[1], [0], [0], [1], [0, 0, 1, 1], [], []>} : vector<8x32xbf16>, vector<32x512xbf16>, vector<8x512xf32> -> vector<8x512xf32>
    %c0_74 = arith.constant 0 : index
    %c0_75 = arith.constant 0 : index
    %167 = vector.load %arg17[%c0_74, %c0_75] : memref<1x512xf32, #tpu.memory_space<vmem>>, vector<1x512xf32>
    %168 = vector.broadcast %167 : vector<1x512xf32> to vector<8x512xf32>
    %169 = arith.addf %166, %168 : vector<8x512xf32>
    %cst_76 = arith.constant 0.353553385 : f32
    %170 = vector.broadcast %cst_76 : f32 to vector<8x512xf32>
    %171 = arith.mulf %169, %170 : vector<8x512xf32>
    %c0_77 = arith.constant 0 : index
    %c0_78 = arith.constant 0 : index
    %172 = vector.load %arg18[%c0_77, %c0_78] : memref<32x512xbf16, #tpu.memory_space<vmem>>, vector<32x512xbf16>
    %cst_79 = arith.constant dense<0.000000e+00> : vector<16x512xf32>
    %173 = tpu.matmul %164, %172, %cst_79 {dimension_numbers = #tpu.dot_dimension_numbers<[1], [0], [0], [1], [0, 0, 1, 1], [], []>} : vector<16x32xbf16>, vector<32x512xbf16>, vector<16x512xf32> -> vector<16x512xf32>
    %c0_80 = arith.constant 0 : index
    %c0_81 = arith.constant 0 : index
    %174 = vector.load %arg19[%c0_80, %c0_81] : memref<1x512xf32, #tpu.memory_space<vmem>>, vector<1x512xf32>
    %175 = vector.broadcast %174 : vector<1x512xf32> to vector<16x512xf32>
    %176 = arith.addf %173, %175 : vector<16x512xf32>
    %c0_82 = arith.constant 0 : index
    %c0_83 = arith.constant 0 : index
    %177 = vector.load %arg20[%c0_82, %c0_83] : memref<32x512xbf16, #tpu.memory_space<vmem>>, vector<32x512xbf16>
    %cst_84 = arith.constant dense<0.000000e+00> : vector<16x512xf32>
    %178 = tpu.matmul %164, %177, %cst_84 {dimension_numbers = #tpu.dot_dimension_numbers<[1], [0], [0], [1], [0, 0, 1, 1], [], []>} : vector<16x32xbf16>, vector<32x512xbf16>, vector<16x512xf32> -> vector<16x512xf32>
    %c0_85 = arith.constant 0 : index
    %c0_86 = arith.constant 0 : index
    %179 = vector.load %arg21[%c0_85, %c0_86] : memref<1x512xf32, #tpu.memory_space<vmem>>, vector<1x512xf32>
    %180 = vector.broadcast %179 : vector<1x512xf32> to vector<16x512xf32>
    %181 = arith.addf %178, %180 : vector<16x512xf32>
    %182 = vector.extract_strided_slice %171 {offsets = [0, 0], sizes = [8, 128], strides = [1, 1]} : vector<8x512xf32> to vector<8x128xf32>
    %183 = arith.truncf %182 : vector<8x128xf32> to vector<8x128xbf16>
    %184 = vector.extract_strided_slice %176 {offsets = [0, 0], sizes = [16, 128], strides = [1, 1]} : vector<16x512xf32> to vector<16x128xf32>
    %185 = arith.truncf %184 : vector<16x128xf32> to vector<16x128xbf16>
    %186 = vector.extract_strided_slice %181 {offsets = [0, 0], sizes = [16, 128], strides = [1, 1]} : vector<16x512xf32> to vector<16x128xf32>
    %187 = arith.truncf %186 : vector<16x128xf32> to vector<16x128xbf16>
    %cst_87 = arith.constant dense<0.000000e+00> : vector<8x16xf32>
    %188 = tpu.matmul %183, %185, %cst_87 {dimension_numbers = #tpu.dot_dimension_numbers<[1], [1], [0], [0], [0, 0, 1, 0], [], []>} : vector<8x128xbf16>, vector<16x128xbf16>, vector<8x16xf32> -> vector<8x16xf32>
    %cst_88 = arith.constant -9.99999984E+17 : f32
    %189 = vector.shape_cast %23 : vector<1x16xi1> to vector<1x16xi1>
    %190 = vector.broadcast %189 : vector<1x16xi1> to vector<8x16xi1>
    %191 = vector.broadcast %cst_88 : f32 to vector<8x16xf32>
    %192 = arith.select %190, %191, %188 : vector<8x16xi1>, vector<8x16xf32>
    %cst_89 = arith.constant dense<0xFF800000> : vector<8xf32>
    %193 = vector.multi_reduction <maximumf>, %192, %cst_89 [1] : vector<8x16xf32> to vector<8xf32>
    %194 = vector.shape_cast %193 : vector<8xf32> to vector<8x1xf32>
    %195 = vector.broadcast %194 : vector<8x1xf32> to vector<8x16xf32>
    %196 = arith.subf %192, %195 : vector<8x16xf32>
    %197 = math.exp %196 : vector<8x16xf32>
    %cst_90 = arith.constant dense<0.000000e+00> : vector<8xf32>
    %198 = vector.multi_reduction <add>, %197, %cst_90 [1] : vector<8x16xf32> to vector<8xf32>
    %199 = vector.shape_cast %198 : vector<8xf32> to vector<8x1xf32>
    %200 = tpu.reciprocal %199 {approx = true} : vector<8x1xf32> -> vector<8x1xf32>
    %201 = vector.broadcast %200 : vector<8x1xf32> to vector<8x16xf32>
    %202 = arith.mulf %197, %201 : vector<8x16xf32>
    %203 = arith.truncf %202 : vector<8x16xf32> to vector<8x16xbf16>
    %cst_91 = arith.constant dense<0.000000e+00> : vector<8x128xf32>
    %204 = tpu.matmul %203, %187, %cst_91 {dimension_numbers = #tpu.dot_dimension_numbers<[1], [0], [0], [1], [0, 0, 1, 1], [], []>} : vector<8x16xbf16>, vector<16x128xbf16>, vector<8x128xf32> -> vector<8x128xf32>
    %c0_92 = arith.constant 0 : index
    %c0_93 = arith.constant 0 : index
    %205 = vector.load %arg34[%c0_92, %c0_93] : memref<8x512xf32, #tpu.memory_space<vmem>>, vector<8x128xf32>
    tpu.vector_store %arg34[%c0_92, %c0_93], %204 {strides = array<i32>} : memref<8x512xf32, #tpu.memory_space<vmem>>, vector<8x128xf32>,
    %206 = vector.extract_strided_slice %171 {offsets = [0, 128], sizes = [8, 128], strides = [1, 1]} : vector<8x512xf32> to vector<8x128xf32>
    %207 = arith.truncf %206 : vector<8x128xf32> to vector<8x128xbf16>
    %208 = vector.extract_strided_slice %176 {offsets = [0, 128], sizes = [16, 128], strides = [1, 1]} : vector<16x512xf32> to vector<16x128xf32>
    %209 = arith.truncf %208 : vector<16x128xf32> to vector<16x128xbf16>
    %210 = vector.extract_strided_slice %181 {offsets = [0, 128], sizes = [16, 128], strides = [1, 1]} : vector<16x512xf32> to vector<16x128xf32>
    %211 = arith.truncf %210 : vector<16x128xf32> to vector<16x128xbf16>
    %cst_94 = arith.constant dense<0.000000e+00> : vector<8x16xf32>
    %212 = tpu.matmul %207, %209, %cst_94 {dimension_numbers = #tpu.dot_dimension_numbers<[1], [1], [0], [0], [0, 0, 1, 0], [], []>} : vector<8x128xbf16>, vector<16x128xbf16>, vector<8x16xf32> -> vector<8x16xf32>
    %cst_95 = arith.constant -9.99999984E+17 : f32
    %213 = vector.shape_cast %23 : vector<1x16xi1> to vector<1x16xi1>
    %214 = vector.broadcast %213 : vector<1x16xi1> to vector<8x16xi1>
    %215 = vector.broadcast %cst_95 : f32 to vector<8x16xf32>
    %216 = arith.select %214, %215, %212 : vector<8x16xi1>, vector<8x16xf32>
    %cst_96 = arith.constant dense<0xFF800000> : vector<8xf32>
    %217 = vector.multi_reduction <maximumf>, %216, %cst_96 [1] : vector<8x16xf32> to vector<8xf32>
    %218 = vector.shape_cast %217 : vector<8xf32> to vector<8x1xf32>
    %219 = vector.broadcast %218 : vector<8x1xf32> to vector<8x16xf32>
    %220 = arith.subf %216, %219 : vector<8x16xf32>
    %221 = math.exp %220 : vector<8x16xf32>
    %cst_97 = arith.constant dense<0.000000e+00> : vector<8xf32>
    %222 = vector.multi_reduction <add>, %221, %cst_97 [1] : vector<8x16xf32> to vector<8xf32>
    %223 = vector.shape_cast %222 : vector<8xf32> to vector<8x1xf32>
    %224 = tpu.reciprocal %223 {approx = true} : vector<8x1xf32> -> vector<8x1xf32>
    %225 = vector.broadcast %224 : vector<8x1xf32> to vector<8x16xf32>
    %226 = arith.mulf %221, %225 : vector<8x16xf32>
    %227 = arith.truncf %226 : vector<8x16xf32> to vector<8x16xbf16>
    %cst_98 = arith.constant dense<0.000000e+00> : vector<8x128xf32>
    %228 = tpu.matmul %227, %211, %cst_98 {dimension_numbers = #tpu.dot_dimension_numbers<[1], [0], [0], [1], [0, 0, 1, 1], [], []>} : vector<8x16xbf16>, vector<16x128xbf16>, vector<8x128xf32> -> vector<8x128xf32>
    %c0_99 = arith.constant 0 : index
    %c128_100 = arith.constant 128 : index
    %229 = vector.load %arg34[%c0_99, %c128_100] : memref<8x512xf32, #tpu.memory_space<vmem>>, vector<8x128xf32>
    tpu.vector_store %arg34[%c0_99, %c128_100], %228 {strides = array<i32>} : memref<8x512xf32, #tpu.memory_space<vmem>>, vector<8x128xf32>,
    %230 = vector.extract_strided_slice %171 {offsets = [0, 256], sizes = [8, 128], strides = [1, 1]} : vector<8x512xf32> to vector<8x128xf32>
    %231 = arith.truncf %230 : vector<8x128xf32> to vector<8x128xbf16>
    %232 = vector.extract_strided_slice %176 {offsets = [0, 256], sizes = [16, 128], strides = [1, 1]} : vector<16x512xf32> to vector<16x128xf32>
    %233 = arith.truncf %232 : vector<16x128xf32> to vector<16x128xbf16>
    %234 = vector.extract_strided_slice %181 {offsets = [0, 256], sizes = [16, 128], strides = [1, 1]} : vector<16x512xf32> to vector<16x128xf32>
    %235 = arith.truncf %234 : vector<16x128xf32> to vector<16x128xbf16>
    %cst_101 = arith.constant dense<0.000000e+00> : vector<8x16xf32>
    %236 = tpu.matmul %231, %233, %cst_101 {dimension_numbers = #tpu.dot_dimension_numbers<[1], [1], [0], [0], [0, 0, 1, 0], [], []>} : vector<8x128xbf16>, vector<16x128xbf16>, vector<8x16xf32> -> vector<8x16xf32>
    %cst_102 = arith.constant -9.99999984E+17 : f32
    %237 = vector.shape_cast %23 : vector<1x16xi1> to vector<1x16xi1>
    %238 = vector.broadcast %237 : vector<1x16xi1> to vector<8x16xi1>
    %239 = vector.broadcast %cst_102 : f32 to vector<8x16xf32>
    %240 = arith.select %238, %239, %236 : vector<8x16xi1>, vector<8x16xf32>
    %cst_103 = arith.constant dense<0xFF800000> : vector<8xf32>
    %241 = vector.multi_reduction <maximumf>, %240, %cst_103 [1] : vector<8x16xf32> to vector<8xf32>
    %242 = vector.shape_cast %241 : vector<8xf32> to vector<8x1xf32>
    %243 = vector.broadcast %242 : vector<8x1xf32> to vector<8x16xf32>
    %244 = arith.subf %240, %243 : vector<8x16xf32>
    %245 = math.exp %244 : vector<8x16xf32>
    %cst_104 = arith.constant dense<0.000000e+00> : vector<8xf32>
    %246 = vector.multi_reduction <add>, %245, %cst_104 [1] : vector<8x16xf32> to vector<8xf32>
    %247 = vector.shape_cast %246 : vector<8xf32> to vector<8x1xf32>
    %248 = tpu.reciprocal %247 {approx = true} : vector<8x1xf32> -> vector<8x1xf32>
    %249 = vector.broadcast %248 : vector<8x1xf32> to vector<8x16xf32>
    %250 = arith.mulf %245, %249 : vector<8x16xf32>
    %251 = arith.truncf %250 : vector<8x16xf32> to vector<8x16xbf16>
    %cst_105 = arith.constant dense<0.000000e+00> : vector<8x128xf32>
    %252 = tpu.matmul %251, %235, %cst_105 {dimension_numbers = #tpu.dot_dimension_numbers<[1], [0], [0], [1], [0, 0, 1, 1], [], []>} : vector<8x16xbf16>, vector<16x128xbf16>, vector<8x128xf32> -> vector<8x128xf32>
    %c0_106 = arith.constant 0 : index
    %c256_107 = arith.constant 256 : index
    %253 = vector.load %arg34[%c0_106, %c256_107] : memref<8x512xf32, #tpu.memory_space<vmem>>, vector<8x128xf32>
    tpu.vector_store %arg34[%c0_106, %c256_107], %252 {strides = array<i32>} : memref<8x512xf32, #tpu.memory_space<vmem>>, vector<8x128xf32>,
    %254 = vector.extract_strided_slice %171 {offsets = [0, 384], sizes = [8, 128], strides = [1, 1]} : vector<8x512xf32> to vector<8x128xf32>
    %255 = arith.truncf %254 : vector<8x128xf32> to vector<8x128xbf16>
    %256 = vector.extract_strided_slice %176 {offsets = [0, 384], sizes = [16, 128], strides = [1, 1]} : vector<16x512xf32> to vector<16x128xf32>
    %257 = arith.truncf %256 : vector<16x128xf32> to vector<16x128xbf16>
    %258 = vector.extract_strided_slice %181 {offsets = [0, 384], sizes = [16, 128], strides = [1, 1]} : vector<16x512xf32> to vector<16x128xf32>
    %259 = arith.truncf %258 : vector<16x128xf32> to vector<16x128xbf16>
    %cst_108 = arith.constant dense<0.000000e+00> : vector<8x16xf32>
    %260 = tpu.matmul %255, %257, %cst_108 {dimension_numbers = #tpu.dot_dimension_numbers<[1], [1], [0], [0], [0, 0, 1, 0], [], []>} : vector<8x128xbf16>, vector<16x128xbf16>, vector<8x16xf32> -> vector<8x16xf32>
    %cst_109 = arith.constant -9.99999984E+17 : f32
    %261 = vector.shape_cast %23 : vector<1x16xi1> to vector<1x16xi1>
    %262 = vector.broadcast %261 : vector<1x16xi1> to vector<8x16xi1>
    %263 = vector.broadcast %cst_109 : f32 to vector<8x16xf32>
    %264 = arith.select %262, %263, %260 : vector<8x16xi1>, vector<8x16xf32>
    %cst_110 = arith.constant dense<0xFF800000> : vector<8xf32>
    %265 = vector.multi_reduction <maximumf>, %264, %cst_110 [1] : vector<8x16xf32> to vector<8xf32>
    %266 = vector.shape_cast %265 : vector<8xf32> to vector<8x1xf32>
    %267 = vector.broadcast %266 : vector<8x1xf32> to vector<8x16xf32>
    %268 = arith.subf %264, %267 : vector<8x16xf32>
    %269 = math.exp %268 : vector<8x16xf32>
    %cst_111 = arith.constant dense<0.000000e+00> : vector<8xf32>
    %270 = vector.multi_reduction <add>, %269, %cst_111 [1] : vector<8x16xf32> to vector<8xf32>
    %271 = vector.shape_cast %270 : vector<8xf32> to vector<8x1xf32>
    %272 = tpu.reciprocal %271 {approx = true} : vector<8x1xf32> -> vector<8x1xf32>
    %273 = vector.broadcast %272 : vector<8x1xf32> to vector<8x16xf32>
    %274 = arith.mulf %269, %273 : vector<8x16xf32>
    %275 = arith.truncf %274 : vector<8x16xf32> to vector<8x16xbf16>
    %cst_112 = arith.constant dense<0.000000e+00> : vector<8x128xf32>
    %276 = tpu.matmul %275, %259, %cst_112 {dimension_numbers = #tpu.dot_dimension_numbers<[1], [0], [0], [1], [0, 0, 1, 1], [], []>} : vector<8x16xbf16>, vector<16x128xbf16>, vector<8x128xf32> -> vector<8x128xf32>
    %c0_113 = arith.constant 0 : index
    %c384_114 = arith.constant 384 : index
    %277 = vector.load %arg34[%c0_113, %c384_114] : memref<8x512xf32, #tpu.memory_space<vmem>>, vector<8x128xf32>
    tpu.vector_store %arg34[%c0_113, %c384_114], %276 {strides = array<i32>} : memref<8x512xf32, #tpu.memory_space<vmem>>, vector<8x128xf32>,
    %c0_115 = arith.constant 0 : index
    %c0_116 = arith.constant 0 : index
    %278 = vector.load %arg34[%c0_115, %c0_116] : memref<8x512xf32, #tpu.memory_space<vmem>>, vector<8x512xf32>
    %279 = arith.truncf %278 : vector<8x512xf32> to vector<8x512xbf16>
    %c0_117 = arith.constant 0 : index
    %c0_118 = arith.constant 0 : index
    %280 = vector.load %arg22[%c0_117, %c0_118] : memref<512x32xbf16, #tpu.memory_space<vmem>>, vector<512x32xbf16>
    %cst_119 = arith.constant dense<0.000000e+00> : vector<8x32xf32>
    %281 = tpu.matmul %279, %280, %cst_119 {dimension_numbers = #tpu.dot_dimension_numbers<[1], [0], [0], [1], [0, 0, 1, 1], [], []>} : vector<8x512xbf16>, vector<512x32xbf16>, vector<8x32xf32> -> vector<8x32xf32>
    %c0_120 = arith.constant 0 : index
    %c0_121 = arith.constant 0 : index
    %282 = vector.load %arg23[%c0_120, %c0_121] : memref<1x32xf32, #tpu.memory_space<vmem>>, vector<1x32xf32>
    %283 = vector.broadcast %282 : vector<1x32xf32> to vector<8x32xf32>
    %284 = arith.addf %281, %283 : vector<8x32xf32>
    %285 = arith.addf %284, %162 : vector<8x32xf32>
    %c0_122 = arith.constant 0 : index
    %c0_123 = arith.constant 0 : index
    %286 = vector.load %arg24[%c0_122, %c0_123] : memref<1x32xf32, #tpu.memory_space<vmem>>, vector<1x32xf32>
    %c0_124 = arith.constant 0 : index
    %c0_125 = arith.constant 0 : index
    %287 = vector.load %arg25[%c0_124, %c0_125] : memref<1x32xf32, #tpu.memory_space<vmem>>, vector<1x32xf32>
    %cst_126 = arith.constant dense<0.000000e+00> : vector<8xf32>
    %288 = vector.multi_reduction <add>, %285, %cst_126 [1] : vector<8x32xf32> to vector<8xf32>
    %289 = vector.shape_cast %288 : vector<8xf32> to vector<8x1xf32>
    %cst_127 = arith.constant 3.200000e+01 : f32
    %290 = vector.broadcast %cst_127 : f32 to vector<8x1xf32>
    %291 = arith.divf %289, %290 : vector<8x1xf32>
    %292 = vector.broadcast %291 : vector<8x1xf32> to vector<8x32xf32>
    %293 = arith.subf %285, %292 : vector<8x32xf32>
    %294 = arith.mulf %293, %293 : vector<8x32xf32>
    %cst_128 = arith.constant dense<0.000000e+00> : vector<8xf32>
    %295 = vector.multi_reduction <add>, %294, %cst_128 [1] : vector<8x32xf32> to vector<8xf32>
    %296 = vector.shape_cast %295 : vector<8xf32> to vector<8x1xf32>
    %cst_129 = arith.constant 3.200000e+01 : f32
    %297 = vector.broadcast %cst_129 : f32 to vector<8x1xf32>
    %298 = arith.divf %296, %297 : vector<8x1xf32>
    %299 = vector.broadcast %291 : vector<8x1xf32> to vector<8x32xf32>
    %300 = arith.subf %285, %299 : vector<8x32xf32>
    %cst_130 = arith.constant 9.99999997E-7 : f32
    %301 = vector.broadcast %cst_130 : f32 to vector<8x1xf32>
    %302 = arith.addf %298, %301 : vector<8x1xf32>
    %303 = math.rsqrt %302 : vector<8x1xf32>
    %304 = vector.broadcast %303 : vector<8x1xf32> to vector<8x32xf32>
    %305 = arith.mulf %300, %304 : vector<8x32xf32>
    %306 = vector.broadcast %286 : vector<1x32xf32> to vector<8x32xf32>
    %307 = arith.mulf %305, %306 : vector<8x32xf32>
    %308 = vector.broadcast %287 : vector<1x32xf32> to vector<8x32xf32>
    %309 = arith.addf %307, %308 : vector<8x32xf32>
    %c0_131 = arith.constant 0 : index
    %c0_132 = arith.constant 0 : index
    %310 = vector.load %arg26[%c0_131, %c0_132] : memref<1x32xf32, #tpu.memory_space<vmem>>, vector<1x32xf32>
    %c0_133 = arith.constant 0 : index
    %c0_134 = arith.constant 0 : index
    %311 = vector.load %arg27[%c0_133, %c0_134] : memref<1x32xf32, #tpu.memory_space<vmem>>, vector<1x32xf32>
    %cst_135 = arith.constant dense<0.000000e+00> : vector<8xf32>
    %312 = vector.multi_reduction <add>, %309, %cst_135 [1] : vector<8x32xf32> to vector<8xf32>
    %313 = vector.shape_cast %312 : vector<8xf32> to vector<8x1xf32>
    %cst_136 = arith.constant 3.200000e+01 : f32
    %314 = vector.broadcast %cst_136 : f32 to vector<8x1xf32>
    %315 = arith.divf %313, %314 : vector<8x1xf32>
    %316 = vector.broadcast %315 : vector<8x1xf32> to vector<8x32xf32>
    %317 = arith.subf %309, %316 : vector<8x32xf32>
    %318 = arith.mulf %317, %317 : vector<8x32xf32>
    %cst_137 = arith.constant dense<0.000000e+00> : vector<8xf32>
    %319 = vector.multi_reduction <add>, %318, %cst_137 [1] : vector<8x32xf32> to vector<8xf32>
    %320 = vector.shape_cast %319 : vector<8xf32> to vector<8x1xf32>
    %cst_138 = arith.constant 3.200000e+01 : f32
    %321 = vector.broadcast %cst_138 : f32 to vector<8x1xf32>
    %322 = arith.divf %320, %321 : vector<8x1xf32>
    %323 = vector.broadcast %315 : vector<8x1xf32> to vector<8x32xf32>
    %324 = arith.subf %309, %323 : vector<8x32xf32>
    %cst_139 = arith.constant 9.99999997E-7 : f32
    %325 = vector.broadcast %cst_139 : f32 to vector<8x1xf32>
    %326 = arith.addf %322, %325 : vector<8x1xf32>
    %327 = math.rsqrt %326 : vector<8x1xf32>
    %328 = vector.broadcast %327 : vector<8x1xf32> to vector<8x32xf32>
    %329 = arith.mulf %324, %328 : vector<8x32xf32>
    %330 = vector.broadcast %310 : vector<1x32xf32> to vector<8x32xf32>
    %331 = arith.mulf %329, %330 : vector<8x32xf32>
    %332 = vector.broadcast %311 : vector<1x32xf32> to vector<8x32xf32>
    %333 = arith.addf %331, %332 : vector<8x32xf32>
    %334 = arith.truncf %333 : vector<8x32xf32> to vector<8x32xbf16>
    %c0_140 = arith.constant 0 : index
    %c0_141 = arith.constant 0 : index
    %335 = vector.load %arg28[%c0_140, %c0_141] : memref<32x64xbf16, #tpu.memory_space<vmem>>, vector<32x64xbf16>
    %cst_142 = arith.constant dense<0.000000e+00> : vector<8x64xf32>
    %336 = tpu.matmul %334, %335, %cst_142 {dimension_numbers = #tpu.dot_dimension_numbers<[1], [0], [0], [1], [0, 0, 1, 1], [], []>} : vector<8x32xbf16>, vector<32x64xbf16>, vector<8x64xf32> -> vector<8x64xf32>
    %c0_143 = arith.constant 0 : index
    %c0_144 = arith.constant 0 : index
    %337 = vector.load %arg29[%c0_143, %c0_144] : memref<1x64xf32, #tpu.memory_space<vmem>>, vector<1x64xf32>
    %338 = vector.broadcast %337 : vector<1x64xf32> to vector<8x64xf32>
    %339 = arith.addf %336, %338 : vector<8x64xf32>
    %cst_145 = arith.constant 0.000000e+00 : f32
    %340 = vector.broadcast %cst_145 : f32 to vector<8x64xf32>
    %341 = arith.maximumf %339, %340 : vector<8x64xf32>
    %342 = arith.truncf %341 : vector<8x64xf32> to vector<8x64xbf16>
    %c0_146 = arith.constant 0 : index
    %c0_147 = arith.constant 0 : index
    %343 = vector.load %arg30[%c0_146, %c0_147] : memref<64x32xbf16, #tpu.memory_space<vmem>>, vector<64x32xbf16>
    %cst_148 = arith.constant dense<0.000000e+00> : vector<8x32xf32>
    %344 = tpu.matmul %342, %343, %cst_148 {dimension_numbers = #tpu.dot_dimension_numbers<[1], [0], [0], [1], [0, 0, 1, 1], [], []>} : vector<8x64xbf16>, vector<64x32xbf16>, vector<8x32xf32> -> vector<8x32xf32>
    %c0_149 = arith.constant 0 : index
    %c0_150 = arith.constant 0 : index
    %345 = vector.load %arg31[%c0_149, %c0_150] : memref<1x32xf32, #tpu.memory_space<vmem>>, vector<1x32xf32>
    %346 = vector.broadcast %345 : vector<1x32xf32> to vector<8x32xf32>
    %347 = arith.addf %344, %346 : vector<8x32xf32>
    %348 = arith.addf %347, %309 : vector<8x32xf32>
    %c0_151 = arith.constant 0 : index
    %c0_152 = arith.constant 0 : index
    %c0_153 = arith.constant 0 : index
    %349 = vector.load %arg32[%c0_151, %c0_152, %c0_153] : memref<1x8x32xf32, #tpu.memory_space<vmem>>, vector<1x8x32xf32>
    %350 = vector.shape_cast %349 : vector<1x8x32xf32> to vector<8x32xf32>
    %351 = vector.shape_cast %348 : vector<8x32xf32> to vector<1x8x32xf32>
    tpu.vector_store %arg32[%c0_151, %c0_152, %c0_153], %351 {strides = array<i32>} : memref<1x8x32xf32, #tpu.memory_space<vmem>>, vector<1x8x32xf32>,
    %c0_154 = arith.constant 0 : index
    %c0_155 = arith.constant 0 : index
    %c0_156 = arith.constant 0 : index
    %352 = vector.load %arg33[%c0_154, %c0_155, %c0_156] : memref<1x8x16xf32, #tpu.memory_space<vmem>>, vector<1x8x16xf32>
    %353 = vector.shape_cast %352 : vector<1x8x16xf32> to vector<8x16xf32>
    %354 = vector.shape_cast %202 : vector<8x16xf32> to vector<1x8x16xf32>
    tpu.vector_store %arg33[%c0_154, %c0_155, %c0_156], %354 {strides = array<i32>} : memref<1x8x16xf32, #tpu.memory_space<vmem>>, vector<1x8x16xf32>,
    return
  }
  func.func @transform_0(%arg0: i32, %arg1: i32) -> (i32, i32, i32) {
    %c0_i32 = arith.constant 0 : i32
    %c0_i32_0 = arith.constant 0 : i32
    %c0_i32_1 = arith.constant 0 : i32
    return %arg0, %c0_i32, %c0_i32_0 : i32, i32, i32
  }
  func.func @transform_1(%arg0: i32, %arg1: i32) -> (i32, i32, i32) {
    %c0_i32 = arith.constant 0 : i32
    %c0_i32_0 = arith.constant 0 : i32
    %c0_i32_1 = arith.constant 0 : i32
    return %arg0, %c0_i32, %c0_i32_0 : i32, i32, i32
  }
  func.func @transform_2(%arg0: i32, %arg1: i32) -> (i32, i32, i32) {
    %c0_i32 = arith.constant 0 : i32
    %c0_i32_0 = arith.constant 0 : i32
    %c0_i32_1 = arith.constant 0 : i32
    return %arg0, %c0_i32, %c0_i32_0 : i32, i32, i32
  }
  func.func @transform_3(%arg0: i32, %arg1: i32) -> (i32, i32, i32) {
    %c0_i32 = arith.constant 0 : i32
    %c0_i32_0 = arith.constant 0 : i32
    %c0_i32_1 = arith.constant 0 : i32
    return %arg0, %c0_i32, %c0_i32_0 : i32, i32, i32
  }
  func.func @transform_4(%arg0: i32, %arg1: i32) -> (i32, i32) {
    %c0_i32 = arith.constant 0 : i32
    %c0_i32_0 = arith.constant 0 : i32
    %c0_i32_1 = arith.constant 0 : i32
    return %c0_i32, %c0_i32_0 : i32, i32
  }
  func.func @transform_5(%arg0: i32, %arg1: i32) -> (i32, i32) {
    %c0_i32 = arith.constant 0 : i32
    %c0_i32_0 = arith.constant 0 : i32
    %c0_i32_1 = arith.constant 0 : i32
    return %c0_i32, %c0_i32_0 : i32, i32
  }
  func.func @transform_6(%arg0: i32, %arg1: i32) -> (i32, i32) {
    %c0_i32 = arith.constant 0 : i32
    %c0_i32_0 = arith.constant 0 : i32
    %c0_i32_1 = arith.constant 0 : i32
    return %c0_i32, %c0_i32_0 : i32, i32
  }
  func.func @transform_7(%arg0: i32, %arg1: i32) -> (i32, i32) {
    %c0_i32 = arith.constant 0 : i32
    %c0_i32_0 = arith.constant 0 : i32
    %c0_i32_1 = arith.constant 0 : i32
    return %c0_i32, %c0_i32_0 : i32, i32
  }
  func.func @transform_8(%arg0: i32, %arg1: i32) -> (i32, i32) {
    %c0_i32 = arith.constant 0 : i32
    %c0_i32_0 = arith.constant 0 : i32
    %c0_i32_1 = arith.constant 0 : i32
    return %c0_i32, %c0_i32_0 : i32, i32
  }
  func.func @transform_9(%arg0: i32, %arg1: i32) -> (i32, i32) {
    %c0_i32 = arith.constant 0 : i32
    %c0_i32_0 = arith.constant 0 : i32
    %c0_i32_1 = arith.constant 0 : i32
    return %c0_i32, %c0_i32_0 : i32, i32
  }
  func.func @transform_10(%arg0: i32, %arg1: i32) -> (i32, i32) {
    %c0_i32 = arith.constant 0 : i32
    %c0_i32_0 = arith.constant 0 : i32
    %c0_i32_1 = arith.constant 0 : i32
    return %c0_i32, %c0_i32_0 : i32, i32
  }
  func.func @transform_11(%arg0: i32, %arg1: i32) -> (i32, i32) {
    %c0_i32 = arith.constant 0 : i32
    %c0_i32_0 = arith.constant 0 : i32
    %c0_i32_1 = arith.constant 0 : i32
    return %c0_i32, %c0_i32_0 : i32, i32
  }
  func.func @transform_12(%arg0: i32, %arg1: i32) -> (i32, i32) {
    %c0_i32 = arith.constant 0 : i32
    %c0_i32_0 = arith.constant 0 : i32
    %c0_i32_1 = arith.constant 0 : i32
    return %c0_i32, %c0_i32_0 : i32, i32
  }
  func.func @transform_13(%arg0: i32, %arg1: i32) -> (i32, i32) {
    %c0_i32 = arith.constant 0 : i32
    %c0_i32_0 = arith.constant 0 : i32
    %c0_i32_1 = arith.constant 0 : i32
    return %c0_i32, %c0_i32_0 : i32, i32
  }
  func.func @transform_14(%arg0: i32, %arg1: i32) -> (i32, i32) {
    %c0_i32 = arith.constant 0 : i32
    %c0_i32_0 = arith.constant 0 : i32
    %c0_i32_1 = arith.constant 0 : i32
    return %c0_i32, %c0_i32_0 : i32, i32
  }
  func.func @transform_15(%arg0: i32, %arg1: i32) -> (i32, i32) {
    %c0_i32 = arith.constant 0 : i32
    %c0_i32_0 = arith.constant 0 : i32
    %c0_i32_1 = arith.constant 0 : i32
    return %c0_i32, %c0_i32_0 : i32, i32
  }
  func.func @transform_16(%arg0: i32, %arg1: i32) -> (i32, i32) {
    %c0_i32 = arith.constant 0 : i32
    %c0_i32_0 = arith.constant 0 : i32
    %c0_i32_1 = arith.constant 0 : i32
    return %c0_i32, %c0_i32_0 : i32, i32
  }
  func.func @transform_17(%arg0: i32, %arg1: i32) -> (i32, i32) {
    %c0_i32 = arith.constant 0 : i32
    %c0_i32_0 = arith.constant 0 : i32
    %c0_i32_1 = arith.constant 0 : i32
    return %c0_i32, %c0_i32_0 : i32, i32
  }
  func.func @transform_18(%arg0: i32, %arg1: i32) -> (i32, i32) {
    %c0_i32 = arith.constant 0 : i32
    %c0_i32_0 = arith.constant 0 : i32
    %c0_i32_1 = arith.constant 0 : i32
    return %c0_i32, %c0_i32_0 : i32, i32
  }
  func.func @transform_19(%arg0: i32, %arg1: i32) -> (i32, i32) {
    %c0_i32 = arith.constant 0 : i32
    %c0_i32_0 = arith.constant 0 : i32
    %c0_i32_1 = arith.constant 0 : i32
    return %c0_i32, %c0_i32_0 : i32, i32
  }
  func.func @transform_20(%arg0: i32, %arg1: i32) -> (i32, i32) {
    %c0_i32 = arith.constant 0 : i32
    %c0_i32_0 = arith.constant 0 : i32
    %c0_i32_1 = arith.constant 0 : i32
    return %c0_i32, %c0_i32_0 : i32, i32
  }
  func.func @transform_21(%arg0: i32, %arg1: i32) -> (i32, i32) {
    %c0_i32 = arith.constant 0 : i32
    %c0_i32_0 = arith.constant 0 : i32
    %c0_i32_1 = arith.constant 0 : i32
    return %c0_i32, %c0_i32_0 : i32, i32
  }
  func.func @transform_22(%arg0: i32, %arg1: i32) -> (i32, i32) {
    %c0_i32 = arith.constant 0 : i32
    %c0_i32_0 = arith.constant 0 : i32
    %c0_i32_1 = arith.constant 0 : i32
    return %c0_i32, %c0_i32_0 : i32, i32
  }
  func.func @transform_23(%arg0: i32, %arg1: i32) -> (i32, i32) {
    %c0_i32 = arith.constant 0 : i32
    %c0_i32_0 = arith.constant 0 : i32
    %c0_i32_1 = arith.constant 0 : i32
    return %c0_i32, %c0_i32_0 : i32, i32
  }
  func.func @transform_24(%arg0: i32, %arg1: i32) -> (i32, i32) {
    %c0_i32 = arith.constant 0 : i32
    %c0_i32_0 = arith.constant 0 : i32
    %c0_i32_1 = arith.constant 0 : i32
    return %c0_i32, %c0_i32_0 : i32, i32
  }
  func.func @transform_25(%arg0: i32, %arg1: i32) -> (i32, i32) {
    %c0_i32 = arith.constant 0 : i32
    %c0_i32_0 = arith.constant 0 : i32
    %c0_i32_1 = arith.constant 0 : i32
    return %c0_i32, %c0_i32_0 : i32, i32
  }
  func.func @transform_26(%arg0: i32, %arg1: i32) -> (i32, i32) {
    %c0_i32 = arith.constant 0 : i32
    %c0_i32_0 = arith.constant 0 : i32
    %c0_i32_1 = arith.constant 0 : i32
    return %c0_i32, %c0_i32_0 : i32, i32
  }
  func.func @transform_27(%arg0: i32, %arg1: i32) -> (i32, i32) {
    %c0_i32 = arith.constant 0 : i32
    %c0_i32_0 = arith.constant 0 : i32
    %c0_i32_1 = arith.constant 0 : i32
    return %c0_i32, %c0_i32_0 : i32, i32
  }
  func.func @transform_28(%arg0: i32, %arg1: i32) -> (i32, i32) {
    %c0_i32 = arith.constant 0 : i32
    %c0_i32_0 = arith.constant 0 : i32
    %c0_i32_1 = arith.constant 0 : i32
    return %c0_i32, %c0_i32_0 : i32, i32
  }
  func.func @transform_29(%arg0: i32, %arg1: i32) -> (i32, i32) {
    %c0_i32 = arith.constant 0 : i32
    %c0_i32_0 = arith.constant 0 : i32
    %c0_i32_1 = arith.constant 0 : i32
    return %c0_i32, %c0_i32_0 : i32, i32
  }
  func.func @transform_30(%arg0: i32, %arg1: i32) -> (i32, i32, i32) {
    %c0_i32 = arith.constant 0 : i32
    %c0_i32_0 = arith.constant 0 : i32
    return %arg0, %arg1, %c0_i32 : i32, i32, i32
  }
  func.func @transform_31(%arg0: i32, %arg1: i32) -> (i32, i32, i32) {
    %c0_i32 = arith.constant 0 : i32
    %c0_i32_0 = arith.constant 0 : i32
    return %arg0, %arg1, %c0_i32 : i32, i32, i32
  }
}

</mosaic_0001>

<llo_original>
// kernel: tpu_custom_call.1
$region0: #{tpu_custom_call.1}
  #allocation0 [shape = 'u32[]', space=smem, size = 0x4, offset = 0x4, fixed_abs, tag = 'smem constant byte address 0x4 - core index']
  #allocation1 [shape = 'u32[144,128]{1,0:T(1,128)}', space=vmem, size = 0x12000, scoped, tag = 'internal scratch']
  #allocation2 [shape = 'f32[8,512]{1,0:T(8,128)}', space=vmem, size = 0x4000, scoped, tag = 'scratch operand']
  %s0 = inlined_call_operand.smem [shape: u32[32], index: -1, kind: input, shape index: {}]
  %s1 = sld [smem:[%s0]]
  %s2 = scalar_lea.smem %s0, 1
  %s3 = sld [smem:[%s2]]
  %s4 = scalar_lea.smem %s0, 2
  %s5 = sld [smem:[%s4]]
  %s6 = scalar_lea.smem %s0, 3
  %s7 = sld [smem:[%s6]]
  %s8 = scalar_lea.smem %s0, 4
  %s9 = sld [smem:[%s8]]
  %s10 = scalar_lea.smem %s0, 5
  %s11 = sld [smem:[%s10]]
  %s12 = scalar_lea.smem %s0, 6
  %s13 = sld [smem:[%s12]]
  %s14 = scalar_lea.smem %s0, 7
  %s15 = sld [smem:[%s14]]
  %s16 = scalar_lea.smem %s0, 8
  %s17 = sld [smem:[%s16]]
  %s18 = scalar_lea.smem %s0, 9
  %s19 = sld [smem:[%s18]]
  %s20 = scalar_lea.smem %s0, 10
  %s21 = sld [smem:[%s20]]
  %s22 = scalar_lea.smem %s0, 11
  %s23 = sld [smem:[%s22]]
  %s24 = scalar_lea.smem %s0, 12
  %s25 = sld [smem:[%s24]]
  %s26 = scalar_lea.smem %s0, 13
  %s27 = sld [smem:[%s26]]
  %s28 = scalar_lea.smem %s0, 14
  %s29 = sld [smem:[%s28]]
  %s30 = scalar_lea.smem %s0, 15
  %s31 = sld [smem:[%s30]]
  %s32 = scalar_lea.smem %s0, 16
  %s33 = sld [smem:[%s32]]
  %s34 = scalar_lea.smem %s0, 17
  %s35 = sld [smem:[%s34]]
  %s36 = scalar_lea.smem %s0, 18
  %s37 = sld [smem:[%s36]]
  %s38 = scalar_lea.smem %s0, 19
  %s39 = sld [smem:[%s38]]
  %s40 = scalar_lea.smem %s0, 20
  %s41 = sld [smem:[%s40]]
  %s42 = scalar_lea.smem %s0, 21
  %s43 = sld [smem:[%s42]]
  %s44 = scalar_lea.smem %s0, 22
  %s45 = sld [smem:[%s44]]
  %s46 = scalar_lea.smem %s0, 23
  %s47 = sld [smem:[%s46]]
  %s48 = scalar_lea.smem %s0, 24
  %s49 = sld [smem:[%s48]]
  %s50 = scalar_lea.smem %s0, 25
  %s51 = sld [smem:[%s50]]
  %s52 = scalar_lea.smem %s0, 26
  %s53 = sld [smem:[%s52]]
  %s54 = scalar_lea.smem %s0, 27
  %s55 = sld [smem:[%s54]]
  %s56 = scalar_lea.smem %s0, 28
  %s57 = sld [smem:[%s56]]
  %s58 = scalar_lea.smem %s0, 29
  %s59 = sld [smem:[%s58]]
  %s60 = scalar_lea.smem %s0, 30
  %s61 = sld [smem:[%s60]]
  %s62 = scalar_lea.smem %s0, 31
  %s63 = sld [smem:[%s62]]
  %64 = xla_tuple %s61, %s63
  %s65 = sld [smem:[#allocation0]]
  $region161: #{tpu_custom_call.1} parent=0
    _
  %s67 = ssub.s32 1, %s65
  %s68 = scalar_select 0, %s67, %s65
  $region1: #{tpu_custom_call.1} parent=0
    #allocation3 [shape = 'u8[8192]{0}', space=vmem, size = 0x2000, scoped, tag = 'output window, operand 0']
    #allocation4 [shape = 's32[2]{0}', space=sflag, size = 0x8, scoped, tag = 'scoped memory for tpu_custom_call.1']
    #allocation5 [shape = 'u8[8192]{0}', space=vmem, size = 0x2000, scoped, tag = 'output window, operand 1']
    #allocation6 [shape = 's32[2]{0}', space=sflag, size = 0x8, scoped, tag = 'scoped memory for tpu_custom_call.1']
    %69 = vsyncpa [#allocation4], 0
    %s70 = scalar_lea.sflag [#allocation4], 1
    %71 = vsyncpa %s70, 0
    %72 = vsyncpa [#allocation6], 0
    %s73 = scalar_lea.sflag [#allocation6], 1
    %74 = vsyncpa %s73, 0
    loop: start=0, step=1, limit=4
    $region2: #{tpu_custom_call.1} parent=1 // loop_pre_header
      _
    $region3: #{tpu_custom_call.1} parent=1 // loop_header
      %s76 = sphi 0, %s80
      %p77 = scmp.ge.s32.totalorder %s76, 4
      %s83 = sphi 0, %s95
      %s84 = sphi 0, %s91
      %s85 = sphi 0, %s83
      %s86 = sphi 0, %s84
      %s87 = sphi 0, %s85
      %s88 = sphi 0, %s86
      %s98 = sphi 0, %s100
      %s101 = sphi 0, %s98
      %s102 = sphi 0, %s101
      %s118 = sphi 0, %s102
      %s124 = sphi 0, %s126
      %s127 = sphi 0, %s124
      %s128 = sphi 0, %s127
      %s144 = sphi 0, %s128
      %s150 = sphi 0, %s152
      %s153 = sphi 0, %s150
      %s154 = sphi 0, %s153
      %s170 = sphi 0, %s154
      %s176 = sphi 0, %s178
      %s179 = sphi 0, %s176
      %s180 = sphi 0, %s179
      %s196 = sphi 0, %s180
      %s200 = sphi 0, %s200
      %s202 = sphi 0, %s200
      %s203 = sphi 0, %s202
      %s217 = sphi 0, %s203
      %s221 = sphi 0, %s221
      %s223 = sphi 0, %s221
      %s224 = sphi 0, %s223
      %s238 = sphi 0, %s224
      %s242 = sphi 0, %s242
      %s244 = sphi 0, %s242
      %s245 = sphi 0, %s244
      %s259 = sphi 0, %s245
      %s263 = sphi 0, %s263
      %s265 = sphi 0, %s263
      %s266 = sphi 0, %s265
      %s280 = sphi 0, %s266
      %s284 = sphi 0, %s284
      %s286 = sphi 0, %s284
      %s287 = sphi 0, %s286
      %s301 = sphi 0, %s287
      %s305 = sphi 0, %s305
      %s307 = sphi 0, %s305
      %s308 = sphi 0, %s307
      %s322 = sphi 0, %s308
      %s326 = sphi 0, %s326
      %s328 = sphi 0, %s326
      %s329 = sphi 0, %s328
      %s343 = sphi 0, %s329
      %s347 = sphi 0, %s347
      %s349 = sphi 0, %s347
      %s350 = sphi 0, %s349
      %s364 = sphi 0, %s350
      %s368 = sphi 0, %s368
      %s370 = sphi 0, %s368
      %s371 = sphi 0, %s370
      %s385 = sphi 0, %s371
      %s389 = sphi 0, %s389
      %s391 = sphi 0, %s389
      %s392 = sphi 0, %s391
      %s406 = sphi 0, %s392
      %s410 = sphi 0, %s410
      %s412 = sphi 0, %s410
      %s413 = sphi 0, %s412
      %s427 = sphi 0, %s413
      %s431 = sphi 0, %s431
      %s433 = sphi 0, %s431
      %s434 = sphi 0, %s433
      %s448 = sphi 0, %s434
      %s452 = sphi 0, %s452
      %s454 = sphi 0, %s452
      %s455 = sphi 0, %s454
      %s469 = sphi 0, %s455
      %s473 = sphi 0, %s473
      %s475 = sphi 0, %s473
      %s476 = sphi 0, %s475
      %s490 = sphi 0, %s476
      %s494 = sphi 0, %s494
      %s496 = sphi 0, %s494
      %s497 = sphi 0, %s496
      %s511 = sphi 0, %s497
      %s515 = sphi 0, %s515
      %s517 = sphi 0, %s515
      %s518 = sphi 0, %s517
      %s532 = sphi 0, %s518
      %s536 = sphi 0, %s536
      %s538 = sphi 0, %s536
      %s539 = sphi 0, %s538
      %s553 = sphi 0, %s539
      %s557 = sphi 0, %s557
      %s559 = sphi 0, %s557
      %s560 = sphi 0, %s559
      %s574 = sphi 0, %s560
      %s578 = sphi 0, %s578
      %s580 = sphi 0, %s578
      %s581 = sphi 0, %s580
      %s595 = sphi 0, %s581
      %s599 = sphi 0, %s599
      %s601 = sphi 0, %s599
      %s602 = sphi 0, %s601
      %s616 = sphi 0, %s602
      %s620 = sphi 0, %s620
      %s622 = sphi 0, %s620
      %s623 = sphi 0, %s622
      %s637 = sphi 0, %s623
      %s641 = sphi 0, %s641
      %s643 = sphi 0, %s641
      %s644 = sphi 0, %s643
      %s658 = sphi 0, %s644
      %s662 = sphi 0, %s662
      %s664 = sphi 0, %s662
      %s665 = sphi 0, %s664
      %s679 = sphi 0, %s665
      %s683 = sphi 0, %s683
      %s685 = sphi 0, %s683
      %s686 = sphi 0, %s685
      %s700 = sphi 0, %s686
      %s704 = sphi 0, %s704
      %s706 = sphi 0, %s704
      %s707 = sphi 0, %s706
      %s721 = sphi 0, %s707
      %s725 = sphi 0, %s725
      %s727 = sphi 0, %s725
      %s728 = sphi 0, %s727
      %s742 = sphi 0, %s728
      %s750 = sphi 0, %s752
      %s753 = sphi 0, %s750
      %s754 = sphi 0, %s753
      %s770 = sphi 0, %s754
      %s778 = sphi 0, %s780
      %s781 = sphi 0, %s778
      %s782 = sphi 0, %s781
      %s798 = sphi 0, %s782
    $region4: #{tpu_custom_call.1} parent=1 // loop_header_branch
      %79 = sbr.rel (%p77) target = $region8
    $region5: #{tpu_custom_call.1} parent=1 // loop_body
      %s81 = ssub.s32 %s76, 1
      %s82 = ssub.s32 %s76, 2
      %s89 = sadd.s32 1, %s84
      %p90 = scmp.ge.s32.totalorder %s89, 1
      %s91 = scalar_select %p90, 0, %s89
      %s92 = sadd.s32 1, %s83
      %s93 = scalar_select %p90, %s92, %s83
      %p94 = scmp.ge.s32.totalorder %s93, 2
      %s95 = scalar_select %p94, 0, %s93
      %s96 = ssub.s32 %s83, %s95
      %p97 = scmp.eq.s32.totalorder %s96, 0
      %s99 = sadd.s32 %s98, 1
      %s100 = scalar_select %p97, %s98, %s99
      %p103 = pneg %p97
      %p104 = scmp.eq.s32.totalorder %s76, 1
      %p105 = por %p103, %p104
      %p106 = scmp.ne.s32.totalorder %s98, %s101
      %p107 = scmp.eq.s32.totalorder %s76, 0
      %p108 = por %p106, %p107
      %p109 = scmp.ne.s32.totalorder %s98, %s101
      %p110 = scmp.eq.s32.totalorder %s81, 1
      %p111 = por %p109, %p110
      %p112 = scmp.ne.s32.totalorder %s101, %s102
      %p113 = scmp.eq.s32.totalorder %s81, 0
      %p114 = por %p112, %p113
      %p115 = scmp.ne.s32.totalorder %s101, %s102
      %p116 = scmp.eq.s32.totalorder %s82, 1
      %p117 = por %p115, %p116
      %p119 = scmp.ne.s32.totalorder %s102, %s118
      %p120 = scmp.eq.s32.totalorder %s82, 0
      %p121 = por %p119, %p120
      %s122 = ssub.s32 %s83, %s95
      %p123 = scmp.eq.s32.totalorder %s122, 0
      %s125 = sadd.s32 %s124, 1
      %s126 = scalar_select %p123, %s124, %s125
      %p129 = pneg %p123
      %p130 = scmp.eq.s32.totalorder %s76, 1
      %p131 = por %p129, %p130
      %p132 = scmp.ne.s32.totalorder %s124, %s127
      %p133 = scmp.eq.s32.totalorder %s76, 0
      %p134 = por %p132, %p133
      %p135 = scmp.ne.s32.totalorder %s124, %s127
      %p136 = scmp.eq.s32.totalorder %s81, 1
      %p137 = por %p135, %p136
      %p138 = scmp.ne.s32.totalorder %s127, %s128
      %p139 = scmp.eq.s32.totalorder %s81, 0
      %p140 = por %p138, %p139
      %p141 = scmp.ne.s32.totalorder %s127, %s128
      %p142 = scmp.eq.s32.totalorder %s82, 1
      %p143 = por %p141, %p142
      %p145 = scmp.ne.s32.totalorder %s128, %s144
      %p146 = scmp.eq.s32.totalorder %s82, 0
      %p147 = por %p145, %p146
      %s148 = ssub.s32 %s83, %s95
      %p149 = scmp.eq.s32.totalorder %s148, 0
      %s151 = sadd.s32 %s150, 1
      %s152 = scalar_select %p149, %s150, %s151
      %p155 = pneg %p149
      %p156 = scmp.eq.s32.totalorder %s76, 1
      %p157 = por %p155, %p156
      %p158 = scmp.ne.s32.totalorder %s150, %s153
      %p159 = scmp.eq.s32.totalorder %s76, 0
      %p160 = por %p158, %p159
      %p161 = scmp.ne.s32.totalorder %s150, %s153
      %p162 = scmp.eq.s32.totalorder %s81, 1
      %p163 = por %p161, %p162
      %p164 = scmp.ne.s32.totalorder %s153, %s154
      %p165 = scmp.eq.s32.totalorder %s81, 0
      %p166 = por %p164, %p165
      %p167 = scmp.ne.s32.totalorder %s153, %s154
      %p168 = scmp.eq.s32.totalorder %s82, 1
      %p169 = por %p167, %p168
      %p171 = scmp.ne.s32.totalorder %s154, %s170
      %p172 = scmp.eq.s32.totalorder %s82, 0
      %p173 = por %p171, %p172
      %s174 = ssub.s32 %s83, %s95
      %p175 = scmp.eq.s32.totalorder %s174, 0
      %s177 = sadd.s32 %s176, 1
      %s178 = scalar_select %p175, %s176, %s177
      %p181 = pneg %p175
      %p182 = scmp.eq.s32.totalorder %s76, 1
      %p183 = por %p181, %p182
      %p184 = scmp.ne.s32.totalorder %s176, %s179
      %p185 = scmp.eq.s32.totalorder %s76, 0
      %p186 = por %p184, %p185
      %p187 = scmp.ne.s32.totalorder %s176, %s179
      %p188 = scmp.eq.s32.totalorder %s81, 1
      %p189 = por %p187, %p188
      %p190 = scmp.ne.s32.totalorder %s179, %s180
      %p191 = scmp.eq.s32.totalorder %s81, 0
      %p192 = por %p190, %p191
      %p193 = scmp.ne.s32.totalorder %s179, %s180
      %p194 = scmp.eq.s32.totalorder %s82, 1
      %p195 = por %p193, %p194
      %p197 = scmp.ne.s32.totalorder %s180, %s196
      %p198 = scmp.eq.s32.totalorder %s82, 0
      %p199 = por %p197, %p198
      %s201 = sadd.s32 %s200, 1
      %p204 = scmp.eq.s32.totalorder %s76, 1
      %p205 = scmp.ne.s32.totalorder %s200, %s202
      %p206 = scmp.eq.s32.totalorder %s76, 0
      %p207 = por %p205, %p206
      %p208 = scmp.ne.s32.totalorder %s200, %s202
      %p209 = scmp.eq.s32.totalorder %s81, 1
      %p210 = por %p208, %p209
      %p211 = scmp.ne.s32.totalorder %s202, %s203
      %p212 = scmp.eq.s32.totalorder %s81, 0
      %p213 = por %p211, %p212
      %p214 = scmp.ne.s32.totalorder %s202, %s203
      %p215 = scmp.eq.s32.totalorder %s82, 1
      %p216 = por %p214, %p215
      %p218 = scmp.ne.s32.totalorder %s203, %s217
      %p219 = scmp.eq.s32.totalorder %s82, 0
      %p220 = por %p218, %p219
      %s222 = sadd.s32 %s221, 1
      %p225 = scmp.eq.s32.totalorder %s76, 1
      %p226 = scmp.ne.s32.totalorder %s221, %s223
      %p227 = scmp.eq.s32.totalorder %s76, 0
      %p228 = por %p226, %p227
      %p229 = scmp.ne.s32.totalorder %s221, %s223
      %p230 = scmp.eq.s32.totalorder %s81, 1
      %p231 = por %p229, %p230
      %p232 = scmp.ne.s32.totalorder %s223, %s224
      %p233 = scmp.eq.s32.totalorder %s81, 0
      %p234 = por %p232, %p233
      %p235 = scmp.ne.s32.totalorder %s223, %s224
      %p236 = scmp.eq.s32.totalorder %s82, 1
      %p237 = por %p235, %p236
      %p239 = scmp.ne.s32.totalorder %s224, %s238
      %p240 = scmp.eq.s32.totalorder %s82, 0
      %p241 = por %p239, %p240
      %s243 = sadd.s32 %s242, 1
      %p246 = scmp.eq.s32.totalorder %s76, 1
      %p247 = scmp.ne.s32.totalorder %s242, %s244
      %p248 = scmp.eq.s32.totalorder %s76, 0
      %p249 = por %p247, %p248
      %p250 = scmp.ne.s32.totalorder %s242, %s244
      %p251 = scmp.eq.s32.totalorder %s81, 1
      %p252 = por %p250, %p251
      %p253 = scmp.ne.s32.totalorder %s244, %s245
      %p254 = scmp.eq.s32.totalorder %s81, 0
      %p255 = por %p253, %p254
      %p256 = scmp.ne.s32.totalorder %s244, %s245
      %p257 = scmp.eq.s32.totalorder %s82, 1
      %p258 = por %p256, %p257
      %p260 = scmp.ne.s32.totalorder %s245, %s259
      %p261 = scmp.eq.s32.totalorder %s82, 0
      %p262 = por %p260, %p261
      %s264 = sadd.s32 %s263, 1
      %p267 = scmp.eq.s32.totalorder %s76, 1
      %p268 = scmp.ne.s32.totalorder %s263, %s265
      %p269 = scmp.eq.s32.totalorder %s76, 0
      %p270 = por %p268, %p269
      %p271 = scmp.ne.s32.totalorder %s263, %s265
      %p272 = scmp.eq.s32.totalorder %s81, 1
      %p273 = por %p271, %p272
      %p274 = scmp.ne.s32.totalorder %s265, %s266
      %p275 = scmp.eq.s32.totalorder %s81, 0
      %p276 = por %p274, %p275
      %p277 = scmp.ne.s32.totalorder %s265, %s266
      %p278 = scmp.eq.s32.totalorder %s82, 1
      %p279 = por %p277, %p278
      %p281 = scmp.ne.s32.totalorder %s266, %s280
      %p282 = scmp.eq.s32.totalorder %s82, 0
      %p283 = por %p281, %p282
      %s285 = sadd.s32 %s284, 1
      %p288 = scmp.eq.s32.totalorder %s76, 1
      %p289 = scmp.ne.s32.totalorder %s284, %s286
      %p290 = scmp.eq.s32.totalorder %s76, 0
      %p291 = por %p289, %p290
      %p292 = scmp.ne.s32.totalorder %s284, %s286
      %p293 = scmp.eq.s32.totalorder %s81, 1
      %p294 = por %p292, %p293
      %p295 = scmp.ne.s32.totalorder %s286, %s287
      %p296 = scmp.eq.s32.totalorder %s81, 0
      %p297 = por %p295, %p296
      %p298 = scmp.ne.s32.totalorder %s286, %s287
      %p299 = scmp.eq.s32.totalorder %s82, 1
      %p300 = por %p298, %p299
      %p302 = scmp.ne.s32.totalorder %s287, %s301
      %p303 = scmp.eq.s32.totalorder %s82, 0
      %p304 = por %p302, %p303
      %s306 = sadd.s32 %s305, 1
      %p309 = scmp.eq.s32.totalorder %s76, 1
      %p310 = scmp.ne.s32.totalorder %s305, %s307
      %p311 = scmp.eq.s32.totalorder %s76, 0
      %p312 = por %p310, %p311
      %p313 = scmp.ne.s32.totalorder %s305, %s307
      %p314 = scmp.eq.s32.totalorder %s81, 1
      %p315 = por %p313, %p314
      %p316 = scmp.ne.s32.totalorder %s307, %s308
      %p317 = scmp.eq.s32.totalorder %s81, 0
      %p318 = por %p316, %p317
      %p319 = scmp.ne.s32.totalorder %s307, %s308
      %p320 = scmp.eq.s32.totalorder %s82, 1
      %p321 = por %p319, %p320
      %p323 = scmp.ne.s32.totalorder %s308, %s322
      %p324 = scmp.eq.s32.totalorder %s82, 0
      %p325 = por %p323, %p324
      %s327 = sadd.s32 %s326, 1
      %p330 = scmp.eq.s32.totalorder %s76, 1
      %p331 = scmp.ne.s32.totalorder %s326, %s328
      %p332 = scmp.eq.s32.totalorder %s76, 0
      %p333 = por %p331, %p332
      %p334 = scmp.ne.s32.totalorder %s326, %s328
      %p335 = scmp.eq.s32.totalorder %s81, 1
      %p336 = por %p334, %p335
      %p337 = scmp.ne.s32.totalorder %s328, %s329
      %p338 = scmp.eq.s32.totalorder %s81, 0
      %p339 = por %p337, %p338
      %p340 = scmp.ne.s32.totalorder %s328, %s329
      %p341 = scmp.eq.s32.totalorder %s82, 1
      %p342 = por %p340, %p341
      %p344 = scmp.ne.s32.totalorder %s329, %s343
      %p345 = scmp.eq.s32.totalorder %s82, 0
      %p346 = por %p344, %p345
      %s348 = sadd.s32 %s347, 1
      %p351 = scmp.eq.s32.totalorder %s76, 1
      %p352 = scmp.ne.s32.totalorder %s347, %s349
      %p353 = scmp.eq.s32.totalorder %s76, 0
      %p354 = por %p352, %p353
      %p355 = scmp.ne.s32.totalorder %s347, %s349
      %p356 = scmp.eq.s32.totalorder %s81, 1
      %p357 = por %p355, %p356
      %p358 = scmp.ne.s32.totalorder %s349, %s350
      %p359 = scmp.eq.s32.totalorder %s81, 0
      %p360 = por %p358, %p359
      %p361 = scmp.ne.s32.totalorder %s349, %s350
      %p362 = scmp.eq.s32.totalorder %s82, 1
      %p363 = por %p361, %p362
      %p365 = scmp.ne.s32.totalorder %s350, %s364
      %p366 = scmp.eq.s32.totalorder %s82, 0
      %p367 = por %p365, %p366
      %s369 = sadd.s32 %s368, 1
      %p372 = scmp.eq.s32.totalorder %s76, 1
      %p373 = scmp.ne.s32.totalorder %s368, %s370
      %p374 = scmp.eq.s32.totalorder %s76, 0
      %p375 = por %p373, %p374
      %p376 = scmp.ne.s32.totalorder %s368, %s370
      %p377 = scmp.eq.s32.totalorder %s81, 1
      %p378 = por %p376, %p377
      %p379 = scmp.ne.s32.totalorder %s370, %s371
      %p380 = scmp.eq.s32.totalorder %s81, 0
      %p381 = por %p379, %p380
      %p382 = scmp.ne.s32.totalorder %s370, %s371
      %p383 = scmp.eq.s32.totalorder %s82, 1
      %p384 = por %p382, %p383
      %p386 = scmp.ne.s32.totalorder %s371, %s385
      %p387 = scmp.eq.s32.totalorder %s82, 0
      %p388 = por %p386, %p387
      %s390 = sadd.s32 %s389, 1
      %p393 = scmp.eq.s32.totalorder %s76, 1
      %p394 = scmp.ne.s32.totalorder %s389, %s391
      %p395 = scmp.eq.s32.totalorder %s76, 0
      %p396 = por %p394, %p395
      %p397 = scmp.ne.s32.totalorder %s389, %s391
      %p398 = scmp.eq.s32.totalorder %s81, 1
      %p399 = por %p397, %p398
      %p400 = scmp.ne.s32.totalorder %s391, %s392
      %p401 = scmp.eq.s32.totalorder %s81, 0
      %p402 = por %p400, %p401
      %p403 = scmp.ne.s32.totalorder %s391, %s392
      %p404 = scmp.eq.s32.totalorder %s82, 1
      %p405 = por %p403, %p404
      %p407 = scmp.ne.s32.totalorder %s392, %s406
      %p408 = scmp.eq.s32.totalorder %s82, 0
      %p409 = por %p407, %p408
      %s411 = sadd.s32 %s410, 1
      %p414 = scmp.eq.s32.totalorder %s76, 1
      %p415 = scmp.ne.s32.totalorder %s410, %s412
      %p416 = scmp.eq.s32.totalorder %s76, 0
      %p417 = por %p415, %p416
      %p418 = scmp.ne.s32.totalorder %s410, %s412
      %p419 = scmp.eq.s32.totalorder %s81, 1
      %p420 = por %p418, %p419
      %p421 = scmp.ne.s32.totalorder %s412, %s413
      %p422 = scmp.eq.s32.totalorder %s81, 0
      %p423 = por %p421, %p422
      %p424 = scmp.ne.s32.totalorder %s412, %s413
      %p425 = scmp.eq.s32.totalorder %s82, 1
      %p426 = por %p424, %p425
      %p428 = scmp.ne.s32.totalorder %s413, %s427
      %p429 = scmp.eq.s32.totalorder %s82, 0
      %p430 = por %p428, %p429
      %s432 = sadd.s32 %s431, 1
      %p435 = scmp.eq.s32.totalorder %s76, 1
      %p436 = scmp.ne.s32.totalorder %s431, %s433
      %p437 = scmp.eq.s32.totalorder %s76, 0
      %p438 = por %p436, %p437
      %p439 = scmp.ne.s32.totalorder %s431, %s433
      %p440 = scmp.eq.s32.totalorder %s81, 1
      %p441 = por %p439, %p440
      %p442 = scmp.ne.s32.totalorder %s433, %s434
      %p443 = scmp.eq.s32.totalorder %s81, 0
      %p444 = por %p442, %p443
      %p445 = scmp.ne.s32.totalorder %s433, %s434
      %p446 = scmp.eq.s32.totalorder %s82, 1
      %p447 = por %p445, %p446
      %p449 = scmp.ne.s32.totalorder %s434, %s448
      %p450 = scmp.eq.s32.totalorder %s82, 0
      %p451 = por %p449, %p450
      %s453 = sadd.s32 %s452, 1
      %p456 = scmp.eq.s32.totalorder %s76, 1
      %p457 = scmp.ne.s32.totalorder %s452, %s454
      %p458 = scmp.eq.s32.totalorder %s76, 0
      %p459 = por %p457, %p458
      %p460 = scmp.ne.s32.totalorder %s452, %s454
      %p461 = scmp.eq.s32.totalorder %s81, 1
      %p462 = por %p460, %p461
      %p463 = scmp.ne.s32.totalorder %s454, %s455
      %p464 = scmp.eq.s32.totalorder %s81, 0
      %p465 = por %p463, %p464
      %p466 = scmp.ne.s32.totalorder %s454, %s455
      %p467 = scmp.eq.s32.totalorder %s82, 1
      %p468 = por %p466, %p467
      %p470 = scmp.ne.s32.totalorder %s455, %s469
      %p471 = scmp.eq.s32.totalorder %s82, 0
      %p472 = por %p470, %p471
      %s474 = sadd.s32 %s473, 1
      %p477 = scmp.eq.s32.totalorder %s76, 1
      %p478 = scmp.ne.s32.totalorder %s473, %s475
      %p479 = scmp.eq.s32.totalorder %s76, 0
      %p480 = por %p478, %p479
      %p481 = scmp.ne.s32.totalorder %s473, %s475
      %p482 = scmp.eq.s32.totalorder %s81, 1
      %p483 = por %p481, %p482
      %p484 = scmp.ne.s32.totalorder %s475, %s476
      %p485 = scmp.eq.s32.totalorder %s81, 0
      %p486 = por %p484, %p485
      %p487 = scmp.ne.s32.totalorder %s475, %s476
      %p488 = scmp.eq.s32.totalorder %s82, 1
      %p489 = por %p487, %p488
      %p491 = scmp.ne.s32.totalorder %s476, %s490
      %p492 = scmp.eq.s32.totalorder %s82, 0
      %p493 = por %p491, %p492
      %s495 = sadd.s32 %s494, 1
      %p498 = scmp.eq.s32.totalorder %s76, 1
      %p499 = scmp.ne.s32.totalorder %s494, %s496
      %p500 = scmp.eq.s32.totalorder %s76, 0
      %p501 = por %p499, %p500
      %p502 = scmp.ne.s32.totalorder %s494, %s496
      %p503 = scmp.eq.s32.totalorder %s81, 1
      %p504 = por %p502, %p503
      %p505 = scmp.ne.s32.totalorder %s496, %s497
      %p506 = scmp.eq.s32.totalorder %s81, 0
      %p507 = por %p505, %p506
      %p508 = scmp.ne.s32.totalorder %s496, %s497
      %p509 = scmp.eq.s32.totalorder %s82, 1
      %p510 = por %p508, %p509
      %p512 = scmp.ne.s32.totalorder %s497, %s511
      %p513 = scmp.eq.s32.totalorder %s82, 0
      %p514 = por %p512, %p513
      %s516 = sadd.s32 %s515, 1
      %p519 = scmp.eq.s32.totalorder %s76, 1
      %p520 = scmp.ne.s32.totalorder %s515, %s517
      %p521 = scmp.eq.s32.totalorder %s76, 0
      %p522 = por %p520, %p521
      %p523 = scmp.ne.s32.totalorder %s515, %s517
      %p524 = scmp.eq.s32.totalorder %s81, 1
      %p525 = por %p523, %p524
      %p526 = scmp.ne.s32.totalorder %s517, %s518
      %p527 = scmp.eq.s32.totalorder %s81, 0
      %p528 = por %p526, %p527
      %p529 = scmp.ne.s32.totalorder %s517, %s518
      %p530 = scmp.eq.s32.totalorder %s82, 1
      %p531 = por %p529, %p530
      %p533 = scmp.ne.s32.totalorder %s518, %s532
      %p534 = scmp.eq.s32.totalorder %s82, 0
      %p535 = por %p533, %p534
      %s537 = sadd.s32 %s536, 1
      %p540 = scmp.eq.s32.totalorder %s76, 1
      %p541 = scmp.ne.s32.totalorder %s536, %s538
      %p542 = scmp.eq.s32.totalorder %s76, 0
      %p543 = por %p541, %p542
      %p544 = scmp.ne.s32.totalorder %s536, %s538
      %p545 = scmp.eq.s32.totalorder %s81, 1
      %p546 = por %p544, %p545
      %p547 = scmp.ne.s32.totalorder %s538, %s539
      %p548 = scmp.eq.s32.totalorder %s81, 0
      %p549 = por %p547, %p548
      %p550 = scmp.ne.s32.totalorder %s538, %s539
      %p551 = scmp.eq.s32.totalorder %s82, 1
      %p552 = por %p550, %p551
      %p554 = scmp.ne.s32.totalorder %s539, %s553
      %p555 = scmp.eq.s32.totalorder %s82, 0
      %p556 = por %p554, %p555
      %s558 = sadd.s32 %s557, 1
      %p561 = scmp.eq.s32.totalorder %s76, 1
      %p562 = scmp.ne.s32.totalorder %s557, %s559
      %p563 = scmp.eq.s32.totalorder %s76, 0
      %p564 = por %p562, %p563
      %p565 = scmp.ne.s32.totalorder %s557, %s559
      %p566 = scmp.eq.s32.totalorder %s81, 1
      %p567 = por %p565, %p566
      %p568 = scmp.ne.s32.totalorder %s559, %s560
      %p569 = scmp.eq.s32.totalorder %s81, 0
      %p570 = por %p568, %p569
      %p571 = scmp.ne.s32.totalorder %s559, %s560
      %p572 = scmp.eq.s32.totalorder %s82, 1
      %p573 = por %p571, %p572
      %p575 = scmp.ne.s32.totalorder %s560, %s574
      %p576 = scmp.eq.s32.totalorder %s82, 0
      %p577 = por %p575, %p576
      %s579 = sadd.s32 %s578, 1
      %p582 = scmp.eq.s32.totalorder %s76, 1
      %p583 = scmp.ne.s32.totalorder %s578, %s580
      %p584 = scmp.eq.s32.totalorder %s76, 0
      %p585 = por %p583, %p584
      %p586 = scmp.ne.s32.totalorder %s578, %s580
      %p587 = scmp.eq.s32.totalorder %s81, 1
      %p588 = por %p586, %p587
      %p589 = scmp.ne.s32.totalorder %s580, %s581
      %p590 = scmp.eq.s32.totalorder %s81, 0
      %p591 = por %p589, %p590
      %p592 = scmp.ne.s32.totalorder %s580, %s581
      %p593 = scmp.eq.s32.totalorder %s82, 1
      %p594 = por %p592, %p593
      %p596 = scmp.ne.s32.totalorder %s581, %s595
      %p597 = scmp.eq.s32.totalorder %s82, 0
      %p598 = por %p596, %p597
      %s600 = sadd.s32 %s599, 1
      %p603 = scmp.eq.s32.totalorder %s76, 1
      %p604 = scmp.ne.s32.totalorder %s599, %s601
      %p605 = scmp.eq.s32.totalorder %s76, 0
      %p606 = por %p604, %p605
      %p607 = scmp.ne.s32.totalorder %s599, %s601
      %p608 = scmp.eq.s32.totalorder %s81, 1
      %p609 = por %p607, %p608
      %p610 = scmp.ne.s32.totalorder %s601, %s602
      %p611 = scmp.eq.s32.totalorder %s81, 0
      %p612 = por %p610, %p611
      %p613 = scmp.ne.s32.totalorder %s601, %s602
      %p614 = scmp.eq.s32.totalorder %s82, 1
      %p615 = por %p613, %p614
      %p617 = scmp.ne.s32.totalorder %s602, %s616
      %p618 = scmp.eq.s32.totalorder %s82, 0
      %p619 = por %p617, %p618
      %s621 = sadd.s32 %s620, 1
      %p624 = scmp.eq.s32.totalorder %s76, 1
      %p625 = scmp.ne.s32.totalorder %s620, %s622
      %p626 = scmp.eq.s32.totalorder %s76, 0
      %p627 = por %p625, %p626
      %p628 = scmp.ne.s32.totalorder %s620, %s622
      %p629 = scmp.eq.s32.totalorder %s81, 1
      %p630 = por %p628, %p629
      %p631 = scmp.ne.s32.totalorder %s622, %s623
      %p632 = scmp.eq.s32.totalorder %s81, 0
      %p633 = por %p631, %p632
      %p634 = scmp.ne.s32.totalorder %s622, %s623
      %p635 = scmp.eq.s32.totalorder %s82, 1
      %p636 = por %p634, %p635
      %p638 = scmp.ne.s32.totalorder %s623, %s637
      %p639 = scmp.eq.s32.totalorder %s82, 0
      %p640 = por %p638, %p639
      %s642 = sadd.s32 %s641, 1
      %p645 = scmp.eq.s32.totalorder %s76, 1
      %p646 = scmp.ne.s32.totalorder %s641, %s643
      %p647 = scmp.eq.s32.totalorder %s76, 0
      %p648 = por %p646, %p647
      %p649 = scmp.ne.s32.totalorder %s641, %s643
      %p650 = scmp.eq.s32.totalorder %s81, 1
      %p651 = por %p649, %p650
      %p652 = scmp.ne.s32.totalorder %s643, %s644
      %p653 = scmp.eq.s32.totalorder %s81, 0
      %p654 = por %p652, %p653
      %p655 = scmp.ne.s32.totalorder %s643, %s644
      %p656 = scmp.eq.s32.totalorder %s82, 1
      %p657 = por %p655, %p656
      %p659 = scmp.ne.s32.totalorder %s644, %s658
      %p660 = scmp.eq.s32.totalorder %s82, 0
      %p661 = por %p659, %p660
      %s663 = sadd.s32 %s662, 1
      %p666 = scmp.eq.s32.totalorder %s76, 1
      %p667 = scmp.ne.s32.totalorder %s662, %s664
      %p668 = scmp.eq.s32.totalorder %s76, 0
      %p669 = por %p667, %p668
      %p670 = scmp.ne.s32.totalorder %s662, %s664
      %p671 = scmp.eq.s32.totalorder %s81, 1
      %p672 = por %p670, %p671
      %p673 = scmp.ne.s32.totalorder %s664, %s665
      %p674 = scmp.eq.s32.totalorder %s81, 0
      %p675 = por %p673, %p674
      %p676 = scmp.ne.s32.totalorder %s664, %s665
      %p677 = scmp.eq.s32.totalorder %s82, 1
      %p678 = por %p676, %p677
      %p680 = scmp.ne.s32.totalorder %s665, %s679
      %p681 = scmp.eq.s32.totalorder %s82, 0
      %p682 = por %p680, %p681
      %s684 = sadd.s32 %s683, 1
      %p687 = scmp.eq.s32.totalorder %s76, 1
      %p688 = scmp.ne.s32.totalorder %s683, %s685
      %p689 = scmp.eq.s32.totalorder %s76, 0
      %p690 = por %p688, %p689
      %p691 = scmp.ne.s32.totalorder %s683, %s685
      %p692 = scmp.eq.s32.totalorder %s81, 1
      %p693 = por %p691, %p692
      %p694 = scmp.ne.s32.totalorder %s685, %s686
      %p695 = scmp.eq.s32.totalorder %s81, 0
      %p696 = por %p694, %p695
      %p697 = scmp.ne.s32.totalorder %s685, %s686
      %p698 = scmp.eq.s32.totalorder %s82, 1
      %p699 = por %p697, %p698
      %p701 = scmp.ne.s32.totalorder %s686, %s700
      %p702 = scmp.eq.s32.totalorder %s82, 0
      %p703 = por %p701, %p702
      %s705 = sadd.s32 %s704, 1
      %p708 = scmp.eq.s32.totalorder %s76, 1
      %p709 = scmp.ne.s32.totalorder %s704, %s706
      %p710 = scmp.eq.s32.totalorder %s76, 0
      %p711 = por %p709, %p710
      %p712 = scmp.ne.s32.totalorder %s704, %s706
      %p713 = scmp.eq.s32.totalorder %s81, 1
      %p714 = por %p712, %p713
      %p715 = scmp.ne.s32.totalorder %s706, %s707
      %p716 = scmp.eq.s32.totalorder %s81, 0
      %p717 = por %p715, %p716
      %p718 = scmp.ne.s32.totalorder %s706, %s707
      %p719 = scmp.eq.s32.totalorder %s82, 1
      %p720 = por %p718, %p719
      %p722 = scmp.ne.s32.totalorder %s707, %s721
      %p723 = scmp.eq.s32.totalorder %s82, 0
      %p724 = por %p722, %p723
      %s726 = sadd.s32 %s725, 1
      %p729 = scmp.eq.s32.totalorder %s76, 1
      %p730 = scmp.ne.s32.totalorder %s725, %s727
      %p731 = scmp.eq.s32.totalorder %s76, 0
      %p732 = por %p730, %p731
      %p733 = scmp.ne.s32.totalorder %s725, %s727
      %p734 = scmp.eq.s32.totalorder %s81, 1
      %p735 = por %p733, %p734
      %p736 = scmp.ne.s32.totalorder %s727, %s728
      %p737 = scmp.eq.s32.totalorder %s81, 0
      %p738 = por %p736, %p737
      %p739 = scmp.ne.s32.totalorder %s727, %s728
      %p740 = scmp.eq.s32.totalorder %s82, 1
      %p741 = por %p739, %p740
      %p743 = scmp.ne.s32.totalorder %s728, %s742
      %p744 = scmp.eq.s32.totalorder %s82, 0
      %p745 = por %p743, %p744
      %s746 = ssub.s32 %s83, %s95
      %s747 = ssub.s32 %s84, %s91
      %s748 = sor.u32 %s746, %s747
      %p749 = scmp.eq.s32.totalorder %s748, 0
      %s751 = sadd.s32 %s750, 1
      %s752 = scalar_select %p749, %s750, %s751
      %p755 = pneg %p749
      %p756 = scmp.eq.s32.totalorder %s76, 1
      %p757 = por %p755, %p756
      %p758 = scmp.ne.s32.totalorder %s750, %s753
      %p759 = scmp.eq.s32.totalorder %s76, 0
      %p760 = por %p758, %p759
      %p761 = scmp.ne.s32.totalorder %s750, %s753
      %p762 = scmp.eq.s32.totalorder %s81, 1
      %p763 = por %p761, %p762
      %p764 = scmp.ne.s32.totalorder %s753, %s754
      %p765 = scmp.eq.s32.totalorder %s81, 0
      %p766 = por %p764, %p765
      %p767 = scmp.ne.s32.totalorder %s753, %s754
      %p768 = scmp.eq.s32.totalorder %s82, 1
      %p769 = por %p767, %p768
      %p771 = scmp.ne.s32.totalorder %s754, %s770
      %p772 = scmp.eq.s32.totalorder %s82, 0
      %p773 = por %p771, %p772
      %s774 = ssub.s32 %s83, %s95
      %s775 = ssub.s32 %s84, %s91
      %s776 = sor.u32 %s774, %s775
      %p777 = scmp.eq.s32.totalorder %s776, 0
      %s779 = sadd.s32 %s778, 1
      %s780 = scalar_select %p777, %s778, %s779
      %p783 = pneg %p777
      %p784 = scmp.eq.s32.totalorder %s76, 1
      %p785 = por %p783, %p784
      %p786 = scmp.ne.s32.totalorder %s778, %s781
      %p787 = scmp.eq.s32.totalorder %s76, 0
      %p788 = por %p786, %p787
      %p789 = scmp.ne.s32.totalorder %s778, %s781
      %p790 = scmp.eq.s32.totalorder %s81, 1
      %p791 = por %p789, %p790
      %p792 = scmp.ne.s32.totalorder %s781, %s782
      %p793 = scmp.eq.s32.totalorder %s81, 0
      %p794 = por %p792, %p793
      %p795 = scmp.ne.s32.totalorder %s781, %s782
      %p796 = scmp.eq.s32.totalorder %s82, 1
      %p797 = por %p795, %p796
      %p799 = scmp.ne.s32.totalorder %s782, %s798
      %p800 = scmp.eq.s32.totalorder %s82, 0
      %p801 = por %p799, %p800
      %p802 = scmp.le.s32.totalorder 1, %s76
      %p803 = scmp.lt.s32.totalorder %s76, 3
      %p804 = pnand %p802, %p803
      %p805 = pneg %p804
      // Predicated region
      $region9: #{tpu_custom_call.1} parent=5 // pred_check
        _
      $region10: #{tpu_custom_call.1} parent=5 // pred_check_branch
        %807 = sbr.rel (%p804) target = $region12
      $region11: #{tpu_custom_call.1} parent=5 // pred_region
        %s808 = ssub.s32 %s76, 1
        // Predicated region
        $region13: #{tpu_custom_call.1} parent=11 // pred_check
          %p809 = pneg %p213
        $region14: #{tpu_custom_call.1} parent=11 // pred_check_branch
          %811 = sbr.rel (%p809) target = $region16
        $region15: #{tpu_custom_call.1} parent=11 // pred_region
          _
        $region16: #{tpu_custom_call.1} parent=11 // pred_fallthru
          _
        // Predicated region
        $region17: #{tpu_custom_call.1} parent=11 // pred_check
          %p812 = pneg %p234
        $region18: #{tpu_custom_call.1} parent=11 // pred_check_branch
          %814 = sbr.rel (%p812) target = $region20
        $region19: #{tpu_custom_call.1} parent=11 // pred_region
          _
        $region20: #{tpu_custom_call.1} parent=11 // pred_fallthru
          _
        // Predicated region
        $region21: #{tpu_custom_call.1} parent=11 // pred_check
          %p815 = pneg %p255
        $region22: #{tpu_custom_call.1} parent=11 // pred_check_branch
          %817 = sbr.rel (%p815) target = $region24
        $region23: #{tpu_custom_call.1} parent=11 // pred_region
          _
        $region24: #{tpu_custom_call.1} parent=11 // pred_fallthru
          _
        // Predicated region
        $region25: #{tpu_custom_call.1} parent=11 // pred_check
          %p818 = pneg %p276
        $region26: #{tpu_custom_call.1} parent=11 // pred_check_branch
          %820 = sbr.rel (%p818) target = $region28
        $region27: #{tpu_custom_call.1} parent=11 // pred_region
          _
        $region28: #{tpu_custom_call.1} parent=11 // pred_fallthru
          _
        // Predicated region
        $region29: #{tpu_custom_call.1} parent=11 // pred_check
          %p821 = pneg %p297
        $region30: #{tpu_custom_call.1} parent=11 // pred_check_branch
          %823 = sbr.rel (%p821) target = $region32
        $region31: #{tpu_custom_call.1} parent=11 // pred_region
          _
        $region32: #{tpu_custom_call.1} parent=11 // pred_fallthru
          _
        // Predicated region
        $region33: #{tpu_custom_call.1} parent=11 // pred_check
          %p824 = pneg %p318
        $region34: #{tpu_custom_call.1} parent=11 // pred_check_branch
          %826 = sbr.rel (%p824) target = $region36
        $region35: #{tpu_custom_call.1} parent=11 // pred_region
          _
        $region36: #{tpu_custom_call.1} parent=11 // pred_fallthru
          _
        // Predicated region
        $region37: #{tpu_custom_call.1} parent=11 // pred_check
          %p827 = pneg %p339
        $region38: #{tpu_custom_call.1} parent=11 // pred_check_branch
          %829 = sbr.rel (%p827) target = $region40
        $region39: #{tpu_custom_call.1} parent=11 // pred_region
          _
        $region40: #{tpu_custom_call.1} parent=11 // pred_fallthru
          _
        // Predicated region
        $region41: #{tpu_custom_call.1} parent=11 // pred_check
          %p830 = pneg %p360
        $region42: #{tpu_custom_call.1} parent=11 // pred_check_branch
          %832 = sbr.rel (%p830) target = $region44
        $region43: #{tpu_custom_call.1} parent=11 // pred_region
          _
        $region44: #{tpu_custom_call.1} parent=11 // pred_fallthru
          _
        // Predicated region
        $region45: #{tpu_custom_call.1} parent=11 // pred_check
          %p833 = pneg %p381
        $region46: #{tpu_custom_call.1} parent=11 // pred_check_branch
          %835 = sbr.rel (%p833) target = $region48
        $region47: #{tpu_custom_call.1} parent=11 // pred_region
          _
        $region48: #{tpu_custom_call.1} parent=11 // pred_fallthru
          _
        // Predicated region
        $region49: #{tpu_custom_call.1} parent=11 // pred_check
          %p836 = pneg %p402
        $region50: #{tpu_custom_call.1} parent=11 // pred_check_branch
          %838 = sbr.rel (%p836) target = $region52
        $region51: #{tpu_custom_call.1} parent=11 // pred_region
          _
        $region52: #{tpu_custom_call.1} parent=11 // pred_fallthru
          _
        // Predicated region
        $region53: #{tpu_custom_call.1} parent=11 // pred_check
          %p839 = pneg %p423
        $region54: #{tpu_custom_call.1} parent=11 // pred_check_branch
          %841 = sbr.rel (%p839) target = $region56
        $region55: #{tpu_custom_call.1} parent=11 // pred_region
          _
        $region56: #{tpu_custom_call.1} parent=11 // pred_fallthru
          _
        // Predicated region
        $region57: #{tpu_custom_call.1} parent=11 // pred_check
          %p842 = pneg %p444
        $region58: #{tpu_custom_call.1} parent=11 // pred_check_branch
          %844 = sbr.rel (%p842) target = $region60
        $region59: #{tpu_custom_call.1} parent=11 // pred_region
          _
        $region60: #{tpu_custom_call.1} parent=11 // pred_fallthru
          _
        // Predicated region
        $region61: #{tpu_custom_call.1} parent=11 // pred_check
          %p845 = pneg %p465
        $region62: #{tpu_custom_call.1} parent=11 // pred_check_branch
          %847 = sbr.rel (%p845) target = $region64
        $region63: #{tpu_custom_call.1} parent=11 // pred_region
          _
        $region64: #{tpu_custom_call.1} parent=11 // pred_fallthru
          _
        // Predicated region
        $region65: #{tpu_custom_call.1} parent=11 // pred_check
          %p848 = pneg %p486
        $region66: #{tpu_custom_call.1} parent=11 // pred_check_branch
          %850 = sbr.rel (%p848) target = $region68
        $region67: #{tpu_custom_call.1} parent=11 // pred_region
          _
        $region68: #{tpu_custom_call.1} parent=11 // pred_fallthru
          _
        // Predicated region
        $region69: #{tpu_custom_call.1} parent=11 // pred_check
          %p851 = pneg %p507
        $region70: #{tpu_custom_call.1} parent=11 // pred_check_branch
          %853 = sbr.rel (%p851) target = $region72
        $region71: #{tpu_custom_call.1} parent=11 // pred_region
          _
        $region72: #{tpu_custom_call.1} parent=11 // pred_fallthru
          _
        // Predicated region
        $region73: #{tpu_custom_call.1} parent=11 // pred_check
          %p854 = pneg %p528
        $region74: #{tpu_custom_call.1} parent=11 // pred_check_branch
          %856 = sbr.rel (%p854) target = $region76
        $region75: #{tpu_custom_call.1} parent=11 // pred_region
          _
        $region76: #{tpu_custom_call.1} parent=11 // pred_fallthru
          _
        // Predicated region
        $region77: #{tpu_custom_call.1} parent=11 // pred_check
          %p857 = pneg %p549
        $region78: #{tpu_custom_call.1} parent=11 // pred_check_branch
          %859 = sbr.rel (%p857) target = $region80
        $region79: #{tpu_custom_call.1} parent=11 // pred_region
          _
        $region80: #{tpu_custom_call.1} parent=11 // pred_fallthru
          _
        // Predicated region
        $region81: #{tpu_custom_call.1} parent=11 // pred_check
          %p860 = pneg %p570
        $region82: #{tpu_custom_call.1} parent=11 // pred_check_branch
          %862 = sbr.rel (%p860) target = $region84
        $region83: #{tpu_custom_call.1} parent=11 // pred_region
          _
        $region84: #{tpu_custom_call.1} parent=11 // pred_fallthru
          _
        // Predicated region
        $region85: #{tpu_custom_call.1} parent=11 // pred_check
          %p863 = pneg %p591
        $region86: #{tpu_custom_call.1} parent=11 // pred_check_branch
          %865 = sbr.rel (%p863) target = $region88
        $region87: #{tpu_custom_call.1} parent=11 // pred_region
          _
        $region88: #{tpu_custom_call.1} parent=11 // pred_fallthru
          _
        // Predicated region
        $region89: #{tpu_custom_call.1} parent=11 // pred_check
          %p866 = pneg %p612
        $region90: #{tpu_custom_call.1} parent=11 // pred_check_branch
          %868 = sbr.rel (%p866) target = $region92
        $region91: #{tpu_custom_call.1} parent=11 // pred_region
          _
        $region92: #{tpu_custom_call.1} parent=11 // pred_fallthru
          _
        // Predicated region
        $region93: #{tpu_custom_call.1} parent=11 // pred_check
          %p869 = pneg %p633
        $region94: #{tpu_custom_call.1} parent=11 // pred_check_branch
          %871 = sbr.rel (%p869) target = $region96
        $region95: #{tpu_custom_call.1} parent=11 // pred_region
          _
        $region96: #{tpu_custom_call.1} parent=11 // pred_fallthru
          _
        // Predicated region
        $region97: #{tpu_custom_call.1} parent=11 // pred_check
          %p872 = pneg %p654
        $region98: #{tpu_custom_call.1} parent=11 // pred_check_branch
          %874 = sbr.rel (%p872) target = $region100
        $region99: #{tpu_custom_call.1} parent=11 // pred_region
          _
        $region100: #{tpu_custom_call.1} parent=11 // pred_fallthru
          _
        // Predicated region
        $region101: #{tpu_custom_call.1} parent=11 // pred_check
          %p875 = pneg %p675
        $region102: #{tpu_custom_call.1} parent=11 // pred_check_branch
          %877 = sbr.rel (%p875) target = $region104
        $region103: #{tpu_custom_call.1} parent=11 // pred_region
          _
        $region104: #{tpu_custom_call.1} parent=11 // pred_fallthru
          _
        // Predicated region
        $region105: #{tpu_custom_call.1} parent=11 // pred_check
          %p878 = pneg %p696
        $region106: #{tpu_custom_call.1} parent=11 // pred_check_branch
          %880 = sbr.rel (%p878) target = $region108
        $region107: #{tpu_custom_call.1} parent=11 // pred_region
          _
        $region108: #{tpu_custom_call.1} parent=11 // pred_fallthru
          _
        // Predicated region
        $region109: #{tpu_custom_call.1} parent=11 // pred_check
          %p881 = pneg %p717
        $region110: #{tpu_custom_call.1} parent=11 // pred_check_branch
          %883 = sbr.rel (%p881) target = $region112
        $region111: #{tpu_custom_call.1} parent=11 // pred_region
          _
        $region112: #{tpu_custom_call.1} parent=11 // pred_fallthru
          _
        // Predicated region
        $region113: #{tpu_custom_call.1} parent=11 // pred_check
          %p884 = pneg %p738
        $region114: #{tpu_custom_call.1} parent=11 // pred_check_branch
          %886 = sbr.rel (%p884) target = $region116
        $region115: #{tpu_custom_call.1} parent=11 // pred_region
          _
        $region116: #{tpu_custom_call.1} parent=11 // pred_fallthru
          _
      $region12: #{tpu_custom_call.1} parent=5 // pred_fallthru
        _
      %p887 = scmp.lt.s32.totalorder %s76, 2
      // Predicated region
      $region117: #{tpu_custom_call.1} parent=5 // pred_check
        %p888 = pneg %p887
      $region118: #{tpu_custom_call.1} parent=5 // pred_check_branch
        %890 = sbr.rel (%p888) target = $region120
      $region119: #{tpu_custom_call.1} parent=5 // pred_region
        // Predicated region
        $region121: #{tpu_custom_call.1} parent=119 // pred_check
          %p891 = pneg %p108
        $region122: #{tpu_custom_call.1} parent=119 // pred_check_branch
          %893 = sbr.rel (%p891) target = $region124
        $region123: #{tpu_custom_call.1} parent=119 // pred_region
          %p894 = scmp.lt.s32.totalorder %s83, 1
          %s895 = scalar_select %p894, %s83, 1
          %s896 = smul.addr %s895, 8
          %s897 = scalar_lea.vmem %s1, %s896
        $region124: #{tpu_custom_call.1} parent=119 // pred_fallthru
          _
        // Predicated region
        $region125: #{tpu_custom_call.1} parent=119 // pred_check
          %p898 = pneg %p134
        $region126: #{tpu_custom_call.1} parent=119 // pred_check_branch
          %900 = sbr.rel (%p898) target = $region128
        $region127: #{tpu_custom_call.1} parent=119 // pred_region
          %p901 = scmp.lt.s32.totalorder %s83, 1
          %s902 = scalar_select %p901, %s83, 1
          %s903 = smul.addr %s902, 2
          %s904 = smul.addr %s903, 8
          %s905 = scalar_lea.vmem %s3, %s904
        $region128: #{tpu_custom_call.1} parent=119 // pred_fallthru
          _
        // Predicated region
        $region129: #{tpu_custom_call.1} parent=119 // pred_check
          %p906 = pneg %p160
        $region130: #{tpu_custom_call.1} parent=119 // pred_check_branch
          %908 = sbr.rel (%p906) target = $region132
        $region131: #{tpu_custom_call.1} parent=119 // pred_region
          %p909 = scmp.lt.s32.totalorder %s83, 1
          %s910 = scalar_select %p909, %s83, 1
          %s911 = scalar_lea.vmem %s5, %s910
        $region132: #{tpu_custom_call.1} parent=119 // pred_fallthru
          _
        // Predicated region
        $region133: #{tpu_custom_call.1} parent=119 // pred_check
          %p912 = pneg %p186
        $region134: #{tpu_custom_call.1} parent=119 // pred_check_branch
          %914 = sbr.rel (%p912) target = $region136
        $region135: #{tpu_custom_call.1} parent=119 // pred_region
          %p915 = scmp.lt.s32.totalorder %s83, 1
          %s916 = scalar_select %p915, %s83, 1
          %s917 = scalar_lea.vmem %s7, %s916
        $region136: #{tpu_custom_call.1} parent=119 // pred_fallthru
          _
      $region120: #{tpu_custom_call.1} parent=5 // pred_fallthru
        _
      %p918 = scmp.le.s32.totalorder 1, %s76
      %p919 = scmp.lt.s32.totalorder %s76, 3
      %p920 = pnand %p918, %p919
      %p921 = pneg %p920
      // Predicated region
      $region137: #{tpu_custom_call.1} parent=5 // pred_check
        _
      $region138: #{tpu_custom_call.1} parent=5 // pred_check_branch
        %923 = sbr.rel (%p920) target = $region140
      $region139: #{tpu_custom_call.1} parent=5 // pred_region
        %s924 = ssub.s32 %s76, 1
        %p925 = scmp.lt.s32.totalorder %s85, 1
        %s926 = scalar_select %p925, %s85, 1
        %s927 = smul.addr %s926, 8
        %s928 = scalar_lea.vmem %s1, %s927
        %p929 = pneg %p114
        %p930 = pneg %p111
        %p931 = scmp.lt.s32.totalorder %s85, 1
        %s932 = scalar_select %p931, %s85, 1
        %s933 = smul.addr %s932, 2
        %s934 = smul.addr %s933, 8
        %s935 = scalar_lea.vmem %s3, %s934
        %p936 = pneg %p140
        %p937 = pneg %p137
        %p938 = scmp.lt.s32.totalorder %s85, 1
        %s939 = scalar_select %p938, %s85, 1
        %s940 = scalar_lea.vmem %s5, %s939
        %p941 = pneg %p166
        %p942 = pneg %p163
        %p943 = scmp.lt.s32.totalorder %s85, 1
        %s944 = scalar_select %p943, %s85, 1
        %s945 = scalar_lea.vmem %s7, %s944
        %p946 = pneg %p192
        %p947 = pneg %p189
        %p948 = pneg %p213
        %p949 = pneg %p210
        %p950 = pneg %p234
        %p951 = pneg %p231
        %p952 = pneg %p255
        %p953 = pneg %p252
        %p954 = pneg %p276
        %p955 = pneg %p273
        %p956 = pneg %p297
        %p957 = pneg %p294
        %p958 = pneg %p318
        %p959 = pneg %p315
        %p960 = pneg %p339
        %p961 = pneg %p336
        %p962 = pneg %p360
        %p963 = pneg %p357
        %p964 = pneg %p381
        %p965 = pneg %p378
        %p966 = pneg %p402
        %p967 = pneg %p399
        %p968 = pneg %p423
        %p969 = pneg %p420
        %p970 = pneg %p444
        %p971 = pneg %p441
        %p972 = pneg %p465
        %p973 = pneg %p462
        %p974 = pneg %p486
        %p975 = pneg %p483
        %p976 = pneg %p507
        %p977 = pneg %p504
        %p978 = pneg %p528
        %p979 = pneg %p525
        %p980 = pneg %p549
        %p981 = pneg %p546
        %p982 = pneg %p570
        %p983 = pneg %p567
        %p984 = pneg %p591
        %p985 = pneg %p588
        %p986 = pneg %p612
        %p987 = pneg %p609
        %p988 = pneg %p633
        %p989 = pneg %p630
        %p990 = pneg %p654
        %p991 = pneg %p651
        %p992 = pneg %p675
        %p993 = pneg %p672
        %p994 = pneg %p696
        %p995 = pneg %p693
        %p996 = pneg %p717
        %p997 = pneg %p714
        %p998 = pneg %p738
        %p999 = pneg %p735
        %p1000 = pneg %p766
        %p1001 = pneg %p763
        %s1002 = sand.u32 %s753, 1
        %s1003 = scalar_lea.sflag [#allocation4], %s1002
        %s1004 = sand.u32 %s753, 1
        %s1005 = smul.addr %s1004, 8
        %s1006 = scalar_lea.vmem [#allocation3], %s1005
        %p1007 = pneg %p794
        %p1008 = pneg %p791
        %s1009 = sand.u32 %s781, 1
        %s1010 = scalar_lea.sflag [#allocation6], %s1009
        %s1011 = sand.u32 %s781, 1
        %s1012 = smul.addr %s1011, 8
        %s1013 = scalar_lea.vmem [#allocation5], %s1012
        %p1014 = scmp.lt.s32.totalorder %s85, 1
        %s1015 = scalar_select %p1014, %s85, 1
        %s1016 = smul.addr %s1015, 8
        %s1017 = scalar_lea.vmem %s1, %s1016
        %p1018 = scmp.lt.s32.totalorder %s85, 1
        %s1019 = scalar_select %p1018, %s85, 1
        %s1020 = smul.addr %s1019, 2
        %s1021 = smul.addr %s1020, 8
        %s1022 = scalar_lea.vmem %s3, %s1021
        %p1023 = scmp.lt.s32.totalorder %s85, 1
        %s1024 = scalar_select %p1023, %s85, 1
        %s1025 = scalar_lea.vmem %s5, %s1024
        %p1026 = scmp.lt.s32.totalorder %s85, 1
        %s1027 = scalar_select %p1026, %s85, 1
        %s1028 = scalar_lea.vmem %s7, %s1027
        %s1030 = smul.u32 %s86, 8
        %v1031 = vld [vmem:[%s1017] sm:$0xff]
        %s1032 = scalar_lea.vmem %s1017, %s1030
        %v1033 = vld [vmem:[%s1032] sm:$0xff]
        %v1034 = vld [vmem:[%s1022] sm:$0xff]
        %v1035 = vld [vmem:[%s1022 + $0x8] sm:$0xff]
        %v1036 = vlaneseq
        %v1037 = vshrl.u32 %v1036, 7
        %v1038 = vstv %s1030
        %v1039 = vadd.s32 %v1037, %v1038
        %v1040 = vlaneseq
        %v1041 = vand.u32 %v1040, 127
        %vm1042 = vcmp.gt.s32.totalorder %v1041, %v1039
        %v1043 = vld [vmem:[%s1028] sm:$0x1]
        %vm1044 = vcmp.gt.f32.partialorder %v1043, 0.5
        %v1045 = vsel %vm1044, 1, 0
        %v1046 = vlaneseq
        %v1047 = vshrl.u32 %v1046, 7
        %v1048 = vsub.s32 0, %v1047
        %v1049 = vrot.slane %v1045, %v1048
        %vm1050 = vcmp.eq.s32.totalorder %v1049, 1
        %vm1051 = vmor %vm1042, %vm1050
        %v1052 = vld [vmem:[%s1025] sm:$0x1]
        %vm1053 = vcmp.gt.f32.partialorder %v1052, 0.5
        %v1054 = vpack.c.bf16 %v1033, %v1033
        %v1055 = vpack.c.bf16 %v1031, %v1031
        %v1056 = vld [vmem:[%s9] sm:$0xff]
        %v1057 = vld [vmem:[%s9 + $0x8] sm:$0xff]
        %v1058 = vld [vmem:[%s9 + $0x10] sm:$0xff]
        %v1059 = vld [vmem:[%s9 + $0x18] sm:$0xff]
        %v1060 = vld [vmem:[%s9 + $0x20] sm:$0xff]
        %v1061 = vld [vmem:[%s9 + $0x28] sm:$0xff]
        %v1062 = vld [vmem:[%s9 + $0x30] sm:$0xff]
        %v1063 = vld [vmem:[%s9 + $0x38] sm:$0xff]
        %v1064 = vld [vmem:[%s11] sm:$0xf]
        %v1066 = vlaneseq
        %v1067 = vshrl.u32 %v1066, 7
        %v1068 = vsub.s32 0, %v1067
        %v1069 = vrot.slane %v1064, %v1068
        %v1070 = vlaneseq
        %v1071 = vshrl.u32 %v1070, 7
        %v1072 = vsub.s32 1, %v1071
        %v1073 = vrot.slane %v1064, %v1072
        %v1074 = vlaneseq
        %v1075 = vshrl.u32 %v1074, 7
        %v1076 = vsub.s32 2, %v1075
        %v1077 = vrot.slane %v1064, %v1076
        %v1078 = vlaneseq
        %v1079 = vshrl.u32 %v1078, 7
        %v1080 = vsub.s32 3, %v1079
        %v1081 = vrot.slane %v1064, %v1080
        %v1094 = vunpack.c.l.b16 %v1056
        %v1095 = vunpack.c.h.b16 %v1056
        %v1096 = vunpack.c.l.b16 %v1057
        %v1097 = vunpack.c.h.b16 %v1057
        %v1098 = vunpack.c.l.b16 %v1058
        %v1099 = vunpack.c.h.b16 %v1058
        %v1100 = vunpack.c.l.b16 %v1059
        %v1101 = vunpack.c.h.b16 %v1059
        %v1102 = vunpack.c.l.b16 %v1060
        %v1103 = vunpack.c.h.b16 %v1060
        %v1104 = vunpack.c.l.b16 %v1061
        %v1105 = vunpack.c.h.b16 %v1061
        %v1106 = vunpack.c.l.b16 %v1062
        %v1107 = vunpack.c.h.b16 %v1062
        %v1108 = vunpack.c.l.b16 %v1063
        %v1109 = vunpack.c.h.b16 %v1063
        %v1110 = vpack.c.b16 %v1098, %v1094
        %v1111 = vpack.c.b16 %v1099, %v1095
        %v1112 = vpack.c.b16 %v1100, %v1096
        %v1113 = vpack.c.b16 %v1101, %v1097
        %v1114 = vpack.c.b16 %v1106, %v1102
        %v1115 = vpack.c.b16 %v1107, %v1103
        %v1116 = vpack.c.b16 %v1108, %v1104
        %v1117 = vpack.c.b16 %v1109, %v1105
        %vm1126 = vcmask 261120
        %v1128 = vsel %vm1126, %v1054, 0
        %1130 = vmatprep.subr.bf16.mxu0 %v1111
        %1131 = vmatpush1.bf16.msra.mxu0 %v1110
        %1132 = vmatprep.subr.bf16.mxu0 %v1115
        %1133 = vmatpush1.bf16.msra.mxu0 %v1114
        %1134 = vmatprep.subr.bf16.mxu0 0
        %1135 = vmatpush1.bf16.msra.mxu0 0
        %1136 = vmatprep.subr.bf16.mxu0 0
        %1137 = vmatpush1.bf16.msra.mxu0 0
        %1138 = vmatprep.subr.bf16.mxu0 0
        %1139 = vmatpush1.bf16.msra.mxu0 0
        %1140 = vmatprep.subr.bf16.mxu0 0
        %1141 = vmatpush1.bf16.msra.mxu0 0
        %1142 = vmatprep.subr.bf16.mxu0 0
        %1143 = vmatpush1.bf16.msra.mxu0 0
        %1144 = vmatprep.subr.bf16.mxu0 0
        %1145 = vmatpush1.bf16.msra.mxu0 0
        %1146 = vmatprep.subr.bf16.mxu0 0
        %1147 = vmatpush1.bf16.msra.mxu0 0
        %1148 = vmatprep.subr.bf16.mxu0 0
        %1149 = vmatpush1.bf16.msra.mxu0 0
        %1150 = vmatprep.subr.bf16.mxu0 0
        %1151 = vmatpush1.bf16.msra.mxu0 0
        %1152 = vmatprep.subr.bf16.mxu0 0
        %1153 = vmatpush1.bf16.msra.mxu0 0
        %1154 = vmatprep.subr.bf16.mxu0 0
        %1155 = vmatpush1.bf16.msra.mxu0 0
        %1156 = vmatprep.subr.bf16.mxu0 0
        %1157 = vmatpush1.bf16.msra.mxu0 0
        %1158 = vmatprep.subr.bf16.mxu0 0
        %1159 = vmatpush1.bf16.msra.mxu0 0
        %1160 = vmatprep.subr.bf16.mxu0 0
        %1161 = vmatpush1.bf16.msra.mxu0 0
        %1162 = vmatprep.mubr.bf16.mxu0 0
        %1163 = vmatmul.mubr.bf16.gmra.mrb[0].mxu0 %v1128
        %v1164 = vpop.f32.mrb[0].mxu0
        %v1165 = vadd.f32 %v1069, %v1164
        %v1166 = vpop.f32.mrb[0].mxu0
        %v1167 = vadd.f32 %v1073, %v1166
        %v1168 = vpop.f32.mrb[0].mxu0
        %v1169 = vpop.f32.mrb[0].mxu0
        %1170 = vdwg.mxu0
        %1171 = vmatprep.subr.bf16.mxu0 %v1113
        %1172 = vmatpush1.bf16.msra.mxu0 %v1112
        %1173 = vmatprep.subr.bf16.mxu0 %v1117
        %1174 = vmatpush1.bf16.msra.mxu0 %v1116
        %1175 = vmatprep.subr.bf16.mxu0 0
        %1176 = vmatpush1.bf16.msra.mxu0 0
        %1177 = vmatprep.subr.bf16.mxu0 0
        %1178 = vmatpush1.bf16.msra.mxu0 0
        %1179 = vmatprep.subr.bf16.mxu0 0
        %1180 = vmatpush1.bf16.msra.mxu0 0
        %1181 = vmatprep.subr.bf16.mxu0 0
        %1182 = vmatpush1.bf16.msra.mxu0 0
        %1183 = vmatprep.subr.bf16.mxu0 0
        %1184 = vmatpush1.bf16.msra.mxu0 0
        %1185 = vmatprep.subr.bf16.mxu0 0
        %1186 = vmatpush1.bf16.msra.mxu0 0
        %1187 = vmatprep.subr.bf16.mxu0 0
        %1188 = vmatpush1.bf16.msra.mxu0 0
        %1189 = vmatprep.subr.bf16.mxu0 0
        %1190 = vmatpush1.bf16.msra.mxu0 0
        %1191 = vmatprep.subr.bf16.mxu0 0
        %1192 = vmatpush1.bf16.msra.mxu0 0
        %1193 = vmatprep.subr.bf16.mxu0 0
        %1194 = vmatpush1.bf16.msra.mxu0 0
        %1195 = vmatprep.subr.bf16.mxu0 0
        %1196 = vmatpush1.bf16.msra.mxu0 0
        %1197 = vmatprep.subr.bf16.mxu0 0
        %1198 = vmatpush1.bf16.msra.mxu0 0
        %1199 = vmatprep.subr.bf16.mxu0 0
        %1200 = vmatpush1.bf16.msra.mxu0 0
        %1201 = vmatprep.subr.bf16.mxu0 0
        %1202 = vmatpush1.bf16.msra.mxu0 0
        %1203 = vmatprep.mubr.bf16.mxu0 0
        %1204 = vmatmul.mubr.bf16.gmra.mrb[0].mxu0 %v1128
        %v1205 = vpop.f32.mrb[0].mxu0
        %v1206 = vadd.f32 %v1077, %v1205
        %v1207 = vpop.f32.mrb[0].mxu0
        %v1208 = vadd.f32 %v1081, %v1207
        %v1209 = vpop.f32.mrb[0].mxu0
        %v1210 = vpop.f32.mrb[0].mxu0
        %1211 = vdwg.mxu0
        %v1212 = vmul.f32 %v1165, 0.35355338
        %v1213 = vmul.f32 %v1167, 0.35355338
        %v1214 = vmul.f32 %v1206, 0.35355338
        %v1215 = vmul.f32 %v1208, 0.35355338
        %v1216 = vld [vmem:[%s13] sm:$0xff]
        %v1217 = vld [vmem:[%s13 + $0x8] sm:$0xff]
        %v1218 = vld [vmem:[%s13 + $0x10] sm:$0xff]
        %v1219 = vld [vmem:[%s13 + $0x18] sm:$0xff]
        %v1220 = vld [vmem:[%s13 + $0x20] sm:$0xff]
        %v1221 = vld [vmem:[%s13 + $0x28] sm:$0xff]
        %v1222 = vld [vmem:[%s13 + $0x30] sm:$0xff]
        %v1223 = vld [vmem:[%s13 + $0x38] sm:$0xff]
        %v1224 = vld [vmem:[%s15] sm:$0xf]
        %v1226 = vlaneseq
        %v1227 = vshrl.u32 %v1226, 7
        %v1228 = vsub.s32 0, %v1227
        %v1229 = vrot.slane %v1224, %v1228
        %v1230 = vlaneseq
        %v1231 = vshrl.u32 %v1230, 7
        %v1232 = vsub.s32 1, %v1231
        %v1233 = vrot.slane %v1224, %v1232
        %v1234 = vlaneseq
        %v1235 = vshrl.u32 %v1234, 7
        %v1236 = vsub.s32 2, %v1235
        %v1237 = vrot.slane %v1224, %v1236
        %v1238 = vlaneseq
        %v1239 = vshrl.u32 %v1238, 7
        %v1240 = vsub.s32 3, %v1239
        %v1241 = vrot.slane %v1224, %v1240
        %v1254 = vunpack.c.l.b16 %v1216
        %v1255 = vunpack.c.h.b16 %v1216
        %v1256 = vunpack.c.l.b16 %v1217
        %v1257 = vunpack.c.h.b16 %v1217
        %v1258 = vunpack.c.l.b16 %v1218
        %v1259 = vunpack.c.h.b16 %v1218
        %v1260 = vunpack.c.l.b16 %v1219
        %v1261 = vunpack.c.h.b16 %v1219
        %v1262 = vunpack.c.l.b16 %v1220
        %v1263 = vunpack.c.h.b16 %v1220
        %v1264 = vunpack.c.l.b16 %v1221
        %v1265 = vunpack.c.h.b16 %v1221
        %v1266 = vunpack.c.l.b16 %v1222
        %v1267 = vunpack.c.h.b16 %v1222
        %v1268 = vunpack.c.l.b16 %v1223
        %v1269 = vunpack.c.h.b16 %v1223
        %v1270 = vpack.c.b16 %v1258, %v1254
        %v1271 = vpack.c.b16 %v1259, %v1255
        %v1272 = vpack.c.b16 %v1260, %v1256
        %v1273 = vpack.c.b16 %v1261, %v1257
        %v1274 = vpack.c.b16 %v1266, %v1262
        %v1275 = vpack.c.b16 %v1267, %v1263
        %v1276 = vpack.c.b16 %v1268, %v1264
        %v1277 = vpack.c.b16 %v1269, %v1265
        %v1287 = vsel %vm1126, %v1055, 0
        %1289 = vmatprep.subr.bf16.mxu0 %v1271
        %1290 = vmatpush1.bf16.msra.mxu0 %v1270
        %1291 = vmatprep.subr.bf16.mxu0 %v1275
        %1292 = vmatpush1.bf16.msra.mxu0 %v1274
        %1293 = vmatprep.subr.bf16.mxu0 0
        %1294 = vmatpush1.bf16.msra.mxu0 0
        %1295 = vmatprep.subr.bf16.mxu0 0
        %1296 = vmatpush1.bf16.msra.mxu0 0
        %1297 = vmatprep.subr.bf16.mxu0 0
        %1298 = vmatpush1.bf16.msra.mxu0 0
        %1299 = vmatprep.subr.bf16.mxu0 0
        %1300 = vmatpush1.bf16.msra.mxu0 0
        %1301 = vmatprep.subr.bf16.mxu0 0
        %1302 = vmatpush1.bf16.msra.mxu0 0
        %1303 = vmatprep.subr.bf16.mxu0 0
        %1304 = vmatpush1.bf16.msra.mxu0 0
        %1305 = vmatprep.subr.bf16.mxu0 0
        %1306 = vmatpush1.bf16.msra.mxu0 0
        %1307 = vmatprep.subr.bf16.mxu0 0
        %1308 = vmatpush1.bf16.msra.mxu0 0
        %1309 = vmatprep.subr.bf16.mxu0 0
        %1310 = vmatpush1.bf16.msra.mxu0 0
        %1311 = vmatprep.subr.bf16.mxu0 0
        %1312 = vmatpush1.bf16.msra.mxu0 0
        %1313 = vmatprep.subr.bf16.mxu0 0
        %1314 = vmatpush1.bf16.msra.mxu0 0
        %1315 = vmatprep.subr.bf16.mxu0 0
        %1316 = vmatpush1.bf16.msra.mxu0 0
        %1317 = vmatprep.subr.bf16.mxu0 0
        %1318 = vmatpush1.bf16.msra.mxu0 0
        %1319 = vmatprep.subr.bf16.mxu0 0
        %1320 = vmatpush1.bf16.msra.mxu0 0
        %1321 = vmatprep.mubr.bf16.mxu0 0
        %1322 = vmatmul.mubr.bf16.gmra.mrb[0].mxu0 %v1287
        %v1323 = vpop.f32.mrb[0].mxu0
        %v1324 = vadd.f32 %v1229, %v1323
        %v1325 = vpop.f32.mrb[0].mxu0
        %v1326 = vadd.f32 %v1233, %v1325
        %v1327 = vpop.f32.mrb[0].mxu0
        %v1328 = vpop.f32.mrb[0].mxu0
        %1329 = vdwg.mxu0
        %1330 = vmatprep.subr.bf16.mxu0 %v1273
        %1331 = vmatpush1.bf16.msra.mxu0 %v1272
        %1332 = vmatprep.subr.bf16.mxu0 %v1277
        %1333 = vmatpush1.bf16.msra.mxu0 %v1276
        %1334 = vmatprep.subr.bf16.mxu0 0
        %1335 = vmatpush1.bf16.msra.mxu0 0
        %1336 = vmatprep.subr.bf16.mxu0 0
        %1337 = vmatpush1.bf16.msra.mxu0 0
        %1338 = vmatprep.subr.bf16.mxu0 0
        %1339 = vmatpush1.bf16.msra.mxu0 0
        %1340 = vmatprep.subr.bf16.mxu0 0
        %1341 = vmatpush1.bf16.msra.mxu0 0
        %1342 = vmatprep.subr.bf16.mxu0 0
        %1343 = vmatpush1.bf16.msra.mxu0 0
        %1344 = vmatprep.subr.bf16.mxu0 0
        %1345 = vmatpush1.bf16.msra.mxu0 0
        %1346 = vmatprep.subr.bf16.mxu0 0
        %1347 = vmatpush1.bf16.msra.mxu0 0
        %1348 = vmatprep.subr.bf16.mxu0 0
        %1349 = vmatpush1.bf16.msra.mxu0 0
        %1350 = vmatprep.subr.bf16.mxu0 0
        %1351 = vmatpush1.bf16.msra.mxu0 0
        %1352 = vmatprep.subr.bf16.mxu0 0
        %1353 = vmatpush1.bf16.msra.mxu0 0
        %1354 = vmatprep.subr.bf16.mxu0 0
        %1355 = vmatpush1.bf16.msra.mxu0 0
        %1356 = vmatprep.subr.bf16.mxu0 0
        %1357 = vmatpush1.bf16.msra.mxu0 0
        %1358 = vmatprep.subr.bf16.mxu0 0
        %1359 = vmatpush1.bf16.msra.mxu0 0
        %1360 = vmatprep.subr.bf16.mxu0 0
        %1361 = vmatpush1.bf16.msra.mxu0 0
        %1362 = vmatprep.mubr.bf16.mxu0 0
        %1363 = vmatmul.mubr.bf16.gmra.mrb[0].mxu0 %v1287
        %v1364 = vpop.f32.mrb[0].mxu0
        %v1365 = vadd.f32 %v1237, %v1364
        %v1366 = vpop.f32.mrb[0].mxu0
        %v1367 = vadd.f32 %v1241, %v1366
        %v1368 = vpop.f32.mrb[0].mxu0
        %v1369 = vpop.f32.mrb[0].mxu0
        %1370 = vdwg.mxu0
        %v1371 = vld [vmem:[%s17] sm:$0xff]
        %v1372 = vld [vmem:[%s17 + $0x8] sm:$0xff]
        %v1373 = vld [vmem:[%s17 + $0x10] sm:$0xff]
        %v1374 = vld [vmem:[%s17 + $0x18] sm:$0xff]
        %v1375 = vld [vmem:[%s17 + $0x20] sm:$0xff]
        %v1376 = vld [vmem:[%s17 + $0x28] sm:$0xff]
        %v1377 = vld [vmem:[%s17 + $0x30] sm:$0xff]
        %v1378 = vld [vmem:[%s17 + $0x38] sm:$0xff]
        %v1379 = vld [vmem:[%s19] sm:$0xf]
        %v1381 = vlaneseq
        %v1382 = vshrl.u32 %v1381, 7
        %v1383 = vsub.s32 0, %v1382
        %v1384 = vrot.slane %v1379, %v1383
        %v1385 = vlaneseq
        %v1386 = vshrl.u32 %v1385, 7
        %v1387 = vsub.s32 1, %v1386
        %v1388 = vrot.slane %v1379, %v1387
        %v1389 = vlaneseq
        %v1390 = vshrl.u32 %v1389, 7
        %v1391 = vsub.s32 2, %v1390
        %v1392 = vrot.slane %v1379, %v1391
        %v1393 = vlaneseq
        %v1394 = vshrl.u32 %v1393, 7
        %v1395 = vsub.s32 3, %v1394
        %v1396 = vrot.slane %v1379, %v1395
        %v1409 = vunpack.c.l.b16 %v1371
        %v1410 = vunpack.c.h.b16 %v1371
        %v1411 = vunpack.c.l.b16 %v1372
        %v1412 = vunpack.c.h.b16 %v1372
        %v1413 = vunpack.c.l.b16 %v1373
        %v1414 = vunpack.c.h.b16 %v1373
        %v1415 = vunpack.c.l.b16 %v1374
        %v1416 = vunpack.c.h.b16 %v1374
        %v1417 = vunpack.c.l.b16 %v1375
        %v1418 = vunpack.c.h.b16 %v1375
        %v1419 = vunpack.c.l.b16 %v1376
        %v1420 = vunpack.c.h.b16 %v1376
        %v1421 = vunpack.c.l.b16 %v1377
        %v1422 = vunpack.c.h.b16 %v1377
        %v1423 = vunpack.c.l.b16 %v1378
        %v1424 = vunpack.c.h.b16 %v1378
        %v1425 = vpack.c.b16 %v1413, %v1409
        %v1426 = vpack.c.b16 %v1414, %v1410
        %v1427 = vpack.c.b16 %v1415, %v1411
        %v1428 = vpack.c.b16 %v1416, %v1412
        %v1429 = vpack.c.b16 %v1421, %v1417
        %v1430 = vpack.c.b16 %v1422, %v1418
        %v1431 = vpack.c.b16 %v1423, %v1419
        %v1432 = vpack.c.b16 %v1424, %v1420
        %1441 = vmatprep.subr.bf16.mxu0 %v1426
        %1442 = vmatpush1.bf16.msra.mxu0 %v1425
        %1443 = vmatprep.subr.bf16.mxu0 %v1430
        %1444 = vmatpush1.bf16.msra.mxu0 %v1429
        %1445 = vmatprep.subr.bf16.mxu0 0
        %1446 = vmatpush1.bf16.msra.mxu0 0
        %1447 = vmatprep.subr.bf16.mxu0 0
        %1448 = vmatpush1.bf16.msra.mxu0 0
        %1449 = vmatprep.subr.bf16.mxu0 0
        %1450 = vmatpush1.bf16.msra.mxu0 0
        %1451 = vmatprep.subr.bf16.mxu0 0
        %1452 = vmatpush1.bf16.msra.mxu0 0
        %1453 = vmatprep.subr.bf16.mxu0 0
        %1454 = vmatpush1.bf16.msra.mxu0 0
        %1455 = vmatprep.subr.bf16.mxu0 0
        %1456 = vmatpush1.bf16.msra.mxu0 0
        %1457 = vmatprep.subr.bf16.mxu0 0
        %1458 = vmatpush1.bf16.msra.mxu0 0
        %1459 = vmatprep.subr.bf16.mxu0 0
        %1460 = vmatpush1.bf16.msra.mxu0 0
        %1461 = vmatprep.subr.bf16.mxu0 0
        %1462 = vmatpush1.bf16.msra.mxu0 0
        %1463 = vmatprep.subr.bf16.mxu0 0
        %1464 = vmatpush1.bf16.msra.mxu0 0
        %1465 = vmatprep.subr.bf16.mxu0 0
        %1466 = vmatpush1.bf16.msra.mxu0 0
        %1467 = vmatprep.subr.bf16.mxu0 0
        %1468 = vmatpush1.bf16.msra.mxu0 0
        %1469 = vmatprep.subr.bf16.mxu0 0
        %1470 = vmatpush1.bf16.msra.mxu0 0
        %1471 = vmatprep.subr.bf16.mxu0 0
        %1472 = vmatpush1.bf16.msra.mxu0 0
        %1473 = vmatprep.mubr.bf16.mxu0 0
        %1474 = vmatmul.mubr.bf16.gmra.mrb[0].mxu0 %v1287
        %v1475 = vpop.f32.mrb[0].mxu0
        %v1476 = vadd.f32 %v1384, %v1475
        %v1477 = vpop.f32.mrb[0].mxu0
        %v1478 = vadd.f32 %v1388, %v1477
        %v1479 = vpop.f32.mrb[0].mxu0
        %v1480 = vpop.f32.mrb[0].mxu0
        %1481 = vdwg.mxu0
        %1482 = vmatprep.subr.bf16.mxu0 %v1428
        %1483 = vmatpush1.bf16.msra.mxu0 %v1427
        %1484 = vmatprep.subr.bf16.mxu0 %v1432
        %1485 = vmatpush1.bf16.msra.mxu0 %v1431
        %1486 = vmatprep.subr.bf16.mxu0 0
        %1487 = vmatpush1.bf16.msra.mxu0 0
        %1488 = vmatprep.subr.bf16.mxu0 0
        %1489 = vmatpush1.bf16.msra.mxu0 0
        %1490 = vmatprep.subr.bf16.mxu0 0
        %1491 = vmatpush1.bf16.msra.mxu0 0
        %1492 = vmatprep.subr.bf16.mxu0 0
        %1493 = vmatpush1.bf16.msra.mxu0 0
        %1494 = vmatprep.subr.bf16.mxu0 0
        %1495 = vmatpush1.bf16.msra.mxu0 0
        %1496 = vmatprep.subr.bf16.mxu0 0
        %1497 = vmatpush1.bf16.msra.mxu0 0
        %1498 = vmatprep.subr.bf16.mxu0 0
        %1499 = vmatpush1.bf16.msra.mxu0 0
        %1500 = vmatprep.subr.bf16.mxu0 0
        %1501 = vmatpush1.bf16.msra.mxu0 0
        %1502 = vmatprep.subr.bf16.mxu0 0
        %1503 = vmatpush1.bf16.msra.mxu0 0
        %1504 = vmatprep.subr.bf16.mxu0 0
        %1505 = vmatpush1.bf16.msra.mxu0 0
        %1506 = vmatprep.subr.bf16.mxu0 0
        %1507 = vmatpush1.bf16.msra.mxu0 0
        %1508 = vmatprep.subr.bf16.mxu0 0
        %1509 = vmatpush1.bf16.msra.mxu0 0
        %1510 = vmatprep.subr.bf16.mxu0 0
        %1511 = vmatpush1.bf16.msra.mxu0 0
        %1512 = vmatprep.subr.bf16.mxu0 0
        %1513 = vmatpush1.bf16.msra.mxu0 0
        %1514 = vmatprep.mubr.bf16.mxu0 0
        %1515 = vmatmul.mubr.bf16.gmra.mrb[0].mxu0 %v1287
        %v1516 = vpop.f32.mrb[0].mxu0
        %v1517 = vadd.f32 %v1392, %v1516
        %v1518 = vpop.f32.mrb[0].mxu0
        %v1519 = vadd.f32 %v1396, %v1518
        %v1520 = vpop.f32.mrb[0].mxu0
        %v1521 = vpop.f32.mrb[0].mxu0
        %1522 = vdwg.mxu0
        %v1523 = vpack.c.bf16 %v1212, %v1212
        %v1524 = vpack.c.bf16 %v1324, %v1324
        %v1525 = vpack.c.bf16 %v1476, %v1476
        %1526 = vmatprep.subr.bf16.mxu0 0
        %1527 = vmatpush1.bf16.xpose.msra.mxu0 %v1524
        %1528 = vmatprep.subr.bf16.mxu0 0
        %1529 = vmatpush1.bf16.xpose.msra.mxu0 0
        %1530 = vmatprep.subr.bf16.mxu0 0
        %1531 = vmatpush1.bf16.xpose.msra.mxu0 0
        %1532 = vmatprep.subr.bf16.mxu0 0
        %1533 = vmatpush1.bf16.xpose.msra.mxu0 0
        %1534 = vmatprep.subr.bf16.mxu0 0
        %1535 = vmatpush1.bf16.xpose.msra.mxu0 0
        %1536 = vmatprep.subr.bf16.mxu0 0
        %1537 = vmatpush1.bf16.xpose.msra.mxu0 0
        %1538 = vmatprep.subr.bf16.mxu0 0
        %1539 = vmatpush1.bf16.xpose.msra.mxu0 0
        %1540 = vmatprep.subr.bf16.mxu0 0
        %1541 = vmatpush1.bf16.xpose.msra.mxu0 0
        %1542 = vmatprep.subr.bf16.mxu0 0
        %1543 = vmatpush1.bf16.xpose.msra.mxu0 0
        %1544 = vmatprep.subr.bf16.mxu0 0
        %1545 = vmatpush1.bf16.xpose.msra.mxu0 0
        %1546 = vmatprep.subr.bf16.mxu0 0
        %1547 = vmatpush1.bf16.xpose.msra.mxu0 0
        %1548 = vmatprep.subr.bf16.mxu0 0
        %1549 = vmatpush1.bf16.xpose.msra.mxu0 0
        %1550 = vmatprep.subr.bf16.mxu0 0
        %1551 = vmatpush1.bf16.xpose.msra.mxu0 0
        %1552 = vmatprep.subr.bf16.mxu0 0
        %1553 = vmatpush1.bf16.xpose.msra.mxu0 0
        %1554 = vmatprep.subr.bf16.mxu0 0
        %1555 = vmatpush1.bf16.xpose.msra.mxu0 0
        %1556 = vmatprep.subr.bf16.mxu0 0
        %1557 = vmatpush1.bf16.xpose.msra.mxu0 0
        %1558 = vmatprep.mubr.bf16.mxu0 0
        %1559 = vmatmul.mubr.bf16.gmra.mrb[0].mxu0 %v1523
        %v1560 = vpop.f32.mrb[0].mxu0
        %v1561 = vadd.f32 0.0, %v1560
        %v1562 = vpop.f32.mrb[0].mxu0
        %v1563 = vpop.f32.mrb[0].mxu0
        %v1564 = vpop.f32.mrb[0].mxu0
        %1565 = vdwg.mxu0
        %v1566 = vsel %vm1051, -1e+18, %v1561
        %vm1567 = vcmask 64512
        %v1568 = vsel %vm1567, %v1566, -inf
        %1569 = vmax.xlane.f32.xlu0 %v1568
        %v1570 = vpop.xlane.xlu0 %1569
        %v1571 = vsub.f32 %v1566, %v1570
        %v1572 = vmul.f32 %v1571, 1.442695
        %v1573 = vpow.pop %v1572
        %v1574 = vsel %vm1567, %v1573, 0.0
        %1575 = vadd.xlane.f32.xlu0 %v1574
        %v1576 = vpop.xlane.xlu0 %1575
        %v1577 = vrcp.pop %v1576
        %v1578 = vmul.f32 %v1573, %v1577
        %v1579 = vpack.c.bf16 %v1578, %v1578
        %v1581 = vsel %vm1567, %v1579, 0
        %vm1583 = vcmask 1043456
        %v1585 = vsel %vm1583, %v1525, 0
        %1587 = vmatprep.subr.bf16.mxu0 0
        %1588 = vmatpush1.bf16.msra.mxu0 %v1585
        %1589 = vmatprep.subr.bf16.mxu0 0
        %1590 = vmatpush1.bf16.msra.mxu0 0
        %1591 = vmatprep.subr.bf16.mxu0 0
        %1592 = vmatpush1.bf16.msra.mxu0 0
        %1593 = vmatprep.subr.bf16.mxu0 0
        %1594 = vmatpush1.bf16.msra.mxu0 0
        %1595 = vmatprep.subr.bf16.mxu0 0
        %1596 = vmatpush1.bf16.msra.mxu0 0
        %1597 = vmatprep.subr.bf16.mxu0 0
        %1598 = vmatpush1.bf16.msra.mxu0 0
        %1599 = vmatprep.subr.bf16.mxu0 0
        %1600 = vmatpush1.bf16.msra.mxu0 0
        %1601 = vmatprep.subr.bf16.mxu0 0
        %1602 = vmatpush1.bf16.msra.mxu0 0
        %1603 = vmatprep.subr.bf16.mxu0 0
        %1604 = vmatpush1.bf16.msra.mxu0 0
        %1605 = vmatprep.subr.bf16.mxu0 0
        %1606 = vmatpush1.bf16.msra.mxu0 0
        %1607 = vmatprep.subr.bf16.mxu0 0
        %1608 = vmatpush1.bf16.msra.mxu0 0
        %1609 = vmatprep.subr.bf16.mxu0 0
        %1610 = vmatpush1.bf16.msra.mxu0 0
        %1611 = vmatprep.subr.bf16.mxu0 0
        %1612 = vmatpush1.bf16.msra.mxu0 0
        %1613 = vmatprep.subr.bf16.mxu0 0
        %1614 = vmatpush1.bf16.msra.mxu0 0
        %1615 = vmatprep.subr.bf16.mxu0 0
        %1616 = vmatpush1.bf16.msra.mxu0 0
        %1617 = vmatprep.subr.bf16.mxu0 0
        %1618 = vmatpush1.bf16.msra.mxu0 0
        %1619 = vmatprep.mubr.bf16.mxu0 0
        %1620 = vmatmul.mubr.bf16.gmra.mrb[0].mxu0 %v1581
        %v1621 = vpop.f32.mrb[0].mxu0
        %v1622 = vadd.f32 0.0, %v1621
        %v1623 = vpop.f32.mrb[0].mxu0
        %v1624 = vpop.f32.mrb[0].mxu0
        %v1625 = vpop.f32.mrb[0].mxu0
        %1626 = vdwg.mxu0
        %1627 = vst [vmem:[#allocation2] sm:$0xff] %v1622
        %v1628 = vpack.c.bf16 %v1213, %v1213
        %v1629 = vpack.c.bf16 %v1326, %v1326
        %v1630 = vpack.c.bf16 %v1478, %v1478
        %1631 = vmatprep.subr.bf16.mxu0 0
        %1632 = vmatpush1.bf16.xpose.msra.mxu0 %v1629
        %1633 = vmatprep.subr.bf16.mxu0 0
        %1634 = vmatpush1.bf16.xpose.msra.mxu0 0
        %1635 = vmatprep.subr.bf16.mxu0 0
        %1636 = vmatpush1.bf16.xpose.msra.mxu0 0
        %1637 = vmatprep.subr.bf16.mxu0 0
        %1638 = vmatpush1.bf16.xpose.msra.mxu0 0
        %1639 = vmatprep.subr.bf16.mxu0 0
        %1640 = vmatpush1.bf16.xpose.msra.mxu0 0
        %1641 = vmatprep.subr.bf16.mxu0 0
        %1642 = vmatpush1.bf16.xpose.msra.mxu0 0
        %1643 = vmatprep.subr.bf16.mxu0 0
        %1644 = vmatpush1.bf16.xpose.msra.mxu0 0
        %1645 = vmatprep.subr.bf16.mxu0 0
        %1646 = vmatpush1.bf16.xpose.msra.mxu0 0
        %1647 = vmatprep.subr.bf16.mxu0 0
        %1648 = vmatpush1.bf16.xpose.msra.mxu0 0
        %1649 = vmatprep.subr.bf16.mxu0 0
        %1650 = vmatpush1.bf16.xpose.msra.mxu0 0
        %1651 = vmatprep.subr.bf16.mxu0 0
        %1652 = vmatpush1.bf16.xpose.msra.mxu0 0
        %1653 = vmatprep.subr.bf16.mxu0 0
        %1654 = vmatpush1.bf16.xpose.msra.mxu0 0
        %1655 = vmatprep.subr.bf16.mxu0 0
        %1656 = vmatpush1.bf16.xpose.msra.mxu0 0
        %1657 = vmatprep.subr.bf16.mxu0 0
        %1658 = vmatpush1.bf16.xpose.msra.mxu0 0
        %1659 = vmatprep.subr.bf16.mxu0 0
        %1660 = vmatpush1.bf16.xpose.msra.mxu0 0
        %1661 = vmatprep.subr.bf16.mxu0 0
        %1662 = vmatpush1.bf16.xpose.msra.mxu0 0
        %1663 = vmatprep.mubr.bf16.mxu0 0
        %1664 = vmatmul.mubr.bf16.gmra.mrb[0].mxu0 %v1628
        %v1665 = vpop.f32.mrb[0].mxu0
        %v1666 = vadd.f32 0.0, %v1665
        %v1667 = vpop.f32.mrb[0].mxu0
        %v1668 = vpop.f32.mrb[0].mxu0
        %v1669 = vpop.f32.mrb[0].mxu0
        %1670 = vdwg.mxu0
        %v1671 = vsel %vm1051, -1e+18, %v1666
        %v1672 = vsel %vm1567, %v1671, -inf
        %1673 = vmax.xlane.f32.xlu0 %v1672
        %v1674 = vpop.xlane.xlu0 %1673
        %v1675 = vsub.f32 %v1671, %v1674
        %v1676 = vmul.f32 %v1675, 1.442695
        %v1677 = vpow.pop %v1676
        %v1678 = vsel %vm1567, %v1677, 0.0
        %1679 = vadd.xlane.f32.xlu0 %v1678
        %v1680 = vpop.xlane.xlu0 %1679
        %v1681 = vrcp.pop %v1680
        %v1682 = vmul.f32 %v1677, %v1681
        %v1683 = vpack.c.bf16 %v1682, %v1682
        %v1685 = vsel %vm1567, %v1683, 0
        %v1688 = vsel %vm1583, %v1630, 0
        %1690 = vmatprep.subr.bf16.mxu0 0
        %1691 = vmatpush1.bf16.msra.mxu0 %v1688
        %1692 = vmatprep.subr.bf16.mxu0 0
        %1693 = vmatpush1.bf16.msra.mxu0 0
        %1694 = vmatprep.subr.bf16.mxu0 0
        %1695 = vmatpush1.bf16.msra.mxu0 0
        %1696 = vmatprep.subr.bf16.mxu0 0
        %1697 = vmatpush1.bf16.msra.mxu0 0
        %1698 = vmatprep.subr.bf16.mxu0 0
        %1699 = vmatpush1.bf16.msra.mxu0 0
        %1700 = vmatprep.subr.bf16.mxu0 0
        %1701 = vmatpush1.bf16.msra.mxu0 0
        %1702 = vmatprep.subr.bf16.mxu0 0
        %1703 = vmatpush1.bf16.msra.mxu0 0
        %1704 = vmatprep.subr.bf16.mxu0 0
        %1705 = vmatpush1.bf16.msra.mxu0 0
        %1706 = vmatprep.subr.bf16.mxu0 0
        %1707 = vmatpush1.bf16.msra.mxu0 0
        %1708 = vmatprep.subr.bf16.mxu0 0
        %1709 = vmatpush1.bf16.msra.mxu0 0
        %1710 = vmatprep.subr.bf16.mxu0 0
        %1711 = vmatpush1.bf16.msra.mxu0 0
        %1712 = vmatprep.subr.bf16.mxu0 0
        %1713 = vmatpush1.bf16.msra.mxu0 0
        %1714 = vmatprep.subr.bf16.mxu0 0
        %1715 = vmatpush1.bf16.msra.mxu0 0
        %1716 = vmatprep.subr.bf16.mxu0 0
        %1717 = vmatpush1.bf16.msra.mxu0 0
        %1718 = vmatprep.subr.bf16.mxu0 0
        %1719 = vmatpush1.bf16.msra.mxu0 0
        %1720 = vmatprep.subr.bf16.mxu0 0
        %1721 = vmatpush1.bf16.msra.mxu0 0
        %1722 = vmatprep.mubr.bf16.mxu0 0
        %1723 = vmatmul.mubr.bf16.gmra.mrb[0].mxu0 %v1685
        %v1724 = vpop.f32.mrb[0].mxu0
        %v1725 = vadd.f32 0.0, %v1724
        %v1726 = vpop.f32.mrb[0].mxu0
        %v1727 = vpop.f32.mrb[0].mxu0
        %v1728 = vpop.f32.mrb[0].mxu0
        %1729 = vdwg.mxu0
        %1730 = vst [vmem:[#allocation2 + $0x8] sm:$0xff] %v1725
        %v1731 = vpack.c.bf16 %v1214, %v1214
        %v1732 = vpack.c.bf16 %v1365, %v1365
        %v1733 = vpack.c.bf16 %v1517, %v1517
        %1734 = vmatprep.subr.bf16.mxu0 0
        %1735 = vmatpush1.bf16.xpose.msra.mxu0 %v1732
        %1736 = vmatprep.subr.bf16.mxu0 0
        %1737 = vmatpush1.bf16.xpose.msra.mxu0 0
        %1738 = vmatprep.subr.bf16.mxu0 0
        %1739 = vmatpush1.bf16.xpose.msra.mxu0 0
        %1740 = vmatprep.subr.bf16.mxu0 0
        %1741 = vmatpush1.bf16.xpose.msra.mxu0 0
        %1742 = vmatprep.subr.bf16.mxu0 0
        %1743 = vmatpush1.bf16.xpose.msra.mxu0 0
        %1744 = vmatprep.subr.bf16.mxu0 0
        %1745 = vmatpush1.bf16.xpose.msra.mxu0 0
        %1746 = vmatprep.subr.bf16.mxu0 0
        %1747 = vmatpush1.bf16.xpose.msra.mxu0 0
        %1748 = vmatprep.subr.bf16.mxu0 0
        %1749 = vmatpush1.bf16.xpose.msra.mxu0 0
        %1750 = vmatprep.subr.bf16.mxu0 0
        %1751 = vmatpush1.bf16.xpose.msra.mxu0 0
        %1752 = vmatprep.subr.bf16.mxu0 0
        %1753 = vmatpush1.bf16.xpose.msra.mxu0 0
        %1754 = vmatprep.subr.bf16.mxu0 0
        %1755 = vmatpush1.bf16.xpose.msra.mxu0 0
        %1756 = vmatprep.subr.bf16.mxu0 0
        %1757 = vmatpush1.bf16.xpose.msra.mxu0 0
        %1758 = vmatprep.subr.bf16.mxu0 0
        %1759 = vmatpush1.bf16.xpose.msra.mxu0 0
        %1760 = vmatprep.subr.bf16.mxu0 0
        %1761 = vmatpush1.bf16.xpose.msra.mxu0 0
        %1762 = vmatprep.subr.bf16.mxu0 0
        %1763 = vmatpush1.bf16.xpose.msra.mxu0 0
        %1764 = vmatprep.subr.bf16.mxu0 0
        %1765 = vmatpush1.bf16.xpose.msra.mxu0 0
        %1766 = vmatprep.mubr.bf16.mxu0 0
        %1767 = vmatmul.mubr.bf16.gmra.mrb[0].mxu0 %v1731
        %v1768 = vpop.f32.mrb[0].mxu0
        %v1769 = vadd.f32 0.0, %v1768
        %v1770 = vpop.f32.mrb[0].mxu0
        %v1771 = vpop.f32.mrb[0].mxu0
        %v1772 = vpop.f32.mrb[0].mxu0
        %1773 = vdwg.mxu0
        %v1774 = vsel %vm1051, -1e+18, %v1769
        %v1775 = vsel %vm1567, %v1774, -inf
        %1776 = vmax.xlane.f32.xlu0 %v1775
        %v1777 = vpop.xlane.xlu0 %1776
        %v1778 = vsub.f32 %v1774, %v1777
        %v1779 = vmul.f32 %v1778, 1.442695
        %v1780 = vpow.pop %v1779
        %v1781 = vsel %vm1567, %v1780, 0.0
        %1782 = vadd.xlane.f32.xlu0 %v1781
        %v1783 = vpop.xlane.xlu0 %1782
        %v1784 = vrcp.pop %v1783
        %v1785 = vmul.f32 %v1780, %v1784
        %v1786 = vpack.c.bf16 %v1785, %v1785
        %v1788 = vsel %vm1567, %v1786, 0
        %v1791 = vsel %vm1583, %v1733, 0
        %1793 = vmatprep.subr.bf16.mxu0 0
        %1794 = vmatpush1.bf16.msra.mxu0 %v1791
        %1795 = vmatprep.subr.bf16.mxu0 0
        %1796 = vmatpush1.bf16.msra.mxu0 0
        %1797 = vmatprep.subr.bf16.mxu0 0
        %1798 = vmatpush1.bf16.msra.mxu0 0
        %1799 = vmatprep.subr.bf16.mxu0 0
        %1800 = vmatpush1.bf16.msra.mxu0 0
        %1801 = vmatprep.subr.bf16.mxu0 0
        %1802 = vmatpush1.bf16.msra.mxu0 0
        %1803 = vmatprep.subr.bf16.mxu0 0
        %1804 = vmatpush1.bf16.msra.mxu0 0
        %1805 = vmatprep.subr.bf16.mxu0 0
        %1806 = vmatpush1.bf16.msra.mxu0 0
        %1807 = vmatprep.subr.bf16.mxu0 0
        %1808 = vmatpush1.bf16.msra.mxu0 0
        %1809 = vmatprep.subr.bf16.mxu0 0
        %1810 = vmatpush1.bf16.msra.mxu0 0
        %1811 = vmatprep.subr.bf16.mxu0 0
        %1812 = vmatpush1.bf16.msra.mxu0 0
        %1813 = vmatprep.subr.bf16.mxu0 0
        %1814 = vmatpush1.bf16.msra.mxu0 0
        %1815 = vmatprep.subr.bf16.mxu0 0
        %1816 = vmatpush1.bf16.msra.mxu0 0
        %1817 = vmatprep.subr.bf16.mxu0 0
        %1818 = vmatpush1.bf16.msra.mxu0 0
        %1819 = vmatprep.subr.bf16.mxu0 0
        %1820 = vmatpush1.bf16.msra.mxu0 0
        %1821 = vmatprep.subr.bf16.mxu0 0
        %1822 = vmatpush1.bf16.msra.mxu0 0
        %1823 = vmatprep.subr.bf16.mxu0 0
        %1824 = vmatpush1.bf16.msra.mxu0 0
        %1825 = vmatprep.mubr.bf16.mxu0 0
        %1826 = vmatmul.mubr.bf16.gmra.mrb[0].mxu0 %v1788
        %v1827 = vpop.f32.mrb[0].mxu0
        %v1828 = vadd.f32 0.0, %v1827
        %v1829 = vpop.f32.mrb[0].mxu0
        %v1830 = vpop.f32.mrb[0].mxu0
        %v1831 = vpop.f32.mrb[0].mxu0
        %1832 = vdwg.mxu0
        %1833 = vst [vmem:[#allocation2 + $0x10] sm:$0xff] %v1828
        %v1834 = vpack.c.bf16 %v1215, %v1215
        %v1835 = vpack.c.bf16 %v1367, %v1367
        %v1836 = vpack.c.bf16 %v1519, %v1519
        %1837 = vmatprep.subr.bf16.mxu0 0
        %1838 = vmatpush1.bf16.xpose.msra.mxu0 %v1835
        %1839 = vmatprep.subr.bf16.mxu0 0
        %1840 = vmatpush1.bf16.xpose.msra.mxu0 0
        %1841 = vmatprep.subr.bf16.mxu0 0
        %1842 = vmatpush1.bf16.xpose.msra.mxu0 0
        %1843 = vmatprep.subr.bf16.mxu0 0
        %1844 = vmatpush1.bf16.xpose.msra.mxu0 0
        %1845 = vmatprep.subr.bf16.mxu0 0
        %1846 = vmatpush1.bf16.xpose.msra.mxu0 0
        %1847 = vmatprep.subr.bf16.mxu0 0
        %1848 = vmatpush1.bf16.xpose.msra.mxu0 0
        %1849 = vmatprep.subr.bf16.mxu0 0
        %1850 = vmatpush1.bf16.xpose.msra.mxu0 0
        %1851 = vmatprep.subr.bf16.mxu0 0
        %1852 = vmatpush1.bf16.xpose.msra.mxu0 0
        %1853 = vmatprep.subr.bf16.mxu0 0
        %1854 = vmatpush1.bf16.xpose.msra.mxu0 0
        %1855 = vmatprep.subr.bf16.mxu0 0
        %1856 = vmatpush1.bf16.xpose.msra.mxu0 0
        %1857 = vmatprep.subr.bf16.mxu0 0
        %1858 = vmatpush1.bf16.xpose.msra.mxu0 0
        %1859 = vmatprep.subr.bf16.mxu0 0
        %1860 = vmatpush1.bf16.xpose.msra.mxu0 0
        %1861 = vmatprep.subr.bf16.mxu0 0
        %1862 = vmatpush1.bf16.xpose.msra.mxu0 0
        %1863 = vmatprep.subr.bf16.mxu0 0
        %1864 = vmatpush1.bf16.xpose.msra.mxu0 0
        %1865 = vmatprep.subr.bf16.mxu0 0
        %1866 = vmatpush1.bf16.xpose.msra.mxu0 0
        %1867 = vmatprep.subr.bf16.mxu0 0
        %1868 = vmatpush1.bf16.xpose.msra.mxu0 0
        %1869 = vmatprep.mubr.bf16.mxu0 0
        %1870 = vmatmul.mubr.bf16.gmra.mrb[0].mxu0 %v1834
        %v1871 = vpop.f32.mrb[0].mxu0
        %v1872 = vadd.f32 0.0, %v1871
        %v1873 = vpop.f32.mrb[0].mxu0
        %v1874 = vpop.f32.mrb[0].mxu0
        %v1875 = vpop.f32.mrb[0].mxu0
        %1876 = vdwg.mxu0
        %v1877 = vsel %vm1051, -1e+18, %v1872
        %v1878 = vsel %vm1567, %v1877, -inf
        %1879 = vmax.xlane.f32.xlu0 %v1878
        %v1880 = vpop.xlane.xlu0 %1879
        %v1881 = vsub.f32 %v1877, %v1880
        %v1882 = vmul.f32 %v1881, 1.442695
        %v1883 = vpow.pop %v1882
        %v1884 = vsel %vm1567, %v1883, 0.0
        %1885 = vadd.xlane.f32.xlu0 %v1884
        %v1886 = vpop.xlane.xlu0 %1885
        %v1887 = vrcp.pop %v1886
        %v1888 = vmul.f32 %v1883, %v1887
        %v1889 = vpack.c.bf16 %v1888, %v1888
        %v1891 = vsel %vm1567, %v1889, 0
        %v1894 = vsel %vm1583, %v1836, 0
        %1896 = vmatprep.subr.bf16.mxu0 0
        %1897 = vmatpush1.bf16.msra.mxu0 %v1894
        %1898 = vmatprep.subr.bf16.mxu0 0
        %1899 = vmatpush1.bf16.msra.mxu0 0
        %1900 = vmatprep.subr.bf16.mxu0 0
        %1901 = vmatpush1.bf16.msra.mxu0 0
        %1902 = vmatprep.subr.bf16.mxu0 0
        %1903 = vmatpush1.bf16.msra.mxu0 0
        %1904 = vmatprep.subr.bf16.mxu0 0
        %1905 = vmatpush1.bf16.msra.mxu0 0
        %1906 = vmatprep.subr.bf16.mxu0 0
        %1907 = vmatpush1.bf16.msra.mxu0 0
        %1908 = vmatprep.subr.bf16.mxu0 0
        %1909 = vmatpush1.bf16.msra.mxu0 0
        %1910 = vmatprep.subr.bf16.mxu0 0
        %1911 = vmatpush1.bf16.msra.mxu0 0
        %1912 = vmatprep.subr.bf16.mxu0 0
        %1913 = vmatpush1.bf16.msra.mxu0 0
        %1914 = vmatprep.subr.bf16.mxu0 0
        %1915 = vmatpush1.bf16.msra.mxu0 0
        %1916 = vmatprep.subr.bf16.mxu0 0
        %1917 = vmatpush1.bf16.msra.mxu0 0
        %1918 = vmatprep.subr.bf16.mxu0 0
        %1919 = vmatpush1.bf16.msra.mxu0 0
        %1920 = vmatprep.subr.bf16.mxu0 0
        %1921 = vmatpush1.bf16.msra.mxu0 0
        %1922 = vmatprep.subr.bf16.mxu0 0
        %1923 = vmatpush1.bf16.msra.mxu0 0
        %1924 = vmatprep.subr.bf16.mxu0 0
        %1925 = vmatpush1.bf16.msra.mxu0 0
        %1926 = vmatprep.subr.bf16.mxu0 0
        %1927 = vmatpush1.bf16.msra.mxu0 0
        %1928 = vmatprep.mubr.bf16.mxu0 0
        %1929 = vmatmul.mubr.bf16.gmra.mrb[0].mxu0 %v1891
        %v1930 = vpop.f32.mrb[0].mxu0
        %v1931 = vadd.f32 0.0, %v1930
        %v1932 = vpop.f32.mrb[0].mxu0
        %v1933 = vpop.f32.mrb[0].mxu0
        %v1934 = vpop.f32.mrb[0].mxu0
        %1935 = vdwg.mxu0
        %1936 = vst [vmem:[#allocation2 + $0x18] sm:$0xff] %v1931
        %v1937 = vld [vmem:[#allocation2] sm:$0xff]
        %v1938 = vld [vmem:[#allocation2 + $0x8] sm:$0xff]
        %v1939 = vld [vmem:[#allocation2 + $0x10] sm:$0xff]
        %v1940 = vld [vmem:[#allocation2 + $0x18] sm:$0xff]
        %v1941 = vpack.c.bf16 %v1937, %v1937
        %v1942 = vpack.c.bf16 %v1938, %v1938
        %v1943 = vpack.c.bf16 %v1939, %v1939
        %v1944 = vpack.c.bf16 %v1940, %v1940
        %v1945 = vld [vmem:[%s21] sm:$0xf]
        %v1946 = vld [vmem:[%s21 + $0x4] sm:$0xf]
        %v1947 = vld [vmem:[%s21 + $0x8] sm:$0xf]
        %v1948 = vld [vmem:[%s21 + $0xc] sm:$0xf]
        %v1949 = vld [vmem:[%s21 + $0x10] sm:$0xf]
        %v1950 = vld [vmem:[%s21 + $0x14] sm:$0xf]
        %v1951 = vld [vmem:[%s21 + $0x18] sm:$0xf]
        %v1952 = vld [vmem:[%s21 + $0x1c] sm:$0xf]
        %v1953 = vld [vmem:[%s21 + $0x20] sm:$0xf]
        %v1954 = vld [vmem:[%s21 + $0x24] sm:$0xf]
        %v1955 = vld [vmem:[%s21 + $0x28] sm:$0xf]
        %v1956 = vld [vmem:[%s21 + $0x2c] sm:$0xf]
        %v1957 = vld [vmem:[%s21 + $0x30] sm:$0xf]
        %v1958 = vld [vmem:[%s21 + $0x34] sm:$0xf]
        %v1959 = vld [vmem:[%s21 + $0x38] sm:$0xf]
        %v1960 = vld [vmem:[%s21 + $0x3c] sm:$0xf]
        %v1961 = vld [vmem:[%s21 + $0x40] sm:$0xf]
        %v1962 = vld [vmem:[%s21 + $0x44] sm:$0xf]
        %v1963 = vld [vmem:[%s21 + $0x48] sm:$0xf]
        %v1964 = vld [vmem:[%s21 + $0x4c] sm:$0xf]
        %v1965 = vld [vmem:[%s21 + $0x50] sm:$0xf]
        %v1966 = vld [vmem:[%s21 + $0x54] sm:$0xf]
        %v1967 = vld [vmem:[%s21 + $0x58] sm:$0xf]
        %v1968 = vld [vmem:[%s21 + $0x5c] sm:$0xf]
        %v1969 = vld [vmem:[%s21 + $0x60] sm:$0xf]
        %v1970 = vld [vmem:[%s21 + $0x64] sm:$0xf]
        %v1971 = vld [vmem:[%s21 + $0x68] sm:$0xf]
        %v1972 = vld [vmem:[%s21 + $0x6c] sm:$0xf]
        %v1973 = vld [vmem:[%s21 + $0x70] sm:$0xf]
        %v1974 = vld [vmem:[%s21 + $0x74] sm:$0xf]
        %v1975 = vld [vmem:[%s21 + $0x78] sm:$0xf]
        %v1976 = vld [vmem:[%s21 + $0x7c] sm:$0xf]
        %v1977 = vld [vmem:[%s21 + $0x80] sm:$0xf]
        %v1978 = vld [vmem:[%s21 + $0x84] sm:$0xf]
        %v1979 = vld [vmem:[%s21 + $0x88] sm:$0xf]
        %v1980 = vld [vmem:[%s21 + $0x8c] sm:$0xf]
        %v1981 = vld [vmem:[%s21 + $0x90] sm:$0xf]
        %v1982 = vld [vmem:[%s21 + $0x94] sm:$0xf]
        %v1983 = vld [vmem:[%s21 + $0x98] sm:$0xf]
        %v1984 = vld [vmem:[%s21 + $0x9c] sm:$0xf]
        %v1985 = vld [vmem:[%s21 + $0xa0] sm:$0xf]
        %v1986 = vld [vmem:[%s21 + $0xa4] sm:$0xf]
        %v1987 = vld [vmem:[%s21 + $0xa8] sm:$0xf]
        %v1988 = vld [vmem:[%s21 + $0xac] sm:$0xf]
        %v1989 = vld [vmem:[%s21 + $0xb0] sm:$0xf]
        %v1990 = vld [vmem:[%s21 + $0xb4] sm:$0xf]
        %v1991 = vld [vmem:[%s21 + $0xb8] sm:$0xf]
        %v1992 = vld [vmem:[%s21 + $0xbc] sm:$0xf]
        %v1993 = vld [vmem:[%s21 + $0xc0] sm:$0xf]
        %v1994 = vld [vmem:[%s21 + $0xc4] sm:$0xf]
        %v1995 = vld [vmem:[%s21 + $0xc8] sm:$0xf]
        %v1996 = vld [vmem:[%s21 + $0xcc] sm:$0xf]
        %v1997 = vld [vmem:[%s21 + $0xd0] sm:$0xf]
        %v1998 = vld [vmem:[%s21 + $0xd4] sm:$0xf]
        %v1999 = vld [vmem:[%s21 + $0xd8] sm:$0xf]
        %v2000 = vld [vmem:[%s21 + $0xdc] sm:$0xf]
        %v2001 = vld [vmem:[%s21 + $0xe0] sm:$0xf]
        %v2002 = vld [vmem:[%s21 + $0xe4] sm:$0xf]
        %v2003 = vld [vmem:[%s21 + $0xe8] sm:$0xf]
        %v2004 = vld [vmem:[%s21 + $0xec] sm:$0xf]
        %v2005 = vld [vmem:[%s21 + $0xf0] sm:$0xf]
        %v2006 = vld [vmem:[%s21 + $0xf4] sm:$0xf]
        %v2007 = vld [vmem:[%s21 + $0xf8] sm:$0xf]
        %v2008 = vld [vmem:[%s21 + $0xfc] sm:$0xf]
        %v2009 = vld [vmem:[%s23] sm:$0x1]
        %v2011 = vlaneseq
        %v2012 = vshrl.u32 %v2011, 7
        %v2013 = vsub.s32 0, %v2012
        %v2014 = vrot.slane %v2009, %v2013
        %v2080 = vunpack.c.l.b16 %v1945
        %v2081 = vunpack.c.l.b16 %v1946
        %v2082 = vunpack.c.l.b16 %v1947
        %v2083 = vunpack.c.l.b16 %v1948
        %v2084 = vunpack.c.l.b16 %v1949
        %v2085 = vunpack.c.l.b16 %v1950
        %v2086 = vunpack.c.l.b16 %v1951
        %v2087 = vunpack.c.l.b16 %v1952
        %v2088 = vunpack.c.l.b16 %v1953
        %v2089 = vunpack.c.l.b16 %v1954
        %v2090 = vunpack.c.l.b16 %v1955
        %v2091 = vunpack.c.l.b16 %v1956
        %v2092 = vunpack.c.l.b16 %v1957
        %v2093 = vunpack.c.l.b16 %v1958
        %v2094 = vunpack.c.l.b16 %v1959
        %v2095 = vunpack.c.l.b16 %v1960
        %v2096 = vunpack.c.l.b16 %v1961
        %v2097 = vunpack.c.l.b16 %v1962
        %v2098 = vunpack.c.l.b16 %v1963
        %v2099 = vunpack.c.l.b16 %v1964
        %v2100 = vunpack.c.l.b16 %v1965
        %v2101 = vunpack.c.l.b16 %v1966
        %v2102 = vunpack.c.l.b16 %v1967
        %v2103 = vunpack.c.l.b16 %v1968
        %v2104 = vunpack.c.l.b16 %v1969
        %v2105 = vunpack.c.l.b16 %v1970
        %v2106 = vunpack.c.l.b16 %v1971
        %v2107 = vunpack.c.l.b16 %v1972
        %v2108 = vunpack.c.l.b16 %v1973
        %v2109 = vunpack.c.l.b16 %v1974
        %v2110 = vunpack.c.l.b16 %v1975
        %v2111 = vunpack.c.l.b16 %v1976
        %v2112 = vunpack.c.l.b16 %v1977
        %v2113 = vunpack.c.l.b16 %v1978
        %v2114 = vunpack.c.l.b16 %v1979
        %v2115 = vunpack.c.l.b16 %v1980
        %v2116 = vunpack.c.l.b16 %v1981
        %v2117 = vunpack.c.l.b16 %v1982
        %v2118 = vunpack.c.l.b16 %v1983
        %v2119 = vunpack.c.l.b16 %v1984
        %v2120 = vunpack.c.l.b16 %v1985
        %v2121 = vunpack.c.l.b16 %v1986
        %v2122 = vunpack.c.l.b16 %v1987
        %v2123 = vunpack.c.l.b16 %v1988
        %v2124 = vunpack.c.l.b16 %v1989
        %v2125 = vunpack.c.l.b16 %v1990
        %v2126 = vunpack.c.l.b16 %v1991
        %v2127 = vunpack.c.l.b16 %v1992
        %v2128 = vunpack.c.l.b16 %v1993
        %v2129 = vunpack.c.l.b16 %v1994
        %v2130 = vunpack.c.l.b16 %v1995
        %v2131 = vunpack.c.l.b16 %v1996
        %v2132 = vunpack.c.l.b16 %v1997
        %v2133 = vunpack.c.l.b16 %v1998
        %v2134 = vunpack.c.l.b16 %v1999
        %v2135 = vunpack.c.l.b16 %v2000
        %v2136 = vunpack.c.l.b16 %v2001
        %v2137 = vunpack.c.l.b16 %v2002
        %v2138 = vunpack.c.l.b16 %v2003
        %v2139 = vunpack.c.l.b16 %v2004
        %v2140 = vunpack.c.l.b16 %v2005
        %v2141 = vunpack.c.l.b16 %v2006
        %v2142 = vunpack.c.l.b16 %v2007
        %v2143 = vunpack.c.l.b16 %v2008
        %v2144 = vpack.c.b16 %v2081, %v2080
        %v2145 = vpack.c.b16 %v2083, %v2082
        %v2146 = vpack.c.b16 %v2085, %v2084
        %v2147 = vpack.c.b16 %v2087, %v2086
        %v2148 = vpack.c.b16 %v2089, %v2088
        %v2149 = vpack.c.b16 %v2091, %v2090
        %v2150 = vpack.c.b16 %v2093, %v2092
        %v2151 = vpack.c.b16 %v2095, %v2094
        %v2152 = vpack.c.b16 %v2097, %v2096
        %v2153 = vpack.c.b16 %v2099, %v2098
        %v2154 = vpack.c.b16 %v2101, %v2100
        %v2155 = vpack.c.b16 %v2103, %v2102
        %v2156 = vpack.c.b16 %v2105, %v2104
        %v2157 = vpack.c.b16 %v2107, %v2106
        %v2158 = vpack.c.b16 %v2109, %v2108
        %v2159 = vpack.c.b16 %v2111, %v2110
        %v2160 = vpack.c.b16 %v2113, %v2112
        %v2161 = vpack.c.b16 %v2115, %v2114
        %v2162 = vpack.c.b16 %v2117, %v2116
        %v2163 = vpack.c.b16 %v2119, %v2118
        %v2164 = vpack.c.b16 %v2121, %v2120
        %v2165 = vpack.c.b16 %v2123, %v2122
        %v2166 = vpack.c.b16 %v2125, %v2124
        %v2167 = vpack.c.b16 %v2127, %v2126
        %v2168 = vpack.c.b16 %v2129, %v2128
        %v2169 = vpack.c.b16 %v2131, %v2130
        %v2170 = vpack.c.b16 %v2133, %v2132
        %v2171 = vpack.c.b16 %v2135, %v2134
        %v2172 = vpack.c.b16 %v2137, %v2136
        %v2173 = vpack.c.b16 %v2139, %v2138
        %v2174 = vpack.c.b16 %v2141, %v2140
        %v2175 = vpack.c.b16 %v2143, %v2142
        %2208 = vmatprep.subr.bf16.mxu0 0
        %2209 = vmatpush1.bf16.msra.mxu0 %v2144
        %2210 = vmatprep.subr.bf16.mxu0 0
        %2211 = vmatpush1.bf16.msra.mxu0 %v2145
        %2212 = vmatprep.subr.bf16.mxu0 0
        %2213 = vmatpush1.bf16.msra.mxu0 %v2146
        %2214 = vmatprep.subr.bf16.mxu0 0
        %2215 = vmatpush1.bf16.msra.mxu0 %v2147
        %2216 = vmatprep.subr.bf16.mxu0 0
        %2217 = vmatpush1.bf16.msra.mxu0 %v2148
        %2218 = vmatprep.subr.bf16.mxu0 0
        %2219 = vmatpush1.bf16.msra.mxu0 %v2149
        %2220 = vmatprep.subr.bf16.mxu0 0
        %2221 = vmatpush1.bf16.msra.mxu0 %v2150
        %2222 = vmatprep.subr.bf16.mxu0 0
        %2223 = vmatpush1.bf16.msra.mxu0 %v2151
        %2224 = vmatprep.subr.bf16.mxu0 0
        %2225 = vmatpush1.bf16.msra.mxu0 %v2152
        %2226 = vmatprep.subr.bf16.mxu0 0
        %2227 = vmatpush1.bf16.msra.mxu0 %v2153
        %2228 = vmatprep.subr.bf16.mxu0 0
        %2229 = vmatpush1.bf16.msra.mxu0 %v2154
        %2230 = vmatprep.subr.bf16.mxu0 0
        %2231 = vmatpush1.bf16.msra.mxu0 %v2155
        %2232 = vmatprep.subr.bf16.mxu0 0
        %2233 = vmatpush1.bf16.msra.mxu0 %v2156
        %2234 = vmatprep.subr.bf16.mxu0 0
        %2235 = vmatpush1.bf16.msra.mxu0 %v2157
        %2236 = vmatprep.subr.bf16.mxu0 0
        %2237 = vmatpush1.bf16.msra.mxu0 %v2158
        %2238 = vmatprep.subr.bf16.mxu0 0
        %2239 = vmatpush1.bf16.msra.mxu0 %v2159
        %2240 = vmatprep.mubr.bf16.mxu0 %v1942
        %2241 = vmatmul.mubr.bf16.gmra.mrb[0].mxu0 %v1941
        %v2242 = vpop.f32.mrb[0].mxu0
        %v2243 = vadd.f32 %v2014, %v2242
        %v2244 = vpop.f32.mrb[0].mxu0
        %v2245 = vpop.f32.mrb[0].mxu0
        %v2246 = vpop.f32.mrb[0].mxu0
        %2247 = vdwg.mxu0
        %2248 = vmatprep.subr.bf16.mxu0 0
        %2249 = vmatpush1.bf16.msra.mxu0 %v2160
        %2250 = vmatprep.subr.bf16.mxu0 0
        %2251 = vmatpush1.bf16.msra.mxu0 %v2161
        %2252 = vmatprep.subr.bf16.mxu0 0
        %2253 = vmatpush1.bf16.msra.mxu0 %v2162
        %2254 = vmatprep.subr.bf16.mxu0 0
        %2255 = vmatpush1.bf16.msra.mxu0 %v2163
        %2256 = vmatprep.subr.bf16.mxu0 0
        %2257 = vmatpush1.bf16.msra.mxu0 %v2164
        %2258 = vmatprep.subr.bf16.mxu0 0
        %2259 = vmatpush1.bf16.msra.mxu0 %v2165
        %2260 = vmatprep.subr.bf16.mxu0 0
        %2261 = vmatpush1.bf16.msra.mxu0 %v2166
        %2262 = vmatprep.subr.bf16.mxu0 0
        %2263 = vmatpush1.bf16.msra.mxu0 %v2167
        %2264 = vmatprep.subr.bf16.mxu0 0
        %2265 = vmatpush1.bf16.msra.mxu0 %v2168
        %2266 = vmatprep.subr.bf16.mxu0 0
        %2267 = vmatpush1.bf16.msra.mxu0 %v2169
        %2268 = vmatprep.subr.bf16.mxu0 0
        %2269 = vmatpush1.bf16.msra.mxu0 %v2170
        %2270 = vmatprep.subr.bf16.mxu0 0
        %2271 = vmatpush1.bf16.msra.mxu0 %v2171
        %2272 = vmatprep.subr.bf16.mxu0 0
        %2273 = vmatpush1.bf16.msra.mxu0 %v2172
        %2274 = vmatprep.subr.bf16.mxu0 0
        %2275 = vmatpush1.bf16.msra.mxu0 %v2173
        %2276 = vmatprep.subr.bf16.mxu0 0
        %2277 = vmatpush1.bf16.msra.mxu0 %v2174
        %2278 = vmatprep.subr.bf16.mxu0 0
        %2279 = vmatpush1.bf16.msra.mxu0 %v2175
        %2280 = vmatprep.mubr.bf16.mxu0 %v1944
        %2281 = vmatmul.mubr.bf16.gmra.mrb[0].mxu0 %v1943
        %v2282 = vpop.f32.mrb[0].mxu0
        %v2283 = vadd.f32 %v2243, %v2282
        %v2284 = vpop.f32.mrb[0].mxu0
        %v2285 = vpop.f32.mrb[0].mxu0
        %v2286 = vpop.f32.mrb[0].mxu0
        %2287 = vdwg.mxu0
        %v2288 = vadd.f32 %v2283, %v1033
        %v2289 = vld [vmem:[%s25] sm:$0x1]
        %v2290 = vld [vmem:[%s27] sm:$0x1]
        %v2291 = vsel %vm1126, %v2288, 0.0
        %2292 = vadd.xlane.f32.xlu0 %v2291
        %v2293 = vpop.xlane.xlu0 %2292
        %v2294 = vrcp.pop 32.0
        %v2295 = vmul.f32 %v2293, %v2294
        %v2296 = vsub.f32 %v2288, %v2295
        %v2297 = vmul.f32 %v2296, %v2296
        %v2298 = vsel %vm1126, %v2297, 0.0
        %2299 = vadd.xlane.f32.xlu0 %v2298
        %v2300 = vpop.xlane.xlu0 %2299
        %v2301 = vmul.f32 %v2300, %v2294
        %v2302 = vadd.f32 %v2301, 1e-06
        %v2303 = vrsqrt.pop %v2302
        %v2304 = vmul.f32 %v2296, %v2303
        %v2306 = vlaneseq
        %v2307 = vshrl.u32 %v2306, 7
        %v2308 = vsub.s32 0, %v2307
        %v2309 = vrot.slane %v2289, %v2308
        %v2311 = vmul.f32 %v2304, %v2309
        %v2313 = vlaneseq
        %v2314 = vshrl.u32 %v2313, 7
        %v2315 = vsub.s32 0, %v2314
        %v2316 = vrot.slane %v2290, %v2315
        %v2318 = vadd.f32 %v2311, %v2316
        %v2319 = vpack.c.bf16 %v2318, %v2318
        %v2320 = vpack.c.bf16 %v1035, %v1034
        %v2321 = vld [vmem:[%s29] sm:$0xff]
        %v2322 = vld [vmem:[%s29 + $0x8] sm:$0xff]
        %v2323 = vld [vmem:[%s29 + $0x10] sm:$0xff]
        %v2324 = vld [vmem:[%s29 + $0x18] sm:$0xff]
        %v2325 = vld [vmem:[%s29 + $0x20] sm:$0xff]
        %v2326 = vld [vmem:[%s29 + $0x28] sm:$0xff]
        %v2327 = vld [vmem:[%s29 + $0x30] sm:$0xff]
        %v2328 = vld [vmem:[%s29 + $0x38] sm:$0xff]
        %v2329 = vld [vmem:[%s31] sm:$0xf]
        %v2331 = vlaneseq
        %v2332 = vshrl.u32 %v2331, 7
        %v2333 = vsub.s32 0, %v2332
        %v2334 = vrot.slane %v2329, %v2333
        %v2335 = vlaneseq
        %v2336 = vshrl.u32 %v2335, 7
        %v2337 = vsub.s32 1, %v2336
        %v2338 = vrot.slane %v2329, %v2337
        %v2339 = vlaneseq
        %v2340 = vshrl.u32 %v2339, 7
        %v2341 = vsub.s32 2, %v2340
        %v2342 = vrot.slane %v2329, %v2341
        %v2343 = vlaneseq
        %v2344 = vshrl.u32 %v2343, 7
        %v2345 = vsub.s32 3, %v2344
        %v2346 = vrot.slane %v2329, %v2345
        %v2359 = vunpack.c.l.b16 %v2321
        %v2360 = vunpack.c.h.b16 %v2321
        %v2361 = vunpack.c.l.b16 %v2322
        %v2362 = vunpack.c.h.b16 %v2322
        %v2363 = vunpack.c.l.b16 %v2323
        %v2364 = vunpack.c.h.b16 %v2323
        %v2365 = vunpack.c.l.b16 %v2324
        %v2366 = vunpack.c.h.b16 %v2324
        %v2367 = vunpack.c.l.b16 %v2325
        %v2368 = vunpack.c.h.b16 %v2325
        %v2369 = vunpack.c.l.b16 %v2326
        %v2370 = vunpack.c.h.b16 %v2326
        %v2371 = vunpack.c.l.b16 %v2327
        %v2372 = vunpack.c.h.b16 %v2327
        %v2373 = vunpack.c.l.b16 %v2328
        %v2374 = vunpack.c.h.b16 %v2328
        %v2375 = vpack.c.b16 %v2363, %v2359
        %v2376 = vpack.c.b16 %v2364, %v2360
        %v2377 = vpack.c.b16 %v2365, %v2361
        %v2378 = vpack.c.b16 %v2366, %v2362
        %v2379 = vpack.c.b16 %v2371, %v2367
        %v2380 = vpack.c.b16 %v2372, %v2368
        %v2381 = vpack.c.b16 %v2373, %v2369
        %v2382 = vpack.c.b16 %v2374, %v2370
        %v2392 = vsel %vm1126, %v2319, 0
        %2394 = vmatprep.subr.bf16.mxu0 %v2376
        %2395 = vmatpush1.bf16.msra.mxu0 %v2375
        %2396 = vmatprep.subr.bf16.mxu0 %v2380
        %2397 = vmatpush1.bf16.msra.mxu0 %v2379
        %2398 = vmatprep.subr.bf16.mxu0 0
        %2399 = vmatpush1.bf16.msra.mxu0 0
        %2400 = vmatprep.subr.bf16.mxu0 0
        %2401 = vmatpush1.bf16.msra.mxu0 0
        %2402 = vmatprep.subr.bf16.mxu0 0
        %2403 = vmatpush1.bf16.msra.mxu0 0
        %2404 = vmatprep.subr.bf16.mxu0 0
        %2405 = vmatpush1.bf16.msra.mxu0 0
        %2406 = vmatprep.subr.bf16.mxu0 0
        %2407 = vmatpush1.bf16.msra.mxu0 0
        %2408 = vmatprep.subr.bf16.mxu0 0
        %2409 = vmatpush1.bf16.msra.mxu0 0
        %2410 = vmatprep.subr.bf16.mxu0 0
        %2411 = vmatpush1.bf16.msra.mxu0 0
        %2412 = vmatprep.subr.bf16.mxu0 0
        %2413 = vmatpush1.bf16.msra.mxu0 0
        %2414 = vmatprep.subr.bf16.mxu0 0
        %2415 = vmatpush1.bf16.msra.mxu0 0
        %2416 = vmatprep.subr.bf16.mxu0 0
        %2417 = vmatpush1.bf16.msra.mxu0 0
        %2418 = vmatprep.subr.bf16.mxu0 0
        %2419 = vmatpush1.bf16.msra.mxu0 0
        %2420 = vmatprep.subr.bf16.mxu0 0
        %2421 = vmatpush1.bf16.msra.mxu0 0
        %2422 = vmatprep.subr.bf16.mxu0 0
        %2423 = vmatpush1.bf16.msra.mxu0 0
        %2424 = vmatprep.subr.bf16.mxu0 0
        %2425 = vmatpush1.bf16.msra.mxu0 0
        %2426 = vmatprep.mubr.bf16.mxu0 0
        %2427 = vmatmul.mubr.bf16.gmra.mrb[0].mxu0 %v2392
        %v2428 = vpop.f32.mrb[0].mxu0
        %v2429 = vadd.f32 %v2334, %v2428
        %v2430 = vpop.f32.mrb[0].mxu0
        %v2431 = vadd.f32 %v2338, %v2430
        %v2432 = vpop.f32.mrb[0].mxu0
        %v2433 = vpop.f32.mrb[0].mxu0
        %2434 = vdwg.mxu0
        %2435 = vmatprep.subr.bf16.mxu0 %v2378
        %2436 = vmatpush1.bf16.msra.mxu0 %v2377
        %2437 = vmatprep.subr.bf16.mxu0 %v2382
        %2438 = vmatpush1.bf16.msra.mxu0 %v2381
        %2439 = vmatprep.subr.bf16.mxu0 0
        %2440 = vmatpush1.bf16.msra.mxu0 0
        %2441 = vmatprep.subr.bf16.mxu0 0
        %2442 = vmatpush1.bf16.msra.mxu0 0
        %2443 = vmatprep.subr.bf16.mxu0 0
        %2444 = vmatpush1.bf16.msra.mxu0 0
        %2445 = vmatprep.subr.bf16.mxu0 0
        %2446 = vmatpush1.bf16.msra.mxu0 0
        %2447 = vmatprep.subr.bf16.mxu0 0
        %2448 = vmatpush1.bf16.msra.mxu0 0
        %2449 = vmatprep.subr.bf16.mxu0 0
        %2450 = vmatpush1.bf16.msra.mxu0 0
        %2451 = vmatprep.subr.bf16.mxu0 0
        %2452 = vmatpush1.bf16.msra.mxu0 0
        %2453 = vmatprep.subr.bf16.mxu0 0
        %2454 = vmatpush1.bf16.msra.mxu0 0
        %2455 = vmatprep.subr.bf16.mxu0 0
        %2456 = vmatpush1.bf16.msra.mxu0 0
        %2457 = vmatprep.subr.bf16.mxu0 0
        %2458 = vmatpush1.bf16.msra.mxu0 0
        %2459 = vmatprep.subr.bf16.mxu0 0
        %2460 = vmatpush1.bf16.msra.mxu0 0
        %2461 = vmatprep.subr.bf16.mxu0 0
        %2462 = vmatpush1.bf16.msra.mxu0 0
        %2463 = vmatprep.subr.bf16.mxu0 0
        %2464 = vmatpush1.bf16.msra.mxu0 0
        %2465 = vmatprep.subr.bf16.mxu0 0
        %2466 = vmatpush1.bf16.msra.mxu0 0
        %2467 = vmatprep.mubr.bf16.mxu0 0
        %2468 = vmatmul.mubr.bf16.gmra.mrb[0].mxu0 %v2392
        %v2469 = vpop.f32.mrb[0].mxu0
        %v2470 = vadd.f32 %v2342, %v2469
        %v2471 = vpop.f32.mrb[0].mxu0
        %v2472 = vadd.f32 %v2346, %v2471
        %v2473 = vpop.f32.mrb[0].mxu0
        %v2474 = vpop.f32.mrb[0].mxu0
        %2475 = vdwg.mxu0
        %v2476 = vmul.f32 %v2429, 0.35355338
        %v2477 = vmul.f32 %v2431, 0.35355338
        %v2478 = vmul.f32 %v2470, 0.35355338
        %v2479 = vmul.f32 %v2472, 0.35355338
        %v2480 = vld [vmem:[%s33] sm:$0xff]
        %v2481 = vld [vmem:[%s33 + $0x8] sm:$0xff]
        %v2482 = vld [vmem:[%s33 + $0x10] sm:$0xff]
        %v2483 = vld [vmem:[%s33 + $0x18] sm:$0xff]
        %v2484 = vld [vmem:[%s33 + $0x20] sm:$0xff]
        %v2485 = vld [vmem:[%s33 + $0x28] sm:$0xff]
        %v2486 = vld [vmem:[%s33 + $0x30] sm:$0xff]
        %v2487 = vld [vmem:[%s33 + $0x38] sm:$0xff]
        %v2488 = vld [vmem:[%s35] sm:$0xf]
        %v2490 = vlaneseq
        %v2491 = vshrl.u32 %v2490, 7
        %v2492 = vsub.s32 0, %v2491
        %v2493 = vrot.slane %v2488, %v2492
        %v2494 = vlaneseq
        %v2495 = vshrl.u32 %v2494, 7
        %v2496 = vsub.s32 1, %v2495
        %v2497 = vrot.slane %v2488, %v2496
        %v2498 = vlaneseq
        %v2499 = vshrl.u32 %v2498, 7
        %v2500 = vsub.s32 2, %v2499
        %v2501 = vrot.slane %v2488, %v2500
        %v2502 = vlaneseq
        %v2503 = vshrl.u32 %v2502, 7
        %v2504 = vsub.s32 3, %v2503
        %v2505 = vrot.slane %v2488, %v2504
        %v2518 = vunpack.c.l.b16 %v2480
        %v2519 = vunpack.c.h.b16 %v2480
        %v2520 = vunpack.c.l.b16 %v2481
        %v2521 = vunpack.c.h.b16 %v2481
        %v2522 = vunpack.c.l.b16 %v2482
        %v2523 = vunpack.c.h.b16 %v2482
        %v2524 = vunpack.c.l.b16 %v2483
        %v2525 = vunpack.c.h.b16 %v2483
        %v2526 = vunpack.c.l.b16 %v2484
        %v2527 = vunpack.c.h.b16 %v2484
        %v2528 = vunpack.c.l.b16 %v2485
        %v2529 = vunpack.c.h.b16 %v2485
        %v2530 = vunpack.c.l.b16 %v2486
        %v2531 = vunpack.c.h.b16 %v2486
        %v2532 = vunpack.c.l.b16 %v2487
        %v2533 = vunpack.c.h.b16 %v2487
        %v2534 = vpack.c.b16 %v2522, %v2518
        %v2535 = vpack.c.b16 %v2523, %v2519
        %v2536 = vpack.c.b16 %v2524, %v2520
        %v2537 = vpack.c.b16 %v2525, %v2521
        %v2538 = vpack.c.b16 %v2530, %v2526
        %v2539 = vpack.c.b16 %v2531, %v2527
        %v2540 = vpack.c.b16 %v2532, %v2528
        %v2541 = vpack.c.b16 %v2533, %v2529
        %v2551 = vsel %vm1126, %v2320, 0
        %2553 = vmatprep.subr.bf16.mxu0 %v2535
        %2554 = vmatpush1.bf16.msra.mxu0 %v2534
        %2555 = vmatprep.subr.bf16.mxu0 %v2539
        %2556 = vmatpush1.bf16.msra.mxu0 %v2538
        %2557 = vmatprep.subr.bf16.mxu0 0
        %2558 = vmatpush1.bf16.msra.mxu0 0
        %2559 = vmatprep.subr.bf16.mxu0 0
        %2560 = vmatpush1.bf16.msra.mxu0 0
        %2561 = vmatprep.subr.bf16.mxu0 0
        %2562 = vmatpush1.bf16.msra.mxu0 0
        %2563 = vmatprep.subr.bf16.mxu0 0
        %2564 = vmatpush1.bf16.msra.mxu0 0
        %2565 = vmatprep.subr.bf16.mxu0 0
        %2566 = vmatpush1.bf16.msra.mxu0 0
        %2567 = vmatprep.subr.bf16.mxu0 0
        %2568 = vmatpush1.bf16.msra.mxu0 0
        %2569 = vmatprep.subr.bf16.mxu0 0
        %2570 = vmatpush1.bf16.msra.mxu0 0
        %2571 = vmatprep.subr.bf16.mxu0 0
        %2572 = vmatpush1.bf16.msra.mxu0 0
        %2573 = vmatprep.subr.bf16.mxu0 0
        %2574 = vmatpush1.bf16.msra.mxu0 0
        %2575 = vmatprep.subr.bf16.mxu0 0
        %2576 = vmatpush1.bf16.msra.mxu0 0
        %2577 = vmatprep.subr.bf16.mxu0 0
        %2578 = vmatpush1.bf16.msra.mxu0 0
        %2579 = vmatprep.subr.bf16.mxu0 0
        %2580 = vmatpush1.bf16.msra.mxu0 0
        %2581 = vmatprep.subr.bf16.mxu0 0
        %2582 = vmatpush1.bf16.msra.mxu0 0
        %2583 = vmatprep.subr.bf16.mxu0 0
        %2584 = vmatpush1.bf16.msra.mxu0 0
        %2585 = vmatprep.mubr.bf16.mxu0 0
        %2586 = vmatmul.mubr.bf16.gmra.mrb[0].mxu0 %v2551
        %v2587 = vpop.f32.mrb[0].mxu0
        %v2588 = vadd.f32 %v2493, %v2587
        %v2589 = vpop.f32.mrb[0].mxu0
        %v2590 = vadd.f32 %v2497, %v2589
        %v2591 = vpop.f32.mrb[0].mxu0
        %v2592 = vadd.f32 %v2493, %v2591
        %v2593 = vpop.f32.mrb[0].mxu0
        %v2594 = vadd.f32 %v2497, %v2593
        %2595 = vdwg.mxu0
        %2596 = vmatprep.subr.bf16.mxu0 %v2537
        %2597 = vmatpush1.bf16.msra.mxu0 %v2536
        %2598 = vmatprep.subr.bf16.mxu0 %v2541
        %2599 = vmatpush1.bf16.msra.mxu0 %v2540
        %2600 = vmatprep.subr.bf16.mxu0 0
        %2601 = vmatpush1.bf16.msra.mxu0 0
        %2602 = vmatprep.subr.bf16.mxu0 0
        %2603 = vmatpush1.bf16.msra.mxu0 0
        %2604 = vmatprep.subr.bf16.mxu0 0
        %2605 = vmatpush1.bf16.msra.mxu0 0
        %2606 = vmatprep.subr.bf16.mxu0 0
        %2607 = vmatpush1.bf16.msra.mxu0 0
        %2608 = vmatprep.subr.bf16.mxu0 0
        %2609 = vmatpush1.bf16.msra.mxu0 0
        %2610 = vmatprep.subr.bf16.mxu0 0
        %2611 = vmatpush1.bf16.msra.mxu0 0
        %2612 = vmatprep.subr.bf16.mxu0 0
        %2613 = vmatpush1.bf16.msra.mxu0 0
        %2614 = vmatprep.subr.bf16.mxu0 0
        %2615 = vmatpush1.bf16.msra.mxu0 0
        %2616 = vmatprep.subr.bf16.mxu0 0
        %2617 = vmatpush1.bf16.msra.mxu0 0
        %2618 = vmatprep.subr.bf16.mxu0 0
        %2619 = vmatpush1.bf16.msra.mxu0 0
        %2620 = vmatprep.subr.bf16.mxu0 0
        %2621 = vmatpush1.bf16.msra.mxu0 0
        %2622 = vmatprep.subr.bf16.mxu0 0
        %2623 = vmatpush1.bf16.msra.mxu0 0
        %2624 = vmatprep.subr.bf16.mxu0 0
        %2625 = vmatpush1.bf16.msra.mxu0 0
        %2626 = vmatprep.subr.bf16.mxu0 0
        %2627 = vmatpush1.bf16.msra.mxu0 0
        %2628 = vmatprep.mubr.bf16.mxu0 0
        %2629 = vmatmul.mubr.bf16.gmra.mrb[0].mxu0 %v2551
        %v2630 = vpop.f32.mrb[0].mxu0
        %v2631 = vadd.f32 %v2501, %v2630
        %v2632 = vpop.f32.mrb[0].mxu0
        %v2633 = vadd.f32 %v2505, %v2632
        %v2634 = vpop.f32.mrb[0].mxu0
        %v2635 = vadd.f32 %v2501, %v2634
        %v2636 = vpop.f32.mrb[0].mxu0
        %v2637 = vadd.f32 %v2505, %v2636
        %2638 = vdwg.mxu0
        %v2639 = vld [vmem:[%s37] sm:$0xff]
        %v2640 = vld [vmem:[%s37 + $0x8] sm:$0xff]
        %v2641 = vld [vmem:[%s37 + $0x10] sm:$0xff]
        %v2642 = vld [vmem:[%s37 + $0x18] sm:$0xff]
        %v2643 = vld [vmem:[%s37 + $0x20] sm:$0xff]
        %v2644 = vld [vmem:[%s37 + $0x28] sm:$0xff]
        %v2645 = vld [vmem:[%s37 + $0x30] sm:$0xff]
        %v2646 = vld [vmem:[%s37 + $0x38] sm:$0xff]
        %v2647 = vld [vmem:[%s39] sm:$0xf]
        %v2649 = vlaneseq
        %v2650 = vshrl.u32 %v2649, 7
        %v2651 = vsub.s32 0, %v2650
        %v2652 = vrot.slane %v2647, %v2651
        %v2653 = vlaneseq
        %v2654 = vshrl.u32 %v2653, 7
        %v2655 = vsub.s32 1, %v2654
        %v2656 = vrot.slane %v2647, %v2655
        %v2657 = vlaneseq
        %v2658 = vshrl.u32 %v2657, 7
        %v2659 = vsub.s32 2, %v2658
        %v2660 = vrot.slane %v2647, %v2659
        %v2661 = vlaneseq
        %v2662 = vshrl.u32 %v2661, 7
        %v2663 = vsub.s32 3, %v2662
        %v2664 = vrot.slane %v2647, %v2663
        %v2677 = vunpack.c.l.b16 %v2639
        %v2678 = vunpack.c.h.b16 %v2639
        %v2679 = vunpack.c.l.b16 %v2640
        %v2680 = vunpack.c.h.b16 %v2640
        %v2681 = vunpack.c.l.b16 %v2641
        %v2682 = vunpack.c.h.b16 %v2641
        %v2683 = vunpack.c.l.b16 %v2642
        %v2684 = vunpack.c.h.b16 %v2642
        %v2685 = vunpack.c.l.b16 %v2643
        %v2686 = vunpack.c.h.b16 %v2643
        %v2687 = vunpack.c.l.b16 %v2644
        %v2688 = vunpack.c.h.b16 %v2644
        %v2689 = vunpack.c.l.b16 %v2645
        %v2690 = vunpack.c.h.b16 %v2645
        %v2691 = vunpack.c.l.b16 %v2646
        %v2692 = vunpack.c.h.b16 %v2646
        %v2693 = vpack.c.b16 %v2681, %v2677
        %v2694 = vpack.c.b16 %v2682, %v2678
        %v2695 = vpack.c.b16 %v2683, %v2679
        %v2696 = vpack.c.b16 %v2684, %v2680
        %v2697 = vpack.c.b16 %v2689, %v2685
        %v2698 = vpack.c.b16 %v2690, %v2686
        %v2699 = vpack.c.b16 %v2691, %v2687
        %v2700 = vpack.c.b16 %v2692, %v2688
        %2709 = vmatprep.subr.bf16.mxu0 %v2694
        %2710 = vmatpush1.bf16.msra.mxu0 %v2693
        %2711 = vmatprep.subr.bf16.mxu0 %v2698
        %2712 = vmatpush1.bf16.msra.mxu0 %v2697
        %2713 = vmatprep.subr.bf16.mxu0 0
        %2714 = vmatpush1.bf16.msra.mxu0 0
        %2715 = vmatprep.subr.bf16.mxu0 0
        %2716 = vmatpush1.bf16.msra.mxu0 0
        %2717 = vmatprep.subr.bf16.mxu0 0
        %2718 = vmatpush1.bf16.msra.mxu0 0
        %2719 = vmatprep.subr.bf16.mxu0 0
        %2720 = vmatpush1.bf16.msra.mxu0 0
        %2721 = vmatprep.subr.bf16.mxu0 0
        %2722 = vmatpush1.bf16.msra.mxu0 0
        %2723 = vmatprep.subr.bf16.mxu0 0
        %2724 = vmatpush1.bf16.msra.mxu0 0
        %2725 = vmatprep.subr.bf16.mxu0 0
        %2726 = vmatpush1.bf16.msra.mxu0 0
        %2727 = vmatprep.subr.bf16.mxu0 0
        %2728 = vmatpush1.bf16.msra.mxu0 0
        %2729 = vmatprep.subr.bf16.mxu0 0
        %2730 = vmatpush1.bf16.msra.mxu0 0
        %2731 = vmatprep.subr.bf16.mxu0 0
        %2732 = vmatpush1.bf16.msra.mxu0 0
        %2733 = vmatprep.subr.bf16.mxu0 0
        %2734 = vmatpush1.bf16.msra.mxu0 0
        %2735 = vmatprep.subr.bf16.mxu0 0
        %2736 = vmatpush1.bf16.msra.mxu0 0
        %2737 = vmatprep.subr.bf16.mxu0 0
        %2738 = vmatpush1.bf16.msra.mxu0 0
        %2739 = vmatprep.subr.bf16.mxu0 0
        %2740 = vmatpush1.bf16.msra.mxu0 0
        %2741 = vmatprep.mubr.bf16.mxu0 0
        %2742 = vmatmul.mubr.bf16.gmra.mrb[0].mxu0 %v2551
        %v2743 = vpop.f32.mrb[0].mxu0
        %v2744 = vadd.f32 %v2652, %v2743
        %v2745 = vpop.f32.mrb[0].mxu0
        %v2746 = vadd.f32 %v2656, %v2745
        %v2747 = vpop.f32.mrb[0].mxu0
        %v2748 = vadd.f32 %v2652, %v2747
        %v2749 = vpop.f32.mrb[0].mxu0
        %v2750 = vadd.f32 %v2656, %v2749
        %2751 = vdwg.mxu0
        %2752 = vmatprep.subr.bf16.mxu0 %v2696
        %2753 = vmatpush1.bf16.msra.mxu0 %v2695
        %2754 = vmatprep.subr.bf16.mxu0 %v2700
        %2755 = vmatpush1.bf16.msra.mxu0 %v2699
        %2756 = vmatprep.subr.bf16.mxu0 0
        %2757 = vmatpush1.bf16.msra.mxu0 0
        %2758 = vmatprep.subr.bf16.mxu0 0
        %2759 = vmatpush1.bf16.msra.mxu0 0
        %2760 = vmatprep.subr.bf16.mxu0 0
        %2761 = vmatpush1.bf16.msra.mxu0 0
        %2762 = vmatprep.subr.bf16.mxu0 0
        %2763 = vmatpush1.bf16.msra.mxu0 0
        %2764 = vmatprep.subr.bf16.mxu0 0
        %2765 = vmatpush1.bf16.msra.mxu0 0
        %2766 = vmatprep.subr.bf16.mxu0 0
        %2767 = vmatpush1.bf16.msra.mxu0 0
        %2768 = vmatprep.subr.bf16.mxu0 0
        %2769 = vmatpush1.bf16.msra.mxu0 0
        %2770 = vmatprep.subr.bf16.mxu0 0
        %2771 = vmatpush1.bf16.msra.mxu0 0
        %2772 = vmatprep.subr.bf16.mxu0 0
        %2773 = vmatpush1.bf16.msra.mxu0 0
        %2774 = vmatprep.subr.bf16.mxu0 0
        %2775 = vmatpush1.bf16.msra.mxu0 0
        %2776 = vmatprep.subr.bf16.mxu0 0
        %2777 = vmatpush1.bf16.msra.mxu0 0
        %2778 = vmatprep.subr.bf16.mxu0 0
        %2779 = vmatpush1.bf16.msra.mxu0 0
        %2780 = vmatprep.subr.bf16.mxu0 0
        %2781 = vmatpush1.bf16.msra.mxu0 0
        %2782 = vmatprep.subr.bf16.mxu0 0
        %2783 = vmatpush1.bf16.msra.mxu0 0
        %2784 = vmatprep.mubr.bf16.mxu0 0
        %2785 = vmatmul.mubr.bf16.gmra.mrb[0].mxu0 %v2551
        %v2786 = vpop.f32.mrb[0].mxu0
        %v2787 = vadd.f32 %v2660, %v2786
        %v2788 = vpop.f32.mrb[0].mxu0
        %v2789 = vadd.f32 %v2664, %v2788
        %v2790 = vpop.f32.mrb[0].mxu0
        %v2791 = vadd.f32 %v2660, %v2790
        %v2792 = vpop.f32.mrb[0].mxu0
        %v2793 = vadd.f32 %v2664, %v2792
        %2794 = vdwg.mxu0
        %v2795 = vpack.c.bf16 %v2476, %v2476
        %v2796 = vpack.c.bf16 %v2592, %v2588
        %v2797 = vpack.c.bf16 %v2748, %v2744
        %2798 = vmatprep.subr.bf16.mxu0 0
        %2799 = vmatpush1.bf16.xpose.msra.mxu0 %v2796
        %2800 = vmatprep.subr.bf16.mxu0 0
        %2801 = vmatpush1.bf16.xpose.msra.mxu0 0
        %2802 = vmatprep.subr.bf16.mxu0 0
        %2803 = vmatpush1.bf16.xpose.msra.mxu0 0
        %2804 = vmatprep.subr.bf16.mxu0 0
        %2805 = vmatpush1.bf16.xpose.msra.mxu0 0
        %2806 = vmatprep.subr.bf16.mxu0 0
        %2807 = vmatpush1.bf16.xpose.msra.mxu0 0
        %2808 = vmatprep.subr.bf16.mxu0 0
        %2809 = vmatpush1.bf16.xpose.msra.mxu0 0
        %2810 = vmatprep.subr.bf16.mxu0 0
        %2811 = vmatpush1.bf16.xpose.msra.mxu0 0
        %2812 = vmatprep.subr.bf16.mxu0 0
        %2813 = vmatpush1.bf16.xpose.msra.mxu0 0
        %2814 = vmatprep.subr.bf16.mxu0 0
        %2815 = vmatpush1.bf16.xpose.msra.mxu0 0
        %2816 = vmatprep.subr.bf16.mxu0 0
        %2817 = vmatpush1.bf16.xpose.msra.mxu0 0
        %2818 = vmatprep.subr.bf16.mxu0 0
        %2819 = vmatpush1.bf16.xpose.msra.mxu0 0
        %2820 = vmatprep.subr.bf16.mxu0 0
        %2821 = vmatpush1.bf16.xpose.msra.mxu0 0
        %2822 = vmatprep.subr.bf16.mxu0 0
        %2823 = vmatpush1.bf16.xpose.msra.mxu0 0
        %2824 = vmatprep.subr.bf16.mxu0 0
        %2825 = vmatpush1.bf16.xpose.msra.mxu0 0
        %2826 = vmatprep.subr.bf16.mxu0 0
        %2827 = vmatpush1.bf16.xpose.msra.mxu0 0
        %2828 = vmatprep.subr.bf16.mxu0 0
        %2829 = vmatpush1.bf16.xpose.msra.mxu0 0
        %2830 = vmatprep.mubr.bf16.mxu0 0
        %2831 = vmatmul.mubr.bf16.gmra.mrb[0].mxu0 %v2795
        %v2832 = vpop.f32.mrb[0].mxu0
        %v2833 = vadd.f32 0.0, %v2832
        %v2834 = vpop.f32.mrb[0].mxu0
        %v2835 = vpop.f32.mrb[0].mxu0
        %v2836 = vpop.f32.mrb[0].mxu0
        %2837 = vdwg.mxu0
        %v2838 = vsel %vm1053, 1, 0
        %v2839 = vlaneseq
        %v2840 = vshrl.u32 %v2839, 7
        %v2841 = vsub.s32 0, %v2840
        %v2842 = vrot.slane %v2838, %v2841
        %vm2843 = vcmp.eq.s32.totalorder %v2842, 1
        %v2844 = vsel %vm2843, -1e+18, %v2833
        %vm2845 = vcmask 130048
        %v2846 = vsel %vm2845, %v2844, -inf
        %2847 = vmax.xlane.f32.xlu0 %v2846
        %v2848 = vpop.xlane.xlu0 %2847
        %v2849 = vsub.f32 %v2844, %v2848
        %v2850 = vmul.f32 %v2849, 1.442695
        %v2851 = vpow.pop %v2850
        %v2852 = vsel %vm2845, %v2851, 0.0
        %2853 = vadd.xlane.f32.xlu0 %v2852
        %v2854 = vpop.xlane.xlu0 %2853
        %v2855 = vrcp.pop %v2854
        %v2856 = vmul.f32 %v2851, %v2855
        %v2857 = vpack.c.bf16 %v2856, %v2856
        %v2859 = vsel %vm2845, %v2857, 0
        %2861 = vmatprep.subr.bf16.mxu0 0
        %2862 = vmatpush1.bf16.msra.mxu0 %v2797
        %2863 = vmatprep.subr.bf16.mxu0 0
        %2864 = vmatpush1.bf16.msra.mxu0 0
        %2865 = vmatprep.subr.bf16.mxu0 0
        %2866 = vmatpush1.bf16.msra.mxu0 0
        %2867 = vmatprep.subr.bf16.mxu0 0
        %2868 = vmatpush1.bf16.msra.mxu0 0
        %2869 = vmatprep.subr.bf16.mxu0 0
        %2870 = vmatpush1.bf16.msra.mxu0 0
        %2871 = vmatprep.subr.bf16.mxu0 0
        %2872 = vmatpush1.bf16.msra.mxu0 0
        %2873 = vmatprep.subr.bf16.mxu0 0
        %2874 = vmatpush1.bf16.msra.mxu0 0
        %2875 = vmatprep.subr.bf16.mxu0 0
        %2876 = vmatpush1.bf16.msra.mxu0 0
        %2877 = vmatprep.subr.bf16.mxu0 0
        %2878 = vmatpush1.bf16.msra.mxu0 0
        %2879 = vmatprep.subr.bf16.mxu0 0
        %2880 = vmatpush1.bf16.msra.mxu0 0
        %2881 = vmatprep.subr.bf16.mxu0 0
        %2882 = vmatpush1.bf16.msra.mxu0 0
        %2883 = vmatprep.subr.bf16.mxu0 0
        %2884 = vmatpush1.bf16.msra.mxu0 0
        %2885 = vmatprep.subr.bf16.mxu0 0
        %2886 = vmatpush1.bf16.msra.mxu0 0
        %2887 = vmatprep.subr.bf16.mxu0 0
        %2888 = vmatpush1.bf16.msra.mxu0 0
        %2889 = vmatprep.subr.bf16.mxu0 0
        %2890 = vmatpush1.bf16.msra.mxu0 0
        %2891 = vmatprep.subr.bf16.mxu0 0
        %2892 = vmatpush1.bf16.msra.mxu0 0
        %2893 = vmatprep.mubr.bf16.mxu0 0
        %2894 = vmatmul.mubr.bf16.gmra.mrb[0].mxu0 %v2859
        %v2895 = vpop.f32.mrb[0].mxu0
        %v2896 = vadd.f32 0.0, %v2895
        %v2897 = vpop.f32.mrb[0].mxu0
        %v2898 = vpop.f32.mrb[0].mxu0
        %v2899 = vpop.f32.mrb[0].mxu0
        %2900 = vdwg.mxu0
        %2901 = vst [vmem:[#allocation2] sm:$0xff] %v2896
        %v2902 = vpack.c.bf16 %v2477, %v2477
        %v2903 = vpack.c.bf16 %v2594, %v2590
        %v2904 = vpack.c.bf16 %v2750, %v2746
        %2905 = vmatprep.subr.bf16.mxu0 0
        %2906 = vmatpush1.bf16.xpose.msra.mxu0 %v2903
        %2907 = vmatprep.subr.bf16.mxu0 0
        %2908 = vmatpush1.bf16.xpose.msra.mxu0 0
        %2909 = vmatprep.subr.bf16.mxu0 0
        %2910 = vmatpush1.bf16.xpose.msra.mxu0 0
        %2911 = vmatprep.subr.bf16.mxu0 0
        %2912 = vmatpush1.bf16.xpose.msra.mxu0 0
        %2913 = vmatprep.subr.bf16.mxu0 0
        %2914 = vmatpush1.bf16.xpose.msra.mxu0 0
        %2915 = vmatprep.subr.bf16.mxu0 0
        %2916 = vmatpush1.bf16.xpose.msra.mxu0 0
        %2917 = vmatprep.subr.bf16.mxu0 0
        %2918 = vmatpush1.bf16.xpose.msra.mxu0 0
        %2919 = vmatprep.subr.bf16.mxu0 0
        %2920 = vmatpush1.bf16.xpose.msra.mxu0 0
        %2921 = vmatprep.subr.bf16.mxu0 0
        %2922 = vmatpush1.bf16.xpose.msra.mxu0 0
        %2923 = vmatprep.subr.bf16.mxu0 0
        %2924 = vmatpush1.bf16.xpose.msra.mxu0 0
        %2925 = vmatprep.subr.bf16.mxu0 0
        %2926 = vmatpush1.bf16.xpose.msra.mxu0 0
        %2927 = vmatprep.subr.bf16.mxu0 0
        %2928 = vmatpush1.bf16.xpose.msra.mxu0 0
        %2929 = vmatprep.subr.bf16.mxu0 0
        %2930 = vmatpush1.bf16.xpose.msra.mxu0 0
        %2931 = vmatprep.subr.bf16.mxu0 0
        %2932 = vmatpush1.bf16.xpose.msra.mxu0 0
        %2933 = vmatprep.subr.bf16.mxu0 0
        %2934 = vmatpush1.bf16.xpose.msra.mxu0 0
        %2935 = vmatprep.subr.bf16.mxu0 0
        %2936 = vmatpush1.bf16.xpose.msra.mxu0 0
        %2937 = vmatprep.mubr.bf16.mxu0 0
        %2938 = vmatmul.mubr.bf16.gmra.mrb[0].mxu0 %v2902
        %v2939 = vpop.f32.mrb[0].mxu0
        %v2940 = vadd.f32 0.0, %v2939
        %v2941 = vpop.f32.mrb[0].mxu0
        %v2942 = vpop.f32.mrb[0].mxu0
        %v2943 = vpop.f32.mrb[0].mxu0
        %2944 = vdwg.mxu0
        %v2945 = vsel %vm2843, -1e+18, %v2940
        %v2946 = vsel %vm2845, %v2945, -inf
        %2947 = vmax.xlane.f32.xlu0 %v2946
        %v2948 = vpop.xlane.xlu0 %2947
        %v2949 = vsub.f32 %v2945, %v2948
        %v2950 = vmul.f32 %v2949, 1.442695
        %v2951 = vpow.pop %v2950
        %v2952 = vsel %vm2845, %v2951, 0.0
        %2953 = vadd.xlane.f32.xlu0 %v2952
        %v2954 = vpop.xlane.xlu0 %2953
        %v2955 = vrcp.pop %v2954
        %v2956 = vmul.f32 %v2951, %v2955
        %v2957 = vpack.c.bf16 %v2956, %v2956
        %v2959 = vsel %vm2845, %v2957, 0
        %2961 = vmatprep.subr.bf16.mxu0 0
        %2962 = vmatpush1.bf16.msra.mxu0 %v2904
        %2963 = vmatprep.subr.bf16.mxu0 0
        %2964 = vmatpush1.bf16.msra.mxu0 0
        %2965 = vmatprep.subr.bf16.mxu0 0
        %2966 = vmatpush1.bf16.msra.mxu0 0
        %2967 = vmatprep.subr.bf16.mxu0 0
        %2968 = vmatpush1.bf16.msra.mxu0 0
        %2969 = vmatprep.subr.bf16.mxu0 0
        %2970 = vmatpush1.bf16.msra.mxu0 0
        %2971 = vmatprep.subr.bf16.mxu0 0
        %2972 = vmatpush1.bf16.msra.mxu0 0
        %2973 = vmatprep.subr.bf16.mxu0 0
        %2974 = vmatpush1.bf16.msra.mxu0 0
        %2975 = vmatprep.subr.bf16.mxu0 0
        %2976 = vmatpush1.bf16.msra.mxu0 0
        %2977 = vmatprep.subr.bf16.mxu0 0
        %2978 = vmatpush1.bf16.msra.mxu0 0
        %2979 = vmatprep.subr.bf16.mxu0 0
        %2980 = vmatpush1.bf16.msra.mxu0 0
        %2981 = vmatprep.subr.bf16.mxu0 0
        %2982 = vmatpush1.bf16.msra.mxu0 0
        %2983 = vmatprep.subr.bf16.mxu0 0
        %2984 = vmatpush1.bf16.msra.mxu0 0
        %2985 = vmatprep.subr.bf16.mxu0 0
        %2986 = vmatpush1.bf16.msra.mxu0 0
        %2987 = vmatprep.subr.bf16.mxu0 0
        %2988 = vmatpush1.bf16.msra.mxu0 0
        %2989 = vmatprep.subr.bf16.mxu0 0
        %2990 = vmatpush1.bf16.msra.mxu0 0
        %2991 = vmatprep.subr.bf16.mxu0 0
        %2992 = vmatpush1.bf16.msra.mxu0 0
        %2993 = vmatprep.mubr.bf16.mxu0 0
        %2994 = vmatmul.mubr.bf16.gmra.mrb[0].mxu0 %v2959
        %v2995 = vpop.f32.mrb[0].mxu0
        %v2996 = vadd.f32 0.0, %v2995
        %v2997 = vpop.f32.mrb[0].mxu0
        %v2998 = vpop.f32.mrb[0].mxu0
        %v2999 = vpop.f32.mrb[0].mxu0
        %3000 = vdwg.mxu0
        %3001 = vst [vmem:[#allocation2 + $0x8] sm:$0xff] %v2996
        %v3002 = vpack.c.bf16 %v2478, %v2478
        %v3003 = vpack.c.bf16 %v2635, %v2631
        %v3004 = vpack.c.bf16 %v2791, %v2787
        %3005 = vmatprep.subr.bf16.mxu0 0
        %3006 = vmatpush1.bf16.xpose.msra.mxu0 %v3003
        %3007 = vmatprep.subr.bf16.mxu0 0
        %3008 = vmatpush1.bf16.xpose.msra.mxu0 0
        %3009 = vmatprep.subr.bf16.mxu0 0
        %3010 = vmatpush1.bf16.xpose.msra.mxu0 0
        %3011 = vmatprep.subr.bf16.mxu0 0
        %3012 = vmatpush1.bf16.xpose.msra.mxu0 0
        %3013 = vmatprep.subr.bf16.mxu0 0
        %3014 = vmatpush1.bf16.xpose.msra.mxu0 0
        %3015 = vmatprep.subr.bf16.mxu0 0
        %3016 = vmatpush1.bf16.xpose.msra.mxu0 0
        %3017 = vmatprep.subr.bf16.mxu0 0
        %3018 = vmatpush1.bf16.xpose.msra.mxu0 0
        %3019 = vmatprep.subr.bf16.mxu0 0
        %3020 = vmatpush1.bf16.xpose.msra.mxu0 0
        %3021 = vmatprep.subr.bf16.mxu0 0
        %3022 = vmatpush1.bf16.xpose.msra.mxu0 0
        %3023 = vmatprep.subr.bf16.mxu0 0
        %3024 = vmatpush1.bf16.xpose.msra.mxu0 0
        %3025 = vmatprep.subr.bf16.mxu0 0
        %3026 = vmatpush1.bf16.xpose.msra.mxu0 0
        %3027 = vmatprep.subr.bf16.mxu0 0
        %3028 = vmatpush1.bf16.xpose.msra.mxu0 0
        %3029 = vmatprep.subr.bf16.mxu0 0
        %3030 = vmatpush1.bf16.xpose.msra.mxu0 0
        %3031 = vmatprep.subr.bf16.mxu0 0
        %3032 = vmatpush1.bf16.xpose.msra.mxu0 0
        %3033 = vmatprep.subr.bf16.mxu0 0
        %3034 = vmatpush1.bf16.xpose.msra.mxu0 0
        %3035 = vmatprep.subr.bf16.mxu0 0
        %3036 = vmatpush1.bf16.xpose.msra.mxu0 0
        %3037 = vmatprep.mubr.bf16.mxu0 0
        %3038 = vmatmul.mubr.bf16.gmra.mrb[0].mxu0 %v3002
        %v3039 = vpop.f32.mrb[0].mxu0
        %v3040 = vadd.f32 0.0, %v3039
        %v3041 = vpop.f32.mrb[0].mxu0
        %v3042 = vpop.f32.mrb[0].mxu0
        %v3043 = vpop.f32.mrb[0].mxu0
        %3044 = vdwg.mxu0
        %v3045 = vsel %vm2843, -1e+18, %v3040
        %v3046 = vsel %vm2845, %v3045, -inf
        %3047 = vmax.xlane.f32.xlu0 %v3046
        %v3048 = vpop.xlane.xlu0 %3047
        %v3049 = vsub.f32 %v3045, %v3048
        %v3050 = vmul.f32 %v3049, 1.442695
        %v3051 = vpow.pop %v3050
        %v3052 = vsel %vm2845, %v3051, 0.0
        %3053 = vadd.xlane.f32.xlu0 %v3052
        %v3054 = vpop.xlane.xlu0 %3053
        %v3055 = vrcp.pop %v3054
        %v3056 = vmul.f32 %v3051, %v3055
        %v3057 = vpack.c.bf16 %v3056, %v3056
        %v3059 = vsel %vm2845, %v3057, 0
        %3061 = vmatprep.subr.bf16.mxu0 0
        %3062 = vmatpush1.bf16.msra.mxu0 %v3004
        %3063 = vmatprep.subr.bf16.mxu0 0
        %3064 = vmatpush1.bf16.msra.mxu0 0
        %3065 = vmatprep.subr.bf16.mxu0 0
        %3066 = vmatpush1.bf16.msra.mxu0 0
        %3067 = vmatprep.subr.bf16.mxu0 0
        %3068 = vmatpush1.bf16.msra.mxu0 0
        %3069 = vmatprep.subr.bf16.mxu0 0
        %3070 = vmatpush1.bf16.msra.mxu0 0
        %3071 = vmatprep.subr.bf16.mxu0 0
        %3072 = vmatpush1.bf16.msra.mxu0 0
        %3073 = vmatprep.subr.bf16.mxu0 0
        %3074 = vmatpush1.bf16.msra.mxu0 0
        %3075 = vmatprep.subr.bf16.mxu0 0
        %3076 = vmatpush1.bf16.msra.mxu0 0
        %3077 = vmatprep.subr.bf16.mxu0 0
        %3078 = vmatpush1.bf16.msra.mxu0 0
        %3079 = vmatprep.subr.bf16.mxu0 0
        %3080 = vmatpush1.bf16.msra.mxu0 0
        %3081 = vmatprep.subr.bf16.mxu0 0
        %3082 = vmatpush1.bf16.msra.mxu0 0
        %3083 = vmatprep.subr.bf16.mxu0 0
        %3084 = vmatpush1.bf16.msra.mxu0 0
        %3085 = vmatprep.subr.bf16.mxu0 0
        %3086 = vmatpush1.bf16.msra.mxu0 0
        %3087 = vmatprep.subr.bf16.mxu0 0
        %3088 = vmatpush1.bf16.msra.mxu0 0
        %3089 = vmatprep.subr.bf16.mxu0 0
        %3090 = vmatpush1.bf16.msra.mxu0 0
        %3091 = vmatprep.subr.bf16.mxu0 0
        %3092 = vmatpush1.bf16.msra.mxu0 0
        %3093 = vmatprep.mubr.bf16.mxu0 0
        %3094 = vmatmul.mubr.bf16.gmra.mrb[0].mxu0 %v3059
        %v3095 = vpop.f32.mrb[0].mxu0
        %v3096 = vadd.f32 0.0, %v3095
        %v3097 = vpop.f32.mrb[0].mxu0
        %v3098 = vpop.f32.mrb[0].mxu0
        %v3099 = vpop.f32.mrb[0].mxu0
        %3100 = vdwg.mxu0
        %3101 = vst [vmem:[#allocation2 + $0x10] sm:$0xff] %v3096
        %v3102 = vpack.c.bf16 %v2479, %v2479
        %v3103 = vpack.c.bf16 %v2637, %v2633
        %v3104 = vpack.c.bf16 %v2793, %v2789
        %3105 = vmatprep.subr.bf16.mxu0 0
        %3106 = vmatpush1.bf16.xpose.msra.mxu0 %v3103
        %3107 = vmatprep.subr.bf16.mxu0 0
        %3108 = vmatpush1.bf16.xpose.msra.mxu0 0
        %3109 = vmatprep.subr.bf16.mxu0 0
        %3110 = vmatpush1.bf16.xpose.msra.mxu0 0
        %3111 = vmatprep.subr.bf16.mxu0 0
        %3112 = vmatpush1.bf16.xpose.msra.mxu0 0
        %3113 = vmatprep.subr.bf16.mxu0 0
        %3114 = vmatpush1.bf16.xpose.msra.mxu0 0
        %3115 = vmatprep.subr.bf16.mxu0 0
        %3116 = vmatpush1.bf16.xpose.msra.mxu0 0
        %3117 = vmatprep.subr.bf16.mxu0 0
        %3118 = vmatpush1.bf16.xpose.msra.mxu0 0
        %3119 = vmatprep.subr.bf16.mxu0 0
        %3120 = vmatpush1.bf16.xpose.msra.mxu0 0
        %3121 = vmatprep.subr.bf16.mxu0 0
        %3122 = vmatpush1.bf16.xpose.msra.mxu0 0
        %3123 = vmatprep.subr.bf16.mxu0 0
        %3124 = vmatpush1.bf16.xpose.msra.mxu0 0
        %3125 = vmatprep.subr.bf16.mxu0 0
        %3126 = vmatpush1.bf16.xpose.msra.mxu0 0
        %3127 = vmatprep.subr.bf16.mxu0 0
        %3128 = vmatpush1.bf16.xpose.msra.mxu0 0
        %3129 = vmatprep.subr.bf16.mxu0 0
        %3130 = vmatpush1.bf16.xpose.msra.mxu0 0
        %3131 = vmatprep.subr.bf16.mxu0 0
        %3132 = vmatpush1.bf16.xpose.msra.mxu0 0
        %3133 = vmatprep.subr.bf16.mxu0 0
        %3134 = vmatpush1.bf16.xpose.msra.mxu0 0
        %3135 = vmatprep.subr.bf16.mxu0 0
        %3136 = vmatpush1.bf16.xpose.msra.mxu0 0
        %3137 = vmatprep.mubr.bf16.mxu0 0
        %3138 = vmatmul.mubr.bf16.gmra.mrb[0].mxu0 %v3102
        %v3139 = vpop.f32.mrb[0].mxu0
        %v3140 = vadd.f32 0.0, %v3139
        %v3141 = vpop.f32.mrb[0].mxu0
        %v3142 = vpop.f32.mrb[0].mxu0
        %v3143 = vpop.f32.mrb[0].mxu0
        %3144 = vdwg.mxu0
        %v3145 = vsel %vm2843, -1e+18, %v3140
        %v3146 = vsel %vm2845, %v3145, -inf
        %3147 = vmax.xlane.f32.xlu0 %v3146
        %v3148 = vpop.xlane.xlu0 %3147
        %v3149 = vsub.f32 %v3145, %v3148
        %v3150 = vmul.f32 %v3149, 1.442695
        %v3151 = vpow.pop %v3150
        %v3152 = vsel %vm2845, %v3151, 0.0
        %3153 = vadd.xlane.f32.xlu0 %v3152
        %v3154 = vpop.xlane.xlu0 %3153
        %v3155 = vrcp.pop %v3154
        %v3156 = vmul.f32 %v3151, %v3155
        %v3157 = vpack.c.bf16 %v3156, %v3156
        %v3159 = vsel %vm2845, %v3157, 0
        %3161 = vmatprep.subr.bf16.mxu0 0
        %3162 = vmatpush1.bf16.msra.mxu0 %v3104
        %3163 = vmatprep.subr.bf16.mxu0 0
        %3164 = vmatpush1.bf16.msra.mxu0 0
        %3165 = vmatprep.subr.bf16.mxu0 0
        %3166 = vmatpush1.bf16.msra.mxu0 0
        %3167 = vmatprep.subr.bf16.mxu0 0
        %3168 = vmatpush1.bf16.msra.mxu0 0
        %3169 = vmatprep.subr.bf16.mxu0 0
        %3170 = vmatpush1.bf16.msra.mxu0 0
        %3171 = vmatprep.subr.bf16.mxu0 0
        %3172 = vmatpush1.bf16.msra.mxu0 0
        %3173 = vmatprep.subr.bf16.mxu0 0
        %3174 = vmatpush1.bf16.msra.mxu0 0
        %3175 = vmatprep.subr.bf16.mxu0 0
        %3176 = vmatpush1.bf16.msra.mxu0 0
        %3177 = vmatprep.subr.bf16.mxu0 0
        %3178 = vmatpush1.bf16.msra.mxu0 0
        %3179 = vmatprep.subr.bf16.mxu0 0
        %3180 = vmatpush1.bf16.msra.mxu0 0
        %3181 = vmatprep.subr.bf16.mxu0 0
        %3182 = vmatpush1.bf16.msra.mxu0 0
        %3183 = vmatprep.subr.bf16.mxu0 0
        %3184 = vmatpush1.bf16.msra.mxu0 0
        %3185 = vmatprep.subr.bf16.mxu0 0
        %3186 = vmatpush1.bf16.msra.mxu0 0
        %3187 = vmatprep.subr.bf16.mxu0 0
        %3188 = vmatpush1.bf16.msra.mxu0 0
        %3189 = vmatprep.subr.bf16.mxu0 0
        %3190 = vmatpush1.bf16.msra.mxu0 0
        %3191 = vmatprep.subr.bf16.mxu0 0
        %3192 = vmatpush1.bf16.msra.mxu0 0
        %3193 = vmatprep.mubr.bf16.mxu0 0
        %3194 = vmatmul.mubr.bf16.gmra.mrb[0].mxu0 %v3159
        %v3195 = vpop.f32.mrb[0].mxu0
        %v3196 = vadd.f32 0.0, %v3195
        %v3197 = vpop.f32.mrb[0].mxu0
        %v3198 = vpop.f32.mrb[0].mxu0
        %v3199 = vpop.f32.mrb[0].mxu0
        %3200 = vdwg.mxu0
        %3201 = vst [vmem:[#allocation2 + $0x18] sm:$0xff] %v3196
        %v3202 = vld [vmem:[#allocation2] sm:$0xff]
        %v3203 = vld [vmem:[#allocation2 + $0x8] sm:$0xff]
        %v3204 = vld [vmem:[#allocation2 + $0x10] sm:$0xff]
        %v3205 = vld [vmem:[#allocation2 + $0x18] sm:$0xff]
        %v3206 = vpack.c.bf16 %v3202, %v3202
        %v3207 = vpack.c.bf16 %v3203, %v3203
        %v3208 = vpack.c.bf16 %v3204, %v3204
        %v3209 = vpack.c.bf16 %v3205, %v3205
        %v3210 = vld [vmem:[%s41] sm:$0xf]
        %v3211 = vld [vmem:[%s41 + $0x4] sm:$0xf]
        %v3212 = vld [vmem:[%s41 + $0x8] sm:$0xf]
        %v3213 = vld [vmem:[%s41 + $0xc] sm:$0xf]
        %v3214 = vld [vmem:[%s41 + $0x10] sm:$0xf]
        %v3215 = vld [vmem:[%s41 + $0x14] sm:$0xf]
        %v3216 = vld [vmem:[%s41 + $0x18] sm:$0xf]
        %v3217 = vld [vmem:[%s41 + $0x1c] sm:$0xf]
        %v3218 = vld [vmem:[%s41 + $0x20] sm:$0xf]
        %v3219 = vld [vmem:[%s41 + $0x24] sm:$0xf]
        %v3220 = vld [vmem:[%s41 + $0x28] sm:$0xf]
        %v3221 = vld [vmem:[%s41 + $0x2c] sm:$0xf]
        %v3222 = vld [vmem:[%s41 + $0x30] sm:$0xf]
        %v3223 = vld [vmem:[%s41 + $0x34] sm:$0xf]
        %v3224 = vld [vmem:[%s41 + $0x38] sm:$0xf]
        %v3225 = vld [vmem:[%s41 + $0x3c] sm:$0xf]
        %v3226 = vld [vmem:[%s41 + $0x40] sm:$0xf]
        %v3227 = vld [vmem:[%s41 + $0x44] sm:$0xf]
        %v3228 = vld [vmem:[%s41 + $0x48] sm:$0xf]
        %v3229 = vld [vmem:[%s41 + $0x4c] sm:$0xf]
        %v3230 = vld [vmem:[%s41 + $0x50] sm:$0xf]
        %v3231 = vld [vmem:[%s41 + $0x54] sm:$0xf]
        %v3232 = vld [vmem:[%s41 + $0x58] sm:$0xf]
        %v3233 = vld [vmem:[%s41 + $0x5c] sm:$0xf]
        %v3234 = vld [vmem:[%s41 + $0x60] sm:$0xf]
        %v3235 = vld [vmem:[%s41 + $0x64] sm:$0xf]
        %v3236 = vld [vmem:[%s41 + $0x68] sm:$0xf]
        %v3237 = vld [vmem:[%s41 + $0x6c] sm:$0xf]
        %v3238 = vld [vmem:[%s41 + $0x70] sm:$0xf]
        %v3239 = vld [vmem:[%s41 + $0x74] sm:$0xf]
        %v3240 = vld [vmem:[%s41 + $0x78] sm:$0xf]
        %v3241 = vld [vmem:[%s41 + $0x7c] sm:$0xf]
        %v3242 = vld [vmem:[%s41 + $0x80] sm:$0xf]
        %v3243 = vld [vmem:[%s41 + $0x84] sm:$0xf]
        %v3244 = vld [vmem:[%s41 + $0x88] sm:$0xf]
        %v3245 = vld [vmem:[%s41 + $0x8c] sm:$0xf]
        %v3246 = vld [vmem:[%s41 + $0x90] sm:$0xf]
        %v3247 = vld [vmem:[%s41 + $0x94] sm:$0xf]
        %v3248 = vld [vmem:[%s41 + $0x98] sm:$0xf]
        %v3249 = vld [vmem:[%s41 + $0x9c] sm:$0xf]
        %v3250 = vld [vmem:[%s41 + $0xa0] sm:$0xf]
        %v3251 = vld [vmem:[%s41 + $0xa4] sm:$0xf]
        %v3252 = vld [vmem:[%s41 + $0xa8] sm:$0xf]
        %v3253 = vld [vmem:[%s41 + $0xac] sm:$0xf]
        %v3254 = vld [vmem:[%s41 + $0xb0] sm:$0xf]
        %v3255 = vld [vmem:[%s41 + $0xb4] sm:$0xf]
        %v3256 = vld [vmem:[%s41 + $0xb8] sm:$0xf]
        %v3257 = vld [vmem:[%s41 + $0xbc] sm:$0xf]
        %v3258 = vld [vmem:[%s41 + $0xc0] sm:$0xf]
        %v3259 = vld [vmem:[%s41 + $0xc4] sm:$0xf]
        %v3260 = vld [vmem:[%s41 + $0xc8] sm:$0xf]
        %v3261 = vld [vmem:[%s41 + $0xcc] sm:$0xf]
        %v3262 = vld [vmem:[%s41 + $0xd0] sm:$0xf]
        %v3263 = vld [vmem:[%s41 + $0xd4] sm:$0xf]
        %v3264 = vld [vmem:[%s41 + $0xd8] sm:$0xf]
        %v3265 = vld [vmem:[%s41 + $0xdc] sm:$0xf]
        %v3266 = vld [vmem:[%s41 + $0xe0] sm:$0xf]
        %v3267 = vld [vmem:[%s41 + $0xe4] sm:$0xf]
        %v3268 = vld [vmem:[%s41 + $0xe8] sm:$0xf]
        %v3269 = vld [vmem:[%s41 + $0xec] sm:$0xf]
        %v3270 = vld [vmem:[%s41 + $0xf0] sm:$0xf]
        %v3271 = vld [vmem:[%s41 + $0xf4] sm:$0xf]
        %v3272 = vld [vmem:[%s41 + $0xf8] sm:$0xf]
        %v3273 = vld [vmem:[%s41 + $0xfc] sm:$0xf]
        %v3274 = vld [vmem:[%s43] sm:$0x1]
        %v3276 = vlaneseq
        %v3277 = vshrl.u32 %v3276, 7
        %v3278 = vsub.s32 0, %v3277
        %v3279 = vrot.slane %v3274, %v3278
        %v3345 = vunpack.c.l.b16 %v3210
        %v3346 = vunpack.c.l.b16 %v3211
        %v3347 = vunpack.c.l.b16 %v3212
        %v3348 = vunpack.c.l.b16 %v3213
        %v3349 = vunpack.c.l.b16 %v3214
        %v3350 = vunpack.c.l.b16 %v3215
        %v3351 = vunpack.c.l.b16 %v3216
        %v3352 = vunpack.c.l.b16 %v3217
        %v3353 = vunpack.c.l.b16 %v3218
        %v3354 = vunpack.c.l.b16 %v3219
        %v3355 = vunpack.c.l.b16 %v3220
        %v3356 = vunpack.c.l.b16 %v3221
        %v3357 = vunpack.c.l.b16 %v3222
        %v3358 = vunpack.c.l.b16 %v3223
        %v3359 = vunpack.c.l.b16 %v3224
        %v3360 = vunpack.c.l.b16 %v3225
        %v3361 = vunpack.c.l.b16 %v3226
        %v3362 = vunpack.c.l.b16 %v3227
        %v3363 = vunpack.c.l.b16 %v3228
        %v3364 = vunpack.c.l.b16 %v3229
        %v3365 = vunpack.c.l.b16 %v3230
        %v3366 = vunpack.c.l.b16 %v3231
        %v3367 = vunpack.c.l.b16 %v3232
        %v3368 = vunpack.c.l.b16 %v3233
        %v3369 = vunpack.c.l.b16 %v3234
        %v3370 = vunpack.c.l.b16 %v3235
        %v3371 = vunpack.c.l.b16 %v3236
        %v3372 = vunpack.c.l.b16 %v3237
        %v3373 = vunpack.c.l.b16 %v3238
        %v3374 = vunpack.c.l.b16 %v3239
        %v3375 = vunpack.c.l.b16 %v3240
        %v3376 = vunpack.c.l.b16 %v3241
        %v3377 = vunpack.c.l.b16 %v3242
        %v3378 = vunpack.c.l.b16 %v3243
        %v3379 = vunpack.c.l.b16 %v3244
        %v3380 = vunpack.c.l.b16 %v3245
        %v3381 = vunpack.c.l.b16 %v3246
        %v3382 = vunpack.c.l.b16 %v3247
        %v3383 = vunpack.c.l.b16 %v3248
        %v3384 = vunpack.c.l.b16 %v3249
        %v3385 = vunpack.c.l.b16 %v3250
        %v3386 = vunpack.c.l.b16 %v3251
        %v3387 = vunpack.c.l.b16 %v3252
        %v3388 = vunpack.c.l.b16 %v3253
        %v3389 = vunpack.c.l.b16 %v3254
        %v3390 = vunpack.c.l.b16 %v3255
        %v3391 = vunpack.c.l.b16 %v3256
        %v3392 = vunpack.c.l.b16 %v3257
        %v3393 = vunpack.c.l.b16 %v3258
        %v3394 = vunpack.c.l.b16 %v3259
        %v3395 = vunpack.c.l.b16 %v3260
        %v3396 = vunpack.c.l.b16 %v3261
        %v3397 = vunpack.c.l.b16 %v3262
        %v3398 = vunpack.c.l.b16 %v3263
        %v3399 = vunpack.c.l.b16 %v3264
        %v3400 = vunpack.c.l.b16 %v3265
        %v3401 = vunpack.c.l.b16 %v3266
        %v3402 = vunpack.c.l.b16 %v3267
        %v3403 = vunpack.c.l.b16 %v3268
        %v3404 = vunpack.c.l.b16 %v3269
        %v3405 = vunpack.c.l.b16 %v3270
        %v3406 = vunpack.c.l.b16 %v3271
        %v3407 = vunpack.c.l.b16 %v3272
        %v3408 = vunpack.c.l.b16 %v3273
        %v3409 = vpack.c.b16 %v3346, %v3345
        %v3410 = vpack.c.b16 %v3348, %v3347
        %v3411 = vpack.c.b16 %v3350, %v3349
        %v3412 = vpack.c.b16 %v3352, %v3351
        %v3413 = vpack.c.b16 %v3354, %v3353
        %v3414 = vpack.c.b16 %v3356, %v3355
        %v3415 = vpack.c.b16 %v3358, %v3357
        %v3416 = vpack.c.b16 %v3360, %v3359
        %v3417 = vpack.c.b16 %v3362, %v3361
        %v3418 = vpack.c.b16 %v3364, %v3363
        %v3419 = vpack.c.b16 %v3366, %v3365
        %v3420 = vpack.c.b16 %v3368, %v3367
        %v3421 = vpack.c.b16 %v3370, %v3369
        %v3422 = vpack.c.b16 %v3372, %v3371
        %v3423 = vpack.c.b16 %v3374, %v3373
        %v3424 = vpack.c.b16 %v3376, %v3375
        %v3425 = vpack.c.b16 %v3378, %v3377
        %v3426 = vpack.c.b16 %v3380, %v3379
        %v3427 = vpack.c.b16 %v3382, %v3381
        %v3428 = vpack.c.b16 %v3384, %v3383
        %v3429 = vpack.c.b16 %v3386, %v3385
        %v3430 = vpack.c.b16 %v3388, %v3387
        %v3431 = vpack.c.b16 %v3390, %v3389
        %v3432 = vpack.c.b16 %v3392, %v3391
        %v3433 = vpack.c.b16 %v3394, %v3393
        %v3434 = vpack.c.b16 %v3396, %v3395
        %v3435 = vpack.c.b16 %v3398, %v3397
        %v3436 = vpack.c.b16 %v3400, %v3399
        %v3437 = vpack.c.b16 %v3402, %v3401
        %v3438 = vpack.c.b16 %v3404, %v3403
        %v3439 = vpack.c.b16 %v3406, %v3405
        %v3440 = vpack.c.b16 %v3408, %v3407
        %3473 = vmatprep.subr.bf16.mxu0 0
        %3474 = vmatpush1.bf16.msra.mxu0 %v3409
        %3475 = vmatprep.subr.bf16.mxu0 0
        %3476 = vmatpush1.bf16.msra.mxu0 %v3410
        %3477 = vmatprep.subr.bf16.mxu0 0
        %3478 = vmatpush1.bf16.msra.mxu0 %v3411
        %3479 = vmatprep.subr.bf16.mxu0 0
        %3480 = vmatpush1.bf16.msra.mxu0 %v3412
        %3481 = vmatprep.subr.bf16.mxu0 0
        %3482 = vmatpush1.bf16.msra.mxu0 %v3413
        %3483 = vmatprep.subr.bf16.mxu0 0
        %3484 = vmatpush1.bf16.msra.mxu0 %v3414
        %3485 = vmatprep.subr.bf16.mxu0 0
        %3486 = vmatpush1.bf16.msra.mxu0 %v3415
        %3487 = vmatprep.subr.bf16.mxu0 0
        %3488 = vmatpush1.bf16.msra.mxu0 %v3416
        %3489 = vmatprep.subr.bf16.mxu0 0
        %3490 = vmatpush1.bf16.msra.mxu0 %v3417
        %3491 = vmatprep.subr.bf16.mxu0 0
        %3492 = vmatpush1.bf16.msra.mxu0 %v3418
        %3493 = vmatprep.subr.bf16.mxu0 0
        %3494 = vmatpush1.bf16.msra.mxu0 %v3419
        %3495 = vmatprep.subr.bf16.mxu0 0
        %3496 = vmatpush1.bf16.msra.mxu0 %v3420
        %3497 = vmatprep.subr.bf16.mxu0 0
        %3498 = vmatpush1.bf16.msra.mxu0 %v3421
        %3499 = vmatprep.subr.bf16.mxu0 0
        %3500 = vmatpush1.bf16.msra.mxu0 %v3422
        %3501 = vmatprep.subr.bf16.mxu0 0
        %3502 = vmatpush1.bf16.msra.mxu0 %v3423
        %3503 = vmatprep.subr.bf16.mxu0 0
        %3504 = vmatpush1.bf16.msra.mxu0 %v3424
        %3505 = vmatprep.mubr.bf16.mxu0 %v3207
        %3506 = vmatmul.mubr.bf16.gmra.mrb[0].mxu0 %v3206
        %v3507 = vpop.f32.mrb[0].mxu0
        %v3508 = vadd.f32 %v3279, %v3507
        %v3509 = vpop.f32.mrb[0].mxu0
        %v3510 = vpop.f32.mrb[0].mxu0
        %v3511 = vpop.f32.mrb[0].mxu0
        %3512 = vdwg.mxu0
        %3513 = vmatprep.subr.bf16.mxu0 0
        %3514 = vmatpush1.bf16.msra.mxu0 %v3425
        %3515 = vmatprep.subr.bf16.mxu0 0
        %3516 = vmatpush1.bf16.msra.mxu0 %v3426
        %3517 = vmatprep.subr.bf16.mxu0 0
        %3518 = vmatpush1.bf16.msra.mxu0 %v3427
        %3519 = vmatprep.subr.bf16.mxu0 0
        %3520 = vmatpush1.bf16.msra.mxu0 %v3428
        %3521 = vmatprep.subr.bf16.mxu0 0
        %3522 = vmatpush1.bf16.msra.mxu0 %v3429
        %3523 = vmatprep.subr.bf16.mxu0 0
        %3524 = vmatpush1.bf16.msra.mxu0 %v3430
        %3525 = vmatprep.subr.bf16.mxu0 0
        %3526 = vmatpush1.bf16.msra.mxu0 %v3431
        %3527 = vmatprep.subr.bf16.mxu0 0
        %3528 = vmatpush1.bf16.msra.mxu0 %v3432
        %3529 = vmatprep.subr.bf16.mxu0 0
        %3530 = vmatpush1.bf16.msra.mxu0 %v3433
        %3531 = vmatprep.subr.bf16.mxu0 0
        %3532 = vmatpush1.bf16.msra.mxu0 %v3434
        %3533 = vmatprep.subr.bf16.mxu0 0
        %3534 = vmatpush1.bf16.msra.mxu0 %v3435
        %3535 = vmatprep.subr.bf16.mxu0 0
        %3536 = vmatpush1.bf16.msra.mxu0 %v3436
        %3537 = vmatprep.subr.bf16.mxu0 0
        %3538 = vmatpush1.bf16.msra.mxu0 %v3437
        %3539 = vmatprep.subr.bf16.mxu0 0
        %3540 = vmatpush1.bf16.msra.mxu0 %v3438
        %3541 = vmatprep.subr.bf16.mxu0 0
        %3542 = vmatpush1.bf16.msra.mxu0 %v3439
        %3543 = vmatprep.subr.bf16.mxu0 0
        %3544 = vmatpush1.bf16.msra.mxu0 %v3440
        %3545 = vmatprep.mubr.bf16.mxu0 %v3209
        %3546 = vmatmul.mubr.bf16.gmra.mrb[0].mxu0 %v3208
        %v3547 = vpop.f32.mrb[0].mxu0
        %v3548 = vadd.f32 %v3508, %v3547
        %v3549 = vpop.f32.mrb[0].mxu0
        %v3550 = vpop.f32.mrb[0].mxu0
        %v3551 = vpop.f32.mrb[0].mxu0
        %3552 = vdwg.mxu0
        %v3553 = vadd.f32 %v3548, %v2318
        %v3554 = vld [vmem:[%s45] sm:$0x1]
        %v3555 = vld [vmem:[%s47] sm:$0x1]
        %v3556 = vsel %vm1126, %v3553, 0.0
        %3557 = vadd.xlane.f32.xlu0 %v3556
        %v3558 = vpop.xlane.xlu0 %3557
        %v3559 = vmul.f32 %v3558, %v2294
        %v3560 = vsub.f32 %v3553, %v3559
        %v3561 = vmul.f32 %v3560, %v3560
        %v3562 = vsel %vm1126, %v3561, 0.0
        %3563 = vadd.xlane.f32.xlu0 %v3562
        %v3564 = vpop.xlane.xlu0 %3563
        %v3565 = vmul.f32 %v3564, %v2294
        %v3566 = vadd.f32 %v3565, 1e-06
        %v3567 = vrsqrt.pop %v3566
        %v3568 = vmul.f32 %v3560, %v3567
        %v3570 = vlaneseq
        %v3571 = vshrl.u32 %v3570, 7
        %v3572 = vsub.s32 0, %v3571
        %v3573 = vrot.slane %v3554, %v3572
        %v3575 = vmul.f32 %v3568, %v3573
        %v3577 = vlaneseq
        %v3578 = vshrl.u32 %v3577, 7
        %v3579 = vsub.s32 0, %v3578
        %v3580 = vrot.slane %v3555, %v3579
        %v3582 = vadd.f32 %v3575, %v3580
        %v3583 = vld [vmem:[%s49] sm:$0x1]
        %v3584 = vld [vmem:[%s51] sm:$0x1]
        %v3585 = vsel %vm1126, %v3582, 0.0
        %3586 = vadd.xlane.f32.xlu0 %v3585
        %v3587 = vpop.xlane.xlu0 %3586
        %v3588 = vmul.f32 %v3587, %v2294
        %v3589 = vsub.f32 %v3582, %v3588
        %v3590 = vmul.f32 %v3589, %v3589
        %v3591 = vsel %vm1126, %v3590, 0.0
        %3592 = vadd.xlane.f32.xlu0 %v3591
        %v3593 = vpop.xlane.xlu0 %3592
        %v3594 = vmul.f32 %v3593, %v2294
        %v3595 = vadd.f32 %v3594, 1e-06
        %v3596 = vrsqrt.pop %v3595
        %v3597 = vmul.f32 %v3589, %v3596
        %v3599 = vlaneseq
        %v3600 = vshrl.u32 %v3599, 7
        %v3601 = vsub.s32 0, %v3600
        %v3602 = vrot.slane %v3583, %v3601
        %v3604 = vmul.f32 %v3597, %v3602
        %v3606 = vlaneseq
        %v3607 = vshrl.u32 %v3606, 7
        %v3608 = vsub.s32 0, %v3607
        %v3609 = vrot.slane %v3584, %v3608
        %v3611 = vadd.f32 %v3604, %v3609
        %v3612 = vpack.c.bf16 %v3611, %v3611
        %v3613 = vld [vmem:[%s53] sm:$0xf]
        %v3614 = vld [vmem:[%s53 + $0x4] sm:$0xf]
        %v3615 = vld [vmem:[%s53 + $0x8] sm:$0xf]
        %v3616 = vld [vmem:[%s53 + $0xc] sm:$0xf]
        %v3617 = vld [vmem:[%s55] sm:$0x1]
        %v3619 = vlaneseq
        %v3620 = vshrl.u32 %v3619, 7
        %v3621 = vsub.s32 0, %v3620
        %v3622 = vrot.slane %v3617, %v3621
        %v3628 = vunpack.c.l.b16 %v3613
        %v3629 = vunpack.c.l.b16 %v3614
        %v3630 = vunpack.c.l.b16 %v3615
        %v3631 = vunpack.c.l.b16 %v3616
        %v3632 = vpack.c.b16 %v3629, %v3628
        %v3633 = vpack.c.b16 %v3631, %v3630
        %v3637 = vsel %vm1126, %v3612, 0
        %3639 = vmatprep.subr.bf16.mxu0 0
        %3640 = vmatpush1.bf16.msra.mxu0 %v3632
        %3641 = vmatprep.subr.bf16.mxu0 0
        %3642 = vmatpush1.bf16.msra.mxu0 %v3633
        %3643 = vmatprep.subr.bf16.mxu0 0
        %3644 = vmatpush1.bf16.msra.mxu0 0
        %3645 = vmatprep.subr.bf16.mxu0 0
        %3646 = vmatpush1.bf16.msra.mxu0 0
        %3647 = vmatprep.subr.bf16.mxu0 0
        %3648 = vmatpush1.bf16.msra.mxu0 0
        %3649 = vmatprep.subr.bf16.mxu0 0
        %3650 = vmatpush1.bf16.msra.mxu0 0
        %3651 = vmatprep.subr.bf16.mxu0 0
        %3652 = vmatpush1.bf16.msra.mxu0 0
        %3653 = vmatprep.subr.bf16.mxu0 0
        %3654 = vmatpush1.bf16.msra.mxu0 0
        %3655 = vmatprep.subr.bf16.mxu0 0
        %3656 = vmatpush1.bf16.msra.mxu0 0
        %3657 = vmatprep.subr.bf16.mxu0 0
        %3658 = vmatpush1.bf16.msra.mxu0 0
        %3659 = vmatprep.subr.bf16.mxu0 0
        %3660 = vmatpush1.bf16.msra.mxu0 0
        %3661 = vmatprep.subr.bf16.mxu0 0
        %3662 = vmatpush1.bf16.msra.mxu0 0
        %3663 = vmatprep.subr.bf16.mxu0 0
        %3664 = vmatpush1.bf16.msra.mxu0 0
        %3665 = vmatprep.subr.bf16.mxu0 0
        %3666 = vmatpush1.bf16.msra.mxu0 0
        %3667 = vmatprep.subr.bf16.mxu0 0
        %3668 = vmatpush1.bf16.msra.mxu0 0
        %3669 = vmatprep.subr.bf16.mxu0 0
        %3670 = vmatpush1.bf16.msra.mxu0 0
        %3671 = vmatprep.mubr.bf16.mxu0 0
        %3672 = vmatmul.mubr.bf16.gmra.mrb[0].mxu0 %v3637
        %v3673 = vpop.f32.mrb[0].mxu0
        %v3674 = vadd.f32 %v3622, %v3673
        %v3675 = vpop.f32.mrb[0].mxu0
        %v3676 = vpop.f32.mrb[0].mxu0
        %v3677 = vpop.f32.mrb[0].mxu0
        %3678 = vdwg.mxu0
        %v3679 = vmax.f32 %v3674, 0.0
        %v3680 = vpack.c.bf16 %v3679, %v3679
        %v3681 = vld [vmem:[%s57] sm:$0xf]
        %v3682 = vld [vmem:[%s57 + $0x4] sm:$0xf]
        %v3683 = vld [vmem:[%s57 + $0x8] sm:$0xf]
        %v3684 = vld [vmem:[%s57 + $0xc] sm:$0xf]
        %v3685 = vld [vmem:[%s57 + $0x10] sm:$0xf]
        %v3686 = vld [vmem:[%s57 + $0x14] sm:$0xf]
        %v3687 = vld [vmem:[%s57 + $0x18] sm:$0xf]
        %v3688 = vld [vmem:[%s57 + $0x1c] sm:$0xf]
        %v3689 = vld [vmem:[%s59] sm:$0x1]
        %v3691 = vlaneseq
        %v3692 = vshrl.u32 %v3691, 7
        %v3693 = vsub.s32 0, %v3692
        %v3694 = vrot.slane %v3689, %v3693
        %v3704 = vunpack.c.l.b16 %v3681
        %v3705 = vunpack.c.l.b16 %v3682
        %v3706 = vunpack.c.l.b16 %v3683
        %v3707 = vunpack.c.l.b16 %v3684
        %v3708 = vunpack.c.l.b16 %v3685
        %v3709 = vunpack.c.l.b16 %v3686
        %v3710 = vunpack.c.l.b16 %v3687
        %v3711 = vunpack.c.l.b16 %v3688
        %v3712 = vpack.c.b16 %v3705, %v3704
        %v3713 = vpack.c.b16 %v3707, %v3706
        %v3714 = vpack.c.b16 %v3709, %v3708
        %v3715 = vpack.c.b16 %v3711, %v3710
        %vm3720 = vcmask 523264
        %v3722 = vsel %vm3720, %v3680, 0
        %3724 = vmatprep.subr.bf16.mxu0 0
        %3725 = vmatpush1.bf16.msra.mxu0 %v3712
        %3726 = vmatprep.subr.bf16.mxu0 0
        %3727 = vmatpush1.bf16.msra.mxu0 %v3713
        %3728 = vmatprep.subr.bf16.mxu0 0
        %3729 = vmatpush1.bf16.msra.mxu0 %v3714
        %3730 = vmatprep.subr.bf16.mxu0 0
        %3731 = vmatpush1.bf16.msra.mxu0 %v3715
        %3732 = vmatprep.subr.bf16.mxu0 0
        %3733 = vmatpush1.bf16.msra.mxu0 0
        %3734 = vmatprep.subr.bf16.mxu0 0
        %3735 = vmatpush1.bf16.msra.mxu0 0
        %3736 = vmatprep.subr.bf16.mxu0 0
        %3737 = vmatpush1.bf16.msra.mxu0 0
        %3738 = vmatprep.subr.bf16.mxu0 0
        %3739 = vmatpush1.bf16.msra.mxu0 0
        %3740 = vmatprep.subr.bf16.mxu0 0
        %3741 = vmatpush1.bf16.msra.mxu0 0
        %3742 = vmatprep.subr.bf16.mxu0 0
        %3743 = vmatpush1.bf16.msra.mxu0 0
        %3744 = vmatprep.subr.bf16.mxu0 0
        %3745 = vmatpush1.bf16.msra.mxu0 0
        %3746 = vmatprep.subr.bf16.mxu0 0
        %3747 = vmatpush1.bf16.msra.mxu0 0
        %3748 = vmatprep.subr.bf16.mxu0 0
        %3749 = vmatpush1.bf16.msra.mxu0 0
        %3750 = vmatprep.subr.bf16.mxu0 0
        %3751 = vmatpush1.bf16.msra.mxu0 0
        %3752 = vmatprep.subr.bf16.mxu0 0
        %3753 = vmatpush1.bf16.msra.mxu0 0
        %3754 = vmatprep.subr.bf16.mxu0 0
        %3755 = vmatpush1.bf16.msra.mxu0 0
        %3756 = vmatprep.mubr.bf16.mxu0 0
        %3757 = vmatmul.mubr.bf16.gmra.mrb[0].mxu0 %v3722
        %v3758 = vpop.f32.mrb[0].mxu0
        %v3759 = vadd.f32 %v3694, %v3758
        %v3760 = vpop.f32.mrb[0].mxu0
        %v3761 = vpop.f32.mrb[0].mxu0
        %v3762 = vpop.f32.mrb[0].mxu0
        %3763 = vdwg.mxu0
        %v3764 = vadd.f32 %v3759, %v3582
        %3765 = vst.msk [vmem:[%s1006] sm:$0xff] %vm1126, %v3764
        %3766 = vst.msk [vmem:[%s1013] sm:$0xff] %vm2845, %v2856
        %s3767 = sand.u32 %s753, 1
        %s3768 = scalar_lea.sflag [#allocation4], %s3767
        %s3769 = sand.u32 %s753, 1
        %s3770 = smul.addr %s3769, 8
        %s3771 = scalar_lea.vmem [#allocation3], %s3770
        %s3772 = sand.u32 %s781, 1
        %s3773 = scalar_lea.sflag [#allocation6], %s3772
        %s3774 = sand.u32 %s781, 1
        %s3775 = smul.addr %s3774, 8
        %s3776 = scalar_lea.vmem [#allocation5], %s3775
        // Predicated region
        $region141: #{tpu_custom_call.1} parent=139 // pred_check
          %p3777 = pneg %p763
        $region142: #{tpu_custom_call.1} parent=139 // pred_check_branch
          %3779 = sbr.rel (%p3777) target = $region144
        $region143: #{tpu_custom_call.1} parent=139 // pred_region
          %s3781 = ssub.s32 128, 128
          %3782 = vsyncadd %s3768, %s3781
          %s3783 = sadd.s32 %s86, %s85
          %s3784 = smul.addr %s3783, 128
          %s3785 = scalar_lea.hbm %s61, %s3784
          %s3787 = sshll.u32 %s3771, 4
          %s3788 = int_to_ptr.vmem [resolvable:$true] %s3787
          %3790 = dma.vmem_to_hbm [thread:$0]  %s3788, 128, %s3785, %s3768
        $region144: #{tpu_custom_call.1} parent=139 // pred_fallthru
          _
        // Predicated region
        $region145: #{tpu_custom_call.1} parent=139 // pred_check
          %p3791 = pneg %p791
        $region146: #{tpu_custom_call.1} parent=139 // pred_check_branch
          %3793 = sbr.rel (%p3791) target = $region148
        $region147: #{tpu_custom_call.1} parent=139 // pred_region
          %s3795 = ssub.s32 128, 128
          %3796 = vsyncadd %s3773, %s3795
          %s3797 = sadd.s32 %s86, %s85
          %s3798 = smul.addr %s3797, 128
          %s3799 = scalar_lea.hbm %s63, %s3798
          %s3801 = sshll.u32 %s3776, 4
          %s3802 = int_to_ptr.vmem [resolvable:$true] %s3801
          %3804 = dma.vmem_to_hbm [thread:$0]  %s3802, 128, %s3799, %s3773
        $region148: #{tpu_custom_call.1} parent=139 // pred_fallthru
          _
      $region140: #{tpu_custom_call.1} parent=5 // pred_fallthru
        _
      %p3805 = scmp.le.s32.totalorder 2, %s76
      // Predicated region
      $region149: #{tpu_custom_call.1} parent=5 // pred_check
        %p3806 = pneg %p3805
      $region150: #{tpu_custom_call.1} parent=5 // pred_check_branch
        %3808 = sbr.rel (%p3806) target = $region152
      $region151: #{tpu_custom_call.1} parent=5 // pred_region
        %s3809 = ssub.s32 %s76, 2
        // Predicated region
        $region153: #{tpu_custom_call.1} parent=151 // pred_check
          %p3810 = pneg %p769
        $region154: #{tpu_custom_call.1} parent=151 // pred_check_branch
          %3812 = sbr.rel (%p3810) target = $region156
        $region155: #{tpu_custom_call.1} parent=151 // pred_region
          %s3813 = sand.u32 %s754, 1
          %s3814 = scalar_lea.sflag [#allocation4], %s3813
          %s3815 = sand.u32 %s754, 1
          %s3816 = smul.addr %s3815, 8
          %s3817 = scalar_lea.vmem [#allocation3], %s3816
          %3818 = dma.done %s3814, 128
        $region156: #{tpu_custom_call.1} parent=151 // pred_fallthru
          _
        // Predicated region
        $region157: #{tpu_custom_call.1} parent=151 // pred_check
          %p3819 = pneg %p797
        $region158: #{tpu_custom_call.1} parent=151 // pred_check_branch
          %3821 = sbr.rel (%p3819) target = $region160
        $region159: #{tpu_custom_call.1} parent=151 // pred_region
          %s3822 = sand.u32 %s782, 1
          %s3823 = scalar_lea.sflag [#allocation6], %s3822
          %s3824 = sand.u32 %s782, 1
          %s3825 = smul.addr %s3824, 8
          %s3826 = scalar_lea.vmem [#allocation5], %s3825
          %3827 = dma.done %s3823, 128
        $region160: #{tpu_custom_call.1} parent=151 // pred_fallthru
          _
      $region152: #{tpu_custom_call.1} parent=5 // pred_fallthru
        _
    $region6: #{tpu_custom_call.1} parent=1 // loop_footer
      %s80 = sadd.s32 1, %s76
    $region7: #{tpu_custom_call.1} parent=1 // loop_footer_branch
      %75 = sbr.rel target = $region3
    $region8: #{tpu_custom_call.1} parent=1 // loop_exit
      _
    %3828 = vsyncpa [#allocation4], 1
    %s3829 = scalar_lea.sflag [#allocation4], 1
    %3830 = vsyncpa %s3829, 1
    %3831 = vsyncpa [#allocation6], 1
    %s3832 = scalar_lea.sflag [#allocation6], 1
    %3833 = vsyncpa %s3832, 1

// kernel: tpu_custom_call.1
$region0: #{tpu_custom_call.1}
  #allocation0 [shape = 'u32[]', space=smem, size = 0x4, offset = 0x4, fixed_abs, tag = 'smem constant byte address 0x4 - core index']
  #allocation1 [shape = 'u32[144,128]{1,0:T(1,128)}', space=vmem, size = 0x12000, scoped, tag = 'internal scratch']
  #allocation2 [shape = 'f32[8,512]{1,0:T(8,128)}', space=vmem, size = 0x4000, scoped, tag = 'scratch operand']
  %s0 = inlined_call_operand.smem [shape: u32[32], index: -1, kind: input, shape index: {}]
  %s1 = sld [smem:[%s0]]
  %s2 = scalar_lea.smem %s0, 1
  %s3 = sld [smem:[%s2]]
  %s4 = scalar_lea.smem %s0, 2
  %s5 = sld [smem:[%s4]]
  %s6 = scalar_lea.smem %s0, 3
  %s7 = sld [smem:[%s6]]
  %s8 = scalar_lea.smem %s0, 4
  %s9 = sld [smem:[%s8]]
  %s10 = scalar_lea.smem %s0, 5
  %s11 = sld [smem:[%s10]]
  %s12 = scalar_lea.smem %s0, 6
  %s13 = sld [smem:[%s12]]
  %s14 = scalar_lea.smem %s0, 7
  %s15 = sld [smem:[%s14]]
  %s16 = scalar_lea.smem %s0, 8
  %s17 = sld [smem:[%s16]]
  %s18 = scalar_lea.smem %s0, 9
  %s19 = sld [smem:[%s18]]
  %s20 = scalar_lea.smem %s0, 10
  %s21 = sld [smem:[%s20]]
  %s22 = scalar_lea.smem %s0, 11
  %s23 = sld [smem:[%s22]]
  %s24 = scalar_lea.smem %s0, 12
  %s25 = sld [smem:[%s24]]
  %s26 = scalar_lea.smem %s0, 13
  %s27 = sld [smem:[%s26]]
  %s28 = scalar_lea.smem %s0, 14
  %s29 = sld [smem:[%s28]]
  %s30 = scalar_lea.smem %s0, 15
  %s31 = sld [smem:[%s30]]
  %s32 = scalar_lea.smem %s0, 16
  %s33 = sld [smem:[%s32]]
  %s34 = scalar_lea.smem %s0, 17
  %s35 = sld [smem:[%s34]]
  %s36 = scalar_lea.smem %s0, 18
  %s37 = sld [smem:[%s36]]
  %s38 = scalar_lea.smem %s0, 19
  %s39 = sld [smem:[%s38]]
  %s40 = scalar_lea.smem %s0, 20
  %s41 = sld [smem:[%s40]]
  %s42 = scalar_lea.smem %s0, 21
  %s43 = sld [smem:[%s42]]
  %s44 = scalar_lea.smem %s0, 22
  %s45 = sld [smem:[%s44]]
  %s46 = scalar_lea.smem %s0, 23
  %s47 = sld [smem:[%s46]]
  %s48 = scalar_lea.smem %s0, 24
  %s49 = sld [smem:[%s48]]
  %s50 = scalar_lea.smem %s0, 25
  %s51 = sld [smem:[%s50]]
  %s52 = scalar_lea.smem %s0, 26
  %s53 = sld [smem:[%s52]]
  %s54 = scalar_lea.smem %s0, 27
  %s55 = sld [smem:[%s54]]
  %s56 = scalar_lea.smem %s0, 28
  %s57 = sld [smem:[%s56]]
  %s58 = scalar_lea.smem %s0, 29
  %s59 = sld [smem:[%s58]]
  %s60 = scalar_lea.smem %s0, 30
  %s61 = sld [smem:[%s60]]
  %s62 = scalar_lea.smem %s0, 31
  %s63 = sld [smem:[%s62]]
  %64 = xla_tuple %s61, %s63
  %s65 = sld [smem:[#allocation0]]
  $region161: #{tpu_custom_call.1} parent=0
    _
  %s67 = ssub.s32 1, %s65
  %s68 = scalar_select 0, %s67, %s65
  $region1: #{tpu_custom_call.1} parent=0
    #allocation3 [shape = 'u8[8192]{0}', space=vmem, size = 0x2000, scoped, tag = 'output window, operand 0']
    #allocation4 [shape = 's32[2]{0}', space=sflag, size = 0x8, scoped, tag = 'scoped memory for tpu_custom_call.1']
    #allocation5 [shape = 'u8[8192]{0}', space=vmem, size = 0x2000, scoped, tag = 'output window, operand 1']
    #allocation6 [shape = 's32[2]{0}', space=sflag, size = 0x8, scoped, tag = 'scoped memory for tpu_custom_call.1']
    %69 = vsyncpa [#allocation4], 0
    %s70 = scalar_lea.sflag [#allocation4], 1
    %71 = vsyncpa %s70, 0
    %72 = vsyncpa [#allocation6], 0
    %s73 = scalar_lea.sflag [#allocation6], 1
    %74 = vsyncpa %s73, 0
    loop: start=0, step=1, limit=4
    $region2: #{tpu_custom_call.1} parent=1 // loop_pre_header
      _
    $region3: #{tpu_custom_call.1} parent=1 // loop_header
      %s76 = sphi 0, %s80
      %p77 = scmp.ge.s32.totalorder %s76, 4
      %s83 = sphi 0, %s95
      %s84 = sphi 0, %s91
      %s85 = sphi 0, %s83
      %s86 = sphi 0, %s84
      %s87 = sphi 0, %s85
      %s88 = sphi 0, %s86
      %s98 = sphi 0, %s100
      %s101 = sphi 0, %s98
      %s102 = sphi 0, %s101
      %s118 = sphi 0, %s102
      %s124 = sphi 0, %s126
      %s127 = sphi 0, %s124
      %s128 = sphi 0, %s127
      %s144 = sphi 0, %s128
      %s150 = sphi 0, %s152
      %s153 = sphi 0, %s150
      %s154 = sphi 0, %s153
      %s170 = sphi 0, %s154
      %s176 = sphi 0, %s178
      %s179 = sphi 0, %s176
      %s180 = sphi 0, %s179
      %s196 = sphi 0, %s180
      %s200 = sphi 0, %s200
      %s202 = sphi 0, %s200
      %s203 = sphi 0, %s202
      %s217 = sphi 0, %s203
      %s221 = sphi 0, %s221
      %s223 = sphi 0, %s221
      %s224 = sphi 0, %s223
      %s238 = sphi 0, %s224
      %s242 = sphi 0, %s242
      %s244 = sphi 0, %s242
      %s245 = sphi 0, %s244
      %s259 = sphi 0, %s245
      %s263 = sphi 0, %s263
      %s265 = sphi 0, %s263
      %s266 = sphi 0, %s265
      %s280 = sphi 0, %s266
      %s284 = sphi 0, %s284
      %s286 = sphi 0, %s284
      %s287 = sphi 0, %s286
      %s301 = sphi 0, %s287
      %s305 = sphi 0, %s305
      %s307 = sphi 0, %s305
      %s308 = sphi 0, %s307
      %s322 = sphi 0, %s308
      %s326 = sphi 0, %s326
      %s328 = sphi 0, %s326
      %s329 = sphi 0, %s328
      %s343 = sphi 0, %s329
      %s347 = sphi 0, %s347
      %s349 = sphi 0, %s347
      %s350 = sphi 0, %s349
      %s364 = sphi 0, %s350
      %s368 = sphi 0, %s368
      %s370 = sphi 0, %s368
      %s371 = sphi 0, %s370
      %s385 = sphi 0, %s371
      %s389 = sphi 0, %s389
      %s391 = sphi 0, %s389
      %s392 = sphi 0, %s391
      %s406 = sphi 0, %s392
      %s410 = sphi 0, %s410
      %s412 = sphi 0, %s410
      %s413 = sphi 0, %s412
      %s427 = sphi 0, %s413
      %s431 = sphi 0, %s431
      %s433 = sphi 0, %s431
      %s434 = sphi 0, %s433
      %s448 = sphi 0, %s434
      %s452 = sphi 0, %s452
      %s454 = sphi 0, %s452
      %s455 = sphi 0, %s454
      %s469 = sphi 0, %s455
      %s473 = sphi 0, %s473
      %s475 = sphi 0, %s473
      %s476 = sphi 0, %s475
      %s490 = sphi 0, %s476
      %s494 = sphi 0, %s494
      %s496 = sphi 0, %s494
      %s497 = sphi 0, %s496
      %s511 = sphi 0, %s497
      %s515 = sphi 0, %s515
      %s517 = sphi 0, %s515
      %s518 = sphi 0, %s517
      %s532 = sphi 0, %s518
      %s536 = sphi 0, %s536
      %s538 = sphi 0, %s536
      %s539 = sphi 0, %s538
      %s553 = sphi 0, %s539
      %s557 = sphi 0, %s557
      %s559 = sphi 0, %s557
      %s560 = sphi 0, %s559
      %s574 = sphi 0, %s560
      %s578 = sphi 0, %s578
      %s580 = sphi 0, %s578
      %s581 = sphi 0, %s580
      %s595 = sphi 0, %s581
      %s599 = sphi 0, %s599
      %s601 = sphi 0, %s599
      %s602 = sphi 0, %s601
      %s616 = sphi 0, %s602
      %s620 = sphi 0, %s620
      %s622 = sphi 0, %s620
      %s623 = sphi 0, %s622
      %s637 = sphi 0, %s623
      %s641 = sphi 0, %s641
      %s643 = sphi 0, %s641
      %s644 = sphi 0, %s643
      %s658 = sphi 0, %s644
      %s662 = sphi 0, %s662
      %s664 = sphi 0, %s662
      %s665 = sphi 0, %s664
      %s679 = sphi 0, %s665
      %s683 = sphi 0, %s683
      %s685 = sphi 0, %s683
      %s686 = sphi 0, %s685
      %s700 = sphi 0, %s686
      %s704 = sphi 0, %s704
      %s706 = sphi 0, %s704
      %s707 = sphi 0, %s706
      %s721 = sphi 0, %s707
      %s725 = sphi 0, %s725
      %s727 = sphi 0, %s725
      %s728 = sphi 0, %s727
      %s742 = sphi 0, %s728
      %s750 = sphi 0, %s752
      %s753 = sphi 0, %s750
      %s754 = sphi 0, %s753
      %s770 = sphi 0, %s754
      %s778 = sphi 0, %s780
      %s781 = sphi 0, %s778
      %s782 = sphi 0, %s781
      %s798 = sphi 0, %s782
    $region4: #{tpu_custom_call.1} parent=1 // loop_header_branch
      %79 = sbr.rel (%p77) target = $region8
    $region5: #{tpu_custom_call.1} parent=1 // loop_body
      %s81 = ssub.s32 %s76, 1
      %s82 = ssub.s32 %s76, 2
      %s89 = sadd.s32 1, %s84
      %p90 = scmp.ge.s32.totalorder %s89, 1
      %s91 = scalar_select %p90, 0, %s89
      %s92 = sadd.s32 1, %s83
      %s93 = scalar_select %p90, %s92, %s83
      %p94 = scmp.ge.s32.totalorder %s93, 2
      %s95 = scalar_select %p94, 0, %s93
      %s96 = ssub.s32 %s83, %s95
      %p97 = scmp.eq.s32.totalorder %s96, 0
      %s99 = sadd.s32 %s98, 1
      %s100 = scalar_select %p97, %s98, %s99
      %p103 = pneg %p97
      %p104 = scmp.eq.s32.totalorder %s76, 1
      %p105 = por %p103, %p104
      %p106 = scmp.ne.s32.totalorder %s98, %s101
      %p107 = scmp.eq.s32.totalorder %s76, 0
      %p108 = por %p106, %p107
      %p109 = scmp.ne.s32.totalorder %s98, %s101
      %p110 = scmp.eq.s32.totalorder %s81, 1
      %p111 = por %p109, %p110
      %p112 = scmp.ne.s32.totalorder %s101, %s102
      %p113 = scmp.eq.s32.totalorder %s81, 0
      %p114 = por %p112, %p113
      %p115 = scmp.ne.s32.totalorder %s101, %s102
      %p116 = scmp.eq.s32.totalorder %s82, 1
      %p117 = por %p115, %p116
      %p119 = scmp.ne.s32.totalorder %s102, %s118
      %p120 = scmp.eq.s32.totalorder %s82, 0
      %p121 = por %p119, %p120
      %s122 = ssub.s32 %s83, %s95
      %p123 = scmp.eq.s32.totalorder %s122, 0
      %s125 = sadd.s32 %s124, 1
      %s126 = scalar_select %p123, %s124, %s125
      %p129 = pneg %p123
      %p130 = scmp.eq.s32.totalorder %s76, 1
      %p131 = por %p129, %p130
      %p132 = scmp.ne.s32.totalorder %s124, %s127
      %p133 = scmp.eq.s32.totalorder %s76, 0
      %p134 = por %p132, %p133
      %p135 = scmp.ne.s32.totalorder %s124, %s127
      %p136 = scmp.eq.s32.totalorder %s81, 1
      %p137 = por %p135, %p136
      %p138 = scmp.ne.s32.totalorder %s127, %s128
      %p139 = scmp.eq.s32.totalorder %s81, 0
      %p140 = por %p138, %p139
      %p141 = scmp.ne.s32.totalorder %s127, %s128
      %p142 = scmp.eq.s32.totalorder %s82, 1
      %p143 = por %p141, %p142
      %p145 = scmp.ne.s32.totalorder %s128, %s144
      %p146 = scmp.eq.s32.totalorder %s82, 0
      %p147 = por %p145, %p146
      %s148 = ssub.s32 %s83, %s95
      %p149 = scmp.eq.s32.totalorder %s148, 0
      %s151 = sadd.s32 %s150, 1
      %s152 = scalar_select %p149, %s150, %s151
      %p155 = pneg %p149
      %p156 = scmp.eq.s32.totalorder %s76, 1
      %p157 = por %p155, %p156
      %p158 = scmp.ne.s32.totalorder %s150, %s153
      %p159 = scmp.eq.s32.totalorder %s76, 0
      %p160 = por %p158, %p159
      %p161 = scmp.ne.s32.totalorder %s150, %s153
      %p162 = scmp.eq.s32.totalorder %s81, 1
      %p163 = por %p161, %p162
      %p164 = scmp.ne.s32.totalorder %s153, %s154
      %p165 = scmp.eq.s32.totalorder %s81, 0
      %p166 = por %p164, %p165
      %p167 = scmp.ne.s32.totalorder %s153, %s154
      %p168 = scmp.eq.s32.totalorder %s82, 1
      %p169 = por %p167, %p168
      %p171 = scmp.ne.s32.totalorder %s154, %s170
      %p172 = scmp.eq.s32.totalorder %s82, 0
      %p173 = por %p171, %p172
      %s174 = ssub.s32 %s83, %s95
      %p175 = scmp.eq.s32.totalorder %s174, 0
      %s177 = sadd.s32 %s176, 1
      %s178 = scalar_select %p175, %s176, %s177
      %p181 = pneg %p175
      %p182 = scmp.eq.s32.totalorder %s76, 1
      %p183 = por %p181, %p182
      %p184 = scmp.ne.s32.totalorder %s176, %s179
      %p185 = scmp.eq.s32.totalorder %s76, 0
      %p186 = por %p184, %p185
      %p187 = scmp.ne.s32.totalorder %s176, %s179
      %p188 = scmp.eq.s32.totalorder %s81, 1
      %p189 = por %p187, %p188
      %p190 = scmp.ne.s32.totalorder %s179, %s180
      %p191 = scmp.eq.s32.totalorder %s81, 0
      %p192 = por %p190, %p191
      %p193 = scmp.ne.s32.totalorder %s179, %s180
      %p194 = scmp.eq.s32.totalorder %s82, 1
      %p195 = por %p193, %p194
      %p197 = scmp.ne.s32.totalorder %s180, %s196
      %p198 = scmp.eq.s32.totalorder %s82, 0
      %p199 = por %p197, %p198
      %s201 = sadd.s32 %s200, 1
      %p204 = scmp.eq.s32.totalorder %s76, 1
      %p205 = scmp.ne.s32.totalorder %s200, %s202
      %p206 = scmp.eq.s32.totalorder %s76, 0
      %p207 = por %p205, %p206
      %p208 = scmp.ne.s32.totalorder %s200, %s202
      %p209 = scmp.eq.s32.totalorder %s81, 1
      %p210 = por %p208, %p209
      %p211 = scmp.ne.s32.totalorder %s202, %s203
      %p212 = scmp.eq.s32.totalorder %s81, 0
      %p213 = por %p211, %p212
      %p214 = scmp.ne.s32.totalorder %s202, %s203
      %p215 = scmp.eq.s32.totalorder %s82, 1
      %p216 = por %p214, %p215
      %p218 = scmp.ne.s32.totalorder %s203, %s217
      %p219 = scmp.eq.s32.totalorder %s82, 0
      %p220 = por %p218, %p219
      %s222 = sadd.s32 %s221, 1
      %p225 = scmp.eq.s32.totalorder %s76, 1
      %p226 = scmp.ne.s32.totalorder %s221, %s223
      %p227 = scmp.eq.s32.totalorder %s76, 0
      %p228 = por %p226, %p227
      %p229 = scmp.ne.s32.totalorder %s221, %s223
      %p230 = scmp.eq.s32.totalorder %s81, 1
      %p231 = por %p229, %p230
      %p232 = scmp.ne.s32.totalorder %s223, %s224
      %p233 = scmp.eq.s32.totalorder %s81, 0
      %p234 = por %p232, %p233
      %p235 = scmp.ne.s32.totalorder %s223, %s224
      %p236 = scmp.eq.s32.totalorder %s82, 1
      %p237 = por %p235, %p236
      %p239 = scmp.ne.s32.totalorder %s224, %s238
      %p240 = scmp.eq.s32.totalorder %s82, 0
      %p241 = por %p239, %p240
      %s243 = sadd.s32 %s242, 1
      %p246 = scmp.eq.s32.totalorder %s76, 1
      %p247 = scmp.ne.s32.totalorder %s242, %s244
      %p248 = scmp.eq.s32.totalorder %s76, 0
      %p249 = por %p247, %p248
      %p250 = scmp.ne.s32.totalorder %s242, %s244
      %p251 = scmp.eq.s32.totalorder %s81, 1
      %p252 = por %p250, %p251
      %p253 = scmp.ne.s32.totalorder %s244, %s245
      %p254 = scmp.eq.s32.totalorder %s81, 0
      %p255 = por %p253, %p254
      %p256 = scmp.ne.s32.totalorder %s244, %s245
      %p257 = scmp.eq.s32.totalorder %s82, 1
      %p258 = por %p256, %p257
      %p260 = scmp.ne.s32.totalorder %s245, %s259
      %p261 = scmp.eq.s32.totalorder %s82, 0
      %p262 = por %p260, %p261
      %s264 = sadd.s32 %s263, 1
      %p267 = scmp.eq.s32.totalorder %s76, 1
      %p268 = scmp.ne.s32.totalorder %s263, %s265
      %p269 = scmp.eq.s32.totalorder %s76, 0
      %p270 = por %p268, %p269
      %p271 = scmp.ne.s32.totalorder %s263, %s265
      %p272 = scmp.eq.s32.totalorder %s81, 1
      %p273 = por %p271, %p272
      %p274 = scmp.ne.s32.totalorder %s265, %s266
      %p275 = scmp.eq.s32.totalorder %s81, 0
      %p276 = por %p274, %p275
      %p277 = scmp.ne.s32.totalorder %s265, %s266
      %p278 = scmp.eq.s32.totalorder %s82, 1
      %p279 = por %p277, %p278
      %p281 = scmp.ne.s32.totalorder %s266, %s280
      %p282 = scmp.eq.s32.totalorder %s82, 0
      %p283 = por %p281, %p282
      %s285 = sadd.s32 %s284, 1
      %p288 = scmp.eq.s32.totalorder %s76, 1
      %p289 = scmp.ne.s32.totalorder %s284, %s286
      %p290 = scmp.eq.s32.totalorder %s76, 0
      %p291 = por %p289, %p290
      %p292 = scmp.ne.s32.totalorder %s284, %s286
      %p293 = scmp.eq.s32.totalorder %s81, 1
      %p294 = por %p292, %p293
      %p295 = scmp.ne.s32.totalorder %s286, %s287
      %p296 = scmp.eq.s32.totalorder %s81, 0
      %p297 = por %p295, %p296
      %p298 = scmp.ne.s32.totalorder %s286, %s287
      %p299 = scmp.eq.s32.totalorder %s82, 1
      %p300 = por %p298, %p299
      %p302 = scmp.ne.s32.totalorder %s287, %s301
      %p303 = scmp.eq.s32.totalorder %s82, 0
      %p304 = por %p302, %p303
      %s306 = sadd.s32 %s305, 1
      %p309 = scmp.eq.s32.totalorder %s76, 1
      %p310 = scmp.ne.s32.totalorder %s305, %s307
      %p311 = scmp.eq.s32.totalorder %s76, 0
      %p312 = por %p310, %p311
      %p313 = scmp.ne.s32.totalorder %s305, %s307
      %p314 = scmp.eq.s32.totalorder %s81, 1
      %p315 = por %p313, %p314
      %p316 = scmp.ne.s32.totalorder %s307, %s308
      %p317 = scmp.eq.s32.totalorder %s81, 0
      %p318 = por %p316, %p317
      %p319 = scmp.ne.s32.totalorder %s307, %s308
      %p320 = scmp.eq.s32.totalorder %s82, 1
      %p321 = por %p319, %p320
      %p323 = scmp.ne.s32.totalorder %s308, %s322
      %p324 = scmp.eq.s32.totalorder %s82, 0
      %p325 = por %p323, %p324
      %s327 = sadd.s32 %s326, 1
      %p330 = scmp.eq.s32.totalorder %s76, 1
      %p331 = scmp.ne.s32.totalorder %s326, %s328
      %p332 = scmp.eq.s32.totalorder %s76, 0
      %p333 = por %p331, %p332
      %p334 = scmp.ne.s32.totalorder %s326, %s328
      %p335 = scmp.eq.s32.totalorder %s81, 1
      %p336 = por %p334, %p335
      %p337 = scmp.ne.s32.totalorder %s328, %s329
      %p338 = scmp.eq.s32.totalorder %s81, 0
      %p339 = por %p337, %p338
      %p340 = scmp.ne.s32.totalorder %s328, %s329
      %p341 = scmp.eq.s32.totalorder %s82, 1
      %p342 = por %p340, %p341
      %p344 = scmp.ne.s32.totalorder %s329, %s343
      %p345 = scmp.eq.s32.totalorder %s82, 0
      %p346 = por %p344, %p345
      %s348 = sadd.s32 %s347, 1
      %p351 = scmp.eq.s32.totalorder %s76, 1
      %p352 = scmp.ne.s32.totalorder %s347, %s349
      %p353 = scmp.eq.s32.totalorder %s76, 0
      %p354 = por %p352, %p353
      %p355 = scmp.ne.s32.totalorder %s347, %s349
      %p356 = scmp.eq.s32.totalorder %s81, 1
      %p357 = por %p355, %p356
      %p358 = scmp.ne.s32.totalorder %s349, %s350
      %p359 = scmp.eq.s32.totalorder %s81, 0
      %p360 = por %p358, %p359
      %p361 = scmp.ne.s32.totalorder %s349, %s350
      %p362 = scmp.eq.s32.totalorder %s82, 1
      %p363 = por %p361, %p362
      %p365 = scmp.ne.s32.totalorder %s350, %s364
      %p366 = scmp.eq.s32.totalorder %s82, 0
      %p367 = por %p365, %p366
      %s369 = sadd.s32 %s368, 1
      %p372 = scmp.eq.s32.totalorder %s76, 1
      %p373 = scmp.ne.s32.totalorder %s368, %s370
      %p374 = scmp.eq.s32.totalorder %s76, 0
      %p375 = por %p373, %p374
      %p376 = scmp.ne.s32.totalorder %s368, %s370
      %p377 = scmp.eq.s32.totalorder %s81, 1
      %p378 = por %p376, %p377
      %p379 = scmp.ne.s32.totalorder %s370, %s371
      %p380 = scmp.eq.s32.totalorder %s81, 0
      %p381 = por %p379, %p380
      %p382 = scmp.ne.s32.totalorder %s370, %s371
      %p383 = scmp.eq.s32.totalorder %s82, 1
      %p384 = por %p382, %p383
      %p386 = scmp.ne.s32.totalorder %s371, %s385
      %p387 = scmp.eq.s32.totalorder %s82, 0
      %p388 = por %p386, %p387
      %s390 = sadd.s32 %s389, 1
      %p393 = scmp.eq.s32.totalorder %s76, 1
      %p394 = scmp.ne.s32.totalorder %s389, %s391
      %p395 = scmp.eq.s32.totalorder %s76, 0
      %p396 = por %p394, %p395
      %p397 = scmp.ne.s32.totalorder %s389, %s391
      %p398 = scmp.eq.s32.totalorder %s81, 1
      %p399 = por %p397, %p398
      %p400 = scmp.ne.s32.totalorder %s391, %s392
      %p401 = scmp.eq.s32.totalorder %s81, 0
      %p402 = por %p400, %p401
      %p403 = scmp.ne.s32.totalorder %s391, %s392
      %p404 = scmp.eq.s32.totalorder %s82, 1
      %p405 = por %p403, %p404
      %p407 = scmp.ne.s32.totalorder %s392, %s406
      %p408 = scmp.eq.s32.totalorder %s82, 0
      %p409 = por %p407, %p408
      %s411 = sadd.s32 %s410, 1
      %p414 = scmp.eq.s32.totalorder %s76, 1
      %p415 = scmp.ne.s32.totalorder %s410, %s412
      %p416 = scmp.eq.s32.totalorder %s76, 0
      %p417 = por %p415, %p416
      %p418 = scmp.ne.s32.totalorder %s410, %s412
      %p419 = scmp.eq.s32.totalorder %s81, 1
      %p420 = por %p418, %p419
      %p421 = scmp.ne.s32.totalorder %s412, %s413
      %p422 = scmp.eq.s32.totalorder %s81, 0
      %p423 = por %p421, %p422
      %p424 = scmp.ne.s32.totalorder %s412, %s413
      %p425 = scmp.eq.s32.totalorder %s82, 1
      %p426 = por %p424, %p425
      %p428 = scmp.ne.s32.totalorder %s413, %s427
      %p429 = scmp.eq.s32.totalorder %s82, 0
      %p430 = por %p428, %p429
      %s432 = sadd.s32 %s431, 1
      %p435 = scmp.eq.s32.totalorder %s76, 1
      %p436 = scmp.ne.s32.totalorder %s431, %s433
      %p437 = scmp.eq.s32.totalorder %s76, 0
      %p438 = por %p436, %p437
      %p439 = scmp.ne.s32.totalorder %s431, %s433
      %p440 = scmp.eq.s32.totalorder %s81, 1
      %p441 = por %p439, %p440
      %p442 = scmp.ne.s32.totalorder %s433, %s434
      %p443 = scmp.eq.s32.totalorder %s81, 0
      %p444 = por %p442, %p443
      %p445 = scmp.ne.s32.totalorder %s433, %s434
      %p446 = scmp.eq.s32.totalorder %s82, 1
      %p447 = por %p445, %p446
      %p449 = scmp.ne.s32.totalorder %s434, %s448
      %p450 = scmp.eq.s32.totalorder %s82, 0
      %p451 = por %p449, %p450
      %s453 = sadd.s32 %s452, 1
      %p456 = scmp.eq.s32.totalorder %s76, 1
      %p457 = scmp.ne.s32.totalorder %s452, %s454
      %p458 = scmp.eq.s32.totalorder %s76, 0
      %p459 = por %p457, %p458
      %p460 = scmp.ne.s32.totalorder %s452, %s454
      %p461 = scmp.eq.s32.totalorder %s81, 1
      %p462 = por %p460, %p461
      %p463 = scmp.ne.s32.totalorder %s454, %s455
      %p464 = scmp.eq.s32.totalorder %s81, 0
      %p465 = por %p463, %p464
      %p466 = scmp.ne.s32.totalorder %s454, %s455
      %p467 = scmp.eq.s32.totalorder %s82, 1
      %p468 = por %p466, %p467
      %p470 = scmp.ne.s32.totalorder %s455, %s469
      %p471 = scmp.eq.s32.totalorder %s82, 0
      %p472 = por %p470, %p471
      %s474 = sadd.s32 %s473, 1
      %p477 = scmp.eq.s32.totalorder %s76, 1
      %p478 = scmp.ne.s32.totalorder %s473, %s475
      %p479 = scmp.eq.s32.totalorder %s76, 0
      %p480 = por %p478, %p479
      %p481 = scmp.ne.s32.totalorder %s473, %s475
      %p482 = scmp.eq.s32.totalorder %s81, 1
      %p483 = por %p481, %p482
      %p484 = scmp.ne.s32.totalorder %s475, %s476
      %p485 = scmp.eq.s32.totalorder %s81, 0
      %p486 = por %p484, %p485
      %p487 = scmp.ne.s32.totalorder %s475, %s476
      %p488 = scmp.eq.s32.totalorder %s82, 1
      %p489 = por %p487, %p488
      %p491 = scmp.ne.s32.totalorder %s476, %s490
      %p492 = scmp.eq.s32.totalorder %s82, 0
      %p493 = por %p491, %p492
      %s495 = sadd.s32 %s494, 1
      %p498 = scmp.eq.s32.totalorder %s76, 1
      %p499 = scmp.ne.s32.totalorder %s494, %s496
      %p500 = scmp.eq.s32.totalorder %s76, 0
      %p501 = por %p499, %p500
      %p502 = scmp.ne.s32.totalorder %s494, %s496
      %p503 = scmp.eq.s32.totalorder %s81, 1
      %p504 = por %p502, %p503
      %p505 = scmp.ne.s32.totalorder %s496, %s497
      %p506 = scmp.eq.s32.totalorder %s81, 0
      %p507 = por %p505, %p506
      %p508 = scmp.ne.s32.totalorder %s496, %s497
      %p509 = scmp.eq.s32.totalorder %s82, 1
      %p510 = por %p508, %p509
      %p512 = scmp.ne.s32.totalorder %s497, %s511
      %p513 = scmp.eq.s32.totalorder %s82, 0
      %p514 = por %p512, %p513
      %s516 = sadd.s32 %s515, 1
      %p519 = scmp.eq.s32.totalorder %s76, 1
      %p520 = scmp.ne.s32.totalorder %s515, %s517
      %p521 = scmp.eq.s32.totalorder %s76, 0
      %p522 = por %p520, %p521
      %p523 = scmp.ne.s32.totalorder %s515, %s517
      %p524 = scmp.eq.s32.totalorder %s81, 1
      %p525 = por %p523, %p524
      %p526 = scmp.ne.s32.totalorder %s517, %s518
      %p527 = scmp.eq.s32.totalorder %s81, 0
      %p528 = por %p526, %p527
      %p529 = scmp.ne.s32.totalorder %s517, %s518
      %p530 = scmp.eq.s32.totalorder %s82, 1
      %p531 = por %p529, %p530
      %p533 = scmp.ne.s32.totalorder %s518, %s532
      %p534 = scmp.eq.s32.totalorder %s82, 0
      %p535 = por %p533, %p534
      %s537 = sadd.s32 %s536, 1
      %p540 = scmp.eq.s32.totalorder %s76, 1
      %p541 = scmp.ne.s32.totalorder %s536, %s538
      %p542 = scmp.eq.s32.totalorder %s76, 0
      %p543 = por %p541, %p542
      %p544 = scmp.ne.s32.totalorder %s536, %s538
      %p545 = scmp.eq.s32.totalorder %s81, 1
      %p546 = por %p544, %p545
      %p547 = scmp.ne.s32.totalorder %s538, %s539
      %p548 = scmp.eq.s32.totalorder %s81, 0
      %p549 = por %p547, %p548
      %p550 = scmp.ne.s32.totalorder %s538, %s539
      %p551 = scmp.eq.s32.totalorder %s82, 1
      %p552 = por %p550, %p551
      %p554 = scmp.ne.s32.totalorder %s539, %s553
      %p555 = scmp.eq.s32.totalorder %s82, 0
      %p556 = por %p554, %p555
      %s558 = sadd.s32 %s557, 1
      %p561 = scmp.eq.s32.totalorder %s76, 1
      %p562 = scmp.ne.s32.totalorder %s557, %s559
      %p563 = scmp.eq.s32.totalorder %s76, 0
      %p564 = por %p562, %p563
      %p565 = scmp.ne.s32.totalorder %s557, %s559
      %p566 = scmp.eq.s32.totalorder %s81, 1
      %p567 = por %p565, %p566
      %p568 = scmp.ne.s32.totalorder %s559, %s560
      %p569 = scmp.eq.s32.totalorder %s81, 0
      %p570 = por %p568, %p569
      %p571 = scmp.ne.s32.totalorder %s559, %s560
      %p572 = scmp.eq.s32.totalorder %s82, 1
      %p573 = por %p571, %p572
      %p575 = scmp.ne.s32.totalorder %s560, %s574
      %p576 = scmp.eq.s32.totalorder %s82, 0
      %p577 = por %p575, %p576
      %s579 = sadd.s32 %s578, 1
      %p582 = scmp.eq.s32.totalorder %s76, 1
      %p583 = scmp.ne.s32.totalorder %s578, %s580
      %p584 = scmp.eq.s32.totalorder %s76, 0
      %p585 = por %p583, %p584
      %p586 = scmp.ne.s32.totalorder %s578, %s580
      %p587 = scmp.eq.s32.totalorder %s81, 1
      %p588 = por %p586, %p587
      %p589 = scmp.ne.s32.totalorder %s580, %s581
      %p590 = scmp.eq.s32.totalorder %s81, 0
      %p591 = por %p589, %p590
      %p592 = scmp.ne.s32.totalorder %s580, %s581
      %p593 = scmp.eq.s32.totalorder %s82, 1
      %p594 = por %p592, %p593
      %p596 = scmp.ne.s32.totalorder %s581, %s595
      %p597 = scmp.eq.s32.totalorder %s82, 0
      %p598 = por %p596, %p597
      %s600 = sadd.s32 %s599, 1
      %p603 = scmp.eq.s32.totalorder %s76, 1
      %p604 = scmp.ne.s32.totalorder %s599, %s601
      %p605 = scmp.eq.s32.totalorder %s76, 0
      %p606 = por %p604, %p605
      %p607 = scmp.ne.s32.totalorder %s599, %s601
      %p608 = scmp.eq.s32.totalorder %s81, 1
      %p609 = por %p607, %p608
      %p610 = scmp.ne.s32.totalorder %s601, %s602
      %p611 = scmp.eq.s32.totalorder %s81, 0
      %p612 = por %p610, %p611
      %p613 = scmp.ne.s32.totalorder %s601, %s602
      %p614 = scmp.eq.s32.totalorder %s82, 1
      %p615 = por %p613, %p614
      %p617 = scmp.ne.s32.totalorder %s602, %s616
      %p618 = scmp.eq.s32.totalorder %s82, 0
      %p619 = por %p617, %p618
      %s621 = sadd.s32 %s620, 1
      %p624 = scmp.eq.s32.totalorder %s76, 1
      %p625 = scmp.ne.s32.totalorder %s620, %s622
      %p626 = scmp.eq.s32.totalorder %s76, 0
      %p627 = por %p625, %p626
      %p628 = scmp.ne.s32.totalorder %s620, %s622
      %p629 = scmp.eq.s32.totalorder %s81, 1
      %p630 = por %p628, %p629
      %p631 = scmp.ne.s32.totalorder %s622, %s623
      %p632 = scmp.eq.s32.totalorder %s81, 0
      %p633 = por %p631, %p632
      %p634 = scmp.ne.s32.totalorder %s622, %s623
      %p635 = scmp.eq.s32.totalorder %s82, 1
      %p636 = por %p634, %p635
      %p638 = scmp.ne.s32.totalorder %s623, %s637
      %p639 = scmp.eq.s32.totalorder %s82, 0
      %p640 = por %p638, %p639
      %s642 = sadd.s32 %s641, 1
      %p645 = scmp.eq.s32.totalorder %s76, 1
      %p646 = scmp.ne.s32.totalorder %s641, %s643
      %p647 = scmp.eq.s32.totalorder %s76, 0
      %p648 = por %p646, %p647
      %p649 = scmp.ne.s32.totalorder %s641, %s643
      %p650 = scmp.eq.s32.totalorder %s81, 1
      %p651 = por %p649, %p650
      %p652 = scmp.ne.s32.totalorder %s643, %s644
      %p653 = scmp.eq.s32.totalorder %s81, 0
      %p654 = por %p652, %p653
      %p655 = scmp.ne.s32.totalorder %s643, %s644
      %p656 = scmp.eq.s32.totalorder %s82, 1
      %p657 = por %p655, %p656
      %p659 = scmp.ne.s32.totalorder %s644, %s658
      %p660 = scmp.eq.s32.totalorder %s82, 0
      %p661 = por %p659, %p660
      %s663 = sadd.s32 %s662, 1
      %p666 = scmp.eq.s32.totalorder %s76, 1
      %p667 = scmp.ne.s32.totalorder %s662, %s664
      %p668 = scmp.eq.s32.totalorder %s76, 0
      %p669 = por %p667, %p668
      %p670 = scmp.ne.s32.totalorder %s662, %s664
      %p671 = scmp.eq.s32.totalorder %s81, 1
      %p672 = por %p670, %p671
      %p673 = scmp.ne.s32.totalorder %s664, %s665
      %p674 = scmp.eq.s32.totalorder %s81, 0
      %p675 = por %p673, %p674
      %p676 = scmp.ne.s32.totalorder %s664, %s665
      %p677 = scmp.eq.s32.totalorder %s82, 1
      %p678 = por %p676, %p677
      %p680 = scmp.ne.s32.totalorder %s665, %s679
      %p681 = scmp.eq.s32.totalorder %s82, 0
      %p682 = por %p680, %p681
      %s684 = sadd.s32 %s683, 1
      %p687 = scmp.eq.s32.totalorder %s76, 1
      %p688 = scmp.ne.s32.totalorder %s683, %s685
      %p689 = scmp.eq.s32.totalorder %s76, 0
      %p690 = por %p688, %p689
      %p691 = scmp.ne.s32.totalorder %s683, %s685
      %p692 = scmp.eq.s32.totalorder %s81, 1
      %p693 = por %p691, %p692
      %p694 = scmp.ne.s32.totalorder %s685, %s686
      %p695 = scmp.eq.s32.totalorder %s81, 0
      %p696 = por %p694, %p695
      %p697 = scmp.ne.s32.totalorder %s685, %s686
      %p698 = scmp.eq.s32.totalorder %s82, 1
      %p699 = por %p697, %p698
      %p701 = scmp.ne.s32.totalorder %s686, %s700
      %p702 = scmp.eq.s32.totalorder %s82, 0
      %p703 = por %p701, %p702
      %s705 = sadd.s32 %s704, 1
      %p708 = scmp.eq.s32.totalorder %s76, 1
      %p709 = scmp.ne.s32.totalorder %s704, %s706
      %p710 = scmp.eq.s32.totalorder %s76, 0
      %p711 = por %p709, %p710
      %p712 = scmp.ne.s32.totalorder %s704, %s706
      %p713 = scmp.eq.s32.totalorder %s81, 1
      %p714 = por %p712, %p713
      %p715 = scmp.ne.s32.totalorder %s706, %s707
      %p716 = scmp.eq.s32.totalorder %s81, 0
      %p717 = por %p715, %p716
      %p718 = scmp.ne.s32.totalorder %s706, %s707
      %p719 = scmp.eq.s32.totalorder %s82, 1
      %p720 = por %p718, %p719
      %p722 = scmp.ne.s32.totalorder %s707, %s721
      %p723 = scmp.eq.s32.totalorder %s82, 0
      %p724 = por %p722, %p723
      %s726 = sadd.s32 %s725, 1
      %p729 = scmp.eq.s32.totalorder %s76, 1
      %p730 = scmp.ne.s32.totalorder %s725, %s727
      %p731 = scmp.eq.s32.totalorder %s76, 0
      %p732 = por %p730, %p731
      %p733 = scmp.ne.s32.totalorder %s725, %s727
      %p734 = scmp.eq.s32.totalorder %s81, 1
      %p735 = por %p733, %p734
      %p736 = scmp.ne.s32.totalorder %s727, %s728
      %p737 = scmp.eq.s32.totalorder %s81, 0
      %p738 = por %p736, %p737
      %p739 = scmp.ne.s32.totalorder %s727, %s728
      %p740 = scmp.eq.s32.totalorder %s82, 1
      %p741 = por %p739, %p740
      %p743 = scmp.ne.s32.totalorder %s728, %s742
      %p744 = scmp.eq.s32.totalorder %s82, 0
      %p745 = por %p743, %p744
      %s746 = ssub.s32 %s83, %s95
      %s747 = ssub.s32 %s84, %s91
      %s748 = sor.u32 %s746, %s747
      %p749 = scmp.eq.s32.totalorder %s748, 0
      %s751 = sadd.s32 %s750, 1
      %s752 = scalar_select %p749, %s750, %s751
      %p755 = pneg %p749
      %p756 = scmp.eq.s32.totalorder %s76, 1
      %p757 = por %p755, %p756
      %p758 = scmp.ne.s32.totalorder %s750, %s753
      %p759 = scmp.eq.s32.totalorder %s76, 0
      %p760 = por %p758, %p759
      %p761 = scmp.ne.s32.totalorder %s750, %s753
      %p762 = scmp.eq.s32.totalorder %s81, 1
      %p763 = por %p761, %p762
      %p764 = scmp.ne.s32.totalorder %s753, %s754
      %p765 = scmp.eq.s32.totalorder %s81, 0
      %p766 = por %p764, %p765
      %p767 = scmp.ne.s32.totalorder %s753, %s754
      %p768 = scmp.eq.s32.totalorder %s82, 1
      %p769 = por %p767, %p768
      %p771 = scmp.ne.s32.totalorder %s754, %s770
      %p772 = scmp.eq.s32.totalorder %s82, 0
      %p773 = por %p771, %p772
      %s774 = ssub.s32 %s83, %s95
      %s775 = ssub.s32 %s84, %s91
      %s776 = sor.u32 %s774, %s775
      %p777 = scmp.eq.s32.totalorder %s776, 0
      %s779 = sadd.s32 %s778, 1
      %s780 = scalar_select %p777, %s778, %s779
      %p783 = pneg %p777
      %p784 = scmp.eq.s32.totalorder %s76, 1
      %p785 = por %p783, %p784
      %p786 = scmp.ne.s32.totalorder %s778, %s781
      %p787 = scmp.eq.s32.totalorder %s76, 0
      %p788 = por %p786, %p787
      %p789 = scmp.ne.s32.totalorder %s778, %s781
      %p790 = scmp.eq.s32.totalorder %s81, 1
      %p791 = por %p789, %p790
      %p792 = scmp.ne.s32.totalorder %s781, %s782
      %p793 = scmp.eq.s32.totalorder %s81, 0
      %p794 = por %p792, %p793
      %p795 = scmp.ne.s32.totalorder %s781, %s782
      %p796 = scmp.eq.s32.totalorder %s82, 1
      %p797 = por %p795, %p796
      %p799 = scmp.ne.s32.totalorder %s782, %s798
      %p800 = scmp.eq.s32.totalorder %s82, 0
      %p801 = por %p799, %p800
      %p802 = scmp.le.s32.totalorder 1, %s76
      %p803 = scmp.lt.s32.totalorder %s76, 3
      %p804 = pnand %p802, %p803
      %p805 = pneg %p804
      // Predicated region
      $region9: #{tpu_custom_call.1} parent=5 // pred_check
        _
      $region10: #{tpu_custom_call.1} parent=5 // pred_check_branch
        %807 = sbr.rel (%p804) target = $region12
      $region11: #{tpu_custom_call.1} parent=5 // pred_region
        %s808 = ssub.s32 %s76, 1
        // Predicated region
        $region13: #{tpu_custom_call.1} parent=11 // pred_check
          %p809 = pneg %p213
        $region14: #{tpu_custom_call.1} parent=11 // pred_check_branch
          %811 = sbr.rel (%p809) target = $region16
        $region15: #{tpu_custom_call.1} parent=11 // pred_region
          _
        $region16: #{tpu_custom_call.1} parent=11 // pred_fallthru
          _
        // Predicated region
        $region17: #{tpu_custom_call.1} parent=11 // pred_check
          %p812 = pneg %p234
        $region18: #{tpu_custom_call.1} parent=11 // pred_check_branch
          %814 = sbr.rel (%p812) target = $region20
        $region19: #{tpu_custom_call.1} parent=11 // pred_region
          _
        $region20: #{tpu_custom_call.1} parent=11 // pred_fallthru
          _
        // Predicated region
        $region21: #{tpu_custom_call.1} parent=11 // pred_check
          %p815 = pneg %p255
        $region22: #{tpu_custom_call.1} parent=11 // pred_check_branch
          %817 = sbr.rel (%p815) target = $region24
        $region23: #{tpu_custom_call.1} parent=11 // pred_region
          _
        $region24: #{tpu_custom_call.1} parent=11 // pred_fallthru
          _
        // Predicated region
        $region25: #{tpu_custom_call.1} parent=11 // pred_check
          %p818 = pneg %p276
        $region26: #{tpu_custom_call.1} parent=11 // pred_check_branch
          %820 = sbr.rel (%p818) target = $region28
        $region27: #{tpu_custom_call.1} parent=11 // pred_region
          _
        $region28: #{tpu_custom_call.1} parent=11 // pred_fallthru
          _
        // Predicated region
        $region29: #{tpu_custom_call.1} parent=11 // pred_check
          %p821 = pneg %p297
        $region30: #{tpu_custom_call.1} parent=11 // pred_check_branch
          %823 = sbr.rel (%p821) target = $region32
        $region31: #{tpu_custom_call.1} parent=11 // pred_region
          _
        $region32: #{tpu_custom_call.1} parent=11 // pred_fallthru
          _
        // Predicated region
        $region33: #{tpu_custom_call.1} parent=11 // pred_check
          %p824 = pneg %p318
        $region34: #{tpu_custom_call.1} parent=11 // pred_check_branch
          %826 = sbr.rel (%p824) target = $region36
        $region35: #{tpu_custom_call.1} parent=11 // pred_region
          _
        $region36: #{tpu_custom_call.1} parent=11 // pred_fallthru
          _
        // Predicated region
        $region37: #{tpu_custom_call.1} parent=11 // pred_check
          %p827 = pneg %p339
        $region38: #{tpu_custom_call.1} parent=11 // pred_check_branch
          %829 = sbr.rel (%p827) target = $region40
        $region39: #{tpu_custom_call.1} parent=11 // pred_region
          _
        $region40: #{tpu_custom_call.1} parent=11 // pred_fallthru
          _
        // Predicated region
        $region41: #{tpu_custom_call.1} parent=11 // pred_check
          %p830 = pneg %p360
        $region42: #{tpu_custom_call.1} parent=11 // pred_check_branch
          %832 = sbr.rel (%p830) target = $region44
        $region43: #{tpu_custom_call.1} parent=11 // pred_region
          _
        $region44: #{tpu_custom_call.1} parent=11 // pred_fallthru
          _
        // Predicated region
        $region45: #{tpu_custom_call.1} parent=11 // pred_check
          %p833 = pneg %p381
        $region46: #{tpu_custom_call.1} parent=11 // pred_check_branch
          %835 = sbr.rel (%p833) target = $region48
        $region47: #{tpu_custom_call.1} parent=11 // pred_region
          _
        $region48: #{tpu_custom_call.1} parent=11 // pred_fallthru
          _
        // Predicated region
        $region49: #{tpu_custom_call.1} parent=11 // pred_check
          %p836 = pneg %p402
        $region50: #{tpu_custom_call.1} parent=11 // pred_check_branch
          %838 = sbr.rel (%p836) target = $region52
        $region51: #{tpu_custom_call.1} parent=11 // pred_region
          _
        $region52: #{tpu_custom_call.1} parent=11 // pred_fallthru
          _
        // Predicated region
        $region53: #{tpu_custom_call.1} parent=11 // pred_check
          %p839 = pneg %p423
        $region54: #{tpu_custom_call.1} parent=11 // pred_check_branch
          %841 = sbr.rel (%p839) target = $region56
        $region55: #{tpu_custom_call.1} parent=11 // pred_region
          _
        $region56: #{tpu_custom_call.1} parent=11 // pred_fallthru
          _
        // Predicated region
        $region57: #{tpu_custom_call.1} parent=11 // pred_check
          %p842 = pneg %p444
        $region58: #{tpu_custom_call.1} parent=11 // pred_check_branch
          %844 = sbr.rel (%p842) target = $region60
        $region59: #{tpu_custom_call.1} parent=11 // pred_region
          _
        $region60: #{tpu_custom_call.1} parent=11 // pred_fallthru
          _
        // Predicated region
        $region61: #{tpu_custom_call.1} parent=11 // pred_check
          %p845 = pneg %p465
        $region62: #{tpu_custom_call.1} parent=11 // pred_check_branch
          %847 = sbr.rel (%p845) target = $region64
        $region63: #{tpu_custom_call.1} parent=11 // pred_region
          _
        $region64: #{tpu_custom_call.1} parent=11 // pred_fallthru
          _
        // Predicated region
        $region65: #{tpu_custom_call.1} parent=11 // pred_check
          %p848 = pneg %p486
        $region66: #{tpu_custom_call.1} parent=11 // pred_check_branch
          %850 = sbr.rel (%p848) target = $region68
        $region67: #{tpu_custom_call.1} parent=11 // pred_region
          _
        $region68: #{tpu_custom_call.1} parent=11 // pred_fallthru
          _
        // Predicated region
        $region69: #{tpu_custom_call.1} parent=11 // pred_check
          %p851 = pneg %p507
        $region70: #{tpu_custom_call.1} parent=11 // pred_check_branch
          %853 = sbr.rel (%p851) target = $region72
        $region71: #{tpu_custom_call.1} parent=11 // pred_region
          _
        $region72: #{tpu_custom_call.1} parent=11 // pred_fallthru
          _
        // Predicated region
        $region73: #{tpu_custom_call.1} parent=11 // pred_check
          %p854 = pneg %p528
        $region74: #{tpu_custom_call.1} parent=11 // pred_check_branch
          %856 = sbr.rel (%p854) target = $region76
        $region75: #{tpu_custom_call.1} parent=11 // pred_region
          _
        $region76: #{tpu_custom_call.1} parent=11 // pred_fallthru
          _
        // Predicated region
        $region77: #{tpu_custom_call.1} parent=11 // pred_check
          %p857 = pneg %p549
        $region78: #{tpu_custom_call.1} parent=11 // pred_check_branch
          %859 = sbr.rel (%p857) target = $region80
        $region79: #{tpu_custom_call.1} parent=11 // pred_region
          _
        $region80: #{tpu_custom_call.1} parent=11 // pred_fallthru
          _
        // Predicated region
        $region81: #{tpu_custom_call.1} parent=11 // pred_check
          %p860 = pneg %p570
        $region82: #{tpu_custom_call.1} parent=11 // pred_check_branch
          %862 = sbr.rel (%p860) target = $region84
        $region83: #{tpu_custom_call.1} parent=11 // pred_region
          _
        $region84: #{tpu_custom_call.1} parent=11 // pred_fallthru
          _
        // Predicated region
        $region85: #{tpu_custom_call.1} parent=11 // pred_check
          %p863 = pneg %p591
        $region86: #{tpu_custom_call.1} parent=11 // pred_check_branch
          %865 = sbr.rel (%p863) target = $region88
        $region87: #{tpu_custom_call.1} parent=11 // pred_region
          _
        $region88: #{tpu_custom_call.1} parent=11 // pred_fallthru
          _
        // Predicated region
        $region89: #{tpu_custom_call.1} parent=11 // pred_check
          %p866 = pneg %p612
        $region90: #{tpu_custom_call.1} parent=11 // pred_check_branch
          %868 = sbr.rel (%p866) target = $region92
        $region91: #{tpu_custom_call.1} parent=11 // pred_region
          _
        $region92: #{tpu_custom_call.1} parent=11 // pred_fallthru
          _
        // Predicated region
        $region93: #{tpu_custom_call.1} parent=11 // pred_check
          %p869 = pneg %p633
        $region94: #{tpu_custom_call.1} parent=11 // pred_check_branch
          %871 = sbr.rel (%p869) target = $region96
        $region95: #{tpu_custom_call.1} parent=11 // pred_region
          _
        $region96: #{tpu_custom_call.1} parent=11 // pred_fallthru
          _
        // Predicated region
        $region97: #{tpu_custom_call.1} parent=11 // pred_check
          %p872 = pneg %p654
        $region98: #{tpu_custom_call.1} parent=11 // pred_check_branch
          %874 = sbr.rel (%p872) target = $region100
        $region99: #{tpu_custom_call.1} parent=11 // pred_region
          _
        $region100: #{tpu_custom_call.1} parent=11 // pred_fallthru
          _
        // Predicated region
        $region101: #{tpu_custom_call.1} parent=11 // pred_check
          %p875 = pneg %p675
        $region102: #{tpu_custom_call.1} parent=11 // pred_check_branch
          %877 = sbr.rel (%p875) target = $region104
        $region103: #{tpu_custom_call.1} parent=11 // pred_region
          _
        $region104: #{tpu_custom_call.1} parent=11 // pred_fallthru
          _
        // Predicated region
        $region105: #{tpu_custom_call.1} parent=11 // pred_check
          %p878 = pneg %p696
        $region106: #{tpu_custom_call.1} parent=11 // pred_check_branch
          %880 = sbr.rel (%p878) target = $region108
        $region107: #{tpu_custom_call.1} parent=11 // pred_region
          _
        $region108: #{tpu_custom_call.1} parent=11 // pred_fallthru
          _
        // Predicated region
        $region109: #{tpu_custom_call.1} parent=11 // pred_check
          %p881 = pneg %p717
        $region110: #{tpu_custom_call.1} parent=11 // pred_check_branch
          %883 = sbr.rel (%p881) target = $region112
        $region111: #{tpu_custom_call.1} parent=11 // pred_region
          _
        $region112: #{tpu_custom_call.1} parent=11 // pred_fallthru
          _
        // Predicated region
        $region113: #{tpu_custom_call.1} parent=11 // pred_check
          %p884 = pneg %p738
        $region114: #{tpu_custom_call.1} parent=11 // pred_check_branch
          %886 = sbr.rel (%p884) target = $region116
        $region115: #{tpu_custom_call.1} parent=11 // pred_region
          _
        $region116: #{tpu_custom_call.1} parent=11 // pred_fallthru
          _
      $region12: #{tpu_custom_call.1} parent=5 // pred_fallthru
        _
      %p887 = scmp.lt.s32.totalorder %s76, 2
      // Predicated region
      $region117: #{tpu_custom_call.1} parent=5 // pred_check
        %p888 = pneg %p887
      $region118: #{tpu_custom_call.1} parent=5 // pred_check_branch
        %890 = sbr.rel (%p888) target = $region120
      $region119: #{tpu_custom_call.1} parent=5 // pred_region
        // Predicated region
        $region121: #{tpu_custom_call.1} parent=119 // pred_check
          %p891 = pneg %p108
        $region122: #{tpu_custom_call.1} parent=119 // pred_check_branch
          %893 = sbr.rel (%p891) target = $region124
        $region123: #{tpu_custom_call.1} parent=119 // pred_region
          %p894 = scmp.lt.s32.totalorder %s83, 1
          %s895 = scalar_select %p894, %s83, 1
          %s896 = smul.addr %s895, 8
          %s897 = scalar_lea.vmem %s1, %s896
        $region124: #{tpu_custom_call.1} parent=119 // pred_fallthru
          _
        // Predicated region
        $region125: #{tpu_custom_call.1} parent=119 // pred_check
          %p898 = pneg %p134
        $region126: #{tpu_custom_call.1} parent=119 // pred_check_branch
          %900 = sbr.rel (%p898) target = $region128
        $region127: #{tpu_custom_call.1} parent=119 // pred_region
          %p901 = scmp.lt.s32.totalorder %s83, 1
          %s902 = scalar_select %p901, %s83, 1
          %s903 = smul.addr %s902, 2
          %s904 = smul.addr %s903, 8
          %s905 = scalar_lea.vmem %s3, %s904
        $region128: #{tpu_custom_call.1} parent=119 // pred_fallthru
          _
        // Predicated region
        $region129: #{tpu_custom_call.1} parent=119 // pred_check
          %p906 = pneg %p160
        $region130: #{tpu_custom_call.1} parent=119 // pred_check_branch
          %908 = sbr.rel (%p906) target = $region132
        $region131: #{tpu_custom_call.1} parent=119 // pred_region
          %p909 = scmp.lt.s32.totalorder %s83, 1
          %s910 = scalar_select %p909, %s83, 1
          %s911 = scalar_lea.vmem %s5, %s910
        $region132: #{tpu_custom_call.1} parent=119 // pred_fallthru
          _
        // Predicated region
        $region133: #{tpu_custom_call.1} parent=119 // pred_check
          %p912 = pneg %p186
        $region134: #{tpu_custom_call.1} parent=119 // pred_check_branch
          %914 = sbr.rel (%p912) target = $region136
        $region135: #{tpu_custom_call.1} parent=119 // pred_region
          %p915 = scmp.lt.s32.totalorder %s83, 1
          %s916 = scalar_select %p915, %s83, 1
          %s917 = scalar_lea.vmem %s7, %s916
        $region136: #{tpu_custom_call.1} parent=119 // pred_fallthru
          _
      $region120: #{tpu_custom_call.1} parent=5 // pred_fallthru
        _
      %p918 = scmp.le.s32.totalorder 1, %s76
      %p919 = scmp.lt.s32.totalorder %s76, 3
      %p920 = pnand %p918, %p919
      %p921 = pneg %p920
      // Predicated region
      $region137: #{tpu_custom_call.1} parent=5 // pred_check
        _
      $region138: #{tpu_custom_call.1} parent=5 // pred_check_branch
        %923 = sbr.rel (%p920) target = $region140
      $region139: #{tpu_custom_call.1} parent=5 // pred_region
        %s924 = ssub.s32 %s76, 1
        %p925 = scmp.lt.s32.totalorder %s85, 1
        %s926 = scalar_select %p925, %s85, 1
        %s927 = smul.addr %s926, 8
        %s928 = scalar_lea.vmem %s1, %s927
        %p929 = pneg %p114
        %p930 = pneg %p111
        %p931 = scmp.lt.s32.totalorder %s85, 1
        %s932 = scalar_select %p931, %s85, 1
        %s933 = smul.addr %s932, 2
        %s934 = smul.addr %s933, 8
        %s935 = scalar_lea.vmem %s3, %s934
        %p936 = pneg %p140
        %p937 = pneg %p137
        %p938 = scmp.lt.s32.totalorder %s85, 1
        %s939 = scalar_select %p938, %s85, 1
        %s940 = scalar_lea.vmem %s5, %s939
        %p941 = pneg %p166
        %p942 = pneg %p163
        %p943 = scmp.lt.s32.totalorder %s85, 1
        %s944 = scalar_select %p943, %s85, 1
        %s945 = scalar_lea.vmem %s7, %s944
        %p946 = pneg %p192
        %p947 = pneg %p189
        %p948 = pneg %p213
        %p949 = pneg %p210
        %p950 = pneg %p234
        %p951 = pneg %p231
        %p952 = pneg %p255
        %p953 = pneg %p252
        %p954 = pneg %p276
        %p955 = pneg %p273
        %p956 = pneg %p297
        %p957 = pneg %p294
        %p958 = pneg %p318
        %p959 = pneg %p315
        %p960 = pneg %p339
        %p961 = pneg %p336
        %p962 = pneg %p360
        %p963 = pneg %p357
        %p964 = pneg %p381
        %p965 = pneg %p378
        %p966 = pneg %p402
        %p967 = pneg %p399
        %p968 = pneg %p423
        %p969 = pneg %p420
        %p970 = pneg %p444
        %p971 = pneg %p441
        %p972 = pneg %p465
        %p973 = pneg %p462
        %p974 = pneg %p486
        %p975 = pneg %p483
        %p976 = pneg %p507
        %p977 = pneg %p504
        %p978 = pneg %p528
        %p979 = pneg %p525
        %p980 = pneg %p549
        %p981 = pneg %p546
        %p982 = pneg %p570
        %p983 = pneg %p567
        %p984 = pneg %p591
        %p985 = pneg %p588
        %p986 = pneg %p612
        %p987 = pneg %p609
        %p988 = pneg %p633
        %p989 = pneg %p630
        %p990 = pneg %p654
        %p991 = pneg %p651
        %p992 = pneg %p675
        %p993 = pneg %p672
        %p994 = pneg %p696
        %p995 = pneg %p693
        %p996 = pneg %p717
        %p997 = pneg %p714
        %p998 = pneg %p738
        %p999 = pneg %p735
        %p1000 = pneg %p766
        %p1001 = pneg %p763
        %s1002 = sand.u32 %s753, 1
        %s1003 = scalar_lea.sflag [#allocation4], %s1002
        %s1004 = sand.u32 %s753, 1
        %s1005 = smul.addr %s1004, 8
        %s1006 = scalar_lea.vmem [#allocation3], %s1005
        %p1007 = pneg %p794
        %p1008 = pneg %p791
        %s1009 = sand.u32 %s781, 1
        %s1010 = scalar_lea.sflag [#allocation6], %s1009
        %s1011 = sand.u32 %s781, 1
        %s1012 = smul.addr %s1011, 8
        %s1013 = scalar_lea.vmem [#allocation5], %s1012
        %p1014 = scmp.lt.s32.totalorder %s85, 1
        %s1015 = scalar_select %p1014, %s85, 1
        %s1016 = smul.addr %s1015, 8
        %s1017 = scalar_lea.vmem %s1, %s1016
        %p1018 = scmp.lt.s32.totalorder %s85, 1
        %s1019 = scalar_select %p1018, %s85, 1
        %s1020 = smul.addr %s1019, 2
        %s1021 = smul.addr %s1020, 8
        %s1022 = scalar_lea.vmem %s3, %s1021
        %p1023 = scmp.lt.s32.totalorder %s85, 1
        %s1024 = scalar_select %p1023, %s85, 1
        %s1025 = scalar_lea.vmem %s5, %s1024
        %p1026 = scmp.lt.s32.totalorder %s85, 1
        %s1027 = scalar_select %p1026, %s85, 1
        %s1028 = scalar_lea.vmem %s7, %s1027
        %s1030 = smul.u32 %s86, 8
        %v1031 = vld [vmem:[%s1017] sm:$0xff]
        %s1032 = scalar_lea.vmem %s1017, %s1030
        %v1033 = vld [vmem:[%s1032] sm:$0xff]
        %v1034 = vld [vmem:[%s1022] sm:$0xff]
        %v1035 = vld [vmem:[%s1022 + $0x8] sm:$0xff]
        %v1036 = vlaneseq
        %v1037 = vshrl.u32 %v1036, 7
        %v1038 = vstv %s1030
        %v1039 = vadd.s32 %v1037, %v1038
        %v1040 = vlaneseq
        %v1041 = vand.u32 %v1040, 127
        %vm1042 = vcmp.gt.s32.totalorder %v1041, %v1039
        %v1043 = vld [vmem:[%s1028] sm:$0x1]
        %vm1044 = vcmp.gt.f32.partialorder %v1043, 0.5
        %v1045 = vsel %vm1044, 1, 0
        %v1046 = vlaneseq
        %v1047 = vshrl.u32 %v1046, 7
        %v1048 = vsub.s32 0, %v1047
        %v1049 = vrot.slane %v1045, %v1048
        %vm1050 = vcmp.eq.s32.totalorder %v1049, 1
        %vm1051 = vmor %vm1042, %vm1050
        %v1052 = vld [vmem:[%s1025] sm:$0x1]
        %vm1053 = vcmp.gt.f32.partialorder %v1052, 0.5
        %v1054 = vpack.c.bf16 %v1033, %v1033
        %v1055 = vpack.c.bf16 %v1031, %v1031
        %v1056 = vld [vmem:[%s9] sm:$0xff]
        %v1057 = vld [vmem:[%s9 + $0x8] sm:$0xff]
        %v1058 = vld [vmem:[%s9 + $0x10] sm:$0xff]
        %v1059 = vld [vmem:[%s9 + $0x18] sm:$0xff]
        %v1060 = vld [vmem:[%s9 + $0x20] sm:$0xff]
        %v1061 = vld [vmem:[%s9 + $0x28] sm:$0xff]
        %v1062 = vld [vmem:[%s9 + $0x30] sm:$0xff]
        %v1063 = vld [vmem:[%s9 + $0x38] sm:$0xff]
        %v1064 = vld [vmem:[%s11] sm:$0xf]
        %v1066 = vlaneseq
        %v1067 = vshrl.u32 %v1066, 7
        %v1068 = vsub.s32 0, %v1067
        %v1069 = vrot.slane %v1064, %v1068
        %v1070 = vlaneseq
        %v1071 = vshrl.u32 %v1070, 7
        %v1072 = vsub.s32 1, %v1071
        %v1073 = vrot.slane %v1064, %v1072
        %v1074 = vlaneseq
        %v1075 = vshrl.u32 %v1074, 7
        %v1076 = vsub.s32 2, %v1075
        %v1077 = vrot.slane %v1064, %v1076
        %v1078 = vlaneseq
        %v1079 = vshrl.u32 %v1078, 7
        %v1080 = vsub.s32 3, %v1079
        %v1081 = vrot.slane %v1064, %v1080
        %v1094 = vunpack.c.l.b16 %v1056
        %v1095 = vunpack.c.h.b16 %v1056
        %v1096 = vunpack.c.l.b16 %v1057
        %v1097 = vunpack.c.h.b16 %v1057
        %v1098 = vunpack.c.l.b16 %v1058
        %v1099 = vunpack.c.h.b16 %v1058
        %v1100 = vunpack.c.l.b16 %v1059
        %v1101 = vunpack.c.h.b16 %v1059
        %v1102 = vunpack.c.l.b16 %v1060
        %v1103 = vunpack.c.h.b16 %v1060
        %v1104 = vunpack.c.l.b16 %v1061
        %v1105 = vunpack.c.h.b16 %v1061
        %v1106 = vunpack.c.l.b16 %v1062
        %v1107 = vunpack.c.h.b16 %v1062
        %v1108 = vunpack.c.l.b16 %v1063
        %v1109 = vunpack.c.h.b16 %v1063
        %v1110 = vpack.c.b16 %v1098, %v1094
        %v1111 = vpack.c.b16 %v1099, %v1095
        %v1112 = vpack.c.b16 %v1100, %v1096
        %v1113 = vpack.c.b16 %v1101, %v1097
        %v1114 = vpack.c.b16 %v1106, %v1102
        %v1115 = vpack.c.b16 %v1107, %v1103
        %v1116 = vpack.c.b16 %v1108, %v1104
        %v1117 = vpack.c.b16 %v1109, %v1105
        %vm1126 = vcmask 261120
        %v1128 = vsel %vm1126, %v1054, 0
        %1130 = vmatprep.subr.bf16.mxu0 %v1111
        %1131 = vmatpush1.bf16.msra.mxu0 %v1110
        %1132 = vmatprep.subr.bf16.mxu0 %v1115
        %1133 = vmatpush1.bf16.msra.mxu0 %v1114
        %1134 = vmatprep.subr.bf16.mxu0 0
        %1135 = vmatpush1.bf16.msra.mxu0 0
        %1136 = vmatprep.subr.bf16.mxu0 0
        %1137 = vmatpush1.bf16.msra.mxu0 0
        %1138 = vmatprep.subr.bf16.mxu0 0
        %1139 = vmatpush1.bf16.msra.mxu0 0
        %1140 = vmatprep.subr.bf16.mxu0 0
        %1141 = vmatpush1.bf16.msra.mxu0 0
        %1142 = vmatprep.subr.bf16.mxu0 0
        %1143 = vmatpush1.bf16.msra.mxu0 0
        %1144 = vmatprep.subr.bf16.mxu0 0
        %1145 = vmatpush1.bf16.msra.mxu0 0
        %1146 = vmatprep.subr.bf16.mxu0 0
        %1147 = vmatpush1.bf16.msra.mxu0 0
        %1148 = vmatprep.subr.bf16.mxu0 0
        %1149 = vmatpush1.bf16.msra.mxu0 0
        %1150 = vmatprep.subr.bf16.mxu0 0
        %1151 = vmatpush1.bf16.msra.mxu0 0
        %1152 = vmatprep.subr.bf16.mxu0 0
        %1153 = vmatpush1.bf16.msra.mxu0 0
        %1154 = vmatprep.subr.bf16.mxu0 0
        %1155 = vmatpush1.bf16.msra.mxu0 0
        %1156 = vmatprep.subr.bf16.mxu0 0
        %1157 = vmatpush1.bf16.msra.mxu0 0
        %1158 = vmatprep.subr.bf16.mxu0 0
        %1159 = vmatpush1.bf16.msra.mxu0 0
        %1160 = vmatprep.subr.bf16.mxu0 0
        %1161 = vmatpush1.bf16.msra.mxu0 0
        %1162 = vmatprep.mubr.bf16.mxu0 0
        %1163 = vmatmul.mubr.bf16.gmra.mrb[0].mxu0 %v1128
        %v1164 = vpop.f32.mrb[0].mxu0
        %v1165 = vadd.f32 %v1069, %v1164
        %v1166 = vpop.f32.mrb[0].mxu0
        %v1167 = vadd.f32 %v1073, %v1166
        %v1168 = vpop.f32.mrb[0].mxu0
        %v1169 = vpop.f32.mrb[0].mxu0
        %1170 = vdwg.mxu0
        %1171 = vmatprep.subr.bf16.mxu0 %v1113
        %1172 = vmatpush1.bf16.msra.mxu0 %v1112
        %1173 = vmatprep.subr.bf16.mxu0 %v1117
        %1174 = vmatpush1.bf16.msra.mxu0 %v1116
        %1175 = vmatprep.subr.bf16.mxu0 0
        %1176 = vmatpush1.bf16.msra.mxu0 0
        %1177 = vmatprep.subr.bf16.mxu0 0
        %1178 = vmatpush1.bf16.msra.mxu0 0
        %1179 = vmatprep.subr.bf16.mxu0 0
        %1180 = vmatpush1.bf16.msra.mxu0 0
        %1181 = vmatprep.subr.bf16.mxu0 0
        %1182 = vmatpush1.bf16.msra.mxu0 0
        %1183 = vmatprep.subr.bf16.mxu0 0
        %1184 = vmatpush1.bf16.msra.mxu0 0
        %1185 = vmatprep.subr.bf16.mxu0 0
        %1186 = vmatpush1.bf16.msra.mxu0 0
        %1187 = vmatprep.subr.bf16.mxu0 0
        %1188 = vmatpush1.bf16.msra.mxu0 0
        %1189 = vmatprep.subr.bf16.mxu0 0
        %1190 = vmatpush1.bf16.msra.mxu0 0
        %1191 = vmatprep.subr.bf16.mxu0 0
        %1192 = vmatpush1.bf16.msra.mxu0 0
        %1193 = vmatprep.subr.bf16.mxu0 0
        %1194 = vmatpush1.bf16.msra.mxu0 0
        %1195 = vmatprep.subr.bf16.mxu0 0
        %1196 = vmatpush1.bf16.msra.mxu0 0
        %1197 = vmatprep.subr.bf16.mxu0 0
        %1198 = vmatpush1.bf16.msra.mxu0 0
        %1199 = vmatprep.subr.bf16.mxu0 0
        %1200 = vmatpush1.bf16.msra.mxu0 0
        %1201 = vmatprep.subr.bf16.mxu0 0
        %1202 = vmatpush1.bf16.msra.mxu0 0
        %1203 = vmatprep.mubr.bf16.mxu0 0
        %1204 = vmatmul.mubr.bf16.gmra.mrb[0].mxu0 %v1128
        %v1205 = vpop.f32.mrb[0].mxu0
        %v1206 = vadd.f32 %v1077, %v1205
        %v1207 = vpop.f32.mrb[0].mxu0
        %v1208 = vadd.f32 %v1081, %v1207
        %v1209 = vpop.f32.mrb[0].mxu0
        %v1210 = vpop.f32.mrb[0].mxu0
        %1211 = vdwg.mxu0
        %v1212 = vmul.f32 %v1165, 0.35355338
        %v1213 = vmul.f32 %v1167, 0.35355338
        %v1214 = vmul.f32 %v1206, 0.35355338
        %v1215 = vmul.f32 %v1208, 0.35355338
        %v1216 = vld [vmem:[%s13] sm:$0xff]
        %v1217 = vld [vmem:[%s13 + $0x8] sm:$0xff]
        %v1218 = vld [vmem:[%s13 + $0x10] sm:$0xff]
        %v1219 = vld [vmem:[%s13 + $0x18] sm:$0xff]
        %v1220 = vld [vmem:[%s13 + $0x20] sm:$0xff]
        %v1221 = vld [vmem:[%s13 + $0x28] sm:$0xff]
        %v1222 = vld [vmem:[%s13 + $0x30] sm:$0xff]
        %v1223 = vld [vmem:[%s13 + $0x38] sm:$0xff]
        %v1224 = vld [vmem:[%s15] sm:$0xf]
        %v1226 = vlaneseq
        %v1227 = vshrl.u32 %v1226, 7
        %v1228 = vsub.s32 0, %v1227
        %v1229 = vrot.slane %v1224, %v1228
        %v1230 = vlaneseq
        %v1231 = vshrl.u32 %v1230, 7
        %v1232 = vsub.s32 1, %v1231
        %v1233 = vrot.slane %v1224, %v1232
        %v1234 = vlaneseq
        %v1235 = vshrl.u32 %v1234, 7
        %v1236 = vsub.s32 2, %v1235
        %v1237 = vrot.slane %v1224, %v1236
        %v1238 = vlaneseq
        %v1239 = vshrl.u32 %v1238, 7
        %v1240 = vsub.s32 3, %v1239
        %v1241 = vrot.slane %v1224, %v1240
        %v1254 = vunpack.c.l.b16 %v1216
        %v1255 = vunpack.c.h.b16 %v1216
        %v1256 = vunpack.c.l.b16 %v1217
        %v1257 = vunpack.c.h.b16 %v1217
        %v1258 = vunpack.c.l.b16 %v1218
        %v1259 = vunpack.c.h.b16 %v1218
        %v1260 = vunpack.c.l.b16 %v1219
        %v1261 = vunpack.c.h.b16 %v1219
        %v1262 = vunpack.c.l.b16 %v1220
        %v1263 = vunpack.c.h.b16 %v1220
        %v1264 = vunpack.c.l.b16 %v1221
        %v1265 = vunpack.c.h.b16 %v1221
        %v1266 = vunpack.c.l.b16 %v1222
        %v1267 = vunpack.c.h.b16 %v1222
        %v1268 = vunpack.c.l.b16 %v1223
        %v1269 = vunpack.c.h.b16 %v1223
        %v1270 = vpack.c.b16 %v1258, %v1254
        %v1271 = vpack.c.b16 %v1259, %v1255
        %v1272 = vpack.c.b16 %v1260, %v1256
        %v1273 = vpack.c.b16 %v1261, %v1257
        %v1274 = vpack.c.b16 %v1266, %v1262
        %v1275 = vpack.c.b16 %v1267, %v1263
        %v1276 = vpack.c.b16 %v1268, %v1264
        %v1277 = vpack.c.b16 %v1269, %v1265
        %v1287 = vsel %vm1126, %v1055, 0
        %1289 = vmatprep.subr.bf16.mxu0 %v1271
        %1290 = vmatpush1.bf16.msra.mxu0 %v1270
        %1291 = vmatprep.subr.bf16.mxu0 %v1275
        %1292 = vmatpush1.bf16.msra.mxu0 %v1274
        %1293 = vmatprep.subr.bf16.mxu0 0
        %1294 = vmatpush1.bf16.msra.mxu0 0
        %1295 = vmatprep.subr.bf16.mxu0 0
        %1296 = vmatpush1.bf16.msra.mxu0 0
        %1297 = vmatprep.subr.bf16.mxu0 0
        %1298 = vmatpush1.bf16.msra.mxu0 0
        %1299 = vmatprep.subr.bf16.mxu0 0
        %1300 = vmatpush1.bf16.msra.mxu0 0
        %1301 = vmatprep.subr.bf16.mxu0 0
        %1302 = vmatpush1.bf16.msra.mxu0 0
        %1303 = vmatprep.subr.bf16.mxu0 0
        %1304 = vmatpush1.bf16.msra.mxu0 0
        %1305 = vmatprep.subr.bf16.mxu0 0
        %1306 = vmatpush1.bf16.msra.mxu0 0
        %1307 = vmatprep.subr.bf16.mxu0 0
        %1308 = vmatpush1.bf16.msra.mxu0 0
        %1309 = vmatprep.subr.bf16.mxu0 0
        %1310 = vmatpush1.bf16.msra.mxu0 0
        %1311 = vmatprep.subr.bf16.mxu0 0
        %1312 = vmatpush1.bf16.msra.mxu0 0
        %1313 = vmatprep.subr.bf16.mxu0 0
        %1314 = vmatpush1.bf16.msra.mxu0 0
        %1315 = vmatprep.subr.bf16.mxu0 0
        %1316 = vmatpush1.bf16.msra.mxu0 0
        %1317 = vmatprep.subr.bf16.mxu0 0
        %1318 = vmatpush1.bf16.msra.mxu0 0
        %1319 = vmatprep.subr.bf16.mxu0 0
        %1320 = vmatpush1.bf16.msra.mxu0 0
        %1321 = vmatprep.mubr.bf16.mxu0 0
        %1322 = vmatmul.mubr.bf16.gmra.mrb[0].mxu0 %v1287
        %v1323 = vpop.f32.mrb[0].mxu0
        %v1324 = vadd.f32 %v1229, %v1323
        %v1325 = vpop.f32.mrb[0].mxu0
        %v1326 = vadd.f32 %v1233, %v1325
        %v1327 = vpop.f32.mrb[0].mxu0
        %v1328 = vpop.f32.mrb[0].mxu0
        %1329 = vdwg.mxu0
        %1330 = vmatprep.subr.bf16.mxu0 %v1273
        %1331 = vmatpush1.bf16.msra.mxu0 %v1272
        %1332 = vmatprep.subr.bf16.mxu0 %v1277
        %1333 = vmatpush1.bf16.msra.mxu0 %v1276
        %1334 = vmatprep.subr.bf16.mxu0 0
        %1335 = vmatpush1.bf16.msra.mxu0 0
        %1336 = vmatprep.subr.bf16.mxu0 0
        %1337 = vmatpush1.bf16.msra.mxu0 0
        %1338 = vmatprep.subr.bf16.mxu0 0
        %1339 = vmatpush1.bf16.msra.mxu0 0
        %1340 = vmatprep.subr.bf16.mxu0 0
        %1341 = vmatpush1.bf16.msra.mxu0 0
        %1342 = vmatprep.subr.bf16.mxu0 0
        %1343 = vmatpush1.bf16.msra.mxu0 0
        %1344 = vmatprep.subr.bf16.mxu0 0
        %1345 = vmatpush1.bf16.msra.mxu0 0
        %1346 = vmatprep.subr.bf16.mxu0 0
        %1347 = vmatpush1.bf16.msra.mxu0 0
        %1348 = vmatprep.subr.bf16.mxu0 0
        %1349 = vmatpush1.bf16.msra.mxu0 0
        %1350 = vmatprep.subr.bf16.mxu0 0
        %1351 = vmatpush1.bf16.msra.mxu0 0
        %1352 = vmatprep.subr.bf16.mxu0 0
        %1353 = vmatpush1.bf16.msra.mxu0 0
        %1354 = vmatprep.subr.bf16.mxu0 0
        %1355 = vmatpush1.bf16.msra.mxu0 0
        %1356 = vmatprep.subr.bf16.mxu0 0
        %1357 = vmatpush1.bf16.msra.mxu0 0
        %1358 = vmatprep.subr.bf16.mxu0 0
        %1359 = vmatpush1.bf16.msra.mxu0 0
        %1360 = vmatprep.subr.bf16.mxu0 0
        %1361 = vmatpush1.bf16.msra.mxu0 0
        %1362 = vmatprep.mubr.bf16.mxu0 0
        %1363 = vmatmul.mubr.bf16.gmra.mrb[0].mxu0 %v1287
        %v1364 = vpop.f32.mrb[0].mxu0
        %v1365 = vadd.f32 %v1237, %v1364
        %v1366 = vpop.f32.mrb[0].mxu0
        %v1367 = vadd.f32 %v1241, %v1366
        %v1368 = vpop.f32.mrb[0].mxu0
        %v1369 = vpop.f32.mrb[0].mxu0
        %1370 = vdwg.mxu0
        %v1371 = vld [vmem:[%s17] sm:$0xff]
        %v1372 = vld [vmem:[%s17 + $0x8] sm:$0xff]
        %v1373 = vld [vmem:[%s17 + $0x10] sm:$0xff]
        %v1374 = vld [vmem:[%s17 + $0x18] sm:$0xff]
        %v1375 = vld [vmem:[%s17 + $0x20] sm:$0xff]
        %v1376 = vld [vmem:[%s17 + $0x28] sm:$0xff]
        %v1377 = vld [vmem:[%s17 + $0x30] sm:$0xff]
        %v1378 = vld [vmem:[%s17 + $0x38] sm:$0xff]
        %v1379 = vld [vmem:[%s19] sm:$0xf]
        %v1381 = vlaneseq
        %v1382 = vshrl.u32 %v1381, 7
        %v1383 = vsub.s32 0, %v1382
        %v1384 = vrot.slane %v1379, %v1383
        %v1385 = vlaneseq
        %v1386 = vshrl.u32 %v1385, 7
        %v1387 = vsub.s32 1, %v1386
        %v1388 = vrot.slane %v1379, %v1387
        %v1389 = vlaneseq
        %v1390 = vshrl.u32 %v1389, 7
        %v1391 = vsub.s32 2, %v1390
        %v1392 = vrot.slane %v1379, %v1391
        %v1393 = vlaneseq
        %v1394 = vshrl.u32 %v1393, 7
        %v1395 = vsub.s32 3, %v1394
        %v1396 = vrot.slane %v1379, %v1395
        %v1409 = vunpack.c.l.b16 %v1371
        %v1410 = vunpack.c.h.b16 %v1371
        %v1411 = vunpack.c.l.b16 %v1372
        %v1412 = vunpack.c.h.b16 %v1372
        %v1413 = vunpack.c.l.b16 %v1373
        %v1414 = vunpack.c.h.b16 %v1373
        %v1415 = vunpack.c.l.b16 %v1374
        %v1416 = vunpack.c.h.b16 %v1374
        %v1417 = vunpack.c.l.b16 %v1375
        %v1418 = vunpack.c.h.b16 %v1375
        %v1419 = vunpack.c.l.b16 %v1376
        %v1420 = vunpack.c.h.b16 %v1376
        %v1421 = vunpack.c.l.b16 %v1377
        %v1422 = vunpack.c.h.b16 %v1377
        %v1423 = vunpack.c.l.b16 %v1378
        %v1424 = vunpack.c.h.b16 %v1378
        %v1425 = vpack.c.b16 %v1413, %v1409
        %v1426 = vpack.c.b16 %v1414, %v1410
        %v1427 = vpack.c.b16 %v1415, %v1411
        %v1428 = vpack.c.b16 %v1416, %v1412
        %v1429 = vpack.c.b16 %v1421, %v1417
        %v1430 = vpack.c.b16 %v1422, %v1418
        %v1431 = vpack.c.b16 %v1423, %v1419
        %v1432 = vpack.c.b16 %v1424, %v1420
        %1441 = vmatprep.subr.bf16.mxu0 %v1426
        %1442 = vmatpush1.bf16.msra.mxu0 %v1425
        %1443 = vmatprep.subr.bf16.mxu0 %v1430
        %1444 = vmatpush1.bf16.msra.mxu0 %v1429
        %1445 = vmatprep.subr.bf16.mxu0 0
        %1446 = vmatpush1.bf16.msra.mxu0 0
        %1447 = vmatprep.subr.bf16.mxu0 0
        %1448 = vmatpush1.bf16.msra.mxu0 0
        %1449 = vmatprep.subr.bf16.mxu0 0
        %1450 = vmatpush1.bf16.msra.mxu0 0
        %1451 = vmatprep.subr.bf16.mxu0 0
        %1452 = vmatpush1.bf16.msra.mxu0 0
        %1453 = vmatprep.subr.bf16.mxu0 0
        %1454 = vmatpush1.bf16.msra.mxu0 0
        %1455 = vmatprep.subr.bf16.mxu0 0
        %1456 = vmatpush1.bf16.msra.mxu0 0
        %1457 = vmatprep.subr.bf16.mxu0 0
        %1458 = vmatpush1.bf16.msra.mxu0 0
        %1459 = vmatprep.subr.bf16.mxu0 0
        %1460 = vmatpush1.bf16.msra.mxu0 0
        %1461 = vmatprep.subr.bf16.mxu0 0
        %1462 = vmatpush1.bf16.msra.mxu0 0
        %1463 = vmatprep.subr.bf16.mxu0 0
        %1464 = vmatpush1.bf16.msra.mxu0 0
        %1465 = vmatprep.subr.bf16.mxu0 0
        %1466 = vmatpush1.bf16.msra.mxu0 0
        %1467 = vmatprep.subr.bf16.mxu0 0
        %1468 = vmatpush1.bf16.msra.mxu0 0
        %1469 = vmatprep.subr.bf16.mxu0 0
        %1470 = vmatpush1.bf16.msra.mxu0 0
        %1471 = vmatprep.subr.bf16.mxu0 0
        %1472 = vmatpush1.bf16.msra.mxu0 0
        %1473 = vmatprep.mubr.bf16.mxu0 0
        %1474 = vmatmul.mubr.bf16.gmra.mrb[0].mxu0 %v1287
        %v1475 = vpop.f32.mrb[0].mxu0
        %v1476 = vadd.f32 %v1384, %v1475
        %v1477 = vpop.f32.mrb[0].mxu0
        %v1478 = vadd.f32 %v1388, %v1477
        %v1479 = vpop.f32.mrb[0].mxu0
        %v1480 = vpop.f32.mrb[0].mxu0
        %1481 = vdwg.mxu0
        %1482 = vmatprep.subr.bf16.mxu0 %v1428
        %1483 = vmatpush1.bf16.msra.mxu0 %v1427
        %1484 = vmatprep.subr.bf16.mxu0 %v1432
        %1485 = vmatpush1.bf16.msra.mxu0 %v1431
        %1486 = vmatprep.subr.bf16.mxu0 0
        %1487 = vmatpush1.bf16.msra.mxu0 0
        %1488 = vmatprep.subr.bf16.mxu0 0
        %1489 = vmatpush1.bf16.msra.mxu0 0
        %1490 = vmatprep.subr.bf16.mxu0 0
        %1491 = vmatpush1.bf16.msra.mxu0 0
        %1492 = vmatprep.subr.bf16.mxu0 0
        %1493 = vmatpush1.bf16.msra.mxu0 0
        %1494 = vmatprep.subr.bf16.mxu0 0
        %1495 = vmatpush1.bf16.msra.mxu0 0
        %1496 = vmatprep.subr.bf16.mxu0 0
        %1497 = vmatpush1.bf16.msra.mxu0 0
        %1498 = vmatprep.subr.bf16.mxu0 0
        %1499 = vmatpush1.bf16.msra.mxu0 0
        %1500 = vmatprep.subr.bf16.mxu0 0
        %1501 = vmatpush1.bf16.msra.mxu0 0
        %1502 = vmatprep.subr.bf16.mxu0 0
        %1503 = vmatpush1.bf16.msra.mxu0 0
        %1504 = vmatprep.subr.bf16.mxu0 0
        %1505 = vmatpush1.bf16.msra.mxu0 0
        %1506 = vmatprep.subr.bf16.mxu0 0
        %1507 = vmatpush1.bf16.msra.mxu0 0
        %1508 = vmatprep.subr.bf16.mxu0 0
        %1509 = vmatpush1.bf16.msra.mxu0 0
        %1510 = vmatprep.subr.bf16.mxu0 0
        %1511 = vmatpush1.bf16.msra.mxu0 0
        %1512 = vmatprep.subr.bf16.mxu0 0
        %1513 = vmatpush1.bf16.msra.mxu0 0
        %1514 = vmatprep.mubr.bf16.mxu0 0
        %1515 = vmatmul.mubr.bf16.gmra.mrb[0].mxu0 %v1287
        %v1516 = vpop.f32.mrb[0].mxu0
        %v1517 = vadd.f32 %v1392, %v1516
        %v1518 = vpop.f32.mrb[0].mxu0
        %v1519 = vadd.f32 %v1396, %v1518
        %v1520 = vpop.f32.mrb[0].mxu0
        %v1521 = vpop.f32.mrb[0].mxu0
        %1522 = vdwg.mxu0
        %v1523 = vpack.c.bf16 %v1212, %v1212
        %v1524 = vpack.c.bf16 %v1324, %v1324
        %v1525 = vpack.c.bf16 %v1476, %v1476
        %1526 = vmatprep.subr.bf16.mxu0 0
        %1527 = vmatpush1.bf16.xpose.msra.mxu0 %v1524
        %1528 = vmatprep.subr.bf16.mxu0 0
        %1529 = vmatpush1.bf16.xpose.msra.mxu0 0
        %1530 = vmatprep.subr.bf16.mxu0 0
        %1531 = vmatpush1.bf16.xpose.msra.mxu0 0
        %1532 = vmatprep.subr.bf16.mxu0 0
        %1533 = vmatpush1.bf16.xpose.msra.mxu0 0
        %1534 = vmatprep.subr.bf16.mxu0 0
        %1535 = vmatpush1.bf16.xpose.msra.mxu0 0
        %1536 = vmatprep.subr.bf16.mxu0 0
        %1537 = vmatpush1.bf16.xpose.msra.mxu0 0
        %1538 = vmatprep.subr.bf16.mxu0 0
        %1539 = vmatpush1.bf16.xpose.msra.mxu0 0
        %1540 = vmatprep.subr.bf16.mxu0 0
        %1541 = vmatpush1.bf16.xpose.msra.mxu0 0
        %1542 = vmatprep.subr.bf16.mxu0 0
        %1543 = vmatpush1.bf16.xpose.msra.mxu0 0
        %1544 = vmatprep.subr.bf16.mxu0 0
        %1545 = vmatpush1.bf16.xpose.msra.mxu0 0
        %1546 = vmatprep.subr.bf16.mxu0 0
        %1547 = vmatpush1.bf16.xpose.msra.mxu0 0
        %1548 = vmatprep.subr.bf16.mxu0 0
        %1549 = vmatpush1.bf16.xpose.msra.mxu0 0
        %1550 = vmatprep.subr.bf16.mxu0 0
        %1551 = vmatpush1.bf16.xpose.msra.mxu0 0
        %1552 = vmatprep.subr.bf16.mxu0 0
        %1553 = vmatpush1.bf16.xpose.msra.mxu0 0
        %1554 = vmatprep.subr.bf16.mxu0 0
        %1555 = vmatpush1.bf16.xpose.msra.mxu0 0
        %1556 = vmatprep.subr.bf16.mxu0 0
        %1557 = vmatpush1.bf16.xpose.msra.mxu0 0
        %1558 = vmatprep.mubr.bf16.mxu0 0
        %1559 = vmatmul.mubr.bf16.gmra.mrb[0].mxu0 %v1523
        %v1560 = vpop.f32.mrb[0].mxu0
        %v1561 = vadd.f32 0.0, %v1560
        %v1562 = vpop.f32.mrb[0].mxu0
        %v1563 = vpop.f32.mrb[0].mxu0
        %v1564 = vpop.f32.mrb[0].mxu0
        %1565 = vdwg.mxu0
        %v1566 = vsel %vm1051, -1e+18, %v1561
        %vm1567 = vcmask 64512
        %v1568 = vsel %vm1567, %v1566, -inf
        %1569 = vmax.xlane.f32.xlu0 %v1568
        %v1570 = vpop.xlane.xlu0 %1569
        %v1571 = vsub.f32 %v1566, %v1570
        %v1572 = vmul.f32 %v1571, 1.442695
        %v1573 = vpow.pop %v1572
        %v1574 = vsel %vm1567, %v1573, 0.0
        %1575 = vadd.xlane.f32.xlu0 %v1574
        %v1576 = vpop.xlane.xlu0 %1575
        %v1577 = vrcp.pop %v1576
        %v1578 = vmul.f32 %v1573, %v1577
        %v1579 = vpack.c.bf16 %v1578, %v1578
        %v1581 = vsel %vm1567, %v1579, 0
        %vm1583 = vcmask 1043456
        %v1585 = vsel %vm1583, %v1525, 0
        %1587 = vmatprep.subr.bf16.mxu0 0
        %1588 = vmatpush1.bf16.msra.mxu0 %v1585
        %1589 = vmatprep.subr.bf16.mxu0 0
        %1590 = vmatpush1.bf16.msra.mxu0 0
        %1591 = vmatprep.subr.bf16.mxu0 0
        %1592 = vmatpush1.bf16.msra.mxu0 0
        %1593 = vmatprep.subr.bf16.mxu0 0
        %1594 = vmatpush1.bf16.msra.mxu0 0
        %1595 = vmatprep.subr.bf16.mxu0 0
        %1596 = vmatpush1.bf16.msra.mxu0 0
        %1597 = vmatprep.subr.bf16.mxu0 0
        %1598 = vmatpush1.bf16.msra.mxu0 0
        %1599 = vmatprep.subr.bf16.mxu0 0
        %1600 = vmatpush1.bf16.msra.mxu0 0
        %1601 = vmatprep.subr.bf16.mxu0 0
        %1602 = vmatpush1.bf16.msra.mxu0 0
        %1603 = vmatprep.subr.bf16.mxu0 0
        %1604 = vmatpush1.bf16.msra.mxu0 0
        %1605 = vmatprep.subr.bf16.mxu0 0
        %1606 = vmatpush1.bf16.msra.mxu0 0
        %1607 = vmatprep.subr.bf16.mxu0 0
        %1608 = vmatpush1.bf16.msra.mxu0 0
        %1609 = vmatprep.subr.bf16.mxu0 0
        %1610 = vmatpush1.bf16.msra.mxu0 0
        %1611 = vmatprep.subr.bf16.mxu0 0
        %1612 = vmatpush1.bf16.msra.mxu0 0
        %1613 = vmatprep.subr.bf16.mxu0 0
        %1614 = vmatpush1.bf16.msra.mxu0 0
        %1615 = vmatprep.subr.bf16.mxu0 0
        %1616 = vmatpush1.bf16.msra.mxu0 0
        %1617 = vmatprep.subr.bf16.mxu0 0
        %1618 = vmatpush1.bf16.msra.mxu0 0
        %1619 = vmatprep.mubr.bf16.mxu0 0
        %1620 = vmatmul.mubr.bf16.gmra.mrb[0].mxu0 %v1581
        %v1621 = vpop.f32.mrb[0].mxu0
        %v1622 = vadd.f32 0.0, %v1621
        %v1623 = vpop.f32.mrb[0].mxu0
        %v1624 = vpop.f32.mrb[0].mxu0
        %v1625 = vpop.f32.mrb[0].mxu0
        %1626 = vdwg.mxu0
        %1627 = vst [vmem:[#allocation2] sm:$0xff] %v1622
        %v1628 = vpack.c.bf16 %v1213, %v1213
        %v1629 = vpack.c.bf16 %v1326, %v1326
        %v1630 = vpack.c.bf16 %v1478, %v1478
        %1631 = vmatprep.subr.bf16.mxu0 0
        %1632 = vmatpush1.bf16.xpose.msra.mxu0 %v1629
        %1633 = vmatprep.subr.bf16.mxu0 0
        %1634 = vmatpush1.bf16.xpose.msra.mxu0 0
        %1635 = vmatprep.subr.bf16.mxu0 0
        %1636 = vmatpush1.bf16.xpose.msra.mxu0 0
        %1637 = vmatprep.subr.bf16.mxu0 0
        %1638 = vmatpush1.bf16.xpose.msra.mxu0 0
        %1639 = vmatprep.subr.bf16.mxu0 0
        %1640 = vmatpush1.bf16.xpose.msra.mxu0 0
        %1641 = vmatprep.subr.bf16.mxu0 0
        %1642 = vmatpush1.bf16.xpose.msra.mxu0 0
        %1643 = vmatprep.subr.bf16.mxu0 0
        %1644 = vmatpush1.bf16.xpose.msra.mxu0 0
        %1645 = vmatprep.subr.bf16.mxu0 0
        %1646 = vmatpush1.bf16.xpose.msra.mxu0 0
        %1647 = vmatprep.subr.bf16.mxu0 0
        %1648 = vmatpush1.bf16.xpose.msra.mxu0 0
        %1649 = vmatprep.subr.bf16.mxu0 0
        %1650 = vmatpush1.bf16.xpose.msra.mxu0 0
        %1651 = vmatprep.subr.bf16.mxu0 0
        %1652 = vmatpush1.bf16.xpose.msra.mxu0 0
        %1653 = vmatprep.subr.bf16.mxu0 0
        %1654 = vmatpush1.bf16.xpose.msra.mxu0 0
        %1655 = vmatprep.subr.bf16.mxu0 0
        %1656 = vmatpush1.bf16.xpose.msra.mxu0 0
        %1657 = vmatprep.subr.bf16.mxu0 0
        %1658 = vmatpush1.bf16.xpose.msra.mxu0 0
        %1659 = vmatprep.subr.bf16.mxu0 0
        %1660 = vmatpush1.bf16.xpose.msra.mxu0 0
        %1661 = vmatprep.subr.bf16.mxu0 0
        %1662 = vmatpush1.bf16.xpose.msra.mxu0 0
        %1663 = vmatprep.mubr.bf16.mxu0 0
        %1664 = vmatmul.mubr.bf16.gmra.mrb[0].mxu0 %v1628
        %v1665 = vpop.f32.mrb[0].mxu0
        %v1666 = vadd.f32 0.0, %v1665
        %v1667 = vpop.f32.mrb[0].mxu0
        %v1668 = vpop.f32.mrb[0].mxu0
        %v1669 = vpop.f32.mrb[0].mxu0
        %1670 = vdwg.mxu0
        %v1671 = vsel %vm1051, -1e+18, %v1666
        %v1672 = vsel %vm1567, %v1671, -inf
        %1673 = vmax.xlane.f32.xlu0 %v1672
        %v1674 = vpop.xlane.xlu0 %1673
        %v1675 = vsub.f32 %v1671, %v1674
        %v1676 = vmul.f32 %v1675, 1.442695
        %v1677 = vpow.pop %v1676
        %v1678 = vsel %vm1567, %v1677, 0.0
        %1679 = vadd.xlane.f32.xlu0 %v1678
        %v1680 = vpop.xlane.xlu0 %1679
        %v1681 = vrcp.pop %v1680
        %v1682 = vmul.f32 %v1677, %v1681
        %v1683 = vpack.c.bf16 %v1682, %v1682
        %v1685 = vsel %vm1567, %v1683, 0
        %v1688 = vsel %vm1583, %v1630, 0
        %1690 = vmatprep.subr.bf16.mxu0 0
        %1691 = vmatpush1.bf16.msra.mxu0 %v1688
        %1692 = vmatprep.subr.bf16.mxu0 0
        %1693 = vmatpush1.bf16.msra.mxu0 0
        %1694 = vmatprep.subr.bf16.mxu0 0
        %1695 = vmatpush1.bf16.msra.mxu0 0
        %1696 = vmatprep.subr.bf16.mxu0 0
        %1697 = vmatpush1.bf16.msra.mxu0 0
        %1698 = vmatprep.subr.bf16.mxu0 0
        %1699 = vmatpush1.bf16.msra.mxu0 0
        %1700 = vmatprep.subr.bf16.mxu0 0
        %1701 = vmatpush1.bf16.msra.mxu0 0
        %1702 = vmatprep.subr.bf16.mxu0 0
        %1703 = vmatpush1.bf16.msra.mxu0 0
        %1704 = vmatprep.subr.bf16.mxu0 0
        %1705 = vmatpush1.bf16.msra.mxu0 0
        %1706 = vmatprep.subr.bf16.mxu0 0
        %1707 = vmatpush1.bf16.msra.mxu0 0
        %1708 = vmatprep.subr.bf16.mxu0 0
        %1709 = vmatpush1.bf16.msra.mxu0 0
        %1710 = vmatprep.subr.bf16.mxu0 0
        %1711 = vmatpush1.bf16.msra.mxu0 0
        %1712 = vmatprep.subr.bf16.mxu0 0
        %1713 = vmatpush1.bf16.msra.mxu0 0
        %1714 = vmatprep.subr.bf16.mxu0 0
        %1715 = vmatpush1.bf16.msra.mxu0 0
        %1716 = vmatprep.subr.bf16.mxu0 0
        %1717 = vmatpush1.bf16.msra.mxu0 0
        %1718 = vmatprep.subr.bf16.mxu0 0
        %1719 = vmatpush1.bf16.msra.mxu0 0
        %1720 = vmatprep.subr.bf16.mxu0 0
        %1721 = vmatpush1.bf16.msra.mxu0 0
        %1722 = vmatprep.mubr.bf16.mxu0 0
        %1723 = vmatmul.mubr.bf16.gmra.mrb[0].mxu0 %v1685
        %v1724 = vpop.f32.mrb[0].mxu0
        %v1725 = vadd.f32 0.0, %v1724
        %v1726 = vpop.f32.mrb[0].mxu0
        %v1727 = vpop.f32.mrb[0].mxu0
        %v1728 = vpop.f32.mrb[0].mxu0
        %1729 = vdwg.mxu0
        %1730 = vst [vmem:[#allocation2 + $0x8] sm:$0xff] %v1725
        %v1731 = vpack.c.bf16 %v1214, %v1214
        %v1732 = vpack.c.bf16 %v1365, %v1365
        %v1733 = vpack.c.bf16 %v1517, %v1517
        %1734 = vmatprep.subr.bf16.mxu0 0
        %1735 = vmatpush1.bf16.xpose.msra.mxu0 %v1732
        %1736 = vmatprep.subr.bf16.mxu0 0
        %1737 = vmatpush1.bf16.xpose.msra.mxu0 0
        %1738 = vmatprep.subr.bf16.mxu0 0
        %1739 = vmatpush1.bf16.xpose.msra.mxu0 0
        %1740 = vmatprep.subr.bf16.mxu0 0
        %1741 = vmatpush1.bf16.xpose.msra.mxu0 0
        %1742 = vmatprep.subr.bf16.mxu0 0
        %1743 = vmatpush1.bf16.xpose.msra.mxu0 0
        %1744 = vmatprep.subr.bf16.mxu0 0
        %1745 = vmatpush1.bf16.xpose.msra.mxu0 0
        %1746 = vmatprep.subr.bf16.mxu0 0
        %1747 = vmatpush1.bf16.xpose.msra.mxu0 0
        %1748 = vmatprep.subr.bf16.mxu0 0
        %1749 = vmatpush1.bf16.xpose.msra.mxu0 0
        %1750 = vmatprep.subr.bf16.mxu0 0
        %1751 = vmatpush1.bf16.xpose.msra.mxu0 0
        %1752 = vmatprep.subr.bf16.mxu0 0
        %1753 = vmatpush1.bf16.xpose.msra.mxu0 0
        %1754 = vmatprep.subr.bf16.mxu0 0
        %1755 = vmatpush1.bf16.xpose.msra.mxu0 0
        %1756 = vmatprep.subr.bf16.mxu0 0
        %1757 = vmatpush1.bf16.xpose.msra.mxu0 0
        %1758 = vmatprep.subr.bf16.mxu0 0
        %1759 = vmatpush1.bf16.xpose.msra.mxu0 0
        %1760 = vmatprep.subr.bf16.mxu0 0
        %1761 = vmatpush1.bf16.xpose.msra.mxu0 0
        %1762 = vmatprep.subr.bf16.mxu0 0
        %1763 = vmatpush1.bf16.xpose.msra.mxu0 0
        %1764 = vmatprep.subr.bf16.mxu0 0
        %1765 = vmatpush1.bf16.xpose.msra.mxu0 0
        %1766 = vmatprep.mubr.bf16.mxu0 0
        %1767 = vmatmul.mubr.bf16.gmra.mrb[0].mxu0 %v1731
        %v1768 = vpop.f32.mrb[0].mxu0
        %v1769 = vadd.f32 0.0, %v1768
        %v1770 = vpop.f32.mrb[0].mxu0
        %v1771 = vpop.f32.mrb[0].mxu0
        %v1772 = vpop.f32.mrb[0].mxu0
        %1773 = vdwg.mxu0
        %v1774 = vsel %vm1051, -1e+18, %v1769
        %v1775 = vsel %vm1567, %v1774, -inf
        %1776 = vmax.xlane.f32.xlu0 %v1775
        %v1777 = vpop.xlane.xlu0 %1776
        %v1778 = vsub.f32 %v1774, %v1777
        %v1779 = vmul.f32 %v1778, 1.442695
        %v1780 = vpow.pop %v1779
        %v1781 = vsel %vm1567, %v1780, 0.0
        %1782 = vadd.xlane.f32.xlu0 %v1781
        %v1783 = vpop.xlane.xlu0 %1782
        %v1784 = vrcp.pop %v1783
        %v1785 = vmul.f32 %v1780, %v1784
        %v1786 = vpack.c.bf16 %v1785, %v1785
        %v1788 = vsel %vm1567, %v1786, 0
        %v1791 = vsel %vm1583, %v1733, 0
        %1793 = vmatprep.subr.bf16.mxu0 0
        %1794 = vmatpush1.bf16.msra.mxu0 %v1791
        %1795 = vmatprep.subr.bf16.mxu0 0
        %1796 = vmatpush1.bf16.msra.mxu0 0
        %1797 = vmatprep.subr.bf16.mxu0 0
        %1798 = vmatpush1.bf16.msra.mxu0 0
        %1799 = vmatprep.subr.bf16.mxu0 0
        %1800 = vmatpush1.bf16.msra.mxu0 0
        %1801 = vmatprep.subr.bf16.mxu0 0
        %1802 = vmatpush1.bf16.msra.mxu0 0
        %1803 = vmatprep.subr.bf16.mxu0 0
        %1804 = vmatpush1.bf16.msra.mxu0 0
        %1805 = vmatprep.subr.bf16.mxu0 0
        %1806 = vmatpush1.bf16.msra.mxu0 0
        %1807 = vmatprep.subr.bf16.mxu0 0
        %1808 = vmatpush1.bf16.msra.mxu0 0
        %1809 = vmatprep.subr.bf16.mxu0 0
        %1810 = vmatpush1.bf16.msra.mxu0 0
        %1811 = vmatprep.subr.bf16.mxu0 0
        %1812 = vmatpush1.bf16.msra.mxu0 0
        %1813 = vmatprep.subr.bf16.mxu0 0
        %1814 = vmatpush1.bf16.msra.mxu0 0
        %1815 = vmatprep.subr.bf16.mxu0 0
        %1816 = vmatpush1.bf16.msra.mxu0 0
        %1817 = vmatprep.subr.bf16.mxu0 0
        %1818 = vmatpush1.bf16.msra.mxu0 0
        %1819 = vmatprep.subr.bf16.mxu0 0
        %1820 = vmatpush1.bf16.msra.mxu0 0
        %1821 = vmatprep.subr.bf16.mxu0 0
        %1822 = vmatpush1.bf16.msra.mxu0 0
        %1823 = vmatprep.subr.bf16.mxu0 0
        %1824 = vmatpush1.bf16.msra.mxu0 0
        %1825 = vmatprep.mubr.bf16.mxu0 0
        %1826 = vmatmul.mubr.bf16.gmra.mrb[0].mxu0 %v1788
        %v1827 = vpop.f32.mrb[0].mxu0
        %v1828 = vadd.f32 0.0, %v1827
        %v1829 = vpop.f32.mrb[0].mxu0
        %v1830 = vpop.f32.mrb[0].mxu0
        %v1831 = vpop.f32.mrb[0].mxu0
        %1832 = vdwg.mxu0
        %1833 = vst [vmem:[#allocation2 + $0x10] sm:$0xff] %v1828
        %v1834 = vpack.c.bf16 %v1215, %v1215
        %v1835 = vpack.c.bf16 %v1367, %v1367
        %v1836 = vpack.c.bf16 %v1519, %v1519
        %1837 = vmatprep.subr.bf16.mxu0 0
        %1838 = vmatpush1.bf16.xpose.msra.mxu0 %v1835
        %1839 = vmatprep.subr.bf16.mxu0 0
        %1840 = vmatpush1.bf16.xpose.msra.mxu0 0
        %1841 = vmatprep.subr.bf16.mxu0 0
        %1842 = vmatpush1.bf16.xpose.msra.mxu0 0
        %1843 = vmatprep.subr.bf16.mxu0 0
        %1844 = vmatpush1.bf16.xpose.msra.mxu0 0
        %1845 = vmatprep.subr.bf16.mxu0 0
        %1846 = vmatpush1.bf16.xpose.msra.mxu0 0
        %1847 = vmatprep.subr.bf16.mxu0 0
        %1848 = vmatpush1.bf16.xpose.msra.mxu0 0
        %1849 = vmatprep.subr.bf16.mxu0 0
        %1850 = vmatpush1.bf16.xpose.msra.mxu0 0
        %1851 = vmatprep.subr.bf16.mxu0 0
        %1852 = vmatpush1.bf16.xpose.msra.mxu0 0
        %1853 = vmatprep.subr.bf16.mxu0 0
        %1854 = vmatpush1.bf16.xpose.msra.mxu0 0
        %1855 = vmatprep.subr.bf16.mxu0 0
        %1856 = vmatpush1.bf16.xpose.msra.mxu0 0
        %1857 = vmatprep.subr.bf16.mxu0 0
        %1858 = vmatpush1.bf16.xpose.msra.mxu0 0
        %1859 = vmatprep.subr.bf16.mxu0 0
        %1860 = vmatpush1.bf16.xpose.msra.mxu0 0
        %1861 = vmatprep.subr.bf16.mxu0 0
        %1862 = vmatpush1.bf16.xpose.msra.mxu0 0
        %1863 = vmatprep.subr.bf16.mxu0 0
        %1864 = vmatpush1.bf16.xpose.msra.mxu0 0
        %1865 = vmatprep.subr.bf16.mxu0 0
        %1866 = vmatpush1.bf16.xpose.msra.mxu0 0
        %1867 = vmatprep.subr.bf16.mxu0 0
        %1868 = vmatpush1.bf16.xpose.msra.mxu0 0
        %1869 = vmatprep.mubr.bf16.mxu0 0
        %1870 = vmatmul.mubr.bf16.gmra.mrb[0].mxu0 %v1834
        %v1871 = vpop.f32.mrb[0].mxu0
        %v1872 = vadd.f32 0.0, %v1871
        %v1873 = vpop.f32.mrb[0].mxu0
        %v1874 = vpop.f32.mrb[0].mxu0
        %v1875 = vpop.f32.mrb[0].mxu0
        %1876 = vdwg.mxu0
        %v1877 = vsel %vm1051, -1e+18, %v1872
        %v1878 = vsel %vm1567, %v1877, -inf
        %1879 = vmax.xlane.f32.xlu0 %v1878
        %v1880 = vpop.xlane.xlu0 %1879
        %v1881 = vsub.f32 %v1877, %v1880
        %v1882 = vmul.f32 %v1881, 1.442695
        %v1883 = vpow.pop %v1882
        %v1884 = vsel %vm1567, %v1883, 0.0
        %1885 = vadd.xlane.f32.xlu0 %v1884
        %v1886 = vpop.xlane.xlu0 %1885
        %v1887 = vrcp.pop %v1886
        %v1888 = vmul.f32 %v1883, %v1887
        %v1889 = vpack.c.bf16 %v1888, %v1888
        %v1891 = vsel %vm1567, %v1889, 0
        %v1894 = vsel %vm1583, %v1836, 0
        %1896 = vmatprep.subr.bf16.mxu0 0
        %1897 = vmatpush1.bf16.msra.mxu0 %v1894
        %1898 = vmatprep.subr.bf16.mxu0 0
        %1899 = vmatpush1.bf16.msra.mxu0 0
        %1900 = vmatprep.subr.bf16.mxu0 0
        %1901 = vmatpush1.bf16.msra.mxu0 0
        %1902 = vmatprep.subr.bf16.mxu0 0
        %1903 = vmatpush1.bf16.msra.mxu0 0
        %1904 = vmatprep.subr.bf16.mxu0 0
        %1905 = vmatpush1.bf16.msra.mxu0 0
        %1906 = vmatprep.subr.bf16.mxu0 0
        %1907 = vmatpush1.bf16.msra.mxu0 0
        %1908 = vmatprep.subr.bf16.mxu0 0
        %1909 = vmatpush1.bf16.msra.mxu0 0
        %1910 = vmatprep.subr.bf16.mxu0 0
        %1911 = vmatpush1.bf16.msra.mxu0 0
        %1912 = vmatprep.subr.bf16.mxu0 0
        %1913 = vmatpush1.bf16.msra.mxu0 0
        %1914 = vmatprep.subr.bf16.mxu0 0
        %1915 = vmatpush1.bf16.msra.mxu0 0
        %1916 = vmatprep.subr.bf16.mxu0 0
        %1917 = vmatpush1.bf16.msra.mxu0 0
        %1918 = vmatprep.subr.bf16.mxu0 0
        %1919 = vmatpush1.bf16.msra.mxu0 0
        %1920 = vmatprep.subr.bf16.mxu0 0
        %1921 = vmatpush1.bf16.msra.mxu0 0
        %1922 = vmatprep.subr.bf16.mxu0 0
        %1923 = vmatpush1.bf16.msra.mxu0 0
        %1924 = vmatprep.subr.bf16.mxu0 0
        %1925 = vmatpush1.bf16.msra.mxu0 0
        %1926 = vmatprep.subr.bf16.mxu0 0
        %1927 = vmatpush1.bf16.msra.mxu0 0
        %1928 = vmatprep.mubr.bf16.mxu0 0
        %1929 = vmatmul.mubr.bf16.gmra.mrb[0].mxu0 %v1891
        %v1930 = vpop.f32.mrb[0].mxu0
        %v1931 = vadd.f32 0.0, %v1930
        %v1932 = vpop.f32.mrb[0].mxu0
        %v1933 = vpop.f32.mrb[0].mxu0
        %v1934 = vpop.f32.mrb[0].mxu0
        %1935 = vdwg.mxu0
        %1936 = vst [vmem:[#allocation2 + $0x18] sm:$0xff] %v1931
        %v1937 = vld [vmem:[#allocation2] sm:$0xff]
        %v1938 = vld [vmem:[#allocation2 + $0x8] sm:$0xff]
        %v1939 = vld [vmem:[#allocation2 + $0x10] sm:$0xff]
        %v1940 = vld [vmem:[#allocation2 + $0x18] sm:$0xff]
        %v1941 = vpack.c.bf16 %v1937, %v1937
        %v1942 = vpack.c.bf16 %v1938, %v1938
        %v1943 = vpack.c.bf16 %v1939, %v1939
        %v1944 = vpack.c.bf16 %v1940, %v1940
        %v1945 = vld [vmem:[%s21] sm:$0xf]
        %v1946 = vld [vmem:[%s21 + $0x4] sm:$0xf]
        %v1947 = vld [vmem:[%s21 + $0x8] sm:$0xf]
        %v1948 = vld [vmem:[%s21 + $0xc] sm:$0xf]
        %v1949 = vld [vmem:[%s21 + $0x10] sm:$0xf]
        %v1950 = vld [vmem:[%s21 + $0x14] sm:$0xf]
        %v1951 = vld [vmem:[%s21 + $0x18] sm:$0xf]
        %v1952 = vld [vmem:[%s21 + $0x1c] sm:$0xf]
        %v1953 = vld [vmem:[%s21 + $0x20] sm:$0xf]
        %v1954 = vld [vmem:[%s21 + $0x24] sm:$0xf]
        %v1955 = vld [vmem:[%s21 + $0x28] sm:$0xf]
        %v1956 = vld [vmem:[%s21 + $0x2c] sm:$0xf]
        %v1957 = vld [vmem:[%s21 + $0x30] sm:$0xf]
        %v1958 = vld [vmem:[%s21 + $0x34] sm:$0xf]
        %v1959 = vld [vmem:[%s21 + $0x38] sm:$0xf]
        %v1960 = vld [vmem:[%s21 + $0x3c] sm:$0xf]
        %v1961 = vld [vmem:[%s21 + $0x40] sm:$0xf]
        %v1962 = vld [vmem:[%s21 + $0x44] sm:$0xf]
        %v1963 = vld [vmem:[%s21 + $0x48] sm:$0xf]
        %v1964 = vld [vmem:[%s21 + $0x4c] sm:$0xf]
        %v1965 = vld [vmem:[%s21 + $0x50] sm:$0xf]
        %v1966 = vld [vmem:[%s21 + $0x54] sm:$0xf]
        %v1967 = vld [vmem:[%s21 + $0x58] sm:$0xf]
        %v1968 = vld [vmem:[%s21 + $0x5c] sm:$0xf]
        %v1969 = vld [vmem:[%s21 + $0x60] sm:$0xf]
        %v1970 = vld [vmem:[%s21 + $0x64] sm:$0xf]
        %v1971 = vld [vmem:[%s21 + $0x68] sm:$0xf]
        %v1972 = vld [vmem:[%s21 + $0x6c] sm:$0xf]
        %v1973 = vld [vmem:[%s21 + $0x70] sm:$0xf]
        %v1974 = vld [vmem:[%s21 + $0x74] sm:$0xf]
        %v1975 = vld [vmem:[%s21 + $0x78] sm:$0xf]
        %v1976 = vld [vmem:[%s21 + $0x7c] sm:$0xf]
        %v1977 = vld [vmem:[%s21 + $0x80] sm:$0xf]
        %v1978 = vld [vmem:[%s21 + $0x84] sm:$0xf]
        %v1979 = vld [vmem:[%s21 + $0x88] sm:$0xf]
        %v1980 = vld [vmem:[%s21 + $0x8c] sm:$0xf]
        %v1981 = vld [vmem:[%s21 + $0x90] sm:$0xf]
        %v1982 = vld [vmem:[%s21 + $0x94] sm:$0xf]
        %v1983 = vld [vmem:[%s21 + $0x98] sm:$0xf]
        %v1984 = vld [vmem:[%s21 + $0x9c] sm:$0xf]
        %v1985 = vld [vmem:[%s21 + $0xa0] sm:$0xf]
        %v1986 = vld [vmem:[%s21 + $0xa4] sm:$0xf]
        %v1987 = vld [vmem:[%s21 + $0xa8] sm:$0xf]
        %v1988 = vld [vmem:[%s21 + $0xac] sm:$0xf]
        %v1989 = vld [vmem:[%s21 + $0xb0] sm:$0xf]
        %v1990 = vld [vmem:[%s21 + $0xb4] sm:$0xf]
        %v1991 = vld [vmem:[%s21 + $0xb8] sm:$0xf]
        %v1992 = vld [vmem:[%s21 + $0xbc] sm:$0xf]
        %v1993 = vld [vmem:[%s21 + $0xc0] sm:$0xf]
        %v1994 = vld [vmem:[%s21 + $0xc4] sm:$0xf]
        %v1995 = vld [vmem:[%s21 + $0xc8] sm:$0xf]
        %v1996 = vld [vmem:[%s21 + $0xcc] sm:$0xf]
        %v1997 = vld [vmem:[%s21 + $0xd0] sm:$0xf]
        %v1998 = vld [vmem:[%s21 + $0xd4] sm:$0xf]
        %v1999 = vld [vmem:[%s21 + $0xd8] sm:$0xf]
        %v2000 = vld [vmem:[%s21 + $0xdc] sm:$0xf]
        %v2001 = vld [vmem:[%s21 + $0xe0] sm:$0xf]
        %v2002 = vld [vmem:[%s21 + $0xe4] sm:$0xf]
        %v2003 = vld [vmem:[%s21 + $0xe8] sm:$0xf]
        %v2004 = vld [vmem:[%s21 + $0xec] sm:$0xf]
        %v2005 = vld [vmem:[%s21 + $0xf0] sm:$0xf]
        %v2006 = vld [vmem:[%s21 + $0xf4] sm:$0xf]
        %v2007 = vld [vmem:[%s21 + $0xf8] sm:$0xf]
        %v2008 = vld [vmem:[%s21 + $0xfc] sm:$0xf]
        %v2009 = vld [vmem:[%s23] sm:$0x1]
        %v2011 = vlaneseq
        %v2012 = vshrl.u32 %v2011, 7
        %v2013 = vsub.s32 0, %v2012
        %v2014 = vrot.slane %v2009, %v2013
        %v2080 = vunpack.c.l.b16 %v1945
        %v2081 = vunpack.c.l.b16 %v1946
        %v2082 = vunpack.c.l.b16 %v1947
        %v2083 = vunpack.c.l.b16 %v1948
        %v2084 = vunpack.c.l.b16 %v1949
        %v2085 = vunpack.c.l.b16 %v1950
        %v2086 = vunpack.c.l.b16 %v1951
        %v2087 = vunpack.c.l.b16 %v1952
        %v2088 = vunpack.c.l.b16 %v1953
        %v2089 = vunpack.c.l.b16 %v1954
        %v2090 = vunpack.c.l.b16 %v1955
        %v2091 = vunpack.c.l.b16 %v1956
        %v2092 = vunpack.c.l.b16 %v1957
        %v2093 = vunpack.c.l.b16 %v1958
        %v2094 = vunpack.c.l.b16 %v1959
        %v2095 = vunpack.c.l.b16 %v1960
        %v2096 = vunpack.c.l.b16 %v1961
        %v2097 = vunpack.c.l.b16 %v1962
        %v2098 = vunpack.c.l.b16 %v1963
        %v2099 = vunpack.c.l.b16 %v1964
        %v2100 = vunpack.c.l.b16 %v1965
        %v2101 = vunpack.c.l.b16 %v1966
        %v2102 = vunpack.c.l.b16 %v1967
        %v2103 = vunpack.c.l.b16 %v1968
        %v2104 = vunpack.c.l.b16 %v1969
        %v2105 = vunpack.c.l.b16 %v1970
        %v2106 = vunpack.c.l.b16 %v1971
        %v2107 = vunpack.c.l.b16 %v1972
        %v2108 = vunpack.c.l.b16 %v1973
        %v2109 = vunpack.c.l.b16 %v1974
        %v2110 = vunpack.c.l.b16 %v1975
        %v2111 = vunpack.c.l.b16 %v1976
        %v2112 = vunpack.c.l.b16 %v1977
        %v2113 = vunpack.c.l.b16 %v1978
        %v2114 = vunpack.c.l.b16 %v1979
        %v2115 = vunpack.c.l.b16 %v1980
        %v2116 = vunpack.c.l.b16 %v1981
        %v2117 = vunpack.c.l.b16 %v1982
        %v2118 = vunpack.c.l.b16 %v1983
        %v2119 = vunpack.c.l.b16 %v1984
        %v2120 = vunpack.c.l.b16 %v1985
        %v2121 = vunpack.c.l.b16 %v1986
        %v2122 = vunpack.c.l.b16 %v1987
        %v2123 = vunpack.c.l.b16 %v1988
        %v2124 = vunpack.c.l.b16 %v1989
        %v2125 = vunpack.c.l.b16 %v1990
        %v2126 = vunpack.c.l.b16 %v1991
        %v2127 = vunpack.c.l.b16 %v1992
        %v2128 = vunpack.c.l.b16 %v1993
        %v2129 = vunpack.c.l.b16 %v1994
        %v2130 = vunpack.c.l.b16 %v1995
        %v2131 = vunpack.c.l.b16 %v1996
        %v2132 = vunpack.c.l.b16 %v1997
        %v2133 = vunpack.c.l.b16 %v1998
        %v2134 = vunpack.c.l.b16 %v1999
        %v2135 = vunpack.c.l.b16 %v2000
        %v2136 = vunpack.c.l.b16 %v2001
        %v2137 = vunpack.c.l.b16 %v2002
        %v2138 = vunpack.c.l.b16 %v2003
        %v2139 = vunpack.c.l.b16 %v2004
        %v2140 = vunpack.c.l.b16 %v2005
        %v2141 = vunpack.c.l.b16 %v2006
        %v2142 = vunpack.c.l.b16 %v2007
        %v2143 = vunpack.c.l.b16 %v2008
        %v2144 = vpack.c.b16 %v2081, %v2080
        %v2145 = vpack.c.b16 %v2083, %v2082
        %v2146 = vpack.c.b16 %v2085, %v2084
        %v2147 = vpack.c.b16 %v2087, %v2086
        %v2148 = vpack.c.b16 %v2089, %v2088
        %v2149 = vpack.c.b16 %v2091, %v2090
        %v2150 = vpack.c.b16 %v2093, %v2092
        %v2151 = vpack.c.b16 %v2095, %v2094
        %v2152 = vpack.c.b16 %v2097, %v2096
        %v2153 = vpack.c.b16 %v2099, %v2098
        %v2154 = vpack.c.b16 %v2101, %v2100
        %v2155 = vpack.c.b16 %v2103, %v2102
        %v2156 = vpack.c.b16 %v2105, %v2104
        %v2157 = vpack.c.b16 %v2107, %v2106
        %v2158 = vpack.c.b16 %v2109, %v2108
        %v2159 = vpack.c.b16 %v2111, %v2110
        %v2160 = vpack.c.b16 %v2113, %v2112
        %v2161 = vpack.c.b16 %v2115, %v2114
        %v2162 = vpack.c.b16 %v2117, %v2116
        %v2163 = vpack.c.b16 %v2119, %v2118
        %v2164 = vpack.c.b16 %v2121, %v2120
        %v2165 = vpack.c.b16 %v2123, %v2122
        %v2166 = vpack.c.b16 %v2125, %v2124
        %v2167 = vpack.c.b16 %v2127, %v2126
        %v2168 = vpack.c.b16 %v2129, %v2128
        %v2169 = vpack.c.b16 %v2131, %v2130
        %v2170 = vpack.c.b16 %v2133, %v2132
        %v2171 = vpack.c.b16 %v2135, %v2134
        %v2172 = vpack.c.b16 %v2137, %v2136
        %v2173 = vpack.c.b16 %v2139, %v2138
        %v2174 = vpack.c.b16 %v2141, %v2140
        %v2175 = vpack.c.b16 %v2143, %v2142
        %2208 = vmatprep.subr.bf16.mxu0 0
        %2209 = vmatpush1.bf16.msra.mxu0 %v2144
        %2210 = vmatprep.subr.bf16.mxu0 0
        %2211 = vmatpush1.bf16.msra.mxu0 %v2145
        %2212 = vmatprep.subr.bf16.mxu0 0
        %2213 = vmatpush1.bf16.msra.mxu0 %v2146
        %2214 = vmatprep.subr.bf16.mxu0 0
        %2215 = vmatpush1.bf16.msra.mxu0 %v2147
        %2216 = vmatprep.subr.bf16.mxu0 0
        %2217 = vmatpush1.bf16.msra.mxu0 %v2148
        %2218 = vmatprep.subr.bf16.mxu0 0
        %2219 = vmatpush1.bf16.msra.mxu0 %v2149
        %2220 = vmatprep.subr.bf16.mxu0 0
        %2221 = vmatpush1.bf16.msra.mxu0 %v2150
        %2222 = vmatprep.subr.bf16.mxu0 0
        %2223 = vmatpush1.bf16.msra.mxu0 %v2151
        %2224 = vmatprep.subr.bf16.mxu0 0
        %2225 = vmatpush1.bf16.msra.mxu0 %v2152
        %2226 = vmatprep.subr.bf16.mxu0 0
        %2227 = vmatpush1.bf16.msra.mxu0 %v2153
        %2228 = vmatprep.subr.bf16.mxu0 0
        %2229 = vmatpush1.bf16.msra.mxu0 %v2154
        %2230 = vmatprep.subr.bf16.mxu0 0
        %2231 = vmatpush1.bf16.msra.mxu0 %v2155
        %2232 = vmatprep.subr.bf16.mxu0 0
        %2233 = vmatpush1.bf16.msra.mxu0 %v2156
        %2234 = vmatprep.subr.bf16.mxu0 0
        %2235 = vmatpush1.bf16.msra.mxu0 %v2157
        %2236 = vmatprep.subr.bf16.mxu0 0
        %2237 = vmatpush1.bf16.msra.mxu0 %v2158
        %2238 = vmatprep.subr.bf16.mxu0 0
        %2239 = vmatpush1.bf16.msra.mxu0 %v2159
        %2240 = vmatprep.mubr.bf16.mxu0 %v1942
        %2241 = vmatmul.mubr.bf16.gmra.mrb[0].mxu0 %v1941
        %v2242 = vpop.f32.mrb[0].mxu0
        %v2243 = vadd.f32 %v2014, %v2242
        %v2244 = vpop.f32.mrb[0].mxu0
        %v2245 = vpop.f32.mrb[0].mxu0
        %v2246 = vpop.f32.mrb[0].mxu0
        %2247 = vdwg.mxu0
        %2248 = vmatprep.subr.bf16.mxu0 0
        %2249 = vmatpush1.bf16.msra.mxu0 %v2160
        %2250 = vmatprep.subr.bf16.mxu0 0
        %2251 = vmatpush1.bf16.msra.mxu0 %v2161
        %2252 = vmatprep.subr.bf16.mxu0 0
        %2253 = vmatpush1.bf16.msra.mxu0 %v2162
        %2254 = vmatprep.subr.bf16.mxu0 0
        %2255 = vmatpush1.bf16.msra.mxu0 %v2163
        %2256 = vmatprep.subr.bf16.mxu0 0
        %2257 = vmatpush1.bf16.msra.mxu0 %v2164
        %2258 = vmatprep.subr.bf16.mxu0 0
        %2259 = vmatpush1.bf16.msra.mxu0 %v2165
        %2260 = vmatprep.subr.bf16.mxu0 0
        %2261 = vmatpush1.bf16.msra.mxu0 %v2166
        %2262 = vmatprep.subr.bf16.mxu0 0
        %2263 = vmatpush1.bf16.msra.mxu0 %v2167
        %2264 = vmatprep.subr.bf16.mxu0 0
        %2265 = vmatpush1.bf16.msra.mxu0 %v2168
        %2266 = vmatprep.subr.bf16.mxu0 0
        %2267 = vmatpush1.bf16.msra.mxu0 %v2169
        %2268 = vmatprep.subr.bf16.mxu0 0
        %2269 = vmatpush1.bf16.msra.mxu0 %v2170
        %2270 = vmatprep.subr.bf16.mxu0 0
        %2271 = vmatpush1.bf16.msra.mxu0 %v2171
        %2272 = vmatprep.subr.bf16.mxu0 0
        %2273 = vmatpush1.bf16.msra.mxu0 %v2172
        %2274 = vmatprep.subr.bf16.mxu0 0
        %2275 = vmatpush1.bf16.msra.mxu0 %v2173
        %2276 = vmatprep.subr.bf16.mxu0 0
        %2277 = vmatpush1.bf16.msra.mxu0 %v2174
        %2278 = vmatprep.subr.bf16.mxu0 0
        %2279 = vmatpush1.bf16.msra.mxu0 %v2175
        %2280 = vmatprep.mubr.bf16.mxu0 %v1944
        %2281 = vmatmul.mubr.bf16.gmra.mrb[0].mxu0 %v1943
        %v2282 = vpop.f32.mrb[0].mxu0
        %v2283 = vadd.f32 %v2243, %v2282
        %v2284 = vpop.f32.mrb[0].mxu0
        %v2285 = vpop.f32.mrb[0].mxu0
        %v2286 = vpop.f32.mrb[0].mxu0
        %2287 = vdwg.mxu0
        %v2288 = vadd.f32 %v2283, %v1033
        %v2289 = vld [vmem:[%s25] sm:$0x1]
        %v2290 = vld [vmem:[%s27] sm:$0x1]
        %v2291 = vsel %vm1126, %v2288, 0.0
        %2292 = vadd.xlane.f32.xlu0 %v2291
        %v2293 = vpop.xlane.xlu0 %2292
        %v2294 = vrcp.pop 32.0
        %v2295 = vmul.f32 %v2293, %v2294
        %v2296 = vsub.f32 %v2288, %v2295
        %v2297 = vmul.f32 %v2296, %v2296
        %v2298 = vsel %vm1126, %v2297, 0.0
        %2299 = vadd.xlane.f32.xlu0 %v2298
        %v2300 = vpop.xlane.xlu0 %2299
        %v2301 = vmul.f32 %v2300, %v2294
        %v2302 = vadd.f32 %v2301, 1e-06
        %v2303 = vrsqrt.pop %v2302
        %v2304 = vmul.f32 %v2296, %v2303
        %v2306 = vlaneseq
        %v2307 = vshrl.u32 %v2306, 7
        %v2308 = vsub.s32 0, %v2307
        %v2309 = vrot.slane %v2289, %v2308
        %v2311 = vmul.f32 %v2304, %v2309
        %v2313 = vlaneseq
        %v2314 = vshrl.u32 %v2313, 7
        %v2315 = vsub.s32 0, %v2314
        %v2316 = vrot.slane %v2290, %v2315
        %v2318 = vadd.f32 %v2311, %v2316
        %v2319 = vpack.c.bf16 %v2318, %v2318
        %v2320 = vpack.c.bf16 %v1035, %v1034
        %v2321 = vld [vmem:[%s29] sm:$0xff]
        %v2322 = vld [vmem:[%s29 + $0x8] sm:$0xff]
        %v2323 = vld [vmem:[%s29 + $0x10] sm:$0xff]
        %v2324 = vld [vmem:[%s29 + $0x18] sm:$0xff]
        %v2325 = vld [vmem:[%s29 + $0x20] sm:$0xff]
        %v2326 = vld [vmem:[%s29 + $0x28] sm:$0xff]
        %v2327 = vld [vmem:[%s29 + $0x30] sm:$0xff]
        %v2328 = vld [vmem:[%s29 + $0x38] sm:$0xff]
        %v2329 = vld [vmem:[%s31] sm:$0xf]
        %v2331 = vlaneseq
        %v2332 = vshrl.u32 %v2331, 7
        %v2333 = vsub.s32 0, %v2332
        %v2334 = vrot.slane %v2329, %v2333
        %v2335 = vlaneseq
        %v2336 = vshrl.u32 %v2335, 7
        %v2337 = vsub.s32 1, %v2336
        %v2338 = vrot.slane %v2329, %v2337
        %v2339 = vlaneseq
        %v2340 = vshrl.u32 %v2339, 7
        %v2341 = vsub.s32 2, %v2340
        %v2342 = vrot.slane %v2329, %v2341
        %v2343 = vlaneseq
        %v2344 = vshrl.u32 %v2343, 7
        %v2345 = vsub.s32 3, %v2344
        %v2346 = vrot.slane %v2329, %v2345
        %v2359 = vunpack.c.l.b16 %v2321
        %v2360 = vunpack.c.h.b16 %v2321
        %v2361 = vunpack.c.l.b16 %v2322
        %v2362 = vunpack.c.h.b16 %v2322
        %v2363 = vunpack.c.l.b16 %v2323
        %v2364 = vunpack.c.h.b16 %v2323
        %v2365 = vunpack.c.l.b16 %v2324
        %v2366 = vunpack.c.h.b16 %v2324
        %v2367 = vunpack.c.l.b16 %v2325
        %v2368 = vunpack.c.h.b16 %v2325
        %v2369 = vunpack.c.l.b16 %v2326
        %v2370 = vunpack.c.h.b16 %v2326
        %v2371 = vunpack.c.l.b16 %v2327
        %v2372 = vunpack.c.h.b16 %v2327
        %v2373 = vunpack.c.l.b16 %v2328
        %v2374 = vunpack.c.h.b16 %v2328
        %v2375 = vpack.c.b16 %v2363, %v2359
        %v2376 = vpack.c.b16 %v2364, %v2360
        %v2377 = vpack.c.b16 %v2365, %v2361
        %v2378 = vpack.c.b16 %v2366, %v2362
        %v2379 = vpack.c.b16 %v2371, %v2367
        %v2380 = vpack.c.b16 %v2372, %v2368
        %v2381 = vpack.c.b16 %v2373, %v2369
        %v2382 = vpack.c.b16 %v2374, %v2370
        %v2392 = vsel %vm1126, %v2319, 0
        %2394 = vmatprep.subr.bf16.mxu0 %v2376
        %2395 = vmatpush1.bf16.msra.mxu0 %v2375
        %2396 = vmatprep.subr.bf16.mxu0 %v2380
        %2397 = vmatpush1.bf16.msra.mxu0 %v2379
        %2398 = vmatprep.subr.bf16.mxu0 0
        %2399 = vmatpush1.bf16.msra.mxu0 0
        %2400 = vmatprep.subr.bf16.mxu0 0
        %2401 = vmatpush1.bf16.msra.mxu0 0
        %2402 = vmatprep.subr.bf16.mxu0 0
        %2403 = vmatpush1.bf16.msra.mxu0 0
        %2404 = vmatprep.subr.bf16.mxu0 0
        %2405 = vmatpush1.bf16.msra.mxu0 0
        %2406 = vmatprep.subr.bf16.mxu0 0
        %2407 = vmatpush1.bf16.msra.mxu0 0
        %2408 = vmatprep.subr.bf16.mxu0 0
        %2409 = vmatpush1.bf16.msra.mxu0 0
        %2410 = vmatprep.subr.bf16.mxu0 0
        %2411 = vmatpush1.bf16.msra.mxu0 0
        %2412 = vmatprep.subr.bf16.mxu0 0
        %2413 = vmatpush1.bf16.msra.mxu0 0
        %2414 = vmatprep.subr.bf16.mxu0 0
        %2415 = vmatpush1.bf16.msra.mxu0 0
        %2416 = vmatprep.subr.bf16.mxu0 0
        %2417 = vmatpush1.bf16.msra.mxu0 0
        %2418 = vmatprep.subr.bf16.mxu0 0
        %2419 = vmatpush1.bf16.msra.mxu0 0
        %2420 = vmatprep.subr.bf16.mxu0 0
        %2421 = vmatpush1.bf16.msra.mxu0 0
        %2422 = vmatprep.subr.bf16.mxu0 0
        %2423 = vmatpush1.bf16.msra.mxu0 0
        %2424 = vmatprep.subr.bf16.mxu0 0
        %2425 = vmatpush1.bf16.msra.mxu0 0
        %2426 = vmatprep.mubr.bf16.mxu0 0
        %2427 = vmatmul.mubr.bf16.gmra.mrb[0].mxu0 %v2392
        %v2428 = vpop.f32.mrb[0].mxu0
        %v2429 = vadd.f32 %v2334, %v2428
        %v2430 = vpop.f32.mrb[0].mxu0
        %v2431 = vadd.f32 %v2338, %v2430
        %v2432 = vpop.f32.mrb[0].mxu0
        %v2433 = vpop.f32.mrb[0].mxu0
        %2434 = vdwg.mxu0
        %2435 = vmatprep.subr.bf16.mxu0 %v2378
        %2436 = vmatpush1.bf16.msra.mxu0 %v2377
        %2437 = vmatprep.subr.bf16.mxu0 %v2382
        %2438 = vmatpush1.bf16.msra.mxu0 %v2381
        %2439 = vmatprep.subr.bf16.mxu0 0
        %2440 = vmatpush1.bf16.msra.mxu0 0
        %2441 = vmatprep.subr.bf16.mxu0 0
        %2442 = vmatpush1.bf16.msra.mxu0 0
        %2443 = vmatprep.subr.bf16.mxu0 0
        %2444 = vmatpush1.bf16.msra.mxu0 0
        %2445 = vmatprep.subr.bf16.mxu0 0
        %2446 = vmatpush1.bf16.msra.mxu0 0
        %2447 = vmatprep.subr.bf16.mxu0 0
        %2448 = vmatpush1.bf16.msra.mxu0 0
        %2449 = vmatprep.subr.bf16.mxu0 0
        %2450 = vmatpush1.bf16.msra.mxu0 0
        %2451 = vmatprep.subr.bf16.mxu0 0
        %2452 = vmatpush1.bf16.msra.mxu0 0
        %2453 = vmatprep.subr.bf16.mxu0 0
        %2454 = vmatpush1.bf16.msra.mxu0 0
        %2455 = vmatprep.subr.bf16.mxu0 0
        %2456 = vmatpush1.bf16.msra.mxu0 0
        %2457 = vmatprep.subr.bf16.mxu0 0
        %2458 = vmatpush1.bf16.msra.mxu0 0
        %2459 = vmatprep.subr.bf16.mxu0 0
        %2460 = vmatpush1.bf16.msra.mxu0 0
        %2461 = vmatprep.subr.bf16.mxu0 0
        %2462 = vmatpush1.bf16.msra.mxu0 0
        %2463 = vmatprep.subr.bf16.mxu0 0
        %2464 = vmatpush1.bf16.msra.mxu0 0
        %2465 = vmatprep.subr.bf16.mxu0 0
        %2466 = vmatpush1.bf16.msra.mxu0 0
        %2467 = vmatprep.mubr.bf16.mxu0 0
        %2468 = vmatmul.mubr.bf16.gmra.mrb[0].mxu0 %v2392
        %v2469 = vpop.f32.mrb[0].mxu0
        %v2470 = vadd.f32 %v2342, %v2469
        %v2471 = vpop.f32.mrb[0].mxu0
        %v2472 = vadd.f32 %v2346, %v2471
        %v2473 = vpop.f32.mrb[0].mxu0
        %v2474 = vpop.f32.mrb[0].mxu0
        %2475 = vdwg.mxu0
        %v2476 = vmul.f32 %v2429, 0.35355338
        %v2477 = vmul.f32 %v2431, 0.35355338
        %v2478 = vmul.f32 %v2470, 0.35355338
        %v2479 = vmul.f32 %v2472, 0.35355338
        %v2480 = vld [vmem:[%s33] sm:$0xff]
        %v2481 = vld [vmem:[%s33 + $0x8] sm:$0xff]
        %v2482 = vld [vmem:[%s33 + $0x10] sm:$0xff]
        %v2483 = vld [vmem:[%s33 + $0x18] sm:$0xff]
        %v2484 = vld [vmem:[%s33 + $0x20] sm:$0xff]
        %v2485 = vld [vmem:[%s33 + $0x28] sm:$0xff]
        %v2486 = vld [vmem:[%s33 + $0x30] sm:$0xff]
        %v2487 = vld [vmem:[%s33 + $0x38] sm:$0xff]
        %v2488 = vld [vmem:[%s35] sm:$0xf]
        %v2490 = vlaneseq
        %v2491 = vshrl.u32 %v2490, 7
        %v2492 = vsub.s32 0, %v2491
        %v2493 = vrot.slane %v2488, %v2492
        %v2494 = vlaneseq
        %v2495 = vshrl.u32 %v2494, 7
        %v2496 = vsub.s32 1, %v2495
        %v2497 = vrot.slane %v2488, %v2496
        %v2498 = vlaneseq
        %v2499 = vshrl.u32 %v2498, 7
        %v2500 = vsub.s32 2, %v2499
        %v2501 = vrot.slane %v2488, %v2500
        %v2502 = vlaneseq
        %v2503 = vshrl.u32 %v2502, 7
        %v2504 = vsub.s32 3, %v2503
        %v2505 = vrot.slane %v2488, %v2504
        %v2518 = vunpack.c.l.b16 %v2480
        %v2519 = vunpack.c.h.b16 %v2480
        %v2520 = vunpack.c.l.b16 %v2481
        %v2521 = vunpack.c.h.b16 %v2481
        %v2522 = vunpack.c.l.b16 %v2482
        %v2523 = vunpack.c.h.b16 %v2482
        %v2524 = vunpack.c.l.b16 %v2483
        %v2525 = vunpack.c.h.b16 %v2483
        %v2526 = vunpack.c.l.b16 %v2484
        %v2527 = vunpack.c.h.b16 %v2484
        %v2528 = vunpack.c.l.b16 %v2485
        %v2529 = vunpack.c.h.b16 %v2485
        %v2530 = vunpack.c.l.b16 %v2486
        %v2531 = vunpack.c.h.b16 %v2486
        %v2532 = vunpack.c.l.b16 %v2487
        %v2533 = vunpack.c.h.b16 %v2487
        %v2534 = vpack.c.b16 %v2522, %v2518
        %v2535 = vpack.c.b16 %v2523, %v2519
        %v2536 = vpack.c.b16 %v2524, %v2520
        %v2537 = vpack.c.b16 %v2525, %v2521
        %v2538 = vpack.c.b16 %v2530, %v2526
        %v2539 = vpack.c.b16 %v2531, %v2527
        %v2540 = vpack.c.b16 %v2532, %v2528
        %v2541 = vpack.c.b16 %v2533, %v2529
        %v2551 = vsel %vm1126, %v2320, 0
        %2553 = vmatprep.subr.bf16.mxu0 %v2535
        %2554 = vmatpush1.bf16.msra.mxu0 %v2534
        %2555 = vmatprep.subr.bf16.mxu0 %v2539
        %2556 = vmatpush1.bf16.msra.mxu0 %v2538
        %2557 = vmatprep.subr.bf16.mxu0 0
        %2558 = vmatpush1.bf16.msra.mxu0 0
        %2559 = vmatprep.subr.bf16.mxu0 0
        %2560 = vmatpush1.bf16.msra.mxu0 0
        %2561 = vmatprep.subr.bf16.mxu0 0
        %2562 = vmatpush1.bf16.msra.mxu0 0
        %2563 = vmatprep.subr.bf16.mxu0 0
        %2564 = vmatpush1.bf16.msra.mxu0 0
        %2565 = vmatprep.subr.bf16.mxu0 0
        %2566 = vmatpush1.bf16.msra.mxu0 0
        %2567 = vmatprep.subr.bf16.mxu0 0
        %2568 = vmatpush1.bf16.msra.mxu0 0
        %2569 = vmatprep.subr.bf16.mxu0 0
        %2570 = vmatpush1.bf16.msra.mxu0 0
        %2571 = vmatprep.subr.bf16.mxu0 0
        %2572 = vmatpush1.bf16.msra.mxu0 0
        %2573 = vmatprep.subr.bf16.mxu0 0
        %2574 = vmatpush1.bf16.msra.mxu0 0
        %2575 = vmatprep.subr.bf16.mxu0 0
        %2576 = vmatpush1.bf16.msra.mxu0 0
        %2577 = vmatprep.subr.bf16.mxu0 0
        %2578 = vmatpush1.bf16.msra.mxu0 0
        %2579 = vmatprep.subr.bf16.mxu0 0
        %2580 = vmatpush1.bf16.msra.mxu0 0
        %2581 = vmatprep.subr.bf16.mxu0 0
        %2582 = vmatpush1.bf16.msra.mxu0 0
        %2583 = vmatprep.subr.bf16.mxu0 0
        %2584 = vmatpush1.bf16.msra.mxu0 0
        %2585 = vmatprep.mubr.bf16.mxu0 0
        %2586 = vmatmul.mubr.bf16.gmra.mrb[0].mxu0 %v2551
        %v2587 = vpop.f32.mrb[0].mxu0
        %v2588 = vadd.f32 %v2493, %v2587
        %v2589 = vpop.f32.mrb[0].mxu0
        %v2590 = vadd.f32 %v2497, %v2589
        %v2591 = vpop.f32.mrb[0].mxu0
        %v2592 = vadd.f32 %v2493, %v2591
        %v2593 = vpop.f32.mrb[0].mxu0
        %v2594 = vadd.f32 %v2497, %v2593
        %2595 = vdwg.mxu0
        %2596 = vmatprep.subr.bf16.mxu0 %v2537
        %2597 = vmatpush1.bf16.msra.mxu0 %v2536
        %2598 = vmatprep.subr.bf16.mxu0 %v2541
        %2599 = vmatpush1.bf16.msra.mxu0 %v2540
        %2600 = vmatprep.subr.bf16.mxu0 0
        %2601 = vmatpush1.bf16.msra.mxu0 0
        %2602 = vmatprep.subr.bf16.mxu0 0
        %2603 = vmatpush1.bf16.msra.mxu0 0
        %2604 = vmatprep.subr.bf16.mxu0 0
        %2605 = vmatpush1.bf16.msra.mxu0 0
        %2606 = vmatprep.subr.bf16.mxu0 0
        %2607 = vmatpush1.bf16.msra.mxu0 0
        %2608 = vmatprep.subr.bf16.mxu0 0
        %2609 = vmatpush1.bf16.msra.mxu0 0
        %2610 = vmatprep.subr.bf16.mxu0 0
        %2611 = vmatpush1.bf16.msra.mxu0 0
        %2612 = vmatprep.subr.bf16.mxu0 0
        %2613 = vmatpush1.bf16.msra.mxu0 0
        %2614 = vmatprep.subr.bf16.mxu0 0
        %2615 = vmatpush1.bf16.msra.mxu0 0
        %2616 = vmatprep.subr.bf16.mxu0 0
        %2617 = vmatpush1.bf16.msra.mxu0 0
        %2618 = vmatprep.subr.bf16.mxu0 0
        %2619 = vmatpush1.bf16.msra.mxu0 0
        %2620 = vmatprep.subr.bf16.mxu0 0
        %2621 = vmatpush1.bf16.msra.mxu0 0
        %2622 = vmatprep.subr.bf16.mxu0 0
        %2623 = vmatpush1.bf16.msra.mxu0 0
        %2624 = vmatprep.subr.bf16.mxu0 0
        %2625 = vmatpush1.bf16.msra.mxu0 0
        %2626 = vmatprep.subr.bf16.mxu0 0
        %2627 = vmatpush1.bf16.msra.mxu0 0
        %2628 = vmatprep.mubr.bf16.mxu0 0
        %2629 = vmatmul.mubr.bf16.gmra.mrb[0].mxu0 %v2551
        %v2630 = vpop.f32.mrb[0].mxu0
        %v2631 = vadd.f32 %v2501, %v2630
        %v2632 = vpop.f32.mrb[0].mxu0
        %v2633 = vadd.f32 %v2505, %v2632
        %v2634 = vpop.f32.mrb[0].mxu0
        %v2635 = vadd.f32 %v2501, %v2634
        %v2636 = vpop.f32.mrb[0].mxu0
        %v2637 = vadd.f32 %v2505, %v2636
        %2638 = vdwg.mxu0
        %v2639 = vld [vmem:[%s37] sm:$0xff]
        %v2640 = vld [vmem:[%s37 + $0x8] sm:$0xff]
        %v2641 = vld [vmem:[%s37 + $0x10] sm:$0xff]
        %v2642 = vld [vmem:[%s37 + $0x18] sm:$0xff]
        %v2643 = vld [vmem:[%s37 + $0x20] sm:$0xff]
        %v2644 = vld [vmem:[%s37 + $0x28] sm:$0xff]
        %v2645 = vld [vmem:[%s37 + $0x30] sm:$0xff]
        %v2646 = vld [vmem:[%s37 + $0x38] sm:$0xff]
        %v2647 = vld [vmem:[%s39] sm:$0xf]
        %v2649 = vlaneseq
        %v2650 = vshrl.u32 %v2649, 7
        %v2651 = vsub.s32 0, %v2650
        %v2652 = vrot.slane %v2647, %v2651
        %v2653 = vlaneseq
        %v2654 = vshrl.u32 %v2653, 7
        %v2655 = vsub.s32 1, %v2654
        %v2656 = vrot.slane %v2647, %v2655
        %v2657 = vlaneseq
        %v2658 = vshrl.u32 %v2657, 7
        %v2659 = vsub.s32 2, %v2658
        %v2660 = vrot.slane %v2647, %v2659
        %v2661 = vlaneseq
        %v2662 = vshrl.u32 %v2661, 7
        %v2663 = vsub.s32 3, %v2662
        %v2664 = vrot.slane %v2647, %v2663
        %v2677 = vunpack.c.l.b16 %v2639
        %v2678 = vunpack.c.h.b16 %v2639
        %v2679 = vunpack.c.l.b16 %v2640
        %v2680 = vunpack.c.h.b16 %v2640
        %v2681 = vunpack.c.l.b16 %v2641
        %v2682 = vunpack.c.h.b16 %v2641
        %v2683 = vunpack.c.l.b16 %v2642
        %v2684 = vunpack.c.h.b16 %v2642
        %v2685 = vunpack.c.l.b16 %v2643
        %v2686 = vunpack.c.h.b16 %v2643
        %v2687 = vunpack.c.l.b16 %v2644
        %v2688 = vunpack.c.h.b16 %v2644
        %v2689 = vunpack.c.l.b16 %v2645
        %v2690 = vunpack.c.h.b16 %v2645
        %v2691 = vunpack.c.l.b16 %v2646
        %v2692 = vunpack.c.h.b16 %v2646
        %v2693 = vpack.c.b16 %v2681, %v2677
        %v2694 = vpack.c.b16 %v2682, %v2678
        %v2695 = vpack.c.b16 %v2683, %v2679
        %v2696 = vpack.c.b16 %v2684, %v2680
        %v2697 = vpack.c.b16 %v2689, %v2685
        %v2698 = vpack.c.b16 %v2690, %v2686
        %v2699 = vpack.c.b16 %v2691, %v2687
        %v2700 = vpack.c.b16 %v2692, %v2688
        %2709 = vmatprep.subr.bf16.mxu0 %v2694
        %2710 = vmatpush1.bf16.msra.mxu0 %v2693
        %2711 = vmatprep.subr.bf16.mxu0 %v2698
        %2712 = vmatpush1.bf16.msra.mxu0 %v2697
        %2713 = vmatprep.subr.bf16.mxu0 0
        %2714 = vmatpush1.bf16.msra.mxu0 0
        %2715 = vmatprep.subr.bf16.mxu0 0
        %2716 = vmatpush1.bf16.msra.mxu0 0
        %2717 = vmatprep.subr.bf16.mxu0 0
        %2718 = vmatpush1.bf16.msra.mxu0 0
        %2719 = vmatprep.subr.bf16.mxu0 0
        %2720 = vmatpush1.bf16.msra.mxu0 0
        %2721 = vmatprep.subr.bf16.mxu0 0
        %2722 = vmatpush1.bf16.msra.mxu0 0
        %2723 = vmatprep.subr.bf16.mxu0 0
        %2724 = vmatpush1.bf16.msra.mxu0 0
        %2725 = vmatprep.subr.bf16.mxu0 0
        %2726 = vmatpush1.bf16.msra.mxu0 0
        %2727 = vmatprep.subr.bf16.mxu0 0
        %2728 = vmatpush1.bf16.msra.mxu0 0
        %2729 = vmatprep.subr.bf16.mxu0 0
        %2730 = vmatpush1.bf16.msra.mxu0 0
        %2731 = vmatprep.subr.bf16.mxu0 0
        %2732 = vmatpush1.bf16.msra.mxu0 0
        %2733 = vmatprep.subr.bf16.mxu0 0
        %2734 = vmatpush1.bf16.msra.mxu0 0
        %2735 = vmatprep.subr.bf16.mxu0 0
        %2736 = vmatpush1.bf16.msra.mxu0 0
        %2737 = vmatprep.subr.bf16.mxu0 0
        %2738 = vmatpush1.bf16.msra.mxu0 0
        %2739 = vmatprep.subr.bf16.mxu0 0
        %2740 = vmatpush1.bf16.msra.mxu0 0
        %2741 = vmatprep.mubr.bf16.mxu0 0
        %2742 = vmatmul.mubr.bf16.gmra.mrb[0].mxu0 %v2551
        %v2743 = vpop.f32.mrb[0].mxu0
        %v2744 = vadd.f32 %v2652, %v2743
        %v2745 = vpop.f32.mrb[0].mxu0
        %v2746 = vadd.f32 %v2656, %v2745
        %v2747 = vpop.f32.mrb[0].mxu0
        %v2748 = vadd.f32 %v2652, %v2747
        %v2749 = vpop.f32.mrb[0].mxu0
        %v2750 = vadd.f32 %v2656, %v2749
        %2751 = vdwg.mxu0
        %2752 = vmatprep.subr.bf16.mxu0 %v2696
        %2753 = vmatpush1.bf16.msra.mxu0 %v2695
        %2754 = vmatprep.subr.bf16.mxu0 %v2700
        %2755 = vmatpush1.bf16.msra.mxu0 %v2699
        %2756 = vmatprep.subr.bf16.mxu0 0
        %2757 = vmatpush1.bf16.msra.mxu0 0
        %2758 = vmatprep.subr.bf16.mxu0 0
        %2759 = vmatpush1.bf16.msra.mxu0 0
        %2760 = vmatprep.subr.bf16.mxu0 0
        %2761 = vmatpush1.bf16.msra.mxu0 0
        %2762 = vmatprep.subr.bf16.mxu0 0
        %2763 = vmatpush1.bf16.msra.mxu0 0
        %2764 = vmatprep.subr.bf16.mxu0 0
        %2765 = vmatpush1.bf16.msra.mxu0 0
        %2766 = vmatprep.subr.bf16.mxu0 0
        %2767 = vmatpush1.bf16.msra.mxu0 0
        %2768 = vmatprep.subr.bf16.mxu0 0
        %2769 = vmatpush1.bf16.msra.mxu0 0
        %2770 = vmatprep.subr.bf16.mxu0 0
        %2771 = vmatpush1.bf16.msra.mxu0 0
        %2772 = vmatprep.subr.bf16.mxu0 0
        %2773 = vmatpush1.bf16.msra.mxu0 0
        %2774 = vmatprep.subr.bf16.mxu0 0
        %2775 = vmatpush1.bf16.msra.mxu0 0
        %2776 = vmatprep.subr.bf16.mxu0 0
        %2777 = vmatpush1.bf16.msra.mxu0 0
        %2778 = vmatprep.subr.bf16.mxu0 0
        %2779 = vmatpush1.bf16.msra.mxu0 0
        %2780 = vmatprep.subr.bf16.mxu0 0
        %2781 = vmatpush1.bf16.msra.mxu0 0
        %2782 = vmatprep.subr.bf16.mxu0 0
        %2783 = vmatpush1.bf16.msra.mxu0 0
        %2784 = vmatprep.mubr.bf16.mxu0 0
        %2785 = vmatmul.mubr.bf16.gmra.mrb[0].mxu0 %v2551
        %v2786 = vpop.f32.mrb[0].mxu0
        %v2787 = vadd.f32 %v2660, %v2786
        %v2788 = vpop.f32.mrb[0].mxu0
        %v2789 = vadd.f32 %v2664, %v2788
        %v2790 = vpop.f32.mrb[0].mxu0
        %v2791 = vadd.f32 %v2660, %v2790
        %v2792 = vpop.f32.mrb[0].mxu0
        %v2793 = vadd.f32 %v2664, %v2792
        %2794 = vdwg.mxu0
        %v2795 = vpack.c.bf16 %v2476, %v2476
        %v2796 = vpack.c.bf16 %v2592, %v2588
        %v2797 = vpack.c.bf16 %v2748, %v2744
        %2798 = vmatprep.subr.bf16.mxu0 0
        %2799 = vmatpush1.bf16.xpose.msra.mxu0 %v2796
        %2800 = vmatprep.subr.bf16.mxu0 0
        %2801 = vmatpush1.bf16.xpose.msra.mxu0 0
        %2802 = vmatprep.subr.bf16.mxu0 0
        %2803 = vmatpush1.bf16.xpose.msra.mxu0 0
        %2804 = vmatprep.subr.bf16.mxu0 0
        %2805 = vmatpush1.bf16.xpose.msra.mxu0 0
        %2806 = vmatprep.subr.bf16.mxu0 0
        %2807 = vmatpush1.bf16.xpose.msra.mxu0 0
        %2808 = vmatprep.subr.bf16.mxu0 0
        %2809 = vmatpush1.bf16.xpose.msra.mxu0 0
        %2810 = vmatprep.subr.bf16.mxu0 0
        %2811 = vmatpush1.bf16.xpose.msra.mxu0 0
        %2812 = vmatprep.subr.bf16.mxu0 0
        %2813 = vmatpush1.bf16.xpose.msra.mxu0 0
        %2814 = vmatprep.subr.bf16.mxu0 0
        %2815 = vmatpush1.bf16.xpose.msra.mxu0 0
        %2816 = vmatprep.subr.bf16.mxu0 0
        %2817 = vmatpush1.bf16.xpose.msra.mxu0 0
        %2818 = vmatprep.subr.bf16.mxu0 0
        %2819 = vmatpush1.bf16.xpose.msra.mxu0 0
        %2820 = vmatprep.subr.bf16.mxu0 0
        %2821 = vmatpush1.bf16.xpose.msra.mxu0 0
        %2822 = vmatprep.subr.bf16.mxu0 0
        %2823 = vmatpush1.bf16.xpose.msra.mxu0 0
        %2824 = vmatprep.subr.bf16.mxu0 0
        %2825 = vmatpush1.bf16.xpose.msra.mxu0 0
        %2826 = vmatprep.subr.bf16.mxu0 0
        %2827 = vmatpush1.bf16.xpose.msra.mxu0 0
        %2828 = vmatprep.subr.bf16.mxu0 0
        %2829 = vmatpush1.bf16.xpose.msra.mxu0 0
        %2830 = vmatprep.mubr.bf16.mxu0 0
        %2831 = vmatmul.mubr.bf16.gmra.mrb[0].mxu0 %v2795
        %v2832 = vpop.f32.mrb[0].mxu0
        %v2833 = vadd.f32 0.0, %v2832
        %v2834 = vpop.f32.mrb[0].mxu0
        %v2835 = vpop.f32.mrb[0].mxu0
        %v2836 = vpop.f32.mrb[0].mxu0
        %2837 = vdwg.mxu0
        %v2838 = vsel %vm1053, 1, 0
        %v2839 = vlaneseq
        %v2840 = vshrl.u32 %v2839, 7
        %v2841 = vsub.s32 0, %v2840
        %v2842 = vrot.slane %v2838, %v2841
        %vm2843 = vcmp.eq.s32.totalorder %v2842, 1
        %v2844 = vsel %vm2843, -1e+18, %v2833
        %vm2845 = vcmask 130048
        %v2846 = vsel %vm2845, %v2844, -inf
        %2847 = vmax.xlane.f32.xlu0 %v2846
        %v2848 = vpop.xlane.xlu0 %2847
        %v2849 = vsub.f32 %v2844, %v2848
        %v2850 = vmul.f32 %v2849, 1.442695
        %v2851 = vpow.pop %v2850
        %v2852 = vsel %vm2845, %v2851, 0.0
        %2853 = vadd.xlane.f32.xlu0 %v2852
        %v2854 = vpop.xlane.xlu0 %2853
        %v2855 = vrcp.pop %v2854
        %v2856 = vmul.f32 %v2851, %v2855
        %v2857 = vpack.c.bf16 %v2856, %v2856
        %v2859 = vsel %vm2845, %v2857, 0
        %2861 = vmatprep.subr.bf16.mxu0 0
        %2862 = vmatpush1.bf16.msra.mxu0 %v2797
        %2863 = vmatprep.subr.bf16.mxu0 0
        %2864 = vmatpush1.bf16.msra.mxu0 0
        %2865 = vmatprep.subr.bf16.mxu0 0
        %2866 = vmatpush1.bf16.msra.mxu0 0
        %2867 = vmatprep.subr.bf16.mxu0 0
        %2868 = vmatpush1.bf16.msra.mxu0 0
        %2869 = vmatprep.subr.bf16.mxu0 0
        %2870 = vmatpush1.bf16.msra.mxu0 0
        %2871 = vmatprep.subr.bf16.mxu0 0
        %2872 = vmatpush1.bf16.msra.mxu0 0
        %2873 = vmatprep.subr.bf16.mxu0 0
        %2874 = vmatpush1.bf16.msra.mxu0 0
        %2875 = vmatprep.subr.bf16.mxu0 0
        %2876 = vmatpush1.bf16.msra.mxu0 0
        %2877 = vmatprep.subr.bf16.mxu0 0
        %2878 = vmatpush1.bf16.msra.mxu0 0
        %2879 = vmatprep.subr.bf16.mxu0 0
        %2880 = vmatpush1.bf16.msra.mxu0 0
        %2881 = vmatprep.subr.bf16.mxu0 0
        %2882 = vmatpush1.bf16.msra.mxu0 0
        %2883 = vmatprep.subr.bf16.mxu0 0
        %2884 = vmatpush1.bf16.msra.mxu0 0
        %2885 = vmatprep.subr.bf16.mxu0 0
        %2886 = vmatpush1.bf16.msra.mxu0 0
        %2887 = vmatprep.subr.bf16.mxu0 0
        %2888 = vmatpush1.bf16.msra.mxu0 0
        %2889 = vmatprep.subr.bf16.mxu0 0
        %2890 = vmatpush1.bf16.msra.mxu0 0
        %2891 = vmatprep.subr.bf16.mxu0 0
        %2892 = vmatpush1.bf16.msra.mxu0 0
        %2893 = vmatprep.mubr.bf16.mxu0 0
        %2894 = vmatmul.mubr.bf16.gmra.mrb[0].mxu0 %v2859
        %v2895 = vpop.f32.mrb[0].mxu0
        %v2896 = vadd.f32 0.0, %v2895
        %v2897 = vpop.f32.mrb[0].mxu0
        %v2898 = vpop.f32.mrb[0].mxu0
        %v2899 = vpop.f32.mrb[0].mxu0
        %2900 = vdwg.mxu0
        %2901 = vst [vmem:[#allocation2] sm:$0xff] %v2896
        %v2902 = vpack.c.bf16 %v2477, %v2477
        %v2903 = vpack.c.bf16 %v2594, %v2590
        %v2904 = vpack.c.bf16 %v2750, %v2746
        %2905 = vmatprep.subr.bf16.mxu0 0
        %2906 = vmatpush1.bf16.xpose.msra.mxu0 %v2903
        %2907 = vmatprep.subr.bf16.mxu0 0
        %2908 = vmatpush1.bf16.xpose.msra.mxu0 0
        %2909 = vmatprep.subr.bf16.mxu0 0
        %2910 = vmatpush1.bf16.xpose.msra.mxu0 0
        %2911 = vmatprep.subr.bf16.mxu0 0
        %2912 = vmatpush1.bf16.xpose.msra.mxu0 0
        %2913 = vmatprep.subr.bf16.mxu0 0
        %2914 = vmatpush1.bf16.xpose.msra.mxu0 0
        %2915 = vmatprep.subr.bf16.mxu0 0
        %2916 = vmatpush1.bf16.xpose.msra.mxu0 0
        %2917 = vmatprep.subr.bf16.mxu0 0
        %2918 = vmatpush1.bf16.xpose.msra.mxu0 0
        %2919 = vmatprep.subr.bf16.mxu0 0
        %2920 = vmatpush1.bf16.xpose.msra.mxu0 0
        %2921 = vmatprep.subr.bf16.mxu0 0
        %2922 = vmatpush1.bf16.xpose.msra.mxu0 0
        %2923 = vmatprep.subr.bf16.mxu0 0
        %2924 = vmatpush1.bf16.xpose.msra.mxu0 0
        %2925 = vmatprep.subr.bf16.mxu0 0
        %2926 = vmatpush1.bf16.xpose.msra.mxu0 0
        %2927 = vmatprep.subr.bf16.mxu0 0
        %2928 = vmatpush1.bf16.xpose.msra.mxu0 0
        %2929 = vmatprep.subr.bf16.mxu0 0
        %2930 = vmatpush1.bf16.xpose.msra.mxu0 0
        %2931 = vmatprep.subr.bf16.mxu0 0
        %2932 = vmatpush1.bf16.xpose.msra.mxu0 0
        %2933 = vmatprep.subr.bf16.mxu0 0
        %2934 = vmatpush1.bf16.xpose.msra.mxu0 0
        %2935 = vmatprep.subr.bf16.mxu0 0
        %2936 = vmatpush1.bf16.xpose.msra.mxu0 0
        %2937 = vmatprep.mubr.bf16.mxu0 0
        %2938 = vmatmul.mubr.bf16.gmra.mrb[0].mxu0 %v2902
        %v2939 = vpop.f32.mrb[0].mxu0
        %v2940 = vadd.f32 0.0, %v2939
        %v2941 = vpop.f32.mrb[0].mxu0
        %v2942 = vpop.f32.mrb[0].mxu0
        %v2943 = vpop.f32.mrb[0].mxu0
        %2944 = vdwg.mxu0
        %v2945 = vsel %vm2843, -1e+18, %v2940
        %v2946 = vsel %vm2845, %v2945, -inf
        %2947 = vmax.xlane.f32.xlu0 %v2946
        %v2948 = vpop.xlane.xlu0 %2947
        %v2949 = vsub.f32 %v2945, %v2948
        %v2950 = vmul.f32 %v2949, 1.442695
        %v2951 = vpow.pop %v2950
        %v2952 = vsel %vm2845, %v2951, 0.0
        %2953 = vadd.xlane.f32.xlu0 %v2952
        %v2954 = vpop.xlane.xlu0 %2953
        %v2955 = vrcp.pop %v2954
        %v2956 = vmul.f32 %v2951, %v2955
        %v2957 = vpack.c.bf16 %v2956, %v2956
        %v2959 = vsel %vm2845, %v2957, 0
        %2961 = vmatprep.subr.bf16.mxu0 0
        %2962 = vmatpush1.bf16.msra.mxu0 %v2904
        %2963 = vmatprep.subr.bf16.mxu0 0
        %2964 = vmatpush1.bf16.msra.mxu0 0
        %2965 = vmatprep.subr.bf16.mxu0 0
        %2966 = vmatpush1.bf16.msra.mxu0 0
        %2967 = vmatprep.subr.bf16.mxu0 0
        %2968 = vmatpush1.bf16.msra.mxu0 0
        %2969 = vmatprep.subr.bf16.mxu0 0
        %2970 = vmatpush1.bf16.msra.mxu0 0
        %2971 = vmatprep.subr.bf16.mxu0 0
        %2972 = vmatpush1.bf16.msra.mxu0 0
        %2973 = vmatprep.subr.bf16.mxu0 0
        %2974 = vmatpush1.bf16.msra.mxu0 0
        %2975 = vmatprep.subr.bf16.mxu0 0
        %2976 = vmatpush1.bf16.msra.mxu0 0
        %2977 = vmatprep.subr.bf16.mxu0 0
        %2978 = vmatpush1.bf16.msra.mxu0 0
        %2979 = vmatprep.subr.bf16.mxu0 0
        %2980 = vmatpush1.bf16.msra.mxu0 0
        %2981 = vmatprep.subr.bf16.mxu0 0
        %2982 = vmatpush1.bf16.msra.mxu0 0
        %2983 = vmatprep.subr.bf16.mxu0 0
        %2984 = vmatpush1.bf16.msra.mxu0 0
        %2985 = vmatprep.subr.bf16.mxu0 0
        %2986 = vmatpush1.bf16.msra.mxu0 0
        %2987 = vmatprep.subr.bf16.mxu0 0
        %2988 = vmatpush1.bf16.msra.mxu0 0
        %2989 = vmatprep.subr.bf16.mxu0 0
        %2990 = vmatpush1.bf16.msra.mxu0 0
        %2991 = vmatprep.subr.bf16.mxu0 0
        %2992 = vmatpush1.bf16.msra.mxu0 0
        %2993 = vmatprep.mubr.bf16.mxu0 0
        %2994 = vmatmul.mubr.bf16.gmra.mrb[0].mxu0 %v2959
        %v2995 = vpop.f32.mrb[0].mxu0
        %v2996 = vadd.f32 0.0, %v2995
        %v2997 = vpop.f32.mrb[0].mxu0
        %v2998 = vpop.f32.mrb[0].mxu0
        %v2999 = vpop.f32.mrb[0].mxu0
        %3000 = vdwg.mxu0
        %3001 = vst [vmem:[#allocation2 + $0x8] sm:$0xff] %v2996
        %v3002 = vpack.c.bf16 %v2478, %v2478
        %v3003 = vpack.c.bf16 %v2635, %v2631
        %v3004 = vpack.c.bf16 %v2791, %v2787
        %3005 = vmatprep.subr.bf16.mxu0 0
        %3006 = vmatpush1.bf16.xpose.msra.mxu0 %v3003
        %3007 = vmatprep.subr.bf16.mxu0 0
        %3008 = vmatpush1.bf16.xpose.msra.mxu0 0
        %3009 = vmatprep.subr.bf16.mxu0 0
        %3010 = vmatpush1.bf16.xpose.msra.mxu0 0
        %3011 = vmatprep.subr.bf16.mxu0 0
        %3012 = vmatpush1.bf16.xpose.msra.mxu0 0
        %3013 = vmatprep.subr.bf16.mxu0 0
        %3014 = vmatpush1.bf16.xpose.msra.mxu0 0
        %3015 = vmatprep.subr.bf16.mxu0 0
        %3016 = vmatpush1.bf16.xpose.msra.mxu0 0
        %3017 = vmatprep.subr.bf16.mxu0 0
        %3018 = vmatpush1.bf16.xpose.msra.mxu0 0
        %3019 = vmatprep.subr.bf16.mxu0 0
        %3020 = vmatpush1.bf16.xpose.msra.mxu0 0
        %3021 = vmatprep.subr.bf16.mxu0 0
        %3022 = vmatpush1.bf16.xpose.msra.mxu0 0
        %3023 = vmatprep.subr.bf16.mxu0 0
        %3024 = vmatpush1.bf16.xpose.msra.mxu0 0
        %3025 = vmatprep.subr.bf16.mxu0 0
        %3026 = vmatpush1.bf16.xpose.msra.mxu0 0
        %3027 = vmatprep.subr.bf16.mxu0 0
        %3028 = vmatpush1.bf16.xpose.msra.mxu0 0
        %3029 = vmatprep.subr.bf16.mxu0 0
        %3030 = vmatpush1.bf16.xpose.msra.mxu0 0
        %3031 = vmatprep.subr.bf16.mxu0 0
        %3032 = vmatpush1.bf16.xpose.msra.mxu0 0
        %3033 = vmatprep.subr.bf16.mxu0 0
        %3034 = vmatpush1.bf16.xpose.msra.mxu0 0
        %3035 = vmatprep.subr.bf16.mxu0 0
        %3036 = vmatpush1.bf16.xpose.msra.mxu0 0
        %3037 = vmatprep.mubr.bf16.mxu0 0
        %3038 = vmatmul.mubr.bf16.gmra.mrb[0].mxu0 %v3002
        %v3039 = vpop.f32.mrb[0].mxu0
        %v3040 = vadd.f32 0.0, %v3039
        %v3041 = vpop.f32.mrb[0].mxu0
        %v3042 = vpop.f32.mrb[0].mxu0
        %v3043 = vpop.f32.mrb[0].mxu0
        %3044 = vdwg.mxu0
        %v3045 = vsel %vm2843, -1e+18, %v3040
        %v3046 = vsel %vm2845, %v3045, -inf
        %3047 = vmax.xlane.f32.xlu0 %v3046
        %v3048 = vpop.xlane.xlu0 %3047
        %v3049 = vsub.f32 %v3045, %v3048
        %v3050 = vmul.f32 %v3049, 1.442695
        %v3051 = vpow.pop %v3050
        %v3052 = vsel %vm2845, %v3051, 0.0
        %3053 = vadd.xlane.f32.xlu0 %v3052
        %v3054 = vpop.xlane.xlu0 %3053
        %v3055 = vrcp.pop %v3054
        %v3056 = vmul.f32 %v3051, %v3055
        %v3057 = vpack.c.bf16 %v3056, %v3056
        %v3059 = vsel %vm2845, %v3057, 0
        %3061 = vmatprep.subr.bf16.mxu0 0
        %3062 = vmatpush1.bf16.msra.mxu0 %v3004
        %3063 = vmatprep.subr.bf16.mxu0 0
        %3064 = vmatpush1.bf16.msra.mxu0 0
        %3065 = vmatprep.subr.bf16.mxu0 0
        %3066 = vmatpush1.bf16.msra.mxu0 0
        %3067 = vmatprep.subr.bf16.mxu0 0
        %3068 = vmatpush1.bf16.msra.mxu0 0
        %3069 = vmatprep.subr.bf16.mxu0 0
        %3070 = vmatpush1.bf16.msra.mxu0 0
        %3071 = vmatprep.subr.bf16.mxu0 0
        %3072 = vmatpush1.bf16.msra.mxu0 0
        %3073 = vmatprep.subr.bf16.mxu0 0
        %3074 = vmatpush1.bf16.msra.mxu0 0
        %3075 = vmatprep.subr.bf16.mxu0 0
        %3076 = vmatpush1.bf16.msra.mxu0 0
        %3077 = vmatprep.subr.bf16.mxu0 0
        %3078 = vmatpush1.bf16.msra.mxu0 0
        %3079 = vmatprep.subr.bf16.mxu0 0
        %3080 = vmatpush1.bf16.msra.mxu0 0
        %3081 = vmatprep.subr.bf16.mxu0 0
        %3082 = vmatpush1.bf16.msra.mxu0 0
        %3083 = vmatprep.subr.bf16.mxu0 0
        %3084 = vmatpush1.bf16.msra.mxu0 0
        %3085 = vmatprep.subr.bf16.mxu0 0
        %3086 = vmatpush1.bf16.msra.mxu0 0
        %3087 = vmatprep.subr.bf16.mxu0 0
        %3088 = vmatpush1.bf16.msra.mxu0 0
        %3089 = vmatprep.subr.bf16.mxu0 0
        %3090 = vmatpush1.bf16.msra.mxu0 0
        %3091 = vmatprep.subr.bf16.mxu0 0
        %3092 = vmatpush1.bf16.msra.mxu0 0
        %3093 = vmatprep.mubr.bf16.mxu0 0
        %3094 = vmatmul.mubr.bf16.gmra.mrb[0].mxu0 %v3059
        %v3095 = vpop.f32.mrb[0].mxu0
        %v3096 = vadd.f32 0.0, %v3095
        %v3097 = vpop.f32.mrb[0].mxu0
        %v3098 = vpop.f32.mrb[0].mxu0
        %v3099 = vpop.f32.mrb[0].mxu0
        %3100 = vdwg.mxu0
        %3101 = vst [vmem:[#allocation2 + $0x10] sm:$0xff] %v3096
        %v3102 = vpack.c.bf16 %v2479, %v2479
        %v3103 = vpack.c.bf16 %v2637, %v2633
        %v3104 = vpack.c.bf16 %v2793, %v2789
        %3105 = vmatprep.subr.bf16.mxu0 0
        %3106 = vmatpush1.bf16.xpose.msra.mxu0 %v3103
        %3107 = vmatprep.subr.bf16.mxu0 0
        %3108 = vmatpush1.bf16.xpose.msra.mxu0 0
        %3109 = vmatprep.subr.bf16.mxu0 0
        %3110 = vmatpush1.bf16.xpose.msra.mxu0 0
        %3111 = vmatprep.subr.bf16.mxu0 0
        %3112 = vmatpush1.bf16.xpose.msra.mxu0 0
        %3113 = vmatprep.subr.bf16.mxu0 0
        %3114 = vmatpush1.bf16.xpose.msra.mxu0 0
        %3115 = vmatprep.subr.bf16.mxu0 0
        %3116 = vmatpush1.bf16.xpose.msra.mxu0 0
        %3117 = vmatprep.subr.bf16.mxu0 0
        %3118 = vmatpush1.bf16.xpose.msra.mxu0 0
        %3119 = vmatprep.subr.bf16.mxu0 0
        %3120 = vmatpush1.bf16.xpose.msra.mxu0 0
        %3121 = vmatprep.subr.bf16.mxu0 0
        %3122 = vmatpush1.bf16.xpose.msra.mxu0 0
        %3123 = vmatprep.subr.bf16.mxu0 0
        %3124 = vmatpush1.bf16.xpose.msra.mxu0 0
        %3125 = vmatprep.subr.bf16.mxu0 0
        %3126 = vmatpush1.bf16.xpose.msra.mxu0 0
        %3127 = vmatprep.subr.bf16.mxu0 0
        %3128 = vmatpush1.bf16.xpose.msra.mxu0 0
        %3129 = vmatprep.subr.bf16.mxu0 0
        %3130 = vmatpush1.bf16.xpose.msra.mxu0 0
        %3131 = vmatprep.subr.bf16.mxu0 0
        %3132 = vmatpush1.bf16.xpose.msra.mxu0 0
        %3133 = vmatprep.subr.bf16.mxu0 0
        %3134 = vmatpush1.bf16.xpose.msra.mxu0 0
        %3135 = vmatprep.subr.bf16.mxu0 0
        %3136 = vmatpush1.bf16.xpose.msra.mxu0 0
        %3137 = vmatprep.mubr.bf16.mxu0 0
        %3138 = vmatmul.mubr.bf16.gmra.mrb[0].mxu0 %v3102
        %v3139 = vpop.f32.mrb[0].mxu0
        %v3140 = vadd.f32 0.0, %v3139
        %v3141 = vpop.f32.mrb[0].mxu0
        %v3142 = vpop.f32.mrb[0].mxu0
        %v3143 = vpop.f32.mrb[0].mxu0
        %3144 = vdwg.mxu0
        %v3145 = vsel %vm2843, -1e+18, %v3140
        %v3146 = vsel %vm2845, %v3145, -inf
        %3147 = vmax.xlane.f32.xlu0 %v3146
        %v3148 = vpop.xlane.xlu0 %3147
        %v3149 = vsub.f32 %v3145, %v3148
        %v3150 = vmul.f32 %v3149, 1.442695
        %v3151 = vpow.pop %v3150
        %v3152 = vsel %vm2845, %v3151, 0.0
        %3153 = vadd.xlane.f32.xlu0 %v3152
        %v3154 = vpop.xlane.xlu0 %3153
        %v3155 = vrcp.pop %v3154
        %v3156 = vmul.f32 %v3151, %v3155
        %v3157 = vpack.c.bf16 %v3156, %v3156
        %v3159 = vsel %vm2845, %v3157, 0
        %3161 = vmatprep.subr.bf16.mxu0 0
        %3162 = vmatpush1.bf16.msra.mxu0 %v3104
        %3163 = vmatprep.subr.bf16.mxu0 0
        %3164 = vmatpush1.bf16.msra.mxu0 0
        %3165 = vmatprep.subr.bf16.mxu0 0
        %3166 = vmatpush1.bf16.msra.mxu0 0
        %3167 = vmatprep.subr.bf16.mxu0 0
        %3168 = vmatpush1.bf16.msra.mxu0 0
        %3169 = vmatprep.subr.bf16.mxu0 0
        %3170 = vmatpush1.bf16.msra.mxu0 0
        %3171 = vmatprep.subr.bf16.mxu0 0
        %3172 = vmatpush1.bf16.msra.mxu0 0
        %3173 = vmatprep.subr.bf16.mxu0 0
        %3174 = vmatpush1.bf16.msra.mxu0 0
        %3175 = vmatprep.subr.bf16.mxu0 0
        %3176 = vmatpush1.bf16.msra.mxu0 0
        %3177 = vmatprep.subr.bf16.mxu0 0
        %3178 = vmatpush1.bf16.msra.mxu0 0
        %3179 = vmatprep.subr.bf16.mxu0 0
        %3180 = vmatpush1.bf16.msra.mxu0 0
        %3181 = vmatprep.subr.bf16.mxu0 0
        %3182 = vmatpush1.bf16.msra.mxu0 0
        %3183 = vmatprep.subr.bf16.mxu0 0
        %3184 = vmatpush1.bf16.msra.mxu0 0
        %3185 = vmatprep.subr.bf16.mxu0 0
        %3186 = vmatpush1.bf16.msra.mxu0 0
        %3187 = vmatprep.subr.bf16.mxu0 0
        %3188 = vmatpush1.bf16.msra.mxu0 0
        %3189 = vmatprep.subr.bf16.mxu0 0
        %3190 = vmatpush1.bf16.msra.mxu0 0
        %3191 = vmatprep.subr.bf16.mxu0 0
        %3192 = vmatpush1.bf16.msra.mxu0 0
        %3193 = vmatprep.mubr.bf16.mxu0 0
        %3194 = vmatmul.mubr.bf16.gmra.mrb[0].mxu0 %v3159
        %v3195 = vpop.f32.mrb[0].mxu0
        %v3196 = vadd.f32 0.0, %v3195
        %v3197 = vpop.f32.mrb[0].mxu0
        %v3198 = vpop.f32.mrb[0].mxu0
        %v3199 = vpop.f32.mrb[0].mxu0
        %3200 = vdwg.mxu0
        %3201 = vst [vmem:[#allocation2 + $0x18] sm:$0xff] %v3196
        %v3202 = vld [vmem:[#allocation2] sm:$0xff]
        %v3203 = vld [vmem:[#allocation2 + $0x8] sm:$0xff]
        %v3204 = vld [vmem:[#allocation2 + $0x10] sm:$0xff]
        %v3205 = vld [vmem:[#allocation2 + $0x18] sm:$0xff]
        %v3206 = vpack.c.bf16 %v3202, %v3202
        %v3207 = vpack.c.bf16 %v3203, %v3203
        %v3208 = vpack.c.bf16 %v3204, %v3204
        %v3209 = vpack.c.bf16 %v3205, %v3205
        %v3210 = vld [vmem:[%s41] sm:$0xf]
        %v3211 = vld [vmem:[%s41 + $0x4] sm:$0xf]
        %v3212 = vld [vmem:[%s41 + $0x8] sm:$0xf]
        %v3213 = vld [vmem:[%s41 + $0xc] sm:$0xf]
        %v3214 = vld [vmem:[%s41 + $0x10] sm:$0xf]
        %v3215 = vld [vmem:[%s41 + $0x14] sm:$0xf]
        %v3216 = vld [vmem:[%s41 + $0x18] sm:$0xf]
        %v3217 = vld [vmem:[%s41 + $0x1c] sm:$0xf]
        %v3218 = vld [vmem:[%s41 + $0x20] sm:$0xf]
        %v3219 = vld [vmem:[%s41 + $0x24] sm:$0xf]
        %v3220 = vld [vmem:[%s41 + $0x28] sm:$0xf]
        %v3221 = vld [vmem:[%s41 + $0x2c] sm:$0xf]
        %v3222 = vld [vmem:[%s41 + $0x30] sm:$0xf]
        %v3223 = vld [vmem:[%s41 + $0x34] sm:$0xf]
        %v3224 = vld [vmem:[%s41 + $0x38] sm:$0xf]
        %v3225 = vld [vmem:[%s41 + $0x3c] sm:$0xf]
        %v3226 = vld [vmem:[%s41 + $0x40] sm:$0xf]
        %v3227 = vld [vmem:[%s41 + $0x44] sm:$0xf]
        %v3228 = vld [vmem:[%s41 + $0x48] sm:$0xf]
        %v3229 = vld [vmem:[%s41 + $0x4c] sm:$0xf]
        %v3230 = vld [vmem:[%s41 + $0x50] sm:$0xf]
        %v3231 = vld [vmem:[%s41 + $0x54] sm:$0xf]
        %v3232 = vld [vmem:[%s41 + $0x58] sm:$0xf]
        %v3233 = vld [vmem:[%s41 + $0x5c] sm:$0xf]
        %v3234 = vld [vmem:[%s41 + $0x60] sm:$0xf]
        %v3235 = vld [vmem:[%s41 + $0x64] sm:$0xf]
        %v3236 = vld [vmem:[%s41 + $0x68] sm:$0xf]
        %v3237 = vld [vmem:[%s41 + $0x6c] sm:$0xf]
        %v3238 = vld [vmem:[%s41 + $0x70] sm:$0xf]
        %v3239 = vld [vmem:[%s41 + $0x74] sm:$0xf]
        %v3240 = vld [vmem:[%s41 + $0x78] sm:$0xf]
        %v3241 = vld [vmem:[%s41 + $0x7c] sm:$0xf]
        %v3242 = vld [vmem:[%s41 + $0x80] sm:$0xf]
        %v3243 = vld [vmem:[%s41 + $0x84] sm:$0xf]
        %v3244 = vld [vmem:[%s41 + $0x88] sm:$0xf]
        %v3245 = vld [vmem:[%s41 + $0x8c] sm:$0xf]
        %v3246 = vld [vmem:[%s41 + $0x90] sm:$0xf]
        %v3247 = vld [vmem:[%s41 + $0x94] sm:$0xf]
        %v3248 = vld [vmem:[%s41 + $0x98] sm:$0xf]
        %v3249 = vld [vmem:[%s41 + $0x9c] sm:$0xf]
        %v3250 = vld [vmem:[%s41 + $0xa0] sm:$0xf]
        %v3251 = vld [vmem:[%s41 + $0xa4] sm:$0xf]
        %v3252 = vld [vmem:[%s41 + $0xa8] sm:$0xf]
        %v3253 = vld [vmem:[%s41 + $0xac] sm:$0xf]
        %v3254 = vld [vmem:[%s41 + $0xb0] sm:$0xf]
        %v3255 = vld [vmem:[%s41 + $0xb4] sm:$0xf]
        %v3256 = vld [vmem:[%s41 + $0xb8] sm:$0xf]
        %v3257 = vld [vmem:[%s41 + $0xbc] sm:$0xf]
        %v3258 = vld [vmem:[%s41 + $0xc0] sm:$0xf]
        %v3259 = vld [vmem:[%s41 + $0xc4] sm:$0xf]
        %v3260 = vld [vmem:[%s41 + $0xc8] sm:$0xf]
        %v3261 = vld [vmem:[%s41 + $0xcc] sm:$0xf]
        %v3262 = vld [vmem:[%s41 + $0xd0] sm:$0xf]
        %v3263 = vld [vmem:[%s41 + $0xd4] sm:$0xf]
        %v3264 = vld [vmem:[%s41 + $0xd8] sm:$0xf]
        %v3265 = vld [vmem:[%s41 + $0xdc] sm:$0xf]
        %v3266 = vld [vmem:[%s41 + $0xe0] sm:$0xf]
        %v3267 = vld [vmem:[%s41 + $0xe4] sm:$0xf]
        %v3268 = vld [vmem:[%s41 + $0xe8] sm:$0xf]
        %v3269 = vld [vmem:[%s41 + $0xec] sm:$0xf]
        %v3270 = vld [vmem:[%s41 + $0xf0] sm:$0xf]
        %v3271 = vld [vmem:[%s41 + $0xf4] sm:$0xf]
        %v3272 = vld [vmem:[%s41 + $0xf8] sm:$0xf]
        %v3273 = vld [vmem:[%s41 + $0xfc] sm:$0xf]
        %v3274 = vld [vmem:[%s43] sm:$0x1]
        %v3276 = vlaneseq
        %v3277 = vshrl.u32 %v3276, 7
        %v3278 = vsub.s32 0, %v3277
        %v3279 = vrot.slane %v3274, %v3278
        %v3345 = vunpack.c.l.b16 %v3210
        %v3346 = vunpack.c.l.b16 %v3211
        %v3347 = vunpack.c.l.b16 %v3212
        %v3348 = vunpack.c.l.b16 %v3213
        %v3349 = vunpack.c.l.b16 %v3214
        %v3350 = vunpack.c.l.b16 %v3215
        %v3351 = vunpack.c.l.b16 %v3216
        %v3352 = vunpack.c.l.b16 %v3217
        %v3353 = vunpack.c.l.b16 %v3218
        %v3354 = vunpack.c.l.b16 %v3219
        %v3355 = vunpack.c.l.b16 %v3220
        %v3356 = vunpack.c.l.b16 %v3221
        %v3357 = vunpack.c.l.b16 %v3222
        %v3358 = vunpack.c.l.b16 %v3223
        %v3359 = vunpack.c.l.b16 %v3224
        %v3360 = vunpack.c.l.b16 %v3225
        %v3361 = vunpack.c.l.b16 %v3226
        %v3362 = vunpack.c.l.b16 %v3227
        %v3363 = vunpack.c.l.b16 %v3228
        %v3364 = vunpack.c.l.b16 %v3229
        %v3365 = vunpack.c.l.b16 %v3230
        %v3366 = vunpack.c.l.b16 %v3231
        %v3367 = vunpack.c.l.b16 %v3232
        %v3368 = vunpack.c.l.b16 %v3233
        %v3369 = vunpack.c.l.b16 %v3234
        %v3370 = vunpack.c.l.b16 %v3235
        %v3371 = vunpack.c.l.b16 %v3236
        %v3372 = vunpack.c.l.b16 %v3237
        %v3373 = vunpack.c.l.b16 %v3238
        %v3374 = vunpack.c.l.b16 %v3239
        %v3375 = vunpack.c.l.b16 %v3240
        %v3376 = vunpack.c.l.b16 %v3241
        %v3377 = vunpack.c.l.b16 %v3242
        %v3378 = vunpack.c.l.b16 %v3243
        %v3379 = vunpack.c.l.b16 %v3244
        %v3380 = vunpack.c.l.b16 %v3245
        %v3381 = vunpack.c.l.b16 %v3246
        %v3382 = vunpack.c.l.b16 %v3247
        %v3383 = vunpack.c.l.b16 %v3248
        %v3384 = vunpack.c.l.b16 %v3249
        %v3385 = vunpack.c.l.b16 %v3250
        %v3386 = vunpack.c.l.b16 %v3251
        %v3387 = vunpack.c.l.b16 %v3252
        %v3388 = vunpack.c.l.b16 %v3253
        %v3389 = vunpack.c.l.b16 %v3254
        %v3390 = vunpack.c.l.b16 %v3255
        %v3391 = vunpack.c.l.b16 %v3256
        %v3392 = vunpack.c.l.b16 %v3257
        %v3393 = vunpack.c.l.b16 %v3258
        %v3394 = vunpack.c.l.b16 %v3259
        %v3395 = vunpack.c.l.b16 %v3260
        %v3396 = vunpack.c.l.b16 %v3261
        %v3397 = vunpack.c.l.b16 %v3262
        %v3398 = vunpack.c.l.b16 %v3263
        %v3399 = vunpack.c.l.b16 %v3264
        %v3400 = vunpack.c.l.b16 %v3265
        %v3401 = vunpack.c.l.b16 %v3266
        %v3402 = vunpack.c.l.b16 %v3267
        %v3403 = vunpack.c.l.b16 %v3268
        %v3404 = vunpack.c.l.b16 %v3269
        %v3405 = vunpack.c.l.b16 %v3270
        %v3406 = vunpack.c.l.b16 %v3271
        %v3407 = vunpack.c.l.b16 %v3272
        %v3408 = vunpack.c.l.b16 %v3273
        %v3409 = vpack.c.b16 %v3346, %v3345
        %v3410 = vpack.c.b16 %v3348, %v3347
        %v3411 = vpack.c.b16 %v3350, %v3349
        %v3412 = vpack.c.b16 %v3352, %v3351
        %v3413 = vpack.c.b16 %v3354, %v3353
        %v3414 = vpack.c.b16 %v3356, %v3355
        %v3415 = vpack.c.b16 %v3358, %v3357
        %v3416 = vpack.c.b16 %v3360, %v3359
        %v3417 = vpack.c.b16 %v3362, %v3361
        %v3418 = vpack.c.b16 %v3364, %v3363
        %v3419 = vpack.c.b16 %v3366, %v3365
        %v3420 = vpack.c.b16 %v3368, %v3367
        %v3421 = vpack.c.b16 %v3370, %v3369
        %v3422 = vpack.c.b16 %v3372, %v3371
        %v3423 = vpack.c.b16 %v3374, %v3373
        %v3424 = vpack.c.b16 %v3376, %v3375
        %v3425 = vpack.c.b16 %v3378, %v3377
        %v3426 = vpack.c.b16 %v3380, %v3379
        %v3427 = vpack.c.b16 %v3382, %v3381
        %v3428 = vpack.c.b16 %v3384, %v3383
        %v3429 = vpack.c.b16 %v3386, %v3385
        %v3430 = vpack.c.b16 %v3388, %v3387
        %v3431 = vpack.c.b16 %v3390, %v3389
        %v3432 = vpack.c.b16 %v3392, %v3391
        %v3433 = vpack.c.b16 %v3394, %v3393
        %v3434 = vpack.c.b16 %v3396, %v3395
        %v3435 = vpack.c.b16 %v3398, %v3397
        %v3436 = vpack.c.b16 %v3400, %v3399
        %v3437 = vpack.c.b16 %v3402, %v3401
        %v3438 = vpack.c.b16 %v3404, %v3403
        %v3439 = vpack.c.b16 %v3406, %v3405
        %v3440 = vpack.c.b16 %v3408, %v3407
        %3473 = vmatprep.subr.bf16.mxu0 0
        %3474 = vmatpush1.bf16.msra.mxu0 %v3409
        %3475 = vmatprep.subr.bf16.mxu0 0
        %3476 = vmatpush1.bf16.msra.mxu0 %v3410
        %3477 = vmatprep.subr.bf16.mxu0 0
        %3478 = vmatpush1.bf16.msra.mxu0 %v3411
        %3479 = vmatprep.subr.bf16.mxu0 0
        %3480 = vmatpush1.bf16.msra.mxu0 %v3412
        %3481 = vmatprep.subr.bf16.mxu0 0
        %3482 = vmatpush1.bf16.msra.mxu0 %v3413
        %3483 = vmatprep.subr.bf16.mxu0 0
        %3484 = vmatpush1.bf16.msra.mxu0 %v3414
        %3485 = vmatprep.subr.bf16.mxu0 0
        %3486 = vmatpush1.bf16.msra.mxu0 %v3415
        %3487 = vmatprep.subr.bf16.mxu0 0
        %3488 = vmatpush1.bf16.msra.mxu0 %v3416
        %3489 = vmatprep.subr.bf16.mxu0 0
        %3490 = vmatpush1.bf16.msra.mxu0 %v3417
        %3491 = vmatprep.subr.bf16.mxu0 0
        %3492 = vmatpush1.bf16.msra.mxu0 %v3418
        %3493 = vmatprep.subr.bf16.mxu0 0
        %3494 = vmatpush1.bf16.msra.mxu0 %v3419
        %3495 = vmatprep.subr.bf16.mxu0 0
        %3496 = vmatpush1.bf16.msra.mxu0 %v3420
        %3497 = vmatprep.subr.bf16.mxu0 0
        %3498 = vmatpush1.bf16.msra.mxu0 %v3421
        %3499 = vmatprep.subr.bf16.mxu0 0
        %3500 = vmatpush1.bf16.msra.mxu0 %v3422
        %3501 = vmatprep.subr.bf16.mxu0 0
        %3502 = vmatpush1.bf16.msra.mxu0 %v3423
        %3503 = vmatprep.subr.bf16.mxu0 0
        %3504 = vmatpush1.bf16.msra.mxu0 %v3424
        %3505 = vmatprep.mubr.bf16.mxu0 %v3207
        %3506 = vmatmul.mubr.bf16.gmra.mrb[0].mxu0 %v3206
        %v3507 = vpop.f32.mrb[0].mxu0
        %v3508 = vadd.f32 %v3279, %v3507
        %v3509 = vpop.f32.mrb[0].mxu0
        %v3510 = vpop.f32.mrb[0].mxu0
        %v3511 = vpop.f32.mrb[0].mxu0
        %3512 = vdwg.mxu0
        %3513 = vmatprep.subr.bf16.mxu0 0
        %3514 = vmatpush1.bf16.msra.mxu0 %v3425
        %3515 = vmatprep.subr.bf16.mxu0 0
        %3516 = vmatpush1.bf16.msra.mxu0 %v3426
        %3517 = vmatprep.subr.bf16.mxu0 0
        %3518 = vmatpush1.bf16.msra.mxu0 %v3427
        %3519 = vmatprep.subr.bf16.mxu0 0
        %3520 = vmatpush1.bf16.msra.mxu0 %v3428
        %3521 = vmatprep.subr.bf16.mxu0 0
        %3522 = vmatpush1.bf16.msra.mxu0 %v3429
        %3523 = vmatprep.subr.bf16.mxu0 0
        %3524 = vmatpush1.bf16.msra.mxu0 %v3430
        %3525 = vmatprep.subr.bf16.mxu0 0
        %3526 = vmatpush1.bf16.msra.mxu0 %v3431
        %3527 = vmatprep.subr.bf16.mxu0 0
        %3528 = vmatpush1.bf16.msra.mxu0 %v3432
        %3529 = vmatprep.subr.bf16.mxu0 0
        %3530 = vmatpush1.bf16.msra.mxu0 %v3433
        %3531 = vmatprep.subr.bf16.mxu0 0
        %3532 = vmatpush1.bf16.msra.mxu0 %v3434
        %3533 = vmatprep.subr.bf16.mxu0 0
        %3534 = vmatpush1.bf16.msra.mxu0 %v3435
        %3535 = vmatprep.subr.bf16.mxu0 0
        %3536 = vmatpush1.bf16.msra.mxu0 %v3436
        %3537 = vmatprep.subr.bf16.mxu0 0
        %3538 = vmatpush1.bf16.msra.mxu0 %v3437
        %3539 = vmatprep.subr.bf16.mxu0 0
        %3540 = vmatpush1.bf16.msra.mxu0 %v3438
        %3541 = vmatprep.subr.bf16.mxu0 0
        %3542 = vmatpush1.bf16.msra.mxu0 %v3439
        %3543 = vmatprep.subr.bf16.mxu0 0
        %3544 = vmatpush1.bf16.msra.mxu0 %v3440
        %3545 = vmatprep.mubr.bf16.mxu0 %v3209
        %3546 = vmatmul.mubr.bf16.gmra.mrb[0].mxu0 %v3208
        %v3547 = vpop.f32.mrb[0].mxu0
        %v3548 = vadd.f32 %v3508, %v3547
        %v3549 = vpop.f32.mrb[0].mxu0
        %v3550 = vpop.f32.mrb[0].mxu0
        %v3551 = vpop.f32.mrb[0].mxu0
        %3552 = vdwg.mxu0
        %v3553 = vadd.f32 %v3548, %v2318
        %v3554 = vld [vmem:[%s45] sm:$0x1]
        %v3555 = vld [vmem:[%s47] sm:$0x1]
        %v3556 = vsel %vm1126, %v3553, 0.0
        %3557 = vadd.xlane.f32.xlu0 %v3556
        %v3558 = vpop.xlane.xlu0 %3557
        %v3559 = vmul.f32 %v3558, %v2294
        %v3560 = vsub.f32 %v3553, %v3559
        %v3561 = vmul.f32 %v3560, %v3560
        %v3562 = vsel %vm1126, %v3561, 0.0
        %3563 = vadd.xlane.f32.xlu0 %v3562
        %v3564 = vpop.xlane.xlu0 %3563
        %v3565 = vmul.f32 %v3564, %v2294
        %v3566 = vadd.f32 %v3565, 1e-06
        %v3567 = vrsqrt.pop %v3566
        %v3568 = vmul.f32 %v3560, %v3567
        %v3570 = vlaneseq
        %v3571 = vshrl.u32 %v3570, 7
        %v3572 = vsub.s32 0, %v3571
        %v3573 = vrot.slane %v3554, %v3572
        %v3575 = vmul.f32 %v3568, %v3573
        %v3577 = vlaneseq
        %v3578 = vshrl.u32 %v3577, 7
        %v3579 = vsub.s32 0, %v3578
        %v3580 = vrot.slane %v3555, %v3579
        %v3582 = vadd.f32 %v3575, %v3580
        %v3583 = vld [vmem:[%s49] sm:$0x1]
        %v3584 = vld [vmem:[%s51] sm:$0x1]
        %v3585 = vsel %vm1126, %v3582, 0.0
        %3586 = vadd.xlane.f32.xlu0 %v3585
        %v3587 = vpop.xlane.xlu0 %3586
        %v3588 = vmul.f32 %v3587, %v2294
        %v3589 = vsub.f32 %v3582, %v3588
        %v3590 = vmul.f32 %v3589, %v3589
        %v3591 = vsel %vm1126, %v3590, 0.0
        %3592 = vadd.xlane.f32.xlu0 %v3591
        %v3593 = vpop.xlane.xlu0 %3592
        %v3594 = vmul.f32 %v3593, %v2294
        %v3595 = vadd.f32 %v3594, 1e-06
        %v3596 = vrsqrt.pop %v3595
        %v3597 = vmul.f32 %v3589, %v3596
        %v3599 = vlaneseq
        %v3600 = vshrl.u32 %v3599, 7
        %v3601 = vsub.s32 0, %v3600
        %v3602 = vrot.slane %v3583, %v3601
        %v3604 = vmul.f32 %v3597, %v3602
        %v3606 = vlaneseq
        %v3607 = vshrl.u32 %v3606, 7
        %v3608 = vsub.s32 0, %v3607
        %v3609 = vrot.slane %v3584, %v3608
        %v3611 = vadd.f32 %v3604, %v3609
        %v3612 = vpack.c.bf16 %v3611, %v3611
        %v3613 = vld [vmem:[%s53] sm:$0xf]
        %v3614 = vld [vmem:[%s53 + $0x4] sm:$0xf]
        %v3615 = vld [vmem:[%s53 + $0x8] sm:$0xf]
        %v3616 = vld [vmem:[%s53 + $0xc] sm:$0xf]
        %v3617 = vld [vmem:[%s55] sm:$0x1]
        %v3619 = vlaneseq
        %v3620 = vshrl.u32 %v3619, 7
        %v3621 = vsub.s32 0, %v3620
        %v3622 = vrot.slane %v3617, %v3621
        %v3628 = vunpack.c.l.b16 %v3613
        %v3629 = vunpack.c.l.b16 %v3614
        %v3630 = vunpack.c.l.b16 %v3615
        %v3631 = vunpack.c.l.b16 %v3616
        %v3632 = vpack.c.b16 %v3629, %v3628
        %v3633 = vpack.c.b16 %v3631, %v3630
        %v3637 = vsel %vm1126, %v3612, 0
        %3639 = vmatprep.subr.bf16.mxu0 0
        %3640 = vmatpush1.bf16.msra.mxu0 %v3632
        %3641 = vmatprep.subr.bf16.mxu0 0
        %3642 = vmatpush1.bf16.msra.mxu0 %v3633
        %3643 = vmatprep.subr.bf16.mxu0 0
        %3644 = vmatpush1.bf16.msra.mxu0 0
        %3645 = vmatprep.subr.bf16.mxu0 0
        %3646 = vmatpush1.bf16.msra.mxu0 0
        %3647 = vmatprep.subr.bf16.mxu0 0
        %3648 = vmatpush1.bf16.msra.mxu0 0
        %3649 = vmatprep.subr.bf16.mxu0 0
        %3650 = vmatpush1.bf16.msra.mxu0 0
        %3651 = vmatprep.subr.bf16.mxu0 0
        %3652 = vmatpush1.bf16.msra.mxu0 0
        %3653 = vmatprep.subr.bf16.mxu0 0
        %3654 = vmatpush1.bf16.msra.mxu0 0
        %3655 = vmatprep.subr.bf16.mxu0 0
        %3656 = vmatpush1.bf16.msra.mxu0 0
        %3657 = vmatprep.subr.bf16.mxu0 0
        %3658 = vmatpush1.bf16.msra.mxu0 0
        %3659 = vmatprep.subr.bf16.mxu0 0
        %3660 = vmatpush1.bf16.msra.mxu0 0
        %3661 = vmatprep.subr.bf16.mxu0 0
        %3662 = vmatpush1.bf16.msra.mxu0 0
        %3663 = vmatprep.subr.bf16.mxu0 0
        %3664 = vmatpush1.bf16.msra.mxu0 0
        %3665 = vmatprep.subr.bf16.mxu0 0
        %3666 = vmatpush1.bf16.msra.mxu0 0
        %3667 = vmatprep.subr.bf16.mxu0 0
        %3668 = vmatpush1.bf16.msra.mxu0 0
        %3669 = vmatprep.subr.bf16.mxu0 0
        %3670 = vmatpush1.bf16.msra.mxu0 0
        %3671 = vmatprep.mubr.bf16.mxu0 0
        %3672 = vmatmul.mubr.bf16.gmra.mrb[0].mxu0 %v3637
        %v3673 = vpop.f32.mrb[0].mxu0
        %v3674 = vadd.f32 %v3622, %v3673
        %v3675 = vpop.f32.mrb[0].mxu0
        %v3676 = vpop.f32.mrb[0].mxu0
        %v3677 = vpop.f32.mrb[0].mxu0
        %3678 = vdwg.mxu0
        %v3679 = vmax.f32 %v3674, 0.0
        %v3680 = vpack.c.bf16 %v3679, %v3679
        %v3681 = vld [vmem:[%s57] sm:$0xf]
        %v3682 = vld [vmem:[%s57 + $0x4] sm:$0xf]
        %v3683 = vld [vmem:[%s57 + $0x8] sm:$0xf]
        %v3684 = vld [vmem:[%s57 + $0xc] sm:$0xf]
        %v3685 = vld [vmem:[%s57 + $0x10] sm:$0xf]
        %v3686 = vld [vmem:[%s57 + $0x14] sm:$0xf]
        %v3687 = vld [vmem:[%s57 + $0x18] sm:$0xf]
        %v3688 = vld [vmem:[%s57 + $0x1c] sm:$0xf]
        %v3689 = vld [vmem:[%s59] sm:$0x1]
        %v3691 = vlaneseq
        %v3692 = vshrl.u32 %v3691, 7
        %v3693 = vsub.s32 0, %v3692
        %v3694 = vrot.slane %v3689, %v3693
        %v3704 = vunpack.c.l.b16 %v3681
        %v3705 = vunpack.c.l.b16 %v3682
        %v3706 = vunpack.c.l.b16 %v3683
        %v3707 = vunpack.c.l.b16 %v3684
        %v3708 = vunpack.c.l.b16 %v3685
        %v3709 = vunpack.c.l.b16 %v3686
        %v3710 = vunpack.c.l.b16 %v3687
        %v3711 = vunpack.c.l.b16 %v3688
        %v3712 = vpack.c.b16 %v3705, %v3704
        %v3713 = vpack.c.b16 %v3707, %v3706
        %v3714 = vpack.c.b16 %v3709, %v3708
        %v3715 = vpack.c.b16 %v3711, %v3710
        %vm3720 = vcmask 523264
        %v3722 = vsel %vm3720, %v3680, 0
        %3724 = vmatprep.subr.bf16.mxu0 0
        %3725 = vmatpush1.bf16.msra.mxu0 %v3712
        %3726 = vmatprep.subr.bf16.mxu0 0
        %3727 = vmatpush1.bf16.msra.mxu0 %v3713
        %3728 = vmatprep.subr.bf16.mxu0 0
        %3729 = vmatpush1.bf16.msra.mxu0 %v3714
        %3730 = vmatprep.subr.bf16.mxu0 0
        %3731 = vmatpush1.bf16.msra.mxu0 %v3715
        %3732 = vmatprep.subr.bf16.mxu0 0
        %3733 = vmatpush1.bf16.msra.mxu0 0
        %3734 = vmatprep.subr.bf16.mxu0 0
        %3735 = vmatpush1.bf16.msra.mxu0 0
        %3736 = vmatprep.subr.bf16.mxu0 0
        %3737 = vmatpush1.bf16.msra.mxu0 0
        %3738 = vmatprep.subr.bf16.mxu0 0
        %3739 = vmatpush1.bf16.msra.mxu0 0
        %3740 = vmatprep.subr.bf16.mxu0 0
        %3741 = vmatpush1.bf16.msra.mxu0 0
        %3742 = vmatprep.subr.bf16.mxu0 0
        %3743 = vmatpush1.bf16.msra.mxu0 0
        %3744 = vmatprep.subr.bf16.mxu0 0
        %3745 = vmatpush1.bf16.msra.mxu0 0
        %3746 = vmatprep.subr.bf16.mxu0 0
        %3747 = vmatpush1.bf16.msra.mxu0 0
        %3748 = vmatprep.subr.bf16.mxu0 0
        %3749 = vmatpush1.bf16.msra.mxu0 0
        %3750 = vmatprep.subr.bf16.mxu0 0
        %3751 = vmatpush1.bf16.msra.mxu0 0
        %3752 = vmatprep.subr.bf16.mxu0 0
        %3753 = vmatpush1.bf16.msra.mxu0 0
        %3754 = vmatprep.subr.bf16.mxu0 0
        %3755 = vmatpush1.bf16.msra.mxu0 0
        %3756 = vmatprep.mubr.bf16.mxu0 0
        %3757 = vmatmul.mubr.bf16.gmra.mrb[0].mxu0 %v3722
        %v3758 = vpop.f32.mrb[0].mxu0
        %v3759 = vadd.f32 %v3694, %v3758
        %v3760 = vpop.f32.mrb[0].mxu0
        %v3761 = vpop.f32.mrb[0].mxu0
        %v3762 = vpop.f32.mrb[0].mxu0
        %3763 = vdwg.mxu0
        %v3764 = vadd.f32 %v3759, %v3582
        %3765 = vst.msk [vmem:[%s1006] sm:$0xff] %vm1126, %v3764
        %3766 = vst.msk [vmem:[%s1013] sm:$0xff] %vm2845, %v2856
        %s3767 = sand.u32 %s753, 1
        %s3768 = scalar_lea.sflag [#allocation4], %s3767
        %s3769 = sand.u32 %s753, 1
        %s3770 = smul.addr %s3769, 8
        %s3771 = scalar_lea.vmem [#allocation3], %s3770
        %s3772 = sand.u32 %s781, 1
        %s3773 = scalar_lea.sflag [#allocation6], %s3772
        %s3774 = sand.u32 %s781, 1
        %s3775 = smul.addr %s3774, 8
        %s3776 = scalar_lea.vmem [#allocation5], %s3775
        // Predicated region
        $region141: #{tpu_custom_call.1} parent=139 // pred_check
          %p3777 = pneg %p763
        $region142: #{tpu_custom_call.1} parent=139 // pred_check_branch
          %3779 = sbr.rel (%p3777) target = $region144
        $region143: #{tpu_custom_call.1} parent=139 // pred_region
          %s3781 = ssub.s32 128, 128
          %3782 = vsyncadd %s3768, %s3781
          %s3783 = sadd.s32 %s86, %s85
          %s3784 = smul.addr %s3783, 128
          %s3785 = scalar_lea.hbm %s61, %s3784
          %s3787 = sshll.u32 %s3771, 4
          %s3788 = int_to_ptr.vmem [resolvable:$true] %s3787
          %3790 = dma.vmem_to_hbm [thread:$0]  %s3788, 128, %s3785, %s3768
        $region144: #{tpu_custom_call.1} parent=139 // pred_fallthru
          _
        // Predicated region
        $region145: #{tpu_custom_call.1} parent=139 // pred_check
          %p3791 = pneg %p791
        $region146: #{tpu_custom_call.1} parent=139 // pred_check_branch
          %3793 = sbr.rel (%p3791) target = $region148
        $region147: #{tpu_custom_call.1} parent=139 // pred_region
          %s3795 = ssub.s32 128, 128
          %3796 = vsyncadd %s3773, %s3795
          %s3797 = sadd.s32 %s86, %s85
          %s3798 = smul.addr %s3797, 128
          %s3799 = scalar_lea.hbm %s63, %s3798
          %s3801 = sshll.u32 %s3776, 4
          %s3802 = int_to_ptr.vmem [resolvable:$true] %s3801
          %3804 = dma.vmem_to_hbm [thread:$0]  %s3802, 128, %s3799, %s3773
        $region148: #{tpu_custom_call.1} parent=139 // pred_fallthru
          _
      $region140: #{tpu_custom_call.1} parent=5 // pred_fallthru
        _
      %p3805 = scmp.le.s32.totalorder 2, %s76
      // Predicated region
      $region149: #{tpu_custom_call.1} parent=5 // pred_check
        %p3806 = pneg %p3805
      $region150: #{tpu_custom_call.1} parent=5 // pred_check_branch
        %3808 = sbr.rel (%p3806) target = $region152
      $region151: #{tpu_custom_call.1} parent=5 // pred_region
        %s3809 = ssub.s32 %s76, 2
        // Predicated region
        $region153: #{tpu_custom_call.1} parent=151 // pred_check
          %p3810 = pneg %p769
        $region154: #{tpu_custom_call.1} parent=151 // pred_check_branch
          %3812 = sbr.rel (%p3810) target = $region156
        $region155: #{tpu_custom_call.1} parent=151 // pred_region
          %s3813 = sand.u32 %s754, 1
          %s3814 = scalar_lea.sflag [#allocation4], %s3813
          %s3815 = sand.u32 %s754, 1
          %s3816 = smul.addr %s3815, 8
          %s3817 = scalar_lea.vmem [#allocation3], %s3816
          %3818 = dma.done %s3814, 128
        $region156: #{tpu_custom_call.1} parent=151 // pred_fallthru
          _
        // Predicated region
        $region157: #{tpu_custom_call.1} parent=151 // pred_check
          %p3819 = pneg %p797
        $region158: #{tpu_custom_call.1} parent=151 // pred_check_branch
          %3821 = sbr.rel (%p3819) target = $region160
        $region159: #{tpu_custom_call.1} parent=151 // pred_region
          %s3822 = sand.u32 %s782, 1
          %s3823 = scalar_lea.sflag [#allocation6], %s3822
          %s3824 = sand.u32 %s782, 1
          %s3825 = smul.addr %s3824, 8
          %s3826 = scalar_lea.vmem [#allocation5], %s3825
          %3827 = dma.done %s3823, 128
        $region160: #{tpu_custom_call.1} parent=151 // pred_fallthru
          _
      $region152: #{tpu_custom_call.1} parent=5 // pred_fallthru
        _
    $region6: #{tpu_custom_call.1} parent=1 // loop_footer
      %s80 = sadd.s32 1, %s76
    $region7: #{tpu_custom_call.1} parent=1 // loop_footer_branch
      %75 = sbr.rel target = $region3
    $region8: #{tpu_custom_call.1} parent=1 // loop_exit
      _
    %3828 = vsyncpa [#allocation4], 1
    %s3829 = scalar_lea.sflag [#allocation4], 1
    %3830 = vsyncpa %s3829, 1
    %3831 = vsyncpa [#allocation6], 1
    %s3832 = scalar_lea.sflag [#allocation6], 1
    %3833 = vsyncpa %s3832, 1

</llo_original>
